<compile_context>
chip_gen: v7x
topology: tpu7x:2x2x1
jax: 0.10.0
libtpu: 0.0.40
codegen_flags: <defaults>
</compile_context>

<pallas_src>
import functools

import jax
import jax.numpy as jnp
import numpy as np
from jax.experimental import pallas as pl
from jax.experimental.pallas import tpu as pltpu

# ---------------- model hyper-parameters (small, synthetic) ----------------
NUM_LAYERS = 2       # num_layers
D_MODEL = 32         # d_model
NHEAD = 4            # nhead
DIM_FF = 64          # dim_feedforward
T_LEN = 8            # number of queries (tgt length)
S_LEN = 16           # memory length (e.g. flattened H*W)
BATCH = 2
LN_EPS = 1e-5


# ---------------- shared math ----------------
def _layer_norm(x, g, b, eps=LN_EPS):
    mu = jnp.mean(x, axis=-1, keepdims=True)
    var = jnp.mean(jnp.square(x - mu), axis=-1, keepdims=True)
    return (x - mu) * jax.lax.rsqrt(var + eps) * g + b


# ---------------- Pallas kernel ----------------
def decoder_kernel(tgt_ref, mem_ref, qpos_ref, pos_ref,
                   sa_w_ref, sa_b_ref, ca_w_ref, ca_b_ref,
                   w1_ref, b1_ref, w2_ref, b2_ref,
                   ln_g_ref, ln_b_ref, fn_g_ref, fn_b_ref,
                   out_ref, *, batch, nhead):
    num_layers = sa_w_ref.shape[0]
    bt, d = tgt_ref.shape            # (B*T, D)
    bs = mem_ref.shape[0]            # B*S
    t_len = bt // batch
    s_len = bs // batch
    hd = d // nhead
    scale = 1.0 / float(np.sqrt(hd))

    x = tgt_ref[...]                 # (B*T, D) — batch folded into M
    qpos = qpos_ref[...]             # (B*T, D)
    mem = mem_ref[...]               # (B*S, D)
    kmem = mem + pos_ref[...]        # cross-attn key input, hoisted (layer-invariant)

    def mha(q_in, k_in, v_in, w_ref, b_ref, l, n_q, n_kv):
        """nn.MultiheadAttention, no masks, eval mode.

        Weights are pre-transposed on the host to (in, out), so every matmul is
        x @ W (no in-kernel .T).  Batch stays folded in M for the projections and
        is a batch dim of the score/PV einsums.  The per-head output projection is
        accumulated directly (no concat).
        """
        q = (jnp.dot(q_in, w_ref[l, 0], preferred_element_type=jnp.float32)
             + b_ref[l, 0]) * scale
        k = jnp.dot(k_in, w_ref[l, 1], preferred_element_type=jnp.float32) + b_ref[l, 1]
        v = jnp.dot(v_in, w_ref[l, 2], preferred_element_type=jnp.float32) + b_ref[l, 2]
        wo = w_ref[l, 3]                                   # (D, D), already (in, out)
        q3 = q.reshape(batch, n_q, d)
        k3 = k.reshape(batch, n_kv, d)
        v3 = v.reshape(batch, n_kv, d)
        acc = None
        for h in range(nhead):
            sl = slice(h * hd, (h + 1) * hd)
            s = jnp.einsum('btd,bsd->bts', q3[:, :, sl], k3[:, :, sl],
                           preferred_element_type=jnp.float32)      # (B, n_q, n_kv)
            s = s - jnp.max(s, axis=-1, keepdims=True)
            p = jnp.exp(s)
            p = p / jnp.sum(p, axis=-1, keepdims=True)
            oh = jnp.einsum('bts,bsd->btd', p, v3[:, :, sl],
                            preferred_element_type=jnp.float32)     # (B, n_q, hd)
            contrib = jnp.dot(oh.reshape(batch * n_q, hd), wo[sl, :],
                              preferred_element_type=jnp.float32)   # (B*n_q, D)
            acc = contrib if acc is None else acc + contrib
        return acc + b_ref[l, 3]

    for l in range(num_layers):
        # ---- self attention (post-norm) ----
        q_in = x + qpos
        t2 = mha(q_in, q_in, x, sa_w_ref, sa_b_ref, l, t_len, t_len)
        x = _layer_norm(x + t2, ln_g_ref[l, 0], ln_b_ref[l, 0])
        # ---- cross attention ----
        t2 = mha(x + qpos, kmem, mem, ca_w_ref, ca_b_ref, l, t_len, s_len)
        x = _layer_norm(x + t2, ln_g_ref[l, 1], ln_b_ref[l, 1])
        # ---- feed-forward (ReLU) ----
        hdn = jnp.maximum(
            jnp.dot(x, w1_ref[l], preferred_element_type=jnp.float32) + b1_ref[l], 0.0)
        t2 = jnp.dot(hdn, w2_ref[l], preferred_element_type=jnp.float32) + b2_ref[l]
        x = _layer_norm(x + t2, ln_g_ref[l, 2], ln_b_ref[l, 2])

    # final norm (self.norm)
    out_ref[...] = _layer_norm(x, fn_g_ref[0], fn_b_ref[0])
    # TODO(synk): tgt_mask / memory_mask / key_padding_mask handling not implemented
    # (the driver passes None for all of them, matching typical DETR usage).


@jax.jit
def transformer_decoder(tgt, memory, query_pos, pos, params):
    """tgt/query_pos: (B,T,D); memory/pos: (B,S,D). Returns (B,T,D)."""
    B, T, D = tgt.shape
    S = memory.shape[1]
    (sa_w, sa_b, ca_w, ca_b, w1, b1, w2, b2, ln_g, ln_b, fn_g, fn_b) = params

    # Host/XLA-side weight pre-transposition: nn.Linear stores (out, in); the
    # kernel wants (in, out) so every in-kernel matmul is a plain x @ W.
    sa_w_t = jnp.swapaxes(sa_w, -1, -2)
    ca_w_t = jnp.swapaxes(ca_w, -1, -2)
    w1_t = jnp.swapaxes(w1, -1, -2)
    w2_t = jnp.swapaxes(w2, -1, -2)

    # Fold batch into the matmul M dimension (lane dim stays D).
    tgt2d = tgt.reshape(B * T, D)
    qpos2d = query_pos.reshape(B * T, D)
    mem2d = memory.reshape(B * S, D)
    pos2d = pos.reshape(B * S, D)

    vmem = pl.BlockSpec(memory_space=pltpu.MemorySpace.VMEM)
    kernel = functools.partial(decoder_kernel, batch=B, nhead=NHEAD)
    out2d = pl.pallas_call(
        kernel,
        out_shape=jax.ShapeDtypeStruct((B * T, D), jnp.float32),
        in_specs=[vmem] * 16,
        out_specs=vmem,
    )(tgt2d, mem2d, qpos2d, pos2d,
      sa_w_t, sa_b, ca_w_t, ca_b, w1_t, b1, w2_t, b2, ln_g, ln_b, fn_g, fn_b)
    return out2d.reshape(B, T, D)


# ---------------- deterministic parameter construction ----------------
def make_params(key):
    ks = jax.random.split(key, 12)
    scale = 0.05
    sa_w = scale * jax.random.normal(ks[0], (NUM_LAYERS, 4, D_MODEL, D_MODEL), jnp.float32)
    sa_b = scale * jax.random.normal(ks[1], (NUM_LAYERS, 4, D_MODEL), jnp.float32)
    ca_w = scale * jax.random.normal(ks[2], (NUM_LAYERS, 4, D_MODEL, D_MODEL), jnp.float32)
    ca_b = scale * jax.random.normal(ks[3], (NUM_LAYERS, 4, D_MODEL), jnp.float32)
    w1 = scale * jax.random.normal(ks[4], (NUM_LAYERS, DIM_FF, D_MODEL), jnp.float32)
    b1 = scale * jax.random.normal(ks[5], (NUM_LAYERS, DIM_FF), jnp.float32)
    w2 = scale * jax.random.normal(ks[6], (NUM_LAYERS, D_MODEL, DIM_FF), jnp.float32)
    b2 = scale * jax.random.normal(ks[7], (NUM_LAYERS, D_MODEL), jnp.float32)
    ln_g = jnp.ones((NUM_LAYERS, 3, D_MODEL), jnp.float32) + \
        0.01 * jax.random.normal(ks[8], (NUM_LAYERS, 3, D_MODEL), jnp.float32)
    ln_b = 0.01 * jax.random.normal(ks[9], (NUM_LAYERS, 3, D_MODEL), jnp.float32)
    fn_g = jnp.ones((1, D_MODEL), jnp.float32) + \
        0.01 * jax.random.normal(ks[10], (1, D_MODEL), jnp.float32)
    fn_b = 0.01 * jax.random.normal(ks[11], (1, D_MODEL), jnp.float32)
    return (sa_w, sa_b, ca_w, ca_b, w1, b1, w2, b2, ln_g, ln_b, fn_g, fn_b)


# ---------------- pure-JAX reference (PyTorch conventions, no Pallas) ----------------
def _mha_ref(q_in, k_in, v_in, w4, b4, nhead):
    Wq, Wk, Wv, Wo = w4[0], w4[1], w4[2], w4[3]
    bq, bk, bv, bo = b4[0], b4[1], b4[2], b4[3]
    q = jnp.dot(q_in, Wq.T, preferred_element_type=jnp.float32) + bq
    k = jnp.dot(k_in, Wk.T, preferred_element_type=jnp.float32) + bk
    v = jnp.dot(v_in, Wv.T, preferred_element_type=jnp.float32) + bv
    d = q.shape[-1]
    hd = d // nhead
    scale = 1.0 / float(np.sqrt(hd))
    outs = []
    for h in range(nhead):
        qh = q[:, h * hd:(h + 1) * hd] * scale
        kh = k[:, h * hd:(h + 1) * hd]
        vh = v[:, h * hd:(h + 1) * hd]
        s = jnp.dot(qh, kh.T, preferred_element_type=jnp.float32)
        s = s - jnp.max(s, axis=-1, keepdims=True)
        p = jnp.exp(s)
        p = p / jnp.sum(p, axis=-1, keepdims=True)
        outs.append(jnp.dot(p, vh, preferred_element_type=jnp.float32))
    attn = jnp.concatenate(outs, axis=-1)
    return jnp.dot(attn, Wo.T, preferred_element_type=jnp.float32) + bo


def _decoder_body_ref(tgt, mem, qpos, pos, params):
    (sa_w, sa_b, ca_w, ca_b, w1, b1, w2, b2, ln_g, ln_b, fn_g, fn_b) = params
    output = tgt
    for l in range(NUM_LAYERS):
        q = output + qpos
        tgt2 = _mha_ref(q, q, output, sa_w[l], sa_b[l], NHEAD)
        output = _layer_norm(output + tgt2, ln_g[l][0], ln_b[l][0])
        tgt2 = _mha_ref(output + qpos, mem + pos, mem, ca_w[l], ca_b[l], NHEAD)
        output = _layer_norm(output + tgt2, ln_g[l][1], ln_b[l][1])
        h = jnp.maximum(
            jnp.dot(output, w1[l].T, preferred_element_type=jnp.float32) + b1[l], 0.0)
        tgt2 = jnp.dot(h, w2[l].T, preferred_element_type=jnp.float32) + b2[l]
        output = _layer_norm(output + tgt2, ln_g[l][2], ln_b[l][2])
    return _layer_norm(output, fn_g[0], fn_b[0])


def reference_decoder(tgt, memory, query_pos, pos, params):
    f = lambda t, m, qp, p: _decoder_body_ref(t, m, qp, p, params)
    return jax.vmap(f)(tgt, memory, query_pos, pos)


if __name__ == "__main__":
    key = jax.random.PRNGKey(0)
    k_tgt, k_mem, k_qp, k_pos, k_par = jax.random.split(key, 5)

    # layout: (B, T, D) for tgt / query_pos, (B, S, D) for memory / pos
    tgt = jax.random.normal(k_tgt, (BATCH, T_LEN, D_MODEL), jnp.float32)
    memory = jax.random.normal(k_mem, (BATCH, S_LEN, D_MODEL), jnp.float32)
    query_pos = jax.random.normal(k_qp, (BATCH, T_LEN, D_MODEL), jnp.float32)
    pos = jax.random.normal(k_pos, (BATCH, S_LEN, D_MODEL), jnp.float32)

    params = make_params(k_par)

    out = transformer_decoder(tgt, memory, query_pos, pos, params)
    out = jax.block_until_ready(out)

    ref = jax.block_until_ready(reference_decoder(tgt, memory, query_pos, pos, params))
    np.testing.assert_allclose(np.asarray(out), np.asarray(ref), rtol=1e-4, atol=1e-4)

    assert out.shape == (BATCH, T_LEN, D_MODEL)
    print("KERNEL_OK")
</pallas_src>

<mosaic_0001>
module attributes {stable_mosaic.version = 11 : i64} {
  func.func @decoder_kernel(%arg0: memref<16x32xf32, #tpu.memory_space<vmem>>, %arg1: memref<32x32xf32, #tpu.memory_space<vmem>>, %arg2: memref<16x32xf32, #tpu.memory_space<vmem>>, %arg3: memref<32x32xf32, #tpu.memory_space<vmem>>, %arg4: memref<2x4x32x32xf32, #tpu.memory_space<vmem>>, %arg5: memref<2x4x32xf32, #tpu.memory_space<vmem>>, %arg6: memref<2x4x32x32xf32, #tpu.memory_space<vmem>>, %arg7: memref<2x4x32xf32, #tpu.memory_space<vmem>>, %arg8: memref<2x32x64xf32, #tpu.memory_space<vmem>>, %arg9: memref<2x64xf32, #tpu.memory_space<vmem>>, %arg10: memref<2x64x32xf32, #tpu.memory_space<vmem>>, %arg11: memref<2x32xf32, #tpu.memory_space<vmem>>, %arg12: memref<2x3x32xf32, #tpu.memory_space<vmem>>, %arg13: memref<2x3x32xf32, #tpu.memory_space<vmem>>, %arg14: memref<1x32xf32, #tpu.memory_space<vmem>>, %arg15: memref<1x32xf32, #tpu.memory_space<vmem>>, %arg16: memref<16x32xf32, #tpu.memory_space<vmem>>) attributes {dimension_semantics = [], scalar_prefetch = 0 : i64, scratch_operands = 0 : i64, tpu.core_type = #tpu.core_type<tc>} {
    %c0 = arith.constant 0 : index
    %c0_0 = arith.constant 0 : index
    %0 = vector.load %arg0[%c0, %c0_0] : memref<16x32xf32, #tpu.memory_space<vmem>>, vector<16x32xf32>
    %c0_1 = arith.constant 0 : index
    %c0_2 = arith.constant 0 : index
    %1 = vector.load %arg2[%c0_1, %c0_2] : memref<16x32xf32, #tpu.memory_space<vmem>>, vector<16x32xf32>
    %c0_3 = arith.constant 0 : index
    %c0_4 = arith.constant 0 : index
    %2 = vector.load %arg1[%c0_3, %c0_4] : memref<32x32xf32, #tpu.memory_space<vmem>>, vector<32x32xf32>
    %c0_5 = arith.constant 0 : index
    %c0_6 = arith.constant 0 : index
    %3 = vector.load %arg3[%c0_5, %c0_6] : memref<32x32xf32, #tpu.memory_space<vmem>>, vector<32x32xf32>
    %4 = arith.addf %2, %3 : vector<32x32xf32>
    %5 = arith.addf %0, %1 : vector<16x32xf32>
    %c0_7 = arith.constant 0 : index
    %c0_8 = arith.constant 0 : index
    %c0_9 = arith.constant 0 : index
    %c0_10 = arith.constant 0 : index
    %6 = vector.load %arg4[%c0_7, %c0_8, %c0_9, %c0_10] : memref<2x4x32x32xf32, #tpu.memory_space<vmem>>, vector<1x1x32x32xf32>
    %7 = vector.shape_cast %6 : vector<1x1x32x32xf32> to vector<32x32xf32>
    %cst = arith.constant dense<0.000000e+00> : vector<16x32xf32>
    %8 = tpu.matmul %5, %7, %cst {dimension_numbers = #tpu.dot_dimension_numbers<[1], [0], [0], [1], [0, 0, 1, 1], [], []>} : vector<16x32xf32>, vector<32x32xf32>, vector<16x32xf32> -> vector<16x32xf32>
    %c0_11 = arith.constant 0 : index
    %c0_12 = arith.constant 0 : index
    %c0_13 = arith.constant 0 : index
    %9 = vector.load %arg5[%c0_11, %c0_12, %c0_13] : memref<2x4x32xf32, #tpu.memory_space<vmem>>, vector<1x1x32xf32>
    %10 = vector.shape_cast %9 : vector<1x1x32xf32> to vector<32xf32>
    %11 = vector.shape_cast %10 : vector<32xf32> to vector<1x32xf32>
    %12 = vector.broadcast %11 : vector<1x32xf32> to vector<16x32xf32>
    %13 = arith.addf %8, %12 : vector<16x32xf32>
    %cst_14 = arith.constant 0.353553385 : f32
    %14 = vector.broadcast %cst_14 : f32 to vector<16x32xf32>
    %15 = arith.mulf %13, %14 : vector<16x32xf32>
    %c0_15 = arith.constant 0 : index
    %c1 = arith.constant 1 : index
    %c0_16 = arith.constant 0 : index
    %c0_17 = arith.constant 0 : index
    %16 = vector.load %arg4[%c0_15, %c1, %c0_16, %c0_17] : memref<2x4x32x32xf32, #tpu.memory_space<vmem>>, vector<1x1x32x32xf32>
    %17 = vector.shape_cast %16 : vector<1x1x32x32xf32> to vector<32x32xf32>
    %cst_18 = arith.constant dense<0.000000e+00> : vector<16x32xf32>
    %18 = tpu.matmul %5, %17, %cst_18 {dimension_numbers = #tpu.dot_dimension_numbers<[1], [0], [0], [1], [0, 0, 1, 1], [], []>} : vector<16x32xf32>, vector<32x32xf32>, vector<16x32xf32> -> vector<16x32xf32>
    %c0_19 = arith.constant 0 : index
    %c1_20 = arith.constant 1 : index
    %c0_21 = arith.constant 0 : index
    %19 = vector.load %arg5[%c0_19, %c1_20, %c0_21] : memref<2x4x32xf32, #tpu.memory_space<vmem>>, vector<1x1x32xf32>
    %20 = vector.shape_cast %19 : vector<1x1x32xf32> to vector<32xf32>
    %21 = vector.shape_cast %20 : vector<32xf32> to vector<1x32xf32>
    %22 = vector.broadcast %21 : vector<1x32xf32> to vector<16x32xf32>
    %23 = arith.addf %18, %22 : vector<16x32xf32>
    %c0_22 = arith.constant 0 : index
    %c2 = arith.constant 2 : index
    %c0_23 = arith.constant 0 : index
    %c0_24 = arith.constant 0 : index
    %24 = vector.load %arg4[%c0_22, %c2, %c0_23, %c0_24] : memref<2x4x32x32xf32, #tpu.memory_space<vmem>>, vector<1x1x32x32xf32>
    %25 = vector.shape_cast %24 : vector<1x1x32x32xf32> to vector<32x32xf32>
    %cst_25 = arith.constant dense<0.000000e+00> : vector<16x32xf32>
    %26 = tpu.matmul %0, %25, %cst_25 {dimension_numbers = #tpu.dot_dimension_numbers<[1], [0], [0], [1], [0, 0, 1, 1], [], []>} : vector<16x32xf32>, vector<32x32xf32>, vector<16x32xf32> -> vector<16x32xf32>
    %c0_26 = arith.constant 0 : index
    %c2_27 = arith.constant 2 : index
    %c0_28 = arith.constant 0 : index
    %27 = vector.load %arg5[%c0_26, %c2_27, %c0_28] : memref<2x4x32xf32, #tpu.memory_space<vmem>>, vector<1x1x32xf32>
    %28 = vector.shape_cast %27 : vector<1x1x32xf32> to vector<32xf32>
    %29 = vector.shape_cast %28 : vector<32xf32> to vector<1x32xf32>
    %30 = vector.broadcast %29 : vector<1x32xf32> to vector<16x32xf32>
    %31 = arith.addf %26, %30 : vector<16x32xf32>
    %c0_29 = arith.constant 0 : index
    %c3 = arith.constant 3 : index
    %c0_30 = arith.constant 0 : index
    %c0_31 = arith.constant 0 : index
    %32 = vector.load %arg4[%c0_29, %c3, %c0_30, %c0_31] : memref<2x4x32x32xf32, #tpu.memory_space<vmem>>, vector<1x1x32x32xf32>
    %33 = vector.shape_cast %32 : vector<1x1x32x32xf32> to vector<32x32xf32>
    %34 = vector.shape_cast %15 : vector<16x32xf32> to vector<2x8x32xf32>
    %35 = vector.shape_cast %23 : vector<16x32xf32> to vector<2x8x32xf32>
    %36 = vector.shape_cast %31 : vector<16x32xf32> to vector<2x8x32xf32>
    %37 = vector.extract_strided_slice %34 {offsets = [0, 0, 0], sizes = [2, 8, 8], strides = [1, 1, 1]} : vector<2x8x32xf32> to vector<2x8x8xf32>
    %38 = vector.extract_strided_slice %35 {offsets = [0, 0, 0], sizes = [2, 8, 8], strides = [1, 1, 1]} : vector<2x8x32xf32> to vector<2x8x8xf32>
    "tpu.trace_start"() <{level = 10 : i32, message = "btd,bsd->bts"}> : () -> ()
    %cst_32 = arith.constant dense<0.000000e+00> : vector<2x8x8xf32>
    %39 = tpu.matmul %37, %38, %cst_32 {dimension_numbers = #tpu.dot_dimension_numbers<[2], [2], [1], [1], [0, 0, 0, 1, 1, 1], [0], [0]>} : vector<2x8x8xf32>, vector<2x8x8xf32>, vector<2x8x8xf32> -> vector<2x8x8xf32>
    "tpu.trace_stop"() : () -> ()
    %cst_33 = arith.constant dense<0xFF800000> : vector<2x8xf32>
    %40 = vector.multi_reduction <maximumf>, %39, %cst_33 [2] : vector<2x8x8xf32> to vector<2x8xf32>
    %41 = vector.shape_cast %40 : vector<2x8xf32> to vector<2x8x1xf32>
    %42 = vector.broadcast %41 : vector<2x8x1xf32> to vector<2x8x8xf32>
    %43 = arith.subf %39, %42 : vector<2x8x8xf32>
    %44 = math.exp %43 : vector<2x8x8xf32>
    %cst_34 = arith.constant dense<0.000000e+00> : vector<2x8xf32>
    %45 = vector.multi_reduction <add>, %44, %cst_34 [2] : vector<2x8x8xf32> to vector<2x8xf32>
    %46 = vector.shape_cast %45 : vector<2x8xf32> to vector<2x8x1xf32>
    %47 = vector.broadcast %46 : vector<2x8x1xf32> to vector<2x8x8xf32>
    %48 = arith.divf %44, %47 : vector<2x8x8xf32>
    %49 = vector.extract_strided_slice %36 {offsets = [0, 0, 0], sizes = [2, 8, 8], strides = [1, 1, 1]} : vector<2x8x32xf32> to vector<2x8x8xf32>
    "tpu.trace_start"() <{level = 10 : i32, message = "bts,bsd->btd"}> : () -> ()
    %cst_35 = arith.constant dense<0.000000e+00> : vector<2x8x8xf32>
    %50 = tpu.matmul %48, %49, %cst_35 {dimension_numbers = #tpu.dot_dimension_numbers<[2], [1], [1], [2], [0, 0, 0, 1, 1, 2], [0], [0]>} : vector<2x8x8xf32>, vector<2x8x8xf32>, vector<2x8x8xf32> -> vector<2x8x8xf32>
    "tpu.trace_stop"() : () -> ()
    %51 = vector.shape_cast %50 : vector<2x8x8xf32> to vector<16x8xf32>
    %52 = vector.extract_strided_slice %33 {offsets = [0, 0], sizes = [8, 32], strides = [1, 1]} : vector<32x32xf32> to vector<8x32xf32>
    %cst_36 = arith.constant dense<0.000000e+00> : vector<16x32xf32>
    %53 = tpu.matmul %51, %52, %cst_36 {dimension_numbers = #tpu.dot_dimension_numbers<[1], [0], [0], [1], [0, 0, 1, 1], [], []>} : vector<16x8xf32>, vector<8x32xf32>, vector<16x32xf32> -> vector<16x32xf32>
    %54 = vector.extract_strided_slice %34 {offsets = [0, 0, 8], sizes = [2, 8, 8], strides = [1, 1, 1]} : vector<2x8x32xf32> to vector<2x8x8xf32>
    %55 = vector.extract_strided_slice %35 {offsets = [0, 0, 8], sizes = [2, 8, 8], strides = [1, 1, 1]} : vector<2x8x32xf32> to vector<2x8x8xf32>
    "tpu.trace_start"() <{level = 10 : i32, message = "btd,bsd->bts"}> : () -> ()
    %cst_37 = arith.constant dense<0.000000e+00> : vector<2x8x8xf32>
    %56 = tpu.matmul %54, %55, %cst_37 {dimension_numbers = #tpu.dot_dimension_numbers<[2], [2], [1], [1], [0, 0, 0, 1, 1, 1], [0], [0]>} : vector<2x8x8xf32>, vector<2x8x8xf32>, vector<2x8x8xf32> -> vector<2x8x8xf32>
    "tpu.trace_stop"() : () -> ()
    %cst_38 = arith.constant dense<0xFF800000> : vector<2x8xf32>
    %57 = vector.multi_reduction <maximumf>, %56, %cst_38 [2] : vector<2x8x8xf32> to vector<2x8xf32>
    %58 = vector.shape_cast %57 : vector<2x8xf32> to vector<2x8x1xf32>
    %59 = vector.broadcast %58 : vector<2x8x1xf32> to vector<2x8x8xf32>
    %60 = arith.subf %56, %59 : vector<2x8x8xf32>
    %61 = math.exp %60 : vector<2x8x8xf32>
    %cst_39 = arith.constant dense<0.000000e+00> : vector<2x8xf32>
    %62 = vector.multi_reduction <add>, %61, %cst_39 [2] : vector<2x8x8xf32> to vector<2x8xf32>
    %63 = vector.shape_cast %62 : vector<2x8xf32> to vector<2x8x1xf32>
    %64 = vector.broadcast %63 : vector<2x8x1xf32> to vector<2x8x8xf32>
    %65 = arith.divf %61, %64 : vector<2x8x8xf32>
    %66 = vector.extract_strided_slice %36 {offsets = [0, 0, 8], sizes = [2, 8, 8], strides = [1, 1, 1]} : vector<2x8x32xf32> to vector<2x8x8xf32>
    "tpu.trace_start"() <{level = 10 : i32, message = "bts,bsd->btd"}> : () -> ()
    %cst_40 = arith.constant dense<0.000000e+00> : vector<2x8x8xf32>
    %67 = tpu.matmul %65, %66, %cst_40 {dimension_numbers = #tpu.dot_dimension_numbers<[2], [1], [1], [2], [0, 0, 0, 1, 1, 2], [0], [0]>} : vector<2x8x8xf32>, vector<2x8x8xf32>, vector<2x8x8xf32> -> vector<2x8x8xf32>
    "tpu.trace_stop"() : () -> ()
    %68 = vector.shape_cast %67 : vector<2x8x8xf32> to vector<16x8xf32>
    %69 = vector.extract_strided_slice %33 {offsets = [8, 0], sizes = [8, 32], strides = [1, 1]} : vector<32x32xf32> to vector<8x32xf32>
    %cst_41 = arith.constant dense<0.000000e+00> : vector<16x32xf32>
    %70 = tpu.matmul %68, %69, %cst_41 {dimension_numbers = #tpu.dot_dimension_numbers<[1], [0], [0], [1], [0, 0, 1, 1], [], []>} : vector<16x8xf32>, vector<8x32xf32>, vector<16x32xf32> -> vector<16x32xf32>
    %71 = arith.addf %53, %70 : vector<16x32xf32>
    %72 = vector.extract_strided_slice %34 {offsets = [0, 0, 16], sizes = [2, 8, 8], strides = [1, 1, 1]} : vector<2x8x32xf32> to vector<2x8x8xf32>
    %73 = vector.extract_strided_slice %35 {offsets = [0, 0, 16], sizes = [2, 8, 8], strides = [1, 1, 1]} : vector<2x8x32xf32> to vector<2x8x8xf32>
    "tpu.trace_start"() <{level = 10 : i32, message = "btd,bsd->bts"}> : () -> ()
    %cst_42 = arith.constant dense<0.000000e+00> : vector<2x8x8xf32>
    %74 = tpu.matmul %72, %73, %cst_42 {dimension_numbers = #tpu.dot_dimension_numbers<[2], [2], [1], [1], [0, 0, 0, 1, 1, 1], [0], [0]>} : vector<2x8x8xf32>, vector<2x8x8xf32>, vector<2x8x8xf32> -> vector<2x8x8xf32>
    "tpu.trace_stop"() : () -> ()
    %cst_43 = arith.constant dense<0xFF800000> : vector<2x8xf32>
    %75 = vector.multi_reduction <maximumf>, %74, %cst_43 [2] : vector<2x8x8xf32> to vector<2x8xf32>
    %76 = vector.shape_cast %75 : vector<2x8xf32> to vector<2x8x1xf32>
    %77 = vector.broadcast %76 : vector<2x8x1xf32> to vector<2x8x8xf32>
    %78 = arith.subf %74, %77 : vector<2x8x8xf32>
    %79 = math.exp %78 : vector<2x8x8xf32>
    %cst_44 = arith.constant dense<0.000000e+00> : vector<2x8xf32>
    %80 = vector.multi_reduction <add>, %79, %cst_44 [2] : vector<2x8x8xf32> to vector<2x8xf32>
    %81 = vector.shape_cast %80 : vector<2x8xf32> to vector<2x8x1xf32>
    %82 = vector.broadcast %81 : vector<2x8x1xf32> to vector<2x8x8xf32>
    %83 = arith.divf %79, %82 : vector<2x8x8xf32>
    %84 = vector.extract_strided_slice %36 {offsets = [0, 0, 16], sizes = [2, 8, 8], strides = [1, 1, 1]} : vector<2x8x32xf32> to vector<2x8x8xf32>
    "tpu.trace_start"() <{level = 10 : i32, message = "bts,bsd->btd"}> : () -> ()
    %cst_45 = arith.constant dense<0.000000e+00> : vector<2x8x8xf32>
    %85 = tpu.matmul %83, %84, %cst_45 {dimension_numbers = #tpu.dot_dimension_numbers<[2], [1], [1], [2], [0, 0, 0, 1, 1, 2], [0], [0]>} : vector<2x8x8xf32>, vector<2x8x8xf32>, vector<2x8x8xf32> -> vector<2x8x8xf32>
    "tpu.trace_stop"() : () -> ()
    %86 = vector.shape_cast %85 : vector<2x8x8xf32> to vector<16x8xf32>
    %87 = vector.extract_strided_slice %33 {offsets = [16, 0], sizes = [8, 32], strides = [1, 1]} : vector<32x32xf32> to vector<8x32xf32>
    %cst_46 = arith.constant dense<0.000000e+00> : vector<16x32xf32>
    %88 = tpu.matmul %86, %87, %cst_46 {dimension_numbers = #tpu.dot_dimension_numbers<[1], [0], [0], [1], [0, 0, 1, 1], [], []>} : vector<16x8xf32>, vector<8x32xf32>, vector<16x32xf32> -> vector<16x32xf32>
    %89 = arith.addf %71, %88 : vector<16x32xf32>
    %90 = vector.extract_strided_slice %34 {offsets = [0, 0, 24], sizes = [2, 8, 8], strides = [1, 1, 1]} : vector<2x8x32xf32> to vector<2x8x8xf32>
    %91 = vector.extract_strided_slice %35 {offsets = [0, 0, 24], sizes = [2, 8, 8], strides = [1, 1, 1]} : vector<2x8x32xf32> to vector<2x8x8xf32>
    "tpu.trace_start"() <{level = 10 : i32, message = "btd,bsd->bts"}> : () -> ()
    %cst_47 = arith.constant dense<0.000000e+00> : vector<2x8x8xf32>
    %92 = tpu.matmul %90, %91, %cst_47 {dimension_numbers = #tpu.dot_dimension_numbers<[2], [2], [1], [1], [0, 0, 0, 1, 1, 1], [0], [0]>} : vector<2x8x8xf32>, vector<2x8x8xf32>, vector<2x8x8xf32> -> vector<2x8x8xf32>
    "tpu.trace_stop"() : () -> ()
    %cst_48 = arith.constant dense<0xFF800000> : vector<2x8xf32>
    %93 = vector.multi_reduction <maximumf>, %92, %cst_48 [2] : vector<2x8x8xf32> to vector<2x8xf32>
    %94 = vector.shape_cast %93 : vector<2x8xf32> to vector<2x8x1xf32>
    %95 = vector.broadcast %94 : vector<2x8x1xf32> to vector<2x8x8xf32>
    %96 = arith.subf %92, %95 : vector<2x8x8xf32>
    %97 = math.exp %96 : vector<2x8x8xf32>
    %cst_49 = arith.constant dense<0.000000e+00> : vector<2x8xf32>
    %98 = vector.multi_reduction <add>, %97, %cst_49 [2] : vector<2x8x8xf32> to vector<2x8xf32>
    %99 = vector.shape_cast %98 : vector<2x8xf32> to vector<2x8x1xf32>
    %100 = vector.broadcast %99 : vector<2x8x1xf32> to vector<2x8x8xf32>
    %101 = arith.divf %97, %100 : vector<2x8x8xf32>
    %102 = vector.extract_strided_slice %36 {offsets = [0, 0, 24], sizes = [2, 8, 8], strides = [1, 1, 1]} : vector<2x8x32xf32> to vector<2x8x8xf32>
    "tpu.trace_start"() <{level = 10 : i32, message = "bts,bsd->btd"}> : () -> ()
    %cst_50 = arith.constant dense<0.000000e+00> : vector<2x8x8xf32>
    %103 = tpu.matmul %101, %102, %cst_50 {dimension_numbers = #tpu.dot_dimension_numbers<[2], [1], [1], [2], [0, 0, 0, 1, 1, 2], [0], [0]>} : vector<2x8x8xf32>, vector<2x8x8xf32>, vector<2x8x8xf32> -> vector<2x8x8xf32>
    "tpu.trace_stop"() : () -> ()
    %104 = vector.shape_cast %103 : vector<2x8x8xf32> to vector<16x8xf32>
    %105 = vector.extract_strided_slice %33 {offsets = [24, 0], sizes = [8, 32], strides = [1, 1]} : vector<32x32xf32> to vector<8x32xf32>
    %cst_51 = arith.constant dense<0.000000e+00> : vector<16x32xf32>
    %106 = tpu.matmul %104, %105, %cst_51 {dimension_numbers = #tpu.dot_dimension_numbers<[1], [0], [0], [1], [0, 0, 1, 1], [], []>} : vector<16x8xf32>, vector<8x32xf32>, vector<16x32xf32> -> vector<16x32xf32>
    %107 = arith.addf %89, %106 : vector<16x32xf32>
    %c0_52 = arith.constant 0 : index
    %c3_53 = arith.constant 3 : index
    %c0_54 = arith.constant 0 : index
    %108 = vector.load %arg5[%c0_52, %c3_53, %c0_54] : memref<2x4x32xf32, #tpu.memory_space<vmem>>, vector<1x1x32xf32>
    %109 = vector.shape_cast %108 : vector<1x1x32xf32> to vector<32xf32>
    %110 = vector.shape_cast %109 : vector<32xf32> to vector<1x32xf32>
    %111 = vector.broadcast %110 : vector<1x32xf32> to vector<16x32xf32>
    %112 = arith.addf %107, %111 : vector<16x32xf32>
    %113 = arith.addf %0, %112 : vector<16x32xf32>
    %c0_55 = arith.constant 0 : index
    %c0_56 = arith.constant 0 : index
    %c0_57 = arith.constant 0 : index
    %114 = vector.load %arg12[%c0_55, %c0_56, %c0_57] : memref<2x3x32xf32, #tpu.memory_space<vmem>>, vector<1x1x32xf32>
    %115 = vector.shape_cast %114 : vector<1x1x32xf32> to vector<32xf32>
    %c0_58 = arith.constant 0 : index
    %c0_59 = arith.constant 0 : index
    %c0_60 = arith.constant 0 : index
    %116 = vector.load %arg13[%c0_58, %c0_59, %c0_60] : memref<2x3x32xf32, #tpu.memory_space<vmem>>, vector<1x1x32xf32>
    %117 = vector.shape_cast %116 : vector<1x1x32xf32> to vector<32xf32>
    %cst_61 = arith.constant dense<0.000000e+00> : vector<16xf32>
    %118 = vector.multi_reduction <add>, %113, %cst_61 [1] : vector<16x32xf32> to vector<16xf32>
    %119 = vector.shape_cast %118 : vector<16xf32> to vector<16x1xf32>
    %cst_62 = arith.constant 3.200000e+01 : f32
    %120 = vector.broadcast %cst_62 : f32 to vector<16x1xf32>
    %121 = arith.divf %119, %120 : vector<16x1xf32>
    %122 = vector.broadcast %121 : vector<16x1xf32> to vector<16x32xf32>
    %123 = arith.subf %113, %122 : vector<16x32xf32>
    %124 = arith.mulf %123, %123 : vector<16x32xf32>
    %cst_63 = arith.constant dense<0.000000e+00> : vector<16xf32>
    %125 = vector.multi_reduction <add>, %124, %cst_63 [1] : vector<16x32xf32> to vector<16xf32>
    %126 = vector.shape_cast %125 : vector<16xf32> to vector<16x1xf32>
    %cst_64 = arith.constant 3.200000e+01 : f32
    %127 = vector.broadcast %cst_64 : f32 to vector<16x1xf32>
    %128 = arith.divf %126, %127 : vector<16x1xf32>
    %129 = vector.broadcast %121 : vector<16x1xf32> to vector<16x32xf32>
    %130 = arith.subf %113, %129 : vector<16x32xf32>
    %cst_65 = arith.constant 9.99999974E-6 : f32
    %131 = vector.broadcast %cst_65 : f32 to vector<16x1xf32>
    %132 = arith.addf %128, %131 : vector<16x1xf32>
    %133 = math.rsqrt %132 : vector<16x1xf32>
    %134 = vector.broadcast %133 : vector<16x1xf32> to vector<16x32xf32>
    %135 = arith.mulf %130, %134 : vector<16x32xf32>
    %136 = vector.shape_cast %115 : vector<32xf32> to vector<1x32xf32>
    %137 = vector.broadcast %136 : vector<1x32xf32> to vector<16x32xf32>
    %138 = arith.mulf %135, %137 : vector<16x32xf32>
    %139 = vector.shape_cast %117 : vector<32xf32> to vector<1x32xf32>
    %140 = vector.broadcast %139 : vector<1x32xf32> to vector<16x32xf32>
    %141 = arith.addf %138, %140 : vector<16x32xf32>
    %142 = arith.addf %141, %1 : vector<16x32xf32>
    %c0_66 = arith.constant 0 : index
    %c0_67 = arith.constant 0 : index
    %c0_68 = arith.constant 0 : index
    %c0_69 = arith.constant 0 : index
    %143 = vector.load %arg6[%c0_66, %c0_67, %c0_68, %c0_69] : memref<2x4x32x32xf32, #tpu.memory_space<vmem>>, vector<1x1x32x32xf32>
    %144 = vector.shape_cast %143 : vector<1x1x32x32xf32> to vector<32x32xf32>
    %cst_70 = arith.constant dense<0.000000e+00> : vector<16x32xf32>
    %145 = tpu.matmul %142, %144, %cst_70 {dimension_numbers = #tpu.dot_dimension_numbers<[1], [0], [0], [1], [0, 0, 1, 1], [], []>} : vector<16x32xf32>, vector<32x32xf32>, vector<16x32xf32> -> vector<16x32xf32>
    %c0_71 = arith.constant 0 : index
    %c0_72 = arith.constant 0 : index
    %c0_73 = arith.constant 0 : index
    %146 = vector.load %arg7[%c0_71, %c0_72, %c0_73] : memref<2x4x32xf32, #tpu.memory_space<vmem>>, vector<1x1x32xf32>
    %147 = vector.shape_cast %146 : vector<1x1x32xf32> to vector<32xf32>
    %148 = vector.shape_cast %147 : vector<32xf32> to vector<1x32xf32>
    %149 = vector.broadcast %148 : vector<1x32xf32> to vector<16x32xf32>
    %150 = arith.addf %145, %149 : vector<16x32xf32>
    %cst_74 = arith.constant 0.353553385 : f32
    %151 = vector.broadcast %cst_74 : f32 to vector<16x32xf32>
    %152 = arith.mulf %150, %151 : vector<16x32xf32>
    %c0_75 = arith.constant 0 : index
    %c1_76 = arith.constant 1 : index
    %c0_77 = arith.constant 0 : index
    %c0_78 = arith.constant 0 : index
    %153 = vector.load %arg6[%c0_75, %c1_76, %c0_77, %c0_78] : memref<2x4x32x32xf32, #tpu.memory_space<vmem>>, vector<1x1x32x32xf32>
    %154 = vector.shape_cast %153 : vector<1x1x32x32xf32> to vector<32x32xf32>
    %cst_79 = arith.constant dense<0.000000e+00> : vector<32x32xf32>
    %155 = tpu.matmul %4, %154, %cst_79 {dimension_numbers = #tpu.dot_dimension_numbers<[1], [0], [0], [1], [0, 0, 1, 1], [], []>} : vector<32x32xf32>, vector<32x32xf32>, vector<32x32xf32> -> vector<32x32xf32>
    %c0_80 = arith.constant 0 : index
    %c1_81 = arith.constant 1 : index
    %c0_82 = arith.constant 0 : index
    %156 = vector.load %arg7[%c0_80, %c1_81, %c0_82] : memref<2x4x32xf32, #tpu.memory_space<vmem>>, vector<1x1x32xf32>
    %157 = vector.shape_cast %156 : vector<1x1x32xf32> to vector<32xf32>
    %158 = vector.shape_cast %157 : vector<32xf32> to vector<1x32xf32>
    %159 = vector.broadcast %158 : vector<1x32xf32> to vector<32x32xf32>
    %160 = arith.addf %155, %159 : vector<32x32xf32>
    %c0_83 = arith.constant 0 : index
    %c2_84 = arith.constant 2 : index
    %c0_85 = arith.constant 0 : index
    %c0_86 = arith.constant 0 : index
    %161 = vector.load %arg6[%c0_83, %c2_84, %c0_85, %c0_86] : memref<2x4x32x32xf32, #tpu.memory_space<vmem>>, vector<1x1x32x32xf32>
    %162 = vector.shape_cast %161 : vector<1x1x32x32xf32> to vector<32x32xf32>
    %cst_87 = arith.constant dense<0.000000e+00> : vector<32x32xf32>
    %163 = tpu.matmul %2, %162, %cst_87 {dimension_numbers = #tpu.dot_dimension_numbers<[1], [0], [0], [1], [0, 0, 1, 1], [], []>} : vector<32x32xf32>, vector<32x32xf32>, vector<32x32xf32> -> vector<32x32xf32>
    %c0_88 = arith.constant 0 : index
    %c2_89 = arith.constant 2 : index
    %c0_90 = arith.constant 0 : index
    %164 = vector.load %arg7[%c0_88, %c2_89, %c0_90] : memref<2x4x32xf32, #tpu.memory_space<vmem>>, vector<1x1x32xf32>
    %165 = vector.shape_cast %164 : vector<1x1x32xf32> to vector<32xf32>
    %166 = vector.shape_cast %165 : vector<32xf32> to vector<1x32xf32>
    %167 = vector.broadcast %166 : vector<1x32xf32> to vector<32x32xf32>
    %168 = arith.addf %163, %167 : vector<32x32xf32>
    %c0_91 = arith.constant 0 : index
    %c3_92 = arith.constant 3 : index
    %c0_93 = arith.constant 0 : index
    %c0_94 = arith.constant 0 : index
    %169 = vector.load %arg6[%c0_91, %c3_92, %c0_93, %c0_94] : memref<2x4x32x32xf32, #tpu.memory_space<vmem>>, vector<1x1x32x32xf32>
    %170 = vector.shape_cast %169 : vector<1x1x32x32xf32> to vector<32x32xf32>
    %171 = vector.shape_cast %152 : vector<16x32xf32> to vector<2x8x32xf32>
    %172 = vector.shape_cast %160 : vector<32x32xf32> to vector<2x16x32xf32>
    %173 = vector.shape_cast %168 : vector<32x32xf32> to vector<2x16x32xf32>
    %174 = vector.extract_strided_slice %171 {offsets = [0, 0, 0], sizes = [2, 8, 8], strides = [1, 1, 1]} : vector<2x8x32xf32> to vector<2x8x8xf32>
    %175 = vector.extract_strided_slice %172 {offsets = [0, 0, 0], sizes = [2, 16, 8], strides = [1, 1, 1]} : vector<2x16x32xf32> to vector<2x16x8xf32>
    "tpu.trace_start"() <{level = 10 : i32, message = "btd,bsd->bts"}> : () -> ()
    %cst_95 = arith.constant dense<0.000000e+00> : vector<2x8x16xf32>
    %176 = tpu.matmul %174, %175, %cst_95 {dimension_numbers = #tpu.dot_dimension_numbers<[2], [2], [1], [1], [0, 0, 0, 1, 1, 1], [0], [0]>} : vector<2x8x8xf32>, vector<2x16x8xf32>, vector<2x8x16xf32> -> vector<2x8x16xf32>
    "tpu.trace_stop"() : () -> ()
    %cst_96 = arith.constant dense<0xFF800000> : vector<2x8xf32>
    %177 = vector.multi_reduction <maximumf>, %176, %cst_96 [2] : vector<2x8x16xf32> to vector<2x8xf32>
    %178 = vector.shape_cast %177 : vector<2x8xf32> to vector<2x8x1xf32>
    %179 = vector.broadcast %178 : vector<2x8x1xf32> to vector<2x8x16xf32>
    %180 = arith.subf %176, %179 : vector<2x8x16xf32>
    %181 = math.exp %180 : vector<2x8x16xf32>
    %cst_97 = arith.constant dense<0.000000e+00> : vector<2x8xf32>
    %182 = vector.multi_reduction <add>, %181, %cst_97 [2] : vector<2x8x16xf32> to vector<2x8xf32>
    %183 = vector.shape_cast %182 : vector<2x8xf32> to vector<2x8x1xf32>
    %184 = vector.broadcast %183 : vector<2x8x1xf32> to vector<2x8x16xf32>
    %185 = arith.divf %181, %184 : vector<2x8x16xf32>
    %186 = vector.extract_strided_slice %173 {offsets = [0, 0, 0], sizes = [2, 16, 8], strides = [1, 1, 1]} : vector<2x16x32xf32> to vector<2x16x8xf32>
    "tpu.trace_start"() <{level = 10 : i32, message = "bts,bsd->btd"}> : () -> ()
    %cst_98 = arith.constant dense<0.000000e+00> : vector<2x8x8xf32>
    %187 = tpu.matmul %185, %186, %cst_98 {dimension_numbers = #tpu.dot_dimension_numbers<[2], [1], [1], [2], [0, 0, 0, 1, 1, 2], [0], [0]>} : vector<2x8x16xf32>, vector<2x16x8xf32>, vector<2x8x8xf32> -> vector<2x8x8xf32>
    "tpu.trace_stop"() : () -> ()
    %188 = vector.shape_cast %187 : vector<2x8x8xf32> to vector<16x8xf32>
    %189 = vector.extract_strided_slice %170 {offsets = [0, 0], sizes = [8, 32], strides = [1, 1]} : vector<32x32xf32> to vector<8x32xf32>
    %cst_99 = arith.constant dense<0.000000e+00> : vector<16x32xf32>
    %190 = tpu.matmul %188, %189, %cst_99 {dimension_numbers = #tpu.dot_dimension_numbers<[1], [0], [0], [1], [0, 0, 1, 1], [], []>} : vector<16x8xf32>, vector<8x32xf32>, vector<16x32xf32> -> vector<16x32xf32>
    %191 = vector.extract_strided_slice %171 {offsets = [0, 0, 8], sizes = [2, 8, 8], strides = [1, 1, 1]} : vector<2x8x32xf32> to vector<2x8x8xf32>
    %192 = vector.extract_strided_slice %172 {offsets = [0, 0, 8], sizes = [2, 16, 8], strides = [1, 1, 1]} : vector<2x16x32xf32> to vector<2x16x8xf32>
    "tpu.trace_start"() <{level = 10 : i32, message = "btd,bsd->bts"}> : () -> ()
    %cst_100 = arith.constant dense<0.000000e+00> : vector<2x8x16xf32>
    %193 = tpu.matmul %191, %192, %cst_100 {dimension_numbers = #tpu.dot_dimension_numbers<[2], [2], [1], [1], [0, 0, 0, 1, 1, 1], [0], [0]>} : vector<2x8x8xf32>, vector<2x16x8xf32>, vector<2x8x16xf32> -> vector<2x8x16xf32>
    "tpu.trace_stop"() : () -> ()
    %cst_101 = arith.constant dense<0xFF800000> : vector<2x8xf32>
    %194 = vector.multi_reduction <maximumf>, %193, %cst_101 [2] : vector<2x8x16xf32> to vector<2x8xf32>
    %195 = vector.shape_cast %194 : vector<2x8xf32> to vector<2x8x1xf32>
    %196 = vector.broadcast %195 : vector<2x8x1xf32> to vector<2x8x16xf32>
    %197 = arith.subf %193, %196 : vector<2x8x16xf32>
    %198 = math.exp %197 : vector<2x8x16xf32>
    %cst_102 = arith.constant dense<0.000000e+00> : vector<2x8xf32>
    %199 = vector.multi_reduction <add>, %198, %cst_102 [2] : vector<2x8x16xf32> to vector<2x8xf32>
    %200 = vector.shape_cast %199 : vector<2x8xf32> to vector<2x8x1xf32>
    %201 = vector.broadcast %200 : vector<2x8x1xf32> to vector<2x8x16xf32>
    %202 = arith.divf %198, %201 : vector<2x8x16xf32>
    %203 = vector.extract_strided_slice %173 {offsets = [0, 0, 8], sizes = [2, 16, 8], strides = [1, 1, 1]} : vector<2x16x32xf32> to vector<2x16x8xf32>
    "tpu.trace_start"() <{level = 10 : i32, message = "bts,bsd->btd"}> : () -> ()
    %cst_103 = arith.constant dense<0.000000e+00> : vector<2x8x8xf32>
    %204 = tpu.matmul %202, %203, %cst_103 {dimension_numbers = #tpu.dot_dimension_numbers<[2], [1], [1], [2], [0, 0, 0, 1, 1, 2], [0], [0]>} : vector<2x8x16xf32>, vector<2x16x8xf32>, vector<2x8x8xf32> -> vector<2x8x8xf32>
    "tpu.trace_stop"() : () -> ()
    %205 = vector.shape_cast %204 : vector<2x8x8xf32> to vector<16x8xf32>
    %206 = vector.extract_strided_slice %170 {offsets = [8, 0], sizes = [8, 32], strides = [1, 1]} : vector<32x32xf32> to vector<8x32xf32>
    %cst_104 = arith.constant dense<0.000000e+00> : vector<16x32xf32>
    %207 = tpu.matmul %205, %206, %cst_104 {dimension_numbers = #tpu.dot_dimension_numbers<[1], [0], [0], [1], [0, 0, 1, 1], [], []>} : vector<16x8xf32>, vector<8x32xf32>, vector<16x32xf32> -> vector<16x32xf32>
    %208 = arith.addf %190, %207 : vector<16x32xf32>
    %209 = vector.extract_strided_slice %171 {offsets = [0, 0, 16], sizes = [2, 8, 8], strides = [1, 1, 1]} : vector<2x8x32xf32> to vector<2x8x8xf32>
    %210 = vector.extract_strided_slice %172 {offsets = [0, 0, 16], sizes = [2, 16, 8], strides = [1, 1, 1]} : vector<2x16x32xf32> to vector<2x16x8xf32>
    "tpu.trace_start"() <{level = 10 : i32, message = "btd,bsd->bts"}> : () -> ()
    %cst_105 = arith.constant dense<0.000000e+00> : vector<2x8x16xf32>
    %211 = tpu.matmul %209, %210, %cst_105 {dimension_numbers = #tpu.dot_dimension_numbers<[2], [2], [1], [1], [0, 0, 0, 1, 1, 1], [0], [0]>} : vector<2x8x8xf32>, vector<2x16x8xf32>, vector<2x8x16xf32> -> vector<2x8x16xf32>
    "tpu.trace_stop"() : () -> ()
    %cst_106 = arith.constant dense<0xFF800000> : vector<2x8xf32>
    %212 = vector.multi_reduction <maximumf>, %211, %cst_106 [2] : vector<2x8x16xf32> to vector<2x8xf32>
    %213 = vector.shape_cast %212 : vector<2x8xf32> to vector<2x8x1xf32>
    %214 = vector.broadcast %213 : vector<2x8x1xf32> to vector<2x8x16xf32>
    %215 = arith.subf %211, %214 : vector<2x8x16xf32>
    %216 = math.exp %215 : vector<2x8x16xf32>
    %cst_107 = arith.constant dense<0.000000e+00> : vector<2x8xf32>
    %217 = vector.multi_reduction <add>, %216, %cst_107 [2] : vector<2x8x16xf32> to vector<2x8xf32>
    %218 = vector.shape_cast %217 : vector<2x8xf32> to vector<2x8x1xf32>
    %219 = vector.broadcast %218 : vector<2x8x1xf32> to vector<2x8x16xf32>
    %220 = arith.divf %216, %219 : vector<2x8x16xf32>
    %221 = vector.extract_strided_slice %173 {offsets = [0, 0, 16], sizes = [2, 16, 8], strides = [1, 1, 1]} : vector<2x16x32xf32> to vector<2x16x8xf32>
    "tpu.trace_start"() <{level = 10 : i32, message = "bts,bsd->btd"}> : () -> ()
    %cst_108 = arith.constant dense<0.000000e+00> : vector<2x8x8xf32>
    %222 = tpu.matmul %220, %221, %cst_108 {dimension_numbers = #tpu.dot_dimension_numbers<[2], [1], [1], [2], [0, 0, 0, 1, 1, 2], [0], [0]>} : vector<2x8x16xf32>, vector<2x16x8xf32>, vector<2x8x8xf32> -> vector<2x8x8xf32>
    "tpu.trace_stop"() : () -> ()
    %223 = vector.shape_cast %222 : vector<2x8x8xf32> to vector<16x8xf32>
    %224 = vector.extract_strided_slice %170 {offsets = [16, 0], sizes = [8, 32], strides = [1, 1]} : vector<32x32xf32> to vector<8x32xf32>
    %cst_109 = arith.constant dense<0.000000e+00> : vector<16x32xf32>
    %225 = tpu.matmul %223, %224, %cst_109 {dimension_numbers = #tpu.dot_dimension_numbers<[1], [0], [0], [1], [0, 0, 1, 1], [], []>} : vector<16x8xf32>, vector<8x32xf32>, vector<16x32xf32> -> vector<16x32xf32>
    %226 = arith.addf %208, %225 : vector<16x32xf32>
    %227 = vector.extract_strided_slice %171 {offsets = [0, 0, 24], sizes = [2, 8, 8], strides = [1, 1, 1]} : vector<2x8x32xf32> to vector<2x8x8xf32>
    %228 = vector.extract_strided_slice %172 {offsets = [0, 0, 24], sizes = [2, 16, 8], strides = [1, 1, 1]} : vector<2x16x32xf32> to vector<2x16x8xf32>
    "tpu.trace_start"() <{level = 10 : i32, message = "btd,bsd->bts"}> : () -> ()
    %cst_110 = arith.constant dense<0.000000e+00> : vector<2x8x16xf32>
    %229 = tpu.matmul %227, %228, %cst_110 {dimension_numbers = #tpu.dot_dimension_numbers<[2], [2], [1], [1], [0, 0, 0, 1, 1, 1], [0], [0]>} : vector<2x8x8xf32>, vector<2x16x8xf32>, vector<2x8x16xf32> -> vector<2x8x16xf32>
    "tpu.trace_stop"() : () -> ()
    %cst_111 = arith.constant dense<0xFF800000> : vector<2x8xf32>
    %230 = vector.multi_reduction <maximumf>, %229, %cst_111 [2] : vector<2x8x16xf32> to vector<2x8xf32>
    %231 = vector.shape_cast %230 : vector<2x8xf32> to vector<2x8x1xf32>
    %232 = vector.broadcast %231 : vector<2x8x1xf32> to vector<2x8x16xf32>
    %233 = arith.subf %229, %232 : vector<2x8x16xf32>
    %234 = math.exp %233 : vector<2x8x16xf32>
    %cst_112 = arith.constant dense<0.000000e+00> : vector<2x8xf32>
    %235 = vector.multi_reduction <add>, %234, %cst_112 [2] : vector<2x8x16xf32> to vector<2x8xf32>
    %236 = vector.shape_cast %235 : vector<2x8xf32> to vector<2x8x1xf32>
    %237 = vector.broadcast %236 : vector<2x8x1xf32> to vector<2x8x16xf32>
    %238 = arith.divf %234, %237 : vector<2x8x16xf32>
    %239 = vector.extract_strided_slice %173 {offsets = [0, 0, 24], sizes = [2, 16, 8], strides = [1, 1, 1]} : vector<2x16x32xf32> to vector<2x16x8xf32>
    "tpu.trace_start"() <{level = 10 : i32, message = "bts,bsd->btd"}> : () -> ()
    %cst_113 = arith.constant dense<0.000000e+00> : vector<2x8x8xf32>
    %240 = tpu.matmul %238, %239, %cst_113 {dimension_numbers = #tpu.dot_dimension_numbers<[2], [1], [1], [2], [0, 0, 0, 1, 1, 2], [0], [0]>} : vector<2x8x16xf32>, vector<2x16x8xf32>, vector<2x8x8xf32> -> vector<2x8x8xf32>
    "tpu.trace_stop"() : () -> ()
    %241 = vector.shape_cast %240 : vector<2x8x8xf32> to vector<16x8xf32>
    %242 = vector.extract_strided_slice %170 {offsets = [24, 0], sizes = [8, 32], strides = [1, 1]} : vector<32x32xf32> to vector<8x32xf32>
    %cst_114 = arith.constant dense<0.000000e+00> : vector<16x32xf32>
    %243 = tpu.matmul %241, %242, %cst_114 {dimension_numbers = #tpu.dot_dimension_numbers<[1], [0], [0], [1], [0, 0, 1, 1], [], []>} : vector<16x8xf32>, vector<8x32xf32>, vector<16x32xf32> -> vector<16x32xf32>
    %244 = arith.addf %226, %243 : vector<16x32xf32>
    %c0_115 = arith.constant 0 : index
    %c3_116 = arith.constant 3 : index
    %c0_117 = arith.constant 0 : index
    %245 = vector.load %arg7[%c0_115, %c3_116, %c0_117] : memref<2x4x32xf32, #tpu.memory_space<vmem>>, vector<1x1x32xf32>
    %246 = vector.shape_cast %245 : vector<1x1x32xf32> to vector<32xf32>
    %247 = vector.shape_cast %246 : vector<32xf32> to vector<1x32xf32>
    %248 = vector.broadcast %247 : vector<1x32xf32> to vector<16x32xf32>
    %249 = arith.addf %244, %248 : vector<16x32xf32>
    %250 = arith.addf %141, %249 : vector<16x32xf32>
    %c0_118 = arith.constant 0 : index
    %c1_119 = arith.constant 1 : index
    %c0_120 = arith.constant 0 : index
    %251 = vector.load %arg12[%c0_118, %c1_119, %c0_120] : memref<2x3x32xf32, #tpu.memory_space<vmem>>, vector<1x1x32xf32>
    %252 = vector.shape_cast %251 : vector<1x1x32xf32> to vector<32xf32>
    %c0_121 = arith.constant 0 : index
    %c1_122 = arith.constant 1 : index
    %c0_123 = arith.constant 0 : index
    %253 = vector.load %arg13[%c0_121, %c1_122, %c0_123] : memref<2x3x32xf32, #tpu.memory_space<vmem>>, vector<1x1x32xf32>
    %254 = vector.shape_cast %253 : vector<1x1x32xf32> to vector<32xf32>
    %cst_124 = arith.constant dense<0.000000e+00> : vector<16xf32>
    %255 = vector.multi_reduction <add>, %250, %cst_124 [1] : vector<16x32xf32> to vector<16xf32>
    %256 = vector.shape_cast %255 : vector<16xf32> to vector<16x1xf32>
    %cst_125 = arith.constant 3.200000e+01 : f32
    %257 = vector.broadcast %cst_125 : f32 to vector<16x1xf32>
    %258 = arith.divf %256, %257 : vector<16x1xf32>
    %259 = vector.broadcast %258 : vector<16x1xf32> to vector<16x32xf32>
    %260 = arith.subf %250, %259 : vector<16x32xf32>
    %261 = arith.mulf %260, %260 : vector<16x32xf32>
    %cst_126 = arith.constant dense<0.000000e+00> : vector<16xf32>
    %262 = vector.multi_reduction <add>, %261, %cst_126 [1] : vector<16x32xf32> to vector<16xf32>
    %263 = vector.shape_cast %262 : vector<16xf32> to vector<16x1xf32>
    %cst_127 = arith.constant 3.200000e+01 : f32
    %264 = vector.broadcast %cst_127 : f32 to vector<16x1xf32>
    %265 = arith.divf %263, %264 : vector<16x1xf32>
    %266 = vector.broadcast %258 : vector<16x1xf32> to vector<16x32xf32>
    %267 = arith.subf %250, %266 : vector<16x32xf32>
    %cst_128 = arith.constant 9.99999974E-6 : f32
    %268 = vector.broadcast %cst_128 : f32 to vector<16x1xf32>
    %269 = arith.addf %265, %268 : vector<16x1xf32>
    %270 = math.rsqrt %269 : vector<16x1xf32>
    %271 = vector.broadcast %270 : vector<16x1xf32> to vector<16x32xf32>
    %272 = arith.mulf %267, %271 : vector<16x32xf32>
    %273 = vector.shape_cast %252 : vector<32xf32> to vector<1x32xf32>
    %274 = vector.broadcast %273 : vector<1x32xf32> to vector<16x32xf32>
    %275 = arith.mulf %272, %274 : vector<16x32xf32>
    %276 = vector.shape_cast %254 : vector<32xf32> to vector<1x32xf32>
    %277 = vector.broadcast %276 : vector<1x32xf32> to vector<16x32xf32>
    %278 = arith.addf %275, %277 : vector<16x32xf32>
    %c0_129 = arith.constant 0 : index
    %c0_130 = arith.constant 0 : index
    %c0_131 = arith.constant 0 : index
    %279 = vector.load %arg8[%c0_129, %c0_130, %c0_131] : memref<2x32x64xf32, #tpu.memory_space<vmem>>, vector<1x32x64xf32>
    %280 = vector.shape_cast %279 : vector<1x32x64xf32> to vector<32x64xf32>
    %cst_132 = arith.constant dense<0.000000e+00> : vector<16x64xf32>
    %281 = tpu.matmul %278, %280, %cst_132 {dimension_numbers = #tpu.dot_dimension_numbers<[1], [0], [0], [1], [0, 0, 1, 1], [], []>} : vector<16x32xf32>, vector<32x64xf32>, vector<16x64xf32> -> vector<16x64xf32>
    %c0_133 = arith.constant 0 : index
    %c0_134 = arith.constant 0 : index
    %282 = vector.load %arg9[%c0_133, %c0_134] : memref<2x64xf32, #tpu.memory_space<vmem>>, vector<1x64xf32>
    %283 = vector.shape_cast %282 : vector<1x64xf32> to vector<64xf32>
    %284 = vector.shape_cast %283 : vector<64xf32> to vector<1x64xf32>
    %285 = vector.broadcast %284 : vector<1x64xf32> to vector<16x64xf32>
    %286 = arith.addf %281, %285 : vector<16x64xf32>
    %cst_135 = arith.constant 0.000000e+00 : f32
    %287 = vector.broadcast %cst_135 : f32 to vector<16x64xf32>
    %288 = arith.maximumf %286, %287 : vector<16x64xf32>
    %c0_136 = arith.constant 0 : index
    %c0_137 = arith.constant 0 : index
    %c0_138 = arith.constant 0 : index
    %289 = vector.load %arg10[%c0_136, %c0_137, %c0_138] : memref<2x64x32xf32, #tpu.memory_space<vmem>>, vector<1x64x32xf32>
    %290 = vector.shape_cast %289 : vector<1x64x32xf32> to vector<64x32xf32>
    %cst_139 = arith.constant dense<0.000000e+00> : vector<16x32xf32>
    %291 = tpu.matmul %288, %290, %cst_139 {dimension_numbers = #tpu.dot_dimension_numbers<[1], [0], [0], [1], [0, 0, 1, 1], [], []>} : vector<16x64xf32>, vector<64x32xf32>, vector<16x32xf32> -> vector<16x32xf32>
    %c0_140 = arith.constant 0 : index
    %c0_141 = arith.constant 0 : index
    %292 = vector.load %arg11[%c0_140, %c0_141] : memref<2x32xf32, #tpu.memory_space<vmem>>, vector<1x32xf32>
    %293 = vector.shape_cast %292 : vector<1x32xf32> to vector<32xf32>
    %294 = vector.shape_cast %293 : vector<32xf32> to vector<1x32xf32>
    %295 = vector.broadcast %294 : vector<1x32xf32> to vector<16x32xf32>
    %296 = arith.addf %291, %295 : vector<16x32xf32>
    %297 = arith.addf %278, %296 : vector<16x32xf32>
    %c0_142 = arith.constant 0 : index
    %c2_143 = arith.constant 2 : index
    %c0_144 = arith.constant 0 : index
    %298 = vector.load %arg12[%c0_142, %c2_143, %c0_144] : memref<2x3x32xf32, #tpu.memory_space<vmem>>, vector<1x1x32xf32>
    %299 = vector.shape_cast %298 : vector<1x1x32xf32> to vector<32xf32>
    %c0_145 = arith.constant 0 : index
    %c2_146 = arith.constant 2 : index
    %c0_147 = arith.constant 0 : index
    %300 = vector.load %arg13[%c0_145, %c2_146, %c0_147] : memref<2x3x32xf32, #tpu.memory_space<vmem>>, vector<1x1x32xf32>
    %301 = vector.shape_cast %300 : vector<1x1x32xf32> to vector<32xf32>
    %cst_148 = arith.constant dense<0.000000e+00> : vector<16xf32>
    %302 = vector.multi_reduction <add>, %297, %cst_148 [1] : vector<16x32xf32> to vector<16xf32>
    %303 = vector.shape_cast %302 : vector<16xf32> to vector<16x1xf32>
    %cst_149 = arith.constant 3.200000e+01 : f32
    %304 = vector.broadcast %cst_149 : f32 to vector<16x1xf32>
    %305 = arith.divf %303, %304 : vector<16x1xf32>
    %306 = vector.broadcast %305 : vector<16x1xf32> to vector<16x32xf32>
    %307 = arith.subf %297, %306 : vector<16x32xf32>
    %308 = arith.mulf %307, %307 : vector<16x32xf32>
    %cst_150 = arith.constant dense<0.000000e+00> : vector<16xf32>
    %309 = vector.multi_reduction <add>, %308, %cst_150 [1] : vector<16x32xf32> to vector<16xf32>
    %310 = vector.shape_cast %309 : vector<16xf32> to vector<16x1xf32>
    %cst_151 = arith.constant 3.200000e+01 : f32
    %311 = vector.broadcast %cst_151 : f32 to vector<16x1xf32>
    %312 = arith.divf %310, %311 : vector<16x1xf32>
    %313 = vector.broadcast %305 : vector<16x1xf32> to vector<16x32xf32>
    %314 = arith.subf %297, %313 : vector<16x32xf32>
    %cst_152 = arith.constant 9.99999974E-6 : f32
    %315 = vector.broadcast %cst_152 : f32 to vector<16x1xf32>
    %316 = arith.addf %312, %315 : vector<16x1xf32>
    %317 = math.rsqrt %316 : vector<16x1xf32>
    %318 = vector.broadcast %317 : vector<16x1xf32> to vector<16x32xf32>
    %319 = arith.mulf %314, %318 : vector<16x32xf32>
    %320 = vector.shape_cast %299 : vector<32xf32> to vector<1x32xf32>
    %321 = vector.broadcast %320 : vector<1x32xf32> to vector<16x32xf32>
    %322 = arith.mulf %319, %321 : vector<16x32xf32>
    %323 = vector.shape_cast %301 : vector<32xf32> to vector<1x32xf32>
    %324 = vector.broadcast %323 : vector<1x32xf32> to vector<16x32xf32>
    %325 = arith.addf %322, %324 : vector<16x32xf32>
    %326 = arith.addf %325, %1 : vector<16x32xf32>
    %c1_153 = arith.constant 1 : index
    %c0_154 = arith.constant 0 : index
    %c0_155 = arith.constant 0 : index
    %c0_156 = arith.constant 0 : index
    %327 = vector.load %arg4[%c1_153, %c0_154, %c0_155, %c0_156] : memref<2x4x32x32xf32, #tpu.memory_space<vmem>>, vector<1x1x32x32xf32>
    %328 = vector.shape_cast %327 : vector<1x1x32x32xf32> to vector<32x32xf32>
    %cst_157 = arith.constant dense<0.000000e+00> : vector<16x32xf32>
    %329 = tpu.matmul %326, %328, %cst_157 {dimension_numbers = #tpu.dot_dimension_numbers<[1], [0], [0], [1], [0, 0, 1, 1], [], []>} : vector<16x32xf32>, vector<32x32xf32>, vector<16x32xf32> -> vector<16x32xf32>
    %c1_158 = arith.constant 1 : index
    %c0_159 = arith.constant 0 : index
    %c0_160 = arith.constant 0 : index
    %330 = vector.load %arg5[%c1_158, %c0_159, %c0_160] : memref<2x4x32xf32, #tpu.memory_space<vmem>>, vector<1x1x32xf32>
    %331 = vector.shape_cast %330 : vector<1x1x32xf32> to vector<32xf32>
    %332 = vector.shape_cast %331 : vector<32xf32> to vector<1x32xf32>
    %333 = vector.broadcast %332 : vector<1x32xf32> to vector<16x32xf32>
    %334 = arith.addf %329, %333 : vector<16x32xf32>
    %cst_161 = arith.constant 0.353553385 : f32
    %335 = vector.broadcast %cst_161 : f32 to vector<16x32xf32>
    %336 = arith.mulf %334, %335 : vector<16x32xf32>
    %c1_162 = arith.constant 1 : index
    %c1_163 = arith.constant 1 : index
    %c0_164 = arith.constant 0 : index
    %c0_165 = arith.constant 0 : index
    %337 = vector.load %arg4[%c1_162, %c1_163, %c0_164, %c0_165] : memref<2x4x32x32xf32, #tpu.memory_space<vmem>>, vector<1x1x32x32xf32>
    %338 = vector.shape_cast %337 : vector<1x1x32x32xf32> to vector<32x32xf32>
    %cst_166 = arith.constant dense<0.000000e+00> : vector<16x32xf32>
    %339 = tpu.matmul %326, %338, %cst_166 {dimension_numbers = #tpu.dot_dimension_numbers<[1], [0], [0], [1], [0, 0, 1, 1], [], []>} : vector<16x32xf32>, vector<32x32xf32>, vector<16x32xf32> -> vector<16x32xf32>
    %c1_167 = arith.constant 1 : index
    %c1_168 = arith.constant 1 : index
    %c0_169 = arith.constant 0 : index
    %340 = vector.load %arg5[%c1_167, %c1_168, %c0_169] : memref<2x4x32xf32, #tpu.memory_space<vmem>>, vector<1x1x32xf32>
    %341 = vector.shape_cast %340 : vector<1x1x32xf32> to vector<32xf32>
    %342 = vector.shape_cast %341 : vector<32xf32> to vector<1x32xf32>
    %343 = vector.broadcast %342 : vector<1x32xf32> to vector<16x32xf32>
    %344 = arith.addf %339, %343 : vector<16x32xf32>
    %c1_170 = arith.constant 1 : index
    %c2_171 = arith.constant 2 : index
    %c0_172 = arith.constant 0 : index
    %c0_173 = arith.constant 0 : index
    %345 = vector.load %arg4[%c1_170, %c2_171, %c0_172, %c0_173] : memref<2x4x32x32xf32, #tpu.memory_space<vmem>>, vector<1x1x32x32xf32>
    %346 = vector.shape_cast %345 : vector<1x1x32x32xf32> to vector<32x32xf32>
    %cst_174 = arith.constant dense<0.000000e+00> : vector<16x32xf32>
    %347 = tpu.matmul %325, %346, %cst_174 {dimension_numbers = #tpu.dot_dimension_numbers<[1], [0], [0], [1], [0, 0, 1, 1], [], []>} : vector<16x32xf32>, vector<32x32xf32>, vector<16x32xf32> -> vector<16x32xf32>
    %c1_175 = arith.constant 1 : index
    %c2_176 = arith.constant 2 : index
    %c0_177 = arith.constant 0 : index
    %348 = vector.load %arg5[%c1_175, %c2_176, %c0_177] : memref<2x4x32xf32, #tpu.memory_space<vmem>>, vector<1x1x32xf32>
    %349 = vector.shape_cast %348 : vector<1x1x32xf32> to vector<32xf32>
    %350 = vector.shape_cast %349 : vector<32xf32> to vector<1x32xf32>
    %351 = vector.broadcast %350 : vector<1x32xf32> to vector<16x32xf32>
    %352 = arith.addf %347, %351 : vector<16x32xf32>
    %c1_178 = arith.constant 1 : index
    %c3_179 = arith.constant 3 : index
    %c0_180 = arith.constant 0 : index
    %c0_181 = arith.constant 0 : index
    %353 = vector.load %arg4[%c1_178, %c3_179, %c0_180, %c0_181] : memref<2x4x32x32xf32, #tpu.memory_space<vmem>>, vector<1x1x32x32xf32>
    %354 = vector.shape_cast %353 : vector<1x1x32x32xf32> to vector<32x32xf32>
    %355 = vector.shape_cast %336 : vector<16x32xf32> to vector<2x8x32xf32>
    %356 = vector.shape_cast %344 : vector<16x32xf32> to vector<2x8x32xf32>
    %357 = vector.shape_cast %352 : vector<16x32xf32> to vector<2x8x32xf32>
    %358 = vector.extract_strided_slice %355 {offsets = [0, 0, 0], sizes = [2, 8, 8], strides = [1, 1, 1]} : vector<2x8x32xf32> to vector<2x8x8xf32>
    %359 = vector.extract_strided_slice %356 {offsets = [0, 0, 0], sizes = [2, 8, 8], strides = [1, 1, 1]} : vector<2x8x32xf32> to vector<2x8x8xf32>
    "tpu.trace_start"() <{level = 10 : i32, message = "btd,bsd->bts"}> : () -> ()
    %cst_182 = arith.constant dense<0.000000e+00> : vector<2x8x8xf32>
    %360 = tpu.matmul %358, %359, %cst_182 {dimension_numbers = #tpu.dot_dimension_numbers<[2], [2], [1], [1], [0, 0, 0, 1, 1, 1], [0], [0]>} : vector<2x8x8xf32>, vector<2x8x8xf32>, vector<2x8x8xf32> -> vector<2x8x8xf32>
    "tpu.trace_stop"() : () -> ()
    %cst_183 = arith.constant dense<0xFF800000> : vector<2x8xf32>
    %361 = vector.multi_reduction <maximumf>, %360, %cst_183 [2] : vector<2x8x8xf32> to vector<2x8xf32>
    %362 = vector.shape_cast %361 : vector<2x8xf32> to vector<2x8x1xf32>
    %363 = vector.broadcast %362 : vector<2x8x1xf32> to vector<2x8x8xf32>
    %364 = arith.subf %360, %363 : vector<2x8x8xf32>
    %365 = math.exp %364 : vector<2x8x8xf32>
    %cst_184 = arith.constant dense<0.000000e+00> : vector<2x8xf32>
    %366 = vector.multi_reduction <add>, %365, %cst_184 [2] : vector<2x8x8xf32> to vector<2x8xf32>
    %367 = vector.shape_cast %366 : vector<2x8xf32> to vector<2x8x1xf32>
    %368 = vector.broadcast %367 : vector<2x8x1xf32> to vector<2x8x8xf32>
    %369 = arith.divf %365, %368 : vector<2x8x8xf32>
    %370 = vector.extract_strided_slice %357 {offsets = [0, 0, 0], sizes = [2, 8, 8], strides = [1, 1, 1]} : vector<2x8x32xf32> to vector<2x8x8xf32>
    "tpu.trace_start"() <{level = 10 : i32, message = "bts,bsd->btd"}> : () -> ()
    %cst_185 = arith.constant dense<0.000000e+00> : vector<2x8x8xf32>
    %371 = tpu.matmul %369, %370, %cst_185 {dimension_numbers = #tpu.dot_dimension_numbers<[2], [1], [1], [2], [0, 0, 0, 1, 1, 2], [0], [0]>} : vector<2x8x8xf32>, vector<2x8x8xf32>, vector<2x8x8xf32> -> vector<2x8x8xf32>
    "tpu.trace_stop"() : () -> ()
    %372 = vector.shape_cast %371 : vector<2x8x8xf32> to vector<16x8xf32>
    %373 = vector.extract_strided_slice %354 {offsets = [0, 0], sizes = [8, 32], strides = [1, 1]} : vector<32x32xf32> to vector<8x32xf32>
    %cst_186 = arith.constant dense<0.000000e+00> : vector<16x32xf32>
    %374 = tpu.matmul %372, %373, %cst_186 {dimension_numbers = #tpu.dot_dimension_numbers<[1], [0], [0], [1], [0, 0, 1, 1], [], []>} : vector<16x8xf32>, vector<8x32xf32>, vector<16x32xf32> -> vector<16x32xf32>
    %375 = vector.extract_strided_slice %355 {offsets = [0, 0, 8], sizes = [2, 8, 8], strides = [1, 1, 1]} : vector<2x8x32xf32> to vector<2x8x8xf32>
    %376 = vector.extract_strided_slice %356 {offsets = [0, 0, 8], sizes = [2, 8, 8], strides = [1, 1, 1]} : vector<2x8x32xf32> to vector<2x8x8xf32>
    "tpu.trace_start"() <{level = 10 : i32, message = "btd,bsd->bts"}> : () -> ()
    %cst_187 = arith.constant dense<0.000000e+00> : vector<2x8x8xf32>
    %377 = tpu.matmul %375, %376, %cst_187 {dimension_numbers = #tpu.dot_dimension_numbers<[2], [2], [1], [1], [0, 0, 0, 1, 1, 1], [0], [0]>} : vector<2x8x8xf32>, vector<2x8x8xf32>, vector<2x8x8xf32> -> vector<2x8x8xf32>
    "tpu.trace_stop"() : () -> ()
    %cst_188 = arith.constant dense<0xFF800000> : vector<2x8xf32>
    %378 = vector.multi_reduction <maximumf>, %377, %cst_188 [2] : vector<2x8x8xf32> to vector<2x8xf32>
    %379 = vector.shape_cast %378 : vector<2x8xf32> to vector<2x8x1xf32>
    %380 = vector.broadcast %379 : vector<2x8x1xf32> to vector<2x8x8xf32>
    %381 = arith.subf %377, %380 : vector<2x8x8xf32>
    %382 = math.exp %381 : vector<2x8x8xf32>
    %cst_189 = arith.constant dense<0.000000e+00> : vector<2x8xf32>
    %383 = vector.multi_reduction <add>, %382, %cst_189 [2] : vector<2x8x8xf32> to vector<2x8xf32>
    %384 = vector.shape_cast %383 : vector<2x8xf32> to vector<2x8x1xf32>
    %385 = vector.broadcast %384 : vector<2x8x1xf32> to vector<2x8x8xf32>
    %386 = arith.divf %382, %385 : vector<2x8x8xf32>
    %387 = vector.extract_strided_slice %357 {offsets = [0, 0, 8], sizes = [2, 8, 8], strides = [1, 1, 1]} : vector<2x8x32xf32> to vector<2x8x8xf32>
    "tpu.trace_start"() <{level = 10 : i32, message = "bts,bsd->btd"}> : () -> ()
    %cst_190 = arith.constant dense<0.000000e+00> : vector<2x8x8xf32>
    %388 = tpu.matmul %386, %387, %cst_190 {dimension_numbers = #tpu.dot_dimension_numbers<[2], [1], [1], [2], [0, 0, 0, 1, 1, 2], [0], [0]>} : vector<2x8x8xf32>, vector<2x8x8xf32>, vector<2x8x8xf32> -> vector<2x8x8xf32>
    "tpu.trace_stop"() : () -> ()
    %389 = vector.shape_cast %388 : vector<2x8x8xf32> to vector<16x8xf32>
    %390 = vector.extract_strided_slice %354 {offsets = [8, 0], sizes = [8, 32], strides = [1, 1]} : vector<32x32xf32> to vector<8x32xf32>
    %cst_191 = arith.constant dense<0.000000e+00> : vector<16x32xf32>
    %391 = tpu.matmul %389, %390, %cst_191 {dimension_numbers = #tpu.dot_dimension_numbers<[1], [0], [0], [1], [0, 0, 1, 1], [], []>} : vector<16x8xf32>, vector<8x32xf32>, vector<16x32xf32> -> vector<16x32xf32>
    %392 = arith.addf %374, %391 : vector<16x32xf32>
    %393 = vector.extract_strided_slice %355 {offsets = [0, 0, 16], sizes = [2, 8, 8], strides = [1, 1, 1]} : vector<2x8x32xf32> to vector<2x8x8xf32>
    %394 = vector.extract_strided_slice %356 {offsets = [0, 0, 16], sizes = [2, 8, 8], strides = [1, 1, 1]} : vector<2x8x32xf32> to vector<2x8x8xf32>
    "tpu.trace_start"() <{level = 10 : i32, message = "btd,bsd->bts"}> : () -> ()
    %cst_192 = arith.constant dense<0.000000e+00> : vector<2x8x8xf32>
    %395 = tpu.matmul %393, %394, %cst_192 {dimension_numbers = #tpu.dot_dimension_numbers<[2], [2], [1], [1], [0, 0, 0, 1, 1, 1], [0], [0]>} : vector<2x8x8xf32>, vector<2x8x8xf32>, vector<2x8x8xf32> -> vector<2x8x8xf32>
    "tpu.trace_stop"() : () -> ()
    %cst_193 = arith.constant dense<0xFF800000> : vector<2x8xf32>
    %396 = vector.multi_reduction <maximumf>, %395, %cst_193 [2] : vector<2x8x8xf32> to vector<2x8xf32>
    %397 = vector.shape_cast %396 : vector<2x8xf32> to vector<2x8x1xf32>
    %398 = vector.broadcast %397 : vector<2x8x1xf32> to vector<2x8x8xf32>
    %399 = arith.subf %395, %398 : vector<2x8x8xf32>
    %400 = math.exp %399 : vector<2x8x8xf32>
    %cst_194 = arith.constant dense<0.000000e+00> : vector<2x8xf32>
    %401 = vector.multi_reduction <add>, %400, %cst_194 [2] : vector<2x8x8xf32> to vector<2x8xf32>
    %402 = vector.shape_cast %401 : vector<2x8xf32> to vector<2x8x1xf32>
    %403 = vector.broadcast %402 : vector<2x8x1xf32> to vector<2x8x8xf32>
    %404 = arith.divf %400, %403 : vector<2x8x8xf32>
    %405 = vector.extract_strided_slice %357 {offsets = [0, 0, 16], sizes = [2, 8, 8], strides = [1, 1, 1]} : vector<2x8x32xf32> to vector<2x8x8xf32>
    "tpu.trace_start"() <{level = 10 : i32, message = "bts,bsd->btd"}> : () -> ()
    %cst_195 = arith.constant dense<0.000000e+00> : vector<2x8x8xf32>
    %406 = tpu.matmul %404, %405, %cst_195 {dimension_numbers = #tpu.dot_dimension_numbers<[2], [1], [1], [2], [0, 0, 0, 1, 1, 2], [0], [0]>} : vector<2x8x8xf32>, vector<2x8x8xf32>, vector<2x8x8xf32> -> vector<2x8x8xf32>
    "tpu.trace_stop"() : () -> ()
    %407 = vector.shape_cast %406 : vector<2x8x8xf32> to vector<16x8xf32>
    %408 = vector.extract_strided_slice %354 {offsets = [16, 0], sizes = [8, 32], strides = [1, 1]} : vector<32x32xf32> to vector<8x32xf32>
    %cst_196 = arith.constant dense<0.000000e+00> : vector<16x32xf32>
    %409 = tpu.matmul %407, %408, %cst_196 {dimension_numbers = #tpu.dot_dimension_numbers<[1], [0], [0], [1], [0, 0, 1, 1], [], []>} : vector<16x8xf32>, vector<8x32xf32>, vector<16x32xf32> -> vector<16x32xf32>
    %410 = arith.addf %392, %409 : vector<16x32xf32>
    %411 = vector.extract_strided_slice %355 {offsets = [0, 0, 24], sizes = [2, 8, 8], strides = [1, 1, 1]} : vector<2x8x32xf32> to vector<2x8x8xf32>
    %412 = vector.extract_strided_slice %356 {offsets = [0, 0, 24], sizes = [2, 8, 8], strides = [1, 1, 1]} : vector<2x8x32xf32> to vector<2x8x8xf32>
    "tpu.trace_start"() <{level = 10 : i32, message = "btd,bsd->bts"}> : () -> ()
    %cst_197 = arith.constant dense<0.000000e+00> : vector<2x8x8xf32>
    %413 = tpu.matmul %411, %412, %cst_197 {dimension_numbers = #tpu.dot_dimension_numbers<[2], [2], [1], [1], [0, 0, 0, 1, 1, 1], [0], [0]>} : vector<2x8x8xf32>, vector<2x8x8xf32>, vector<2x8x8xf32> -> vector<2x8x8xf32>
    "tpu.trace_stop"() : () -> ()
    %cst_198 = arith.constant dense<0xFF800000> : vector<2x8xf32>
    %414 = vector.multi_reduction <maximumf>, %413, %cst_198 [2] : vector<2x8x8xf32> to vector<2x8xf32>
    %415 = vector.shape_cast %414 : vector<2x8xf32> to vector<2x8x1xf32>
    %416 = vector.broadcast %415 : vector<2x8x1xf32> to vector<2x8x8xf32>
    %417 = arith.subf %413, %416 : vector<2x8x8xf32>
    %418 = math.exp %417 : vector<2x8x8xf32>
    %cst_199 = arith.constant dense<0.000000e+00> : vector<2x8xf32>
    %419 = vector.multi_reduction <add>, %418, %cst_199 [2] : vector<2x8x8xf32> to vector<2x8xf32>
    %420 = vector.shape_cast %419 : vector<2x8xf32> to vector<2x8x1xf32>
    %421 = vector.broadcast %420 : vector<2x8x1xf32> to vector<2x8x8xf32>
    %422 = arith.divf %418, %421 : vector<2x8x8xf32>
    %423 = vector.extract_strided_slice %357 {offsets = [0, 0, 24], sizes = [2, 8, 8], strides = [1, 1, 1]} : vector<2x8x32xf32> to vector<2x8x8xf32>
    "tpu.trace_start"() <{level = 10 : i32, message = "bts,bsd->btd"}> : () -> ()
    %cst_200 = arith.constant dense<0.000000e+00> : vector<2x8x8xf32>
    %424 = tpu.matmul %422, %423, %cst_200 {dimension_numbers = #tpu.dot_dimension_numbers<[2], [1], [1], [2], [0, 0, 0, 1, 1, 2], [0], [0]>} : vector<2x8x8xf32>, vector<2x8x8xf32>, vector<2x8x8xf32> -> vector<2x8x8xf32>
    "tpu.trace_stop"() : () -> ()
    %425 = vector.shape_cast %424 : vector<2x8x8xf32> to vector<16x8xf32>
    %426 = vector.extract_strided_slice %354 {offsets = [24, 0], sizes = [8, 32], strides = [1, 1]} : vector<32x32xf32> to vector<8x32xf32>
    %cst_201 = arith.constant dense<0.000000e+00> : vector<16x32xf32>
    %427 = tpu.matmul %425, %426, %cst_201 {dimension_numbers = #tpu.dot_dimension_numbers<[1], [0], [0], [1], [0, 0, 1, 1], [], []>} : vector<16x8xf32>, vector<8x32xf32>, vector<16x32xf32> -> vector<16x32xf32>
    %428 = arith.addf %410, %427 : vector<16x32xf32>
    %c1_202 = arith.constant 1 : index
    %c3_203 = arith.constant 3 : index
    %c0_204 = arith.constant 0 : index
    %429 = vector.load %arg5[%c1_202, %c3_203, %c0_204] : memref<2x4x32xf32, #tpu.memory_space<vmem>>, vector<1x1x32xf32>
    %430 = vector.shape_cast %429 : vector<1x1x32xf32> to vector<32xf32>
    %431 = vector.shape_cast %430 : vector<32xf32> to vector<1x32xf32>
    %432 = vector.broadcast %431 : vector<1x32xf32> to vector<16x32xf32>
    %433 = arith.addf %428, %432 : vector<16x32xf32>
    %434 = arith.addf %325, %433 : vector<16x32xf32>
    %c1_205 = arith.constant 1 : index
    %c0_206 = arith.constant 0 : index
    %c0_207 = arith.constant 0 : index
    %435 = vector.load %arg12[%c1_205, %c0_206, %c0_207] : memref<2x3x32xf32, #tpu.memory_space<vmem>>, vector<1x1x32xf32>
    %436 = vector.shape_cast %435 : vector<1x1x32xf32> to vector<32xf32>
    %c1_208 = arith.constant 1 : index
    %c0_209 = arith.constant 0 : index
    %c0_210 = arith.constant 0 : index
    %437 = vector.load %arg13[%c1_208, %c0_209, %c0_210] : memref<2x3x32xf32, #tpu.memory_space<vmem>>, vector<1x1x32xf32>
    %438 = vector.shape_cast %437 : vector<1x1x32xf32> to vector<32xf32>
    %cst_211 = arith.constant dense<0.000000e+00> : vector<16xf32>
    %439 = vector.multi_reduction <add>, %434, %cst_211 [1] : vector<16x32xf32> to vector<16xf32>
    %440 = vector.shape_cast %439 : vector<16xf32> to vector<16x1xf32>
    %cst_212 = arith.constant 3.200000e+01 : f32
    %441 = vector.broadcast %cst_212 : f32 to vector<16x1xf32>
    %442 = arith.divf %440, %441 : vector<16x1xf32>
    %443 = vector.broadcast %442 : vector<16x1xf32> to vector<16x32xf32>
    %444 = arith.subf %434, %443 : vector<16x32xf32>
    %445 = arith.mulf %444, %444 : vector<16x32xf32>
    %cst_213 = arith.constant dense<0.000000e+00> : vector<16xf32>
    %446 = vector.multi_reduction <add>, %445, %cst_213 [1] : vector<16x32xf32> to vector<16xf32>
    %447 = vector.shape_cast %446 : vector<16xf32> to vector<16x1xf32>
    %cst_214 = arith.constant 3.200000e+01 : f32
    %448 = vector.broadcast %cst_214 : f32 to vector<16x1xf32>
    %449 = arith.divf %447, %448 : vector<16x1xf32>
    %450 = vector.broadcast %442 : vector<16x1xf32> to vector<16x32xf32>
    %451 = arith.subf %434, %450 : vector<16x32xf32>
    %cst_215 = arith.constant 9.99999974E-6 : f32
    %452 = vector.broadcast %cst_215 : f32 to vector<16x1xf32>
    %453 = arith.addf %449, %452 : vector<16x1xf32>
    %454 = math.rsqrt %453 : vector<16x1xf32>
    %455 = vector.broadcast %454 : vector<16x1xf32> to vector<16x32xf32>
    %456 = arith.mulf %451, %455 : vector<16x32xf32>
    %457 = vector.shape_cast %436 : vector<32xf32> to vector<1x32xf32>
    %458 = vector.broadcast %457 : vector<1x32xf32> to vector<16x32xf32>
    %459 = arith.mulf %456, %458 : vector<16x32xf32>
    %460 = vector.shape_cast %438 : vector<32xf32> to vector<1x32xf32>
    %461 = vector.broadcast %460 : vector<1x32xf32> to vector<16x32xf32>
    %462 = arith.addf %459, %461 : vector<16x32xf32>
    %463 = arith.addf %462, %1 : vector<16x32xf32>
    %c1_216 = arith.constant 1 : index
    %c0_217 = arith.constant 0 : index
    %c0_218 = arith.constant 0 : index
    %c0_219 = arith.constant 0 : index
    %464 = vector.load %arg6[%c1_216, %c0_217, %c0_218, %c0_219] : memref<2x4x32x32xf32, #tpu.memory_space<vmem>>, vector<1x1x32x32xf32>
    %465 = vector.shape_cast %464 : vector<1x1x32x32xf32> to vector<32x32xf32>
    %cst_220 = arith.constant dense<0.000000e+00> : vector<16x32xf32>
    %466 = tpu.matmul %463, %465, %cst_220 {dimension_numbers = #tpu.dot_dimension_numbers<[1], [0], [0], [1], [0, 0, 1, 1], [], []>} : vector<16x32xf32>, vector<32x32xf32>, vector<16x32xf32> -> vector<16x32xf32>
    %c1_221 = arith.constant 1 : index
    %c0_222 = arith.constant 0 : index
    %c0_223 = arith.constant 0 : index
    %467 = vector.load %arg7[%c1_221, %c0_222, %c0_223] : memref<2x4x32xf32, #tpu.memory_space<vmem>>, vector<1x1x32xf32>
    %468 = vector.shape_cast %467 : vector<1x1x32xf32> to vector<32xf32>
    %469 = vector.shape_cast %468 : vector<32xf32> to vector<1x32xf32>
    %470 = vector.broadcast %469 : vector<1x32xf32> to vector<16x32xf32>
    %471 = arith.addf %466, %470 : vector<16x32xf32>
    %cst_224 = arith.constant 0.353553385 : f32
    %472 = vector.broadcast %cst_224 : f32 to vector<16x32xf32>
    %473 = arith.mulf %471, %472 : vector<16x32xf32>
    %c1_225 = arith.constant 1 : index
    %c1_226 = arith.constant 1 : index
    %c0_227 = arith.constant 0 : index
    %c0_228 = arith.constant 0 : index
    %474 = vector.load %arg6[%c1_225, %c1_226, %c0_227, %c0_228] : memref<2x4x32x32xf32, #tpu.memory_space<vmem>>, vector<1x1x32x32xf32>
    %475 = vector.shape_cast %474 : vector<1x1x32x32xf32> to vector<32x32xf32>
    %cst_229 = arith.constant dense<0.000000e+00> : vector<32x32xf32>
    %476 = tpu.matmul %4, %475, %cst_229 {dimension_numbers = #tpu.dot_dimension_numbers<[1], [0], [0], [1], [0, 0, 1, 1], [], []>} : vector<32x32xf32>, vector<32x32xf32>, vector<32x32xf32> -> vector<32x32xf32>
    %c1_230 = arith.constant 1 : index
    %c1_231 = arith.constant 1 : index
    %c0_232 = arith.constant 0 : index
    %477 = vector.load %arg7[%c1_230, %c1_231, %c0_232] : memref<2x4x32xf32, #tpu.memory_space<vmem>>, vector<1x1x32xf32>
    %478 = vector.shape_cast %477 : vector<1x1x32xf32> to vector<32xf32>
    %479 = vector.shape_cast %478 : vector<32xf32> to vector<1x32xf32>
    %480 = vector.broadcast %479 : vector<1x32xf32> to vector<32x32xf32>
    %481 = arith.addf %476, %480 : vector<32x32xf32>
    %c1_233 = arith.constant 1 : index
    %c2_234 = arith.constant 2 : index
    %c0_235 = arith.constant 0 : index
    %c0_236 = arith.constant 0 : index
    %482 = vector.load %arg6[%c1_233, %c2_234, %c0_235, %c0_236] : memref<2x4x32x32xf32, #tpu.memory_space<vmem>>, vector<1x1x32x32xf32>
    %483 = vector.shape_cast %482 : vector<1x1x32x32xf32> to vector<32x32xf32>
    %cst_237 = arith.constant dense<0.000000e+00> : vector<32x32xf32>
    %484 = tpu.matmul %2, %483, %cst_237 {dimension_numbers = #tpu.dot_dimension_numbers<[1], [0], [0], [1], [0, 0, 1, 1], [], []>} : vector<32x32xf32>, vector<32x32xf32>, vector<32x32xf32> -> vector<32x32xf32>
    %c1_238 = arith.constant 1 : index
    %c2_239 = arith.constant 2 : index
    %c0_240 = arith.constant 0 : index
    %485 = vector.load %arg7[%c1_238, %c2_239, %c0_240] : memref<2x4x32xf32, #tpu.memory_space<vmem>>, vector<1x1x32xf32>
    %486 = vector.shape_cast %485 : vector<1x1x32xf32> to vector<32xf32>
    %487 = vector.shape_cast %486 : vector<32xf32> to vector<1x32xf32>
    %488 = vector.broadcast %487 : vector<1x32xf32> to vector<32x32xf32>
    %489 = arith.addf %484, %488 : vector<32x32xf32>
    %c1_241 = arith.constant 1 : index
    %c3_242 = arith.constant 3 : index
    %c0_243 = arith.constant 0 : index
    %c0_244 = arith.constant 0 : index
    %490 = vector.load %arg6[%c1_241, %c3_242, %c0_243, %c0_244] : memref<2x4x32x32xf32, #tpu.memory_space<vmem>>, vector<1x1x32x32xf32>
    %491 = vector.shape_cast %490 : vector<1x1x32x32xf32> to vector<32x32xf32>
    %492 = vector.shape_cast %473 : vector<16x32xf32> to vector<2x8x32xf32>
    %493 = vector.shape_cast %481 : vector<32x32xf32> to vector<2x16x32xf32>
    %494 = vector.shape_cast %489 : vector<32x32xf32> to vector<2x16x32xf32>
    %495 = vector.extract_strided_slice %492 {offsets = [0, 0, 0], sizes = [2, 8, 8], strides = [1, 1, 1]} : vector<2x8x32xf32> to vector<2x8x8xf32>
    %496 = vector.extract_strided_slice %493 {offsets = [0, 0, 0], sizes = [2, 16, 8], strides = [1, 1, 1]} : vector<2x16x32xf32> to vector<2x16x8xf32>
    "tpu.trace_start"() <{level = 10 : i32, message = "btd,bsd->bts"}> : () -> ()
    %cst_245 = arith.constant dense<0.000000e+00> : vector<2x8x16xf32>
    %497 = tpu.matmul %495, %496, %cst_245 {dimension_numbers = #tpu.dot_dimension_numbers<[2], [2], [1], [1], [0, 0, 0, 1, 1, 1], [0], [0]>} : vector<2x8x8xf32>, vector<2x16x8xf32>, vector<2x8x16xf32> -> vector<2x8x16xf32>
    "tpu.trace_stop"() : () -> ()
    %cst_246 = arith.constant dense<0xFF800000> : vector<2x8xf32>
    %498 = vector.multi_reduction <maximumf>, %497, %cst_246 [2] : vector<2x8x16xf32> to vector<2x8xf32>
    %499 = vector.shape_cast %498 : vector<2x8xf32> to vector<2x8x1xf32>
    %500 = vector.broadcast %499 : vector<2x8x1xf32> to vector<2x8x16xf32>
    %501 = arith.subf %497, %500 : vector<2x8x16xf32>
    %502 = math.exp %501 : vector<2x8x16xf32>
    %cst_247 = arith.constant dense<0.000000e+00> : vector<2x8xf32>
    %503 = vector.multi_reduction <add>, %502, %cst_247 [2] : vector<2x8x16xf32> to vector<2x8xf32>
    %504 = vector.shape_cast %503 : vector<2x8xf32> to vector<2x8x1xf32>
    %505 = vector.broadcast %504 : vector<2x8x1xf32> to vector<2x8x16xf32>
    %506 = arith.divf %502, %505 : vector<2x8x16xf32>
    %507 = vector.extract_strided_slice %494 {offsets = [0, 0, 0], sizes = [2, 16, 8], strides = [1, 1, 1]} : vector<2x16x32xf32> to vector<2x16x8xf32>
    "tpu.trace_start"() <{level = 10 : i32, message = "bts,bsd->btd"}> : () -> ()
    %cst_248 = arith.constant dense<0.000000e+00> : vector<2x8x8xf32>
    %508 = tpu.matmul %506, %507, %cst_248 {dimension_numbers = #tpu.dot_dimension_numbers<[2], [1], [1], [2], [0, 0, 0, 1, 1, 2], [0], [0]>} : vector<2x8x16xf32>, vector<2x16x8xf32>, vector<2x8x8xf32> -> vector<2x8x8xf32>
    "tpu.trace_stop"() : () -> ()
    %509 = vector.shape_cast %508 : vector<2x8x8xf32> to vector<16x8xf32>
    %510 = vector.extract_strided_slice %491 {offsets = [0, 0], sizes = [8, 32], strides = [1, 1]} : vector<32x32xf32> to vector<8x32xf32>
    %cst_249 = arith.constant dense<0.000000e+00> : vector<16x32xf32>
    %511 = tpu.matmul %509, %510, %cst_249 {dimension_numbers = #tpu.dot_dimension_numbers<[1], [0], [0], [1], [0, 0, 1, 1], [], []>} : vector<16x8xf32>, vector<8x32xf32>, vector<16x32xf32> -> vector<16x32xf32>
    %512 = vector.extract_strided_slice %492 {offsets = [0, 0, 8], sizes = [2, 8, 8], strides = [1, 1, 1]} : vector<2x8x32xf32> to vector<2x8x8xf32>
    %513 = vector.extract_strided_slice %493 {offsets = [0, 0, 8], sizes = [2, 16, 8], strides = [1, 1, 1]} : vector<2x16x32xf32> to vector<2x16x8xf32>
    "tpu.trace_start"() <{level = 10 : i32, message = "btd,bsd->bts"}> : () -> ()
    %cst_250 = arith.constant dense<0.000000e+00> : vector<2x8x16xf32>
    %514 = tpu.matmul %512, %513, %cst_250 {dimension_numbers = #tpu.dot_dimension_numbers<[2], [2], [1], [1], [0, 0, 0, 1, 1, 1], [0], [0]>} : vector<2x8x8xf32>, vector<2x16x8xf32>, vector<2x8x16xf32> -> vector<2x8x16xf32>
    "tpu.trace_stop"() : () -> ()
    %cst_251 = arith.constant dense<0xFF800000> : vector<2x8xf32>
    %515 = vector.multi_reduction <maximumf>, %514, %cst_251 [2] : vector<2x8x16xf32> to vector<2x8xf32>
    %516 = vector.shape_cast %515 : vector<2x8xf32> to vector<2x8x1xf32>
    %517 = vector.broadcast %516 : vector<2x8x1xf32> to vector<2x8x16xf32>
    %518 = arith.subf %514, %517 : vector<2x8x16xf32>
    %519 = math.exp %518 : vector<2x8x16xf32>
    %cst_252 = arith.constant dense<0.000000e+00> : vector<2x8xf32>
    %520 = vector.multi_reduction <add>, %519, %cst_252 [2] : vector<2x8x16xf32> to vector<2x8xf32>
    %521 = vector.shape_cast %520 : vector<2x8xf32> to vector<2x8x1xf32>
    %522 = vector.broadcast %521 : vector<2x8x1xf32> to vector<2x8x16xf32>
    %523 = arith.divf %519, %522 : vector<2x8x16xf32>
    %524 = vector.extract_strided_slice %494 {offsets = [0, 0, 8], sizes = [2, 16, 8], strides = [1, 1, 1]} : vector<2x16x32xf32> to vector<2x16x8xf32>
    "tpu.trace_start"() <{level = 10 : i32, message = "bts,bsd->btd"}> : () -> ()
    %cst_253 = arith.constant dense<0.000000e+00> : vector<2x8x8xf32>
    %525 = tpu.matmul %523, %524, %cst_253 {dimension_numbers = #tpu.dot_dimension_numbers<[2], [1], [1], [2], [0, 0, 0, 1, 1, 2], [0], [0]>} : vector<2x8x16xf32>, vector<2x16x8xf32>, vector<2x8x8xf32> -> vector<2x8x8xf32>
    "tpu.trace_stop"() : () -> ()
    %526 = vector.shape_cast %525 : vector<2x8x8xf32> to vector<16x8xf32>
    %527 = vector.extract_strided_slice %491 {offsets = [8, 0], sizes = [8, 32], strides = [1, 1]} : vector<32x32xf32> to vector<8x32xf32>
    %cst_254 = arith.constant dense<0.000000e+00> : vector<16x32xf32>
    %528 = tpu.matmul %526, %527, %cst_254 {dimension_numbers = #tpu.dot_dimension_numbers<[1], [0], [0], [1], [0, 0, 1, 1], [], []>} : vector<16x8xf32>, vector<8x32xf32>, vector<16x32xf32> -> vector<16x32xf32>
    %529 = arith.addf %511, %528 : vector<16x32xf32>
    %530 = vector.extract_strided_slice %492 {offsets = [0, 0, 16], sizes = [2, 8, 8], strides = [1, 1, 1]} : vector<2x8x32xf32> to vector<2x8x8xf32>
    %531 = vector.extract_strided_slice %493 {offsets = [0, 0, 16], sizes = [2, 16, 8], strides = [1, 1, 1]} : vector<2x16x32xf32> to vector<2x16x8xf32>
    "tpu.trace_start"() <{level = 10 : i32, message = "btd,bsd->bts"}> : () -> ()
    %cst_255 = arith.constant dense<0.000000e+00> : vector<2x8x16xf32>
    %532 = tpu.matmul %530, %531, %cst_255 {dimension_numbers = #tpu.dot_dimension_numbers<[2], [2], [1], [1], [0, 0, 0, 1, 1, 1], [0], [0]>} : vector<2x8x8xf32>, vector<2x16x8xf32>, vector<2x8x16xf32> -> vector<2x8x16xf32>
    "tpu.trace_stop"() : () -> ()
    %cst_256 = arith.constant dense<0xFF800000> : vector<2x8xf32>
    %533 = vector.multi_reduction <maximumf>, %532, %cst_256 [2] : vector<2x8x16xf32> to vector<2x8xf32>
    %534 = vector.shape_cast %533 : vector<2x8xf32> to vector<2x8x1xf32>
    %535 = vector.broadcast %534 : vector<2x8x1xf32> to vector<2x8x16xf32>
    %536 = arith.subf %532, %535 : vector<2x8x16xf32>
    %537 = math.exp %536 : vector<2x8x16xf32>
    %cst_257 = arith.constant dense<0.000000e+00> : vector<2x8xf32>
    %538 = vector.multi_reduction <add>, %537, %cst_257 [2] : vector<2x8x16xf32> to vector<2x8xf32>
    %539 = vector.shape_cast %538 : vector<2x8xf32> to vector<2x8x1xf32>
    %540 = vector.broadcast %539 : vector<2x8x1xf32> to vector<2x8x16xf32>
    %541 = arith.divf %537, %540 : vector<2x8x16xf32>
    %542 = vector.extract_strided_slice %494 {offsets = [0, 0, 16], sizes = [2, 16, 8], strides = [1, 1, 1]} : vector<2x16x32xf32> to vector<2x16x8xf32>
    "tpu.trace_start"() <{level = 10 : i32, message = "bts,bsd->btd"}> : () -> ()
    %cst_258 = arith.constant dense<0.000000e+00> : vector<2x8x8xf32>
    %543 = tpu.matmul %541, %542, %cst_258 {dimension_numbers = #tpu.dot_dimension_numbers<[2], [1], [1], [2], [0, 0, 0, 1, 1, 2], [0], [0]>} : vector<2x8x16xf32>, vector<2x16x8xf32>, vector<2x8x8xf32> -> vector<2x8x8xf32>
    "tpu.trace_stop"() : () -> ()
    %544 = vector.shape_cast %543 : vector<2x8x8xf32> to vector<16x8xf32>
    %545 = vector.extract_strided_slice %491 {offsets = [16, 0], sizes = [8, 32], strides = [1, 1]} : vector<32x32xf32> to vector<8x32xf32>
    %cst_259 = arith.constant dense<0.000000e+00> : vector<16x32xf32>
    %546 = tpu.matmul %544, %545, %cst_259 {dimension_numbers = #tpu.dot_dimension_numbers<[1], [0], [0], [1], [0, 0, 1, 1], [], []>} : vector<16x8xf32>, vector<8x32xf32>, vector<16x32xf32> -> vector<16x32xf32>
    %547 = arith.addf %529, %546 : vector<16x32xf32>
    %548 = vector.extract_strided_slice %492 {offsets = [0, 0, 24], sizes = [2, 8, 8], strides = [1, 1, 1]} : vector<2x8x32xf32> to vector<2x8x8xf32>
    %549 = vector.extract_strided_slice %493 {offsets = [0, 0, 24], sizes = [2, 16, 8], strides = [1, 1, 1]} : vector<2x16x32xf32> to vector<2x16x8xf32>
    "tpu.trace_start"() <{level = 10 : i32, message = "btd,bsd->bts"}> : () -> ()
    %cst_260 = arith.constant dense<0.000000e+00> : vector<2x8x16xf32>
    %550 = tpu.matmul %548, %549, %cst_260 {dimension_numbers = #tpu.dot_dimension_numbers<[2], [2], [1], [1], [0, 0, 0, 1, 1, 1], [0], [0]>} : vector<2x8x8xf32>, vector<2x16x8xf32>, vector<2x8x16xf32> -> vector<2x8x16xf32>
    "tpu.trace_stop"() : () -> ()
    %cst_261 = arith.constant dense<0xFF800000> : vector<2x8xf32>
    %551 = vector.multi_reduction <maximumf>, %550, %cst_261 [2] : vector<2x8x16xf32> to vector<2x8xf32>
    %552 = vector.shape_cast %551 : vector<2x8xf32> to vector<2x8x1xf32>
    %553 = vector.broadcast %552 : vector<2x8x1xf32> to vector<2x8x16xf32>
    %554 = arith.subf %550, %553 : vector<2x8x16xf32>
    %555 = math.exp %554 : vector<2x8x16xf32>
    %cst_262 = arith.constant dense<0.000000e+00> : vector<2x8xf32>
    %556 = vector.multi_reduction <add>, %555, %cst_262 [2] : vector<2x8x16xf32> to vector<2x8xf32>
    %557 = vector.shape_cast %556 : vector<2x8xf32> to vector<2x8x1xf32>
    %558 = vector.broadcast %557 : vector<2x8x1xf32> to vector<2x8x16xf32>
    %559 = arith.divf %555, %558 : vector<2x8x16xf32>
    %560 = vector.extract_strided_slice %494 {offsets = [0, 0, 24], sizes = [2, 16, 8], strides = [1, 1, 1]} : vector<2x16x32xf32> to vector<2x16x8xf32>
    "tpu.trace_start"() <{level = 10 : i32, message = "bts,bsd->btd"}> : () -> ()
    %cst_263 = arith.constant dense<0.000000e+00> : vector<2x8x8xf32>
    %561 = tpu.matmul %559, %560, %cst_263 {dimension_numbers = #tpu.dot_dimension_numbers<[2], [1], [1], [2], [0, 0, 0, 1, 1, 2], [0], [0]>} : vector<2x8x16xf32>, vector<2x16x8xf32>, vector<2x8x8xf32> -> vector<2x8x8xf32>
    "tpu.trace_stop"() : () -> ()
    %562 = vector.shape_cast %561 : vector<2x8x8xf32> to vector<16x8xf32>
    %563 = vector.extract_strided_slice %491 {offsets = [24, 0], sizes = [8, 32], strides = [1, 1]} : vector<32x32xf32> to vector<8x32xf32>
    %cst_264 = arith.constant dense<0.000000e+00> : vector<16x32xf32>
    %564 = tpu.matmul %562, %563, %cst_264 {dimension_numbers = #tpu.dot_dimension_numbers<[1], [0], [0], [1], [0, 0, 1, 1], [], []>} : vector<16x8xf32>, vector<8x32xf32>, vector<16x32xf32> -> vector<16x32xf32>
    %565 = arith.addf %547, %564 : vector<16x32xf32>
    %c1_265 = arith.constant 1 : index
    %c3_266 = arith.constant 3 : index
    %c0_267 = arith.constant 0 : index
    %566 = vector.load %arg7[%c1_265, %c3_266, %c0_267] : memref<2x4x32xf32, #tpu.memory_space<vmem>>, vector<1x1x32xf32>
    %567 = vector.shape_cast %566 : vector<1x1x32xf32> to vector<32xf32>
    %568 = vector.shape_cast %567 : vector<32xf32> to vector<1x32xf32>
    %569 = vector.broadcast %568 : vector<1x32xf32> to vector<16x32xf32>
    %570 = arith.addf %565, %569 : vector<16x32xf32>
    %571 = arith.addf %462, %570 : vector<16x32xf32>
    %c1_268 = arith.constant 1 : index
    %c1_269 = arith.constant 1 : index
    %c0_270 = arith.constant 0 : index
    %572 = vector.load %arg12[%c1_268, %c1_269, %c0_270] : memref<2x3x32xf32, #tpu.memory_space<vmem>>, vector<1x1x32xf32>
    %573 = vector.shape_cast %572 : vector<1x1x32xf32> to vector<32xf32>
    %c1_271 = arith.constant 1 : index
    %c1_272 = arith.constant 1 : index
    %c0_273 = arith.constant 0 : index
    %574 = vector.load %arg13[%c1_271, %c1_272, %c0_273] : memref<2x3x32xf32, #tpu.memory_space<vmem>>, vector<1x1x32xf32>
    %575 = vector.shape_cast %574 : vector<1x1x32xf32> to vector<32xf32>
    %cst_274 = arith.constant dense<0.000000e+00> : vector<16xf32>
    %576 = vector.multi_reduction <add>, %571, %cst_274 [1] : vector<16x32xf32> to vector<16xf32>
    %577 = vector.shape_cast %576 : vector<16xf32> to vector<16x1xf32>
    %cst_275 = arith.constant 3.200000e+01 : f32
    %578 = vector.broadcast %cst_275 : f32 to vector<16x1xf32>
    %579 = arith.divf %577, %578 : vector<16x1xf32>
    %580 = vector.broadcast %579 : vector<16x1xf32> to vector<16x32xf32>
    %581 = arith.subf %571, %580 : vector<16x32xf32>
    %582 = arith.mulf %581, %581 : vector<16x32xf32>
    %cst_276 = arith.constant dense<0.000000e+00> : vector<16xf32>
    %583 = vector.multi_reduction <add>, %582, %cst_276 [1] : vector<16x32xf32> to vector<16xf32>
    %584 = vector.shape_cast %583 : vector<16xf32> to vector<16x1xf32>
    %cst_277 = arith.constant 3.200000e+01 : f32
    %585 = vector.broadcast %cst_277 : f32 to vector<16x1xf32>
    %586 = arith.divf %584, %585 : vector<16x1xf32>
    %587 = vector.broadcast %579 : vector<16x1xf32> to vector<16x32xf32>
    %588 = arith.subf %571, %587 : vector<16x32xf32>
    %cst_278 = arith.constant 9.99999974E-6 : f32
    %589 = vector.broadcast %cst_278 : f32 to vector<16x1xf32>
    %590 = arith.addf %586, %589 : vector<16x1xf32>
    %591 = math.rsqrt %590 : vector<16x1xf32>
    %592 = vector.broadcast %591 : vector<16x1xf32> to vector<16x32xf32>
    %593 = arith.mulf %588, %592 : vector<16x32xf32>
    %594 = vector.shape_cast %573 : vector<32xf32> to vector<1x32xf32>
    %595 = vector.broadcast %594 : vector<1x32xf32> to vector<16x32xf32>
    %596 = arith.mulf %593, %595 : vector<16x32xf32>
    %597 = vector.shape_cast %575 : vector<32xf32> to vector<1x32xf32>
    %598 = vector.broadcast %597 : vector<1x32xf32> to vector<16x32xf32>
    %599 = arith.addf %596, %598 : vector<16x32xf32>
    %c1_279 = arith.constant 1 : index
    %c0_280 = arith.constant 0 : index
    %c0_281 = arith.constant 0 : index
    %600 = vector.load %arg8[%c1_279, %c0_280, %c0_281] : memref<2x32x64xf32, #tpu.memory_space<vmem>>, vector<1x32x64xf32>
    %601 = vector.shape_cast %600 : vector<1x32x64xf32> to vector<32x64xf32>
    %cst_282 = arith.constant dense<0.000000e+00> : vector<16x64xf32>
    %602 = tpu.matmul %599, %601, %cst_282 {dimension_numbers = #tpu.dot_dimension_numbers<[1], [0], [0], [1], [0, 0, 1, 1], [], []>} : vector<16x32xf32>, vector<32x64xf32>, vector<16x64xf32> -> vector<16x64xf32>
    %c1_283 = arith.constant 1 : index
    %c0_284 = arith.constant 0 : index
    %603 = vector.load %arg9[%c1_283, %c0_284] : memref<2x64xf32, #tpu.memory_space<vmem>>, vector<1x64xf32>
    %604 = vector.shape_cast %603 : vector<1x64xf32> to vector<64xf32>
    %605 = vector.shape_cast %604 : vector<64xf32> to vector<1x64xf32>
    %606 = vector.broadcast %605 : vector<1x64xf32> to vector<16x64xf32>
    %607 = arith.addf %602, %606 : vector<16x64xf32>
    %cst_285 = arith.constant 0.000000e+00 : f32
    %608 = vector.broadcast %cst_285 : f32 to vector<16x64xf32>
    %609 = arith.maximumf %607, %608 : vector<16x64xf32>
    %c1_286 = arith.constant 1 : index
    %c0_287 = arith.constant 0 : index
    %c0_288 = arith.constant 0 : index
    %610 = vector.load %arg10[%c1_286, %c0_287, %c0_288] : memref<2x64x32xf32, #tpu.memory_space<vmem>>, vector<1x64x32xf32>
    %611 = vector.shape_cast %610 : vector<1x64x32xf32> to vector<64x32xf32>
    %cst_289 = arith.constant dense<0.000000e+00> : vector<16x32xf32>
    %612 = tpu.matmul %609, %611, %cst_289 {dimension_numbers = #tpu.dot_dimension_numbers<[1], [0], [0], [1], [0, 0, 1, 1], [], []>} : vector<16x64xf32>, vector<64x32xf32>, vector<16x32xf32> -> vector<16x32xf32>
    %c1_290 = arith.constant 1 : index
    %c0_291 = arith.constant 0 : index
    %613 = vector.load %arg11[%c1_290, %c0_291] : memref<2x32xf32, #tpu.memory_space<vmem>>, vector<1x32xf32>
    %614 = vector.shape_cast %613 : vector<1x32xf32> to vector<32xf32>
    %615 = vector.shape_cast %614 : vector<32xf32> to vector<1x32xf32>
    %616 = vector.broadcast %615 : vector<1x32xf32> to vector<16x32xf32>
    %617 = arith.addf %612, %616 : vector<16x32xf32>
    %618 = arith.addf %599, %617 : vector<16x32xf32>
    %c1_292 = arith.constant 1 : index
    %c2_293 = arith.constant 2 : index
    %c0_294 = arith.constant 0 : index
    %619 = vector.load %arg12[%c1_292, %c2_293, %c0_294] : memref<2x3x32xf32, #tpu.memory_space<vmem>>, vector<1x1x32xf32>
    %620 = vector.shape_cast %619 : vector<1x1x32xf32> to vector<32xf32>
    %c1_295 = arith.constant 1 : index
    %c2_296 = arith.constant 2 : index
    %c0_297 = arith.constant 0 : index
    %621 = vector.load %arg13[%c1_295, %c2_296, %c0_297] : memref<2x3x32xf32, #tpu.memory_space<vmem>>, vector<1x1x32xf32>
    %622 = vector.shape_cast %621 : vector<1x1x32xf32> to vector<32xf32>
    %cst_298 = arith.constant dense<0.000000e+00> : vector<16xf32>
    %623 = vector.multi_reduction <add>, %618, %cst_298 [1] : vector<16x32xf32> to vector<16xf32>
    %624 = vector.shape_cast %623 : vector<16xf32> to vector<16x1xf32>
    %cst_299 = arith.constant 3.200000e+01 : f32
    %625 = vector.broadcast %cst_299 : f32 to vector<16x1xf32>
    %626 = arith.divf %624, %625 : vector<16x1xf32>
    %627 = vector.broadcast %626 : vector<16x1xf32> to vector<16x32xf32>
    %628 = arith.subf %618, %627 : vector<16x32xf32>
    %629 = arith.mulf %628, %628 : vector<16x32xf32>
    %cst_300 = arith.constant dense<0.000000e+00> : vector<16xf32>
    %630 = vector.multi_reduction <add>, %629, %cst_300 [1] : vector<16x32xf32> to vector<16xf32>
    %631 = vector.shape_cast %630 : vector<16xf32> to vector<16x1xf32>
    %cst_301 = arith.constant 3.200000e+01 : f32
    %632 = vector.broadcast %cst_301 : f32 to vector<16x1xf32>
    %633 = arith.divf %631, %632 : vector<16x1xf32>
    %634 = vector.broadcast %626 : vector<16x1xf32> to vector<16x32xf32>
    %635 = arith.subf %618, %634 : vector<16x32xf32>
    %cst_302 = arith.constant 9.99999974E-6 : f32
    %636 = vector.broadcast %cst_302 : f32 to vector<16x1xf32>
    %637 = arith.addf %633, %636 : vector<16x1xf32>
    %638 = math.rsqrt %637 : vector<16x1xf32>
    %639 = vector.broadcast %638 : vector<16x1xf32> to vector<16x32xf32>
    %640 = arith.mulf %635, %639 : vector<16x32xf32>
    %641 = vector.shape_cast %620 : vector<32xf32> to vector<1x32xf32>
    %642 = vector.broadcast %641 : vector<1x32xf32> to vector<16x32xf32>
    %643 = arith.mulf %640, %642 : vector<16x32xf32>
    %644 = vector.shape_cast %622 : vector<32xf32> to vector<1x32xf32>
    %645 = vector.broadcast %644 : vector<1x32xf32> to vector<16x32xf32>
    %646 = arith.addf %643, %645 : vector<16x32xf32>
    %c0_303 = arith.constant 0 : index
    %c0_304 = arith.constant 0 : index
    %647 = vector.load %arg14[%c0_303, %c0_304] : memref<1x32xf32, #tpu.memory_space<vmem>>, vector<1x32xf32>
    %648 = vector.shape_cast %647 : vector<1x32xf32> to vector<32xf32>
    %c0_305 = arith.constant 0 : index
    %c0_306 = arith.constant 0 : index
    %649 = vector.load %arg15[%c0_305, %c0_306] : memref<1x32xf32, #tpu.memory_space<vmem>>, vector<1x32xf32>
    %650 = vector.shape_cast %649 : vector<1x32xf32> to vector<32xf32>
    %cst_307 = arith.constant dense<0.000000e+00> : vector<16xf32>
    %651 = vector.multi_reduction <add>, %646, %cst_307 [1] : vector<16x32xf32> to vector<16xf32>
    %652 = vector.shape_cast %651 : vector<16xf32> to vector<16x1xf32>
    %cst_308 = arith.constant 3.200000e+01 : f32
    %653 = vector.broadcast %cst_308 : f32 to vector<16x1xf32>
    %654 = arith.divf %652, %653 : vector<16x1xf32>
    %655 = vector.broadcast %654 : vector<16x1xf32> to vector<16x32xf32>
    %656 = arith.subf %646, %655 : vector<16x32xf32>
    %657 = arith.mulf %656, %656 : vector<16x32xf32>
    %cst_309 = arith.constant dense<0.000000e+00> : vector<16xf32>
    %658 = vector.multi_reduction <add>, %657, %cst_309 [1] : vector<16x32xf32> to vector<16xf32>
    %659 = vector.shape_cast %658 : vector<16xf32> to vector<16x1xf32>
    %cst_310 = arith.constant 3.200000e+01 : f32
    %660 = vector.broadcast %cst_310 : f32 to vector<16x1xf32>
    %661 = arith.divf %659, %660 : vector<16x1xf32>
    %662 = vector.broadcast %654 : vector<16x1xf32> to vector<16x32xf32>
    %663 = arith.subf %646, %662 : vector<16x32xf32>
    %cst_311 = arith.constant 9.99999974E-6 : f32
    %664 = vector.broadcast %cst_311 : f32 to vector<16x1xf32>
    %665 = arith.addf %661, %664 : vector<16x1xf32>
    %666 = math.rsqrt %665 : vector<16x1xf32>
    %667 = vector.broadcast %666 : vector<16x1xf32> to vector<16x32xf32>
    %668 = arith.mulf %663, %667 : vector<16x32xf32>
    %669 = vector.shape_cast %648 : vector<32xf32> to vector<1x32xf32>
    %670 = vector.broadcast %669 : vector<1x32xf32> to vector<16x32xf32>
    %671 = arith.mulf %668, %670 : vector<16x32xf32>
    %672 = vector.shape_cast %650 : vector<32xf32> to vector<1x32xf32>
    %673 = vector.broadcast %672 : vector<1x32xf32> to vector<16x32xf32>
    %674 = arith.addf %671, %673 : vector<16x32xf32>
    %c0_312 = arith.constant 0 : index
    %c0_313 = arith.constant 0 : index
    %675 = vector.load %arg16[%c0_312, %c0_313] : memref<16x32xf32, #tpu.memory_space<vmem>>, vector<16x32xf32>
    tpu.vector_store %arg16[%c0_312, %c0_313], %674 {strides = array<i32>} : memref<16x32xf32, #tpu.memory_space<vmem>>, vector<16x32xf32>,
    return
  }
}

</mosaic_0001>

<llo_original>
// kernel: transformer_decoder.1
$region0: #{transformer_decoder.1}
  #allocation0 [shape = 'u32[]', space=smem, size = 0x4, offset = 0x4, fixed_abs, tag = 'smem constant byte address 0x4 - core index']
  #allocation1 [shape = 'u32[144,128]{1,0:T(1,128)}', space=vmem, size = 0x12000, scoped, tag = 'internal scratch']
  %s0 = inlined_call_operand.vmem [shape: f32[16,32], index: 0, kind: input, shape index: {}]
  %s1 = inlined_call_operand.vmem [shape: f32[32,32], index: 1, kind: input, shape index: {}]
  %s2 = inlined_call_operand.vmem [shape: f32[16,32], index: 2, kind: input, shape index: {}]
  %s3 = inlined_call_operand.vmem [shape: f32[32,32], index: 3, kind: input, shape index: {}]
  %s4 = inlined_call_operand.vmem [shape: f32[2,4,32,32], index: 4, kind: input, shape index: {}]
  %s5 = inlined_call_operand.vmem [shape: f32[2,4,32], index: 5, kind: input, shape index: {}]
  %s6 = inlined_call_operand.vmem [shape: f32[2,4,32,32], index: 6, kind: input, shape index: {}]
  %s7 = inlined_call_operand.vmem [shape: f32[2,4,32], index: 7, kind: input, shape index: {}]
  %s8 = inlined_call_operand.vmem [shape: f32[2,32,64], index: 8, kind: input, shape index: {}]
  %s9 = inlined_call_operand.vmem [shape: f32[2,64], index: 9, kind: input, shape index: {}]
  %s10 = inlined_call_operand.vmem [shape: f32[2,64,32], index: 10, kind: input, shape index: {}]
  %s11 = inlined_call_operand.vmem [shape: f32[2,32], index: 11, kind: input, shape index: {}]
  %s12 = inlined_call_operand.vmem [shape: f32[2,3,32], index: 12, kind: input, shape index: {}]
  %s13 = inlined_call_operand.vmem [shape: f32[2,3,32], index: 13, kind: input, shape index: {}]
  %s14 = inlined_call_operand.vmem [shape: f32[1,32], index: 14, kind: input, shape index: {}]
  %s15 = inlined_call_operand.vmem [shape: f32[1,32], index: 15, kind: input, shape index: {}]
  %s16 = inlined_call_operand.hbm [shape: f32[16,32], index: 16, kind: output, shape index: {}]
  %s17 = sld [smem:[#allocation0]]
  $region74: #{transformer_decoder.1} parent=0
    _
  %s19 = ssub.s32 1, %s17
  %s20 = scalar_select 0, %s19, %s17
  $region1: #{transformer_decoder.1} parent=0
    #allocation2 [shape = 'u8[8192]{0}', space=vmem, size = 0x2000, scoped, tag = 'output window, operand 0, single buffered']
    #allocation3 [shape = 's32[1]{0}', space=sflag, size = 0x4, scoped, tag = 'scoped memory for transformer_decoder.1']
    %21 = vsyncpa [#allocation3], 0
    // Predicated region
    $region2: #{transformer_decoder.1} parent=1 // pred_check
      _
    $region3: #{transformer_decoder.1} parent=1 // pred_check_branch
      %23 = sbr.rel (0) target = $region5
    $region4: #{transformer_decoder.1} parent=1 // pred_region
      _
    $region5: #{transformer_decoder.1} parent=1 // pred_fallthru
      _
    // Predicated region
    $region6: #{transformer_decoder.1} parent=1 // pred_check
      _
    $region7: #{transformer_decoder.1} parent=1 // pred_check_branch
      %25 = sbr.rel (0) target = $region9
    $region8: #{transformer_decoder.1} parent=1 // pred_region
      _
    $region9: #{transformer_decoder.1} parent=1 // pred_fallthru
      _
    // Predicated region
    $region10: #{transformer_decoder.1} parent=1 // pred_check
      _
    $region11: #{transformer_decoder.1} parent=1 // pred_check_branch
      %27 = sbr.rel (0) target = $region13
    $region12: #{transformer_decoder.1} parent=1 // pred_region
      _
    $region13: #{transformer_decoder.1} parent=1 // pred_fallthru
      _
    // Predicated region
    $region14: #{transformer_decoder.1} parent=1 // pred_check
      _
    $region15: #{transformer_decoder.1} parent=1 // pred_check_branch
      %29 = sbr.rel (0) target = $region17
    $region16: #{transformer_decoder.1} parent=1 // pred_region
      _
    $region17: #{transformer_decoder.1} parent=1 // pred_fallthru
      _
    // Predicated region
    $region18: #{transformer_decoder.1} parent=1 // pred_check
      _
    $region19: #{transformer_decoder.1} parent=1 // pred_check_branch
      %31 = sbr.rel (0) target = $region21
    $region20: #{transformer_decoder.1} parent=1 // pred_region
      _
    $region21: #{transformer_decoder.1} parent=1 // pred_fallthru
      _
    // Predicated region
    $region22: #{transformer_decoder.1} parent=1 // pred_check
      _
    $region23: #{transformer_decoder.1} parent=1 // pred_check_branch
      %33 = sbr.rel (0) target = $region25
    $region24: #{transformer_decoder.1} parent=1 // pred_region
      _
    $region25: #{transformer_decoder.1} parent=1 // pred_fallthru
      _
    // Predicated region
    $region26: #{transformer_decoder.1} parent=1 // pred_check
      _
    $region27: #{transformer_decoder.1} parent=1 // pred_check_branch
      %35 = sbr.rel (0) target = $region29
    $region28: #{transformer_decoder.1} parent=1 // pred_region
      _
    $region29: #{transformer_decoder.1} parent=1 // pred_fallthru
      _
    // Predicated region
    $region30: #{transformer_decoder.1} parent=1 // pred_check
      _
    $region31: #{transformer_decoder.1} parent=1 // pred_check_branch
      %37 = sbr.rel (0) target = $region33
    $region32: #{transformer_decoder.1} parent=1 // pred_region
      _
    $region33: #{transformer_decoder.1} parent=1 // pred_fallthru
      _
    // Predicated region
    $region34: #{transformer_decoder.1} parent=1 // pred_check
      _
    $region35: #{transformer_decoder.1} parent=1 // pred_check_branch
      %39 = sbr.rel (0) target = $region37
    $region36: #{transformer_decoder.1} parent=1 // pred_region
      _
    $region37: #{transformer_decoder.1} parent=1 // pred_fallthru
      _
    // Predicated region
    $region38: #{transformer_decoder.1} parent=1 // pred_check
      _
    $region39: #{transformer_decoder.1} parent=1 // pred_check_branch
      %41 = sbr.rel (0) target = $region41
    $region40: #{transformer_decoder.1} parent=1 // pred_region
      _
    $region41: #{transformer_decoder.1} parent=1 // pred_fallthru
      _
    // Predicated region
    $region42: #{transformer_decoder.1} parent=1 // pred_check
      _
    $region43: #{transformer_decoder.1} parent=1 // pred_check_branch
      %43 = sbr.rel (0) target = $region45
    $region44: #{transformer_decoder.1} parent=1 // pred_region
      _
    $region45: #{transformer_decoder.1} parent=1 // pred_fallthru
      _
    // Predicated region
    $region46: #{transformer_decoder.1} parent=1 // pred_check
      _
    $region47: #{transformer_decoder.1} parent=1 // pred_check_branch
      %45 = sbr.rel (0) target = $region49
    $region48: #{transformer_decoder.1} parent=1 // pred_region
      _
    $region49: #{transformer_decoder.1} parent=1 // pred_fallthru
      _
    // Predicated region
    $region50: #{transformer_decoder.1} parent=1 // pred_check
      _
    $region51: #{transformer_decoder.1} parent=1 // pred_check_branch
      %47 = sbr.rel (0) target = $region53
    $region52: #{transformer_decoder.1} parent=1 // pred_region
      _
    $region53: #{transformer_decoder.1} parent=1 // pred_fallthru
      _
    // Predicated region
    $region54: #{transformer_decoder.1} parent=1 // pred_check
      _
    $region55: #{transformer_decoder.1} parent=1 // pred_check_branch
      %49 = sbr.rel (0) target = $region57
    $region56: #{transformer_decoder.1} parent=1 // pred_region
      _
    $region57: #{transformer_decoder.1} parent=1 // pred_fallthru
      _
    // Predicated region
    $region58: #{transformer_decoder.1} parent=1 // pred_check
      _
    $region59: #{transformer_decoder.1} parent=1 // pred_check_branch
      %51 = sbr.rel (0) target = $region61
    $region60: #{transformer_decoder.1} parent=1 // pred_region
      _
    $region61: #{transformer_decoder.1} parent=1 // pred_fallthru
      _
    // Predicated region
    $region62: #{transformer_decoder.1} parent=1 // pred_check
      _
    $region63: #{transformer_decoder.1} parent=1 // pred_check_branch
      %53 = sbr.rel (0) target = $region65
    $region64: #{transformer_decoder.1} parent=1 // pred_region
      _
    $region65: #{transformer_decoder.1} parent=1 // pred_fallthru
      _
    %v54 = vld [vmem:[%s0] sm:$0xff]
    %v55 = vld [vmem:[%s0 + $0x8] sm:$0xff]
    %v56 = vld [vmem:[%s2] sm:$0xff]
    %v57 = vld [vmem:[%s2 + $0x8] sm:$0xff]
    %v58 = vld [vmem:[%s1] sm:$0xff]
    %v59 = vld [vmem:[%s1 + $0x8] sm:$0xff]
    %v60 = vld [vmem:[%s1 + $0x10] sm:$0xff]
    %v61 = vld [vmem:[%s1 + $0x18] sm:$0xff]
    %v62 = vld [vmem:[%s3] sm:$0xff]
    %v63 = vld [vmem:[%s3 + $0x8] sm:$0xff]
    %v64 = vld [vmem:[%s3 + $0x10] sm:$0xff]
    %v65 = vld [vmem:[%s3 + $0x18] sm:$0xff]
    %v66 = vadd.f32 %v58, %v62
    %v67 = vadd.f32 %v59, %v63
    %v68 = vadd.f32 %v60, %v64
    %v69 = vadd.f32 %v61, %v65
    %v70 = vadd.f32 %v54, %v56
    %v71 = vadd.f32 %v55, %v57
    %v72 = vld [vmem:[%s4] sm:$0xff]
    %v73 = vld [vmem:[%s4 + $0x8] sm:$0xff]
    %v74 = vld [vmem:[%s4 + $0x10] sm:$0xff]
    %v75 = vld [vmem:[%s4 + $0x18] sm:$0xff]
    %v76 = vld [vmem:[%s5] sm:$0x1]
    %v77 = vlaneseq
    %v78 = vshrl.u32 %v77, 7
    %v79 = vsub.s32 0, %v78
    %v80 = vrot.slane %v76, %v79
    %vm81 = vcmask 261120
    %v83 = vsel %vm81, %v70, 0
    %v86 = vsel %vm81, %v71, 0
    %88 = vmatprep.subr.mxu0 0.0
    %89 = vmatpush1.msra.mxu0 %v72
    %90 = vmatprep.subr.mxu0 0.0
    %91 = vmatpush1.msra.mxu0 %v73
    %92 = vmatprep.subr.mxu0 0.0
    %93 = vmatpush1.msra.mxu0 %v74
    %94 = vmatprep.subr.mxu0 0.0
    %95 = vmatpush1.msra.mxu0 %v75
    %96 = vmatprep.subr.mxu0 0.0
    %97 = vmatpush1.msra.mxu0 0.0
    %98 = vmatprep.subr.mxu0 0.0
    %99 = vmatpush1.msra.mxu0 0.0
    %100 = vmatprep.subr.mxu0 0.0
    %101 = vmatpush1.msra.mxu0 0.0
    %102 = vmatprep.subr.mxu0 0.0
    %103 = vmatpush1.msra.mxu0 0.0
    %104 = vmatprep.subr.mxu0 0.0
    %105 = vmatpush1.msra.mxu0 0.0
    %106 = vmatprep.subr.mxu0 0.0
    %107 = vmatpush1.msra.mxu0 0.0
    %108 = vmatprep.subr.mxu0 0.0
    %109 = vmatpush1.msra.mxu0 0.0
    %110 = vmatprep.subr.mxu0 0.0
    %111 = vmatpush1.msra.mxu0 0.0
    %112 = vmatprep.subr.mxu0 0.0
    %113 = vmatpush1.msra.mxu0 0.0
    %114 = vmatprep.subr.mxu0 0.0
    %115 = vmatpush1.msra.mxu0 0.0
    %116 = vmatprep.subr.mxu0 0.0
    %117 = vmatpush1.msra.mxu0 0.0
    %118 = vmatprep.subr.mxu0 0.0
    %119 = vmatpush1.msra.mxu0 0.0
    %120 = vmatprep.subr.mxu0 0.0
    %121 = vmatpush1.msra.mxu0 0.0
    %122 = vmatprep.subr.mxu0 0.0
    %123 = vmatpush1.msra.mxu0 0.0
    %124 = vmatprep.subr.mxu0 0.0
    %125 = vmatpush1.msra.mxu0 0.0
    %126 = vmatprep.subr.mxu0 0.0
    %127 = vmatpush1.msra.mxu0 0.0
    %128 = vmatprep.subr.mxu0 0.0
    %129 = vmatpush1.msra.mxu0 0.0
    %130 = vmatprep.subr.mxu0 0.0
    %131 = vmatpush1.msra.mxu0 0.0
    %132 = vmatprep.subr.mxu0 0.0
    %133 = vmatpush1.msra.mxu0 0.0
    %134 = vmatprep.subr.mxu0 0.0
    %135 = vmatpush1.msra.mxu0 0.0
    %136 = vmatprep.subr.mxu0 0.0
    %137 = vmatpush1.msra.mxu0 0.0
    %138 = vmatprep.subr.mxu0 0.0
    %139 = vmatpush1.msra.mxu0 0.0
    %140 = vmatprep.subr.mxu0 0.0
    %141 = vmatpush1.msra.mxu0 0.0
    %142 = vmatprep.subr.mxu0 0.0
    %143 = vmatpush1.msra.mxu0 0.0
    %144 = vmatprep.subr.mxu0 0.0
    %145 = vmatpush1.msra.mxu0 0.0
    %146 = vmatprep.subr.mxu0 0.0
    %147 = vmatpush1.msra.mxu0 0.0
    %148 = vmatprep.subr.mxu0 0.0
    %149 = vmatpush1.msra.mxu0 0.0
    %150 = vmatprep.subr.mxu0 0.0
    %151 = vmatpush1.msra.mxu0 0.0
    %152 = vmatprep.mubr.f32.mxu0 0.0
    %153 = vmatmul.mubr.f32.gmra.mrb[0].mxu0 %v83
    %v154 = vpop.f32.mrb[0].mxu0
    %v155 = vadd.f32 %v80, %v154
    %v156 = vpop.f32.mrb[0].mxu0
    %157 = vmatprep.mubr.f32.mxu0 0.0
    %158 = vmatmul.mubr.f32.gmra.mrb[0].mxu0 %v86
    %v159 = vpop.f32.mrb[0].mxu0
    %v160 = vadd.f32 %v80, %v159
    %v161 = vpop.f32.mrb[0].mxu0
    %162 = vdwg.mxu0
    %v163 = vmul.f32 %v155, 0.35355338
    %v164 = vmul.f32 %v160, 0.35355338
    %s165 = scalar_lea.vmem %s4, 32
    %v166 = vld [vmem:[%s165] sm:$0xff]
    %v167 = vld [vmem:[%s165 + $0x8] sm:$0xff]
    %v168 = vld [vmem:[%s165 + $0x10] sm:$0xff]
    %v169 = vld [vmem:[%s165 + $0x18] sm:$0xff]
    %v170 = vld [vmem:[%s5 + $0x1] sm:$0x1]
    %v171 = vlaneseq
    %v172 = vshrl.u32 %v171, 7
    %v173 = vsub.s32 0, %v172
    %v174 = vrot.slane %v170, %v173
    %175 = vmatprep.subr.mxu0 0.0
    %176 = vmatpush1.msra.mxu0 %v166
    %177 = vmatprep.subr.mxu0 0.0
    %178 = vmatpush1.msra.mxu0 %v167
    %179 = vmatprep.subr.mxu0 0.0
    %180 = vmatpush1.msra.mxu0 %v168
    %181 = vmatprep.subr.mxu0 0.0
    %182 = vmatpush1.msra.mxu0 %v169
    %183 = vmatprep.subr.mxu0 0.0
    %184 = vmatpush1.msra.mxu0 0.0
    %185 = vmatprep.subr.mxu0 0.0
    %186 = vmatpush1.msra.mxu0 0.0
    %187 = vmatprep.subr.mxu0 0.0
    %188 = vmatpush1.msra.mxu0 0.0
    %189 = vmatprep.subr.mxu0 0.0
    %190 = vmatpush1.msra.mxu0 0.0
    %191 = vmatprep.subr.mxu0 0.0
    %192 = vmatpush1.msra.mxu0 0.0
    %193 = vmatprep.subr.mxu0 0.0
    %194 = vmatpush1.msra.mxu0 0.0
    %195 = vmatprep.subr.mxu0 0.0
    %196 = vmatpush1.msra.mxu0 0.0
    %197 = vmatprep.subr.mxu0 0.0
    %198 = vmatpush1.msra.mxu0 0.0
    %199 = vmatprep.subr.mxu0 0.0
    %200 = vmatpush1.msra.mxu0 0.0
    %201 = vmatprep.subr.mxu0 0.0
    %202 = vmatpush1.msra.mxu0 0.0
    %203 = vmatprep.subr.mxu0 0.0
    %204 = vmatpush1.msra.mxu0 0.0
    %205 = vmatprep.subr.mxu0 0.0
    %206 = vmatpush1.msra.mxu0 0.0
    %207 = vmatprep.subr.mxu0 0.0
    %208 = vmatpush1.msra.mxu0 0.0
    %209 = vmatprep.subr.mxu0 0.0
    %210 = vmatpush1.msra.mxu0 0.0
    %211 = vmatprep.subr.mxu0 0.0
    %212 = vmatpush1.msra.mxu0 0.0
    %213 = vmatprep.subr.mxu0 0.0
    %214 = vmatpush1.msra.mxu0 0.0
    %215 = vmatprep.subr.mxu0 0.0
    %216 = vmatpush1.msra.mxu0 0.0
    %217 = vmatprep.subr.mxu0 0.0
    %218 = vmatpush1.msra.mxu0 0.0
    %219 = vmatprep.subr.mxu0 0.0
    %220 = vmatpush1.msra.mxu0 0.0
    %221 = vmatprep.subr.mxu0 0.0
    %222 = vmatpush1.msra.mxu0 0.0
    %223 = vmatprep.subr.mxu0 0.0
    %224 = vmatpush1.msra.mxu0 0.0
    %225 = vmatprep.subr.mxu0 0.0
    %226 = vmatpush1.msra.mxu0 0.0
    %227 = vmatprep.subr.mxu0 0.0
    %228 = vmatpush1.msra.mxu0 0.0
    %229 = vmatprep.subr.mxu0 0.0
    %230 = vmatpush1.msra.mxu0 0.0
    %231 = vmatprep.subr.mxu0 0.0
    %232 = vmatpush1.msra.mxu0 0.0
    %233 = vmatprep.subr.mxu0 0.0
    %234 = vmatpush1.msra.mxu0 0.0
    %235 = vmatprep.subr.mxu0 0.0
    %236 = vmatpush1.msra.mxu0 0.0
    %237 = vmatprep.subr.mxu0 0.0
    %238 = vmatpush1.msra.mxu0 0.0
    %239 = vmatprep.mubr.f32.mxu0 0.0
    %240 = vmatmul.mubr.f32.gmra.mrb[0].mxu0 %v83
    %v241 = vpop.f32.mrb[0].mxu0
    %v242 = vadd.f32 %v174, %v241
    %v243 = vpop.f32.mrb[0].mxu0
    %244 = vmatprep.mubr.f32.mxu0 0.0
    %245 = vmatmul.mubr.f32.gmra.mrb[0].mxu0 %v86
    %v246 = vpop.f32.mrb[0].mxu0
    %v247 = vadd.f32 %v174, %v246
    %v248 = vpop.f32.mrb[0].mxu0
    %249 = vdwg.mxu0
    %s250 = scalar_lea.vmem %s4, 64
    %v251 = vld [vmem:[%s250] sm:$0xff]
    %v252 = vld [vmem:[%s250 + $0x8] sm:$0xff]
    %v253 = vld [vmem:[%s250 + $0x10] sm:$0xff]
    %v254 = vld [vmem:[%s250 + $0x18] sm:$0xff]
    %v255 = vld [vmem:[%s5 + $0x2] sm:$0x1]
    %v256 = vlaneseq
    %v257 = vshrl.u32 %v256, 7
    %v258 = vsub.s32 0, %v257
    %v259 = vrot.slane %v255, %v258
    %v261 = vsel %vm81, %v54, 0
    %v264 = vsel %vm81, %v55, 0
    %266 = vmatprep.subr.mxu0 0.0
    %267 = vmatpush1.msra.mxu0 %v251
    %268 = vmatprep.subr.mxu0 0.0
    %269 = vmatpush1.msra.mxu0 %v252
    %270 = vmatprep.subr.mxu0 0.0
    %271 = vmatpush1.msra.mxu0 %v253
    %272 = vmatprep.subr.mxu0 0.0
    %273 = vmatpush1.msra.mxu0 %v254
    %274 = vmatprep.subr.mxu0 0.0
    %275 = vmatpush1.msra.mxu0 0.0
    %276 = vmatprep.subr.mxu0 0.0
    %277 = vmatpush1.msra.mxu0 0.0
    %278 = vmatprep.subr.mxu0 0.0
    %279 = vmatpush1.msra.mxu0 0.0
    %280 = vmatprep.subr.mxu0 0.0
    %281 = vmatpush1.msra.mxu0 0.0
    %282 = vmatprep.subr.mxu0 0.0
    %283 = vmatpush1.msra.mxu0 0.0
    %284 = vmatprep.subr.mxu0 0.0
    %285 = vmatpush1.msra.mxu0 0.0
    %286 = vmatprep.subr.mxu0 0.0
    %287 = vmatpush1.msra.mxu0 0.0
    %288 = vmatprep.subr.mxu0 0.0
    %289 = vmatpush1.msra.mxu0 0.0
    %290 = vmatprep.subr.mxu0 0.0
    %291 = vmatpush1.msra.mxu0 0.0
    %292 = vmatprep.subr.mxu0 0.0
    %293 = vmatpush1.msra.mxu0 0.0
    %294 = vmatprep.subr.mxu0 0.0
    %295 = vmatpush1.msra.mxu0 0.0
    %296 = vmatprep.subr.mxu0 0.0
    %297 = vmatpush1.msra.mxu0 0.0
    %298 = vmatprep.subr.mxu0 0.0
    %299 = vmatpush1.msra.mxu0 0.0
    %300 = vmatprep.subr.mxu0 0.0
    %301 = vmatpush1.msra.mxu0 0.0
    %302 = vmatprep.subr.mxu0 0.0
    %303 = vmatpush1.msra.mxu0 0.0
    %304 = vmatprep.subr.mxu0 0.0
    %305 = vmatpush1.msra.mxu0 0.0
    %306 = vmatprep.subr.mxu0 0.0
    %307 = vmatpush1.msra.mxu0 0.0
    %308 = vmatprep.subr.mxu0 0.0
    %309 = vmatpush1.msra.mxu0 0.0
    %310 = vmatprep.subr.mxu0 0.0
    %311 = vmatpush1.msra.mxu0 0.0
    %312 = vmatprep.subr.mxu0 0.0
    %313 = vmatpush1.msra.mxu0 0.0
    %314 = vmatprep.subr.mxu0 0.0
    %315 = vmatpush1.msra.mxu0 0.0
    %316 = vmatprep.subr.mxu0 0.0
    %317 = vmatpush1.msra.mxu0 0.0
    %318 = vmatprep.subr.mxu0 0.0
    %319 = vmatpush1.msra.mxu0 0.0
    %320 = vmatprep.subr.mxu0 0.0
    %321 = vmatpush1.msra.mxu0 0.0
    %322 = vmatprep.subr.mxu0 0.0
    %323 = vmatpush1.msra.mxu0 0.0
    %324 = vmatprep.subr.mxu0 0.0
    %325 = vmatpush1.msra.mxu0 0.0
    %326 = vmatprep.subr.mxu0 0.0
    %327 = vmatpush1.msra.mxu0 0.0
    %328 = vmatprep.subr.mxu0 0.0
    %329 = vmatpush1.msra.mxu0 0.0
    %330 = vmatprep.mubr.f32.mxu0 0.0
    %331 = vmatmul.mubr.f32.gmra.mrb[0].mxu0 %v261
    %v332 = vpop.f32.mrb[0].mxu0
    %v333 = vadd.f32 %v259, %v332
    %v334 = vpop.f32.mrb[0].mxu0
    %335 = vmatprep.mubr.f32.mxu0 0.0
    %336 = vmatmul.mubr.f32.gmra.mrb[0].mxu0 %v264
    %v337 = vpop.f32.mrb[0].mxu0
    %v338 = vadd.f32 %v259, %v337
    %v339 = vpop.f32.mrb[0].mxu0
    %340 = vdwg.mxu0
    %s341 = scalar_lea.vmem %s4, 96
    %v342 = vld [vmem:[%s341] sm:$0xff]
    %v343 = vld [vmem:[%s341 + $0x8] sm:$0xff]
    %v344 = vld [vmem:[%s341 + $0x10] sm:$0xff]
    %v345 = vld [vmem:[%s341 + $0x18] sm:$0xff]
    %vm346 = vcmask 64512
    %v348 = vsel %vm346, %v163, 0
    %v351 = vsel %vm346, %v242, 0
    %353 = vmatprep.subr.mxu0 0.0
    %354 = vmatpush1.xpose.msra.mxu0 %v351
    %355 = vmatprep.subr.mxu0 0.0
    %356 = vmatpush1.xpose.msra.mxu0 0.0
    %357 = vmatprep.subr.mxu0 0.0
    %358 = vmatpush1.xpose.msra.mxu0 0.0
    %359 = vmatprep.subr.mxu0 0.0
    %360 = vmatpush1.xpose.msra.mxu0 0.0
    %361 = vmatprep.subr.mxu0 0.0
    %362 = vmatpush1.xpose.msra.mxu0 0.0
    %363 = vmatprep.subr.mxu0 0.0
    %364 = vmatpush1.xpose.msra.mxu0 0.0
    %365 = vmatprep.subr.mxu0 0.0
    %366 = vmatpush1.xpose.msra.mxu0 0.0
    %367 = vmatprep.subr.mxu0 0.0
    %368 = vmatpush1.xpose.msra.mxu0 0.0
    %369 = vmatprep.subr.mxu0 0.0
    %370 = vmatpush1.xpose.msra.mxu0 0.0
    %371 = vmatprep.subr.mxu0 0.0
    %372 = vmatpush1.xpose.msra.mxu0 0.0
    %373 = vmatprep.subr.mxu0 0.0
    %374 = vmatpush1.xpose.msra.mxu0 0.0
    %375 = vmatprep.subr.mxu0 0.0
    %376 = vmatpush1.xpose.msra.mxu0 0.0
    %377 = vmatprep.subr.mxu0 0.0
    %378 = vmatpush1.xpose.msra.mxu0 0.0
    %379 = vmatprep.subr.mxu0 0.0
    %380 = vmatpush1.xpose.msra.mxu0 0.0
    %381 = vmatprep.subr.mxu0 0.0
    %382 = vmatpush1.xpose.msra.mxu0 0.0
    %383 = vmatprep.subr.mxu0 0.0
    %384 = vmatpush1.xpose.msra.mxu0 0.0
    %385 = vmatprep.subr.mxu0 0.0
    %386 = vmatpush1.xpose.msra.mxu0 0.0
    %387 = vmatprep.subr.mxu0 0.0
    %388 = vmatpush1.xpose.msra.mxu0 0.0
    %389 = vmatprep.subr.mxu0 0.0
    %390 = vmatpush1.xpose.msra.mxu0 0.0
    %391 = vmatprep.subr.mxu0 0.0
    %392 = vmatpush1.xpose.msra.mxu0 0.0
    %393 = vmatprep.subr.mxu0 0.0
    %394 = vmatpush1.xpose.msra.mxu0 0.0
    %395 = vmatprep.subr.mxu0 0.0
    %396 = vmatpush1.xpose.msra.mxu0 0.0
    %397 = vmatprep.subr.mxu0 0.0
    %398 = vmatpush1.xpose.msra.mxu0 0.0
    %399 = vmatprep.subr.mxu0 0.0
    %400 = vmatpush1.xpose.msra.mxu0 0.0
    %401 = vmatprep.subr.mxu0 0.0
    %402 = vmatpush1.xpose.msra.mxu0 0.0
    %403 = vmatprep.subr.mxu0 0.0
    %404 = vmatpush1.xpose.msra.mxu0 0.0
    %405 = vmatprep.subr.mxu0 0.0
    %406 = vmatpush1.xpose.msra.mxu0 0.0
    %407 = vmatprep.subr.mxu0 0.0
    %408 = vmatpush1.xpose.msra.mxu0 0.0
    %409 = vmatprep.subr.mxu0 0.0
    %410 = vmatpush1.xpose.msra.mxu0 0.0
    %411 = vmatprep.subr.mxu0 0.0
    %412 = vmatpush1.xpose.msra.mxu0 0.0
    %413 = vmatprep.subr.mxu0 0.0
    %414 = vmatpush1.xpose.msra.mxu0 0.0
    %415 = vmatprep.subr.mxu0 0.0
    %416 = vmatpush1.xpose.msra.mxu0 0.0
    %417 = vmatprep.mubr.f32.mxu0 0.0
    %418 = vmatmul.mubr.f32.gmra.mrb[0].mxu0 %v348
    %v419 = vpop.f32.mrb[0].mxu0
    %v420 = vadd.f32 0.0, %v419
    %v421 = vpop.f32.mrb[0].mxu0
    %422 = vdwg.mxu0
    %v424 = vsel %vm346, %v164, 0
    %v427 = vsel %vm346, %v247, 0
    %429 = vmatprep.subr.mxu0 0.0
    %430 = vmatpush1.xpose.msra.mxu0 %v427
    %431 = vmatprep.subr.mxu0 0.0
    %432 = vmatpush1.xpose.msra.mxu0 0.0
    %433 = vmatprep.subr.mxu0 0.0
    %434 = vmatpush1.xpose.msra.mxu0 0.0
    %435 = vmatprep.subr.mxu0 0.0
    %436 = vmatpush1.xpose.msra.mxu0 0.0
    %437 = vmatprep.subr.mxu0 0.0
    %438 = vmatpush1.xpose.msra.mxu0 0.0
    %439 = vmatprep.subr.mxu0 0.0
    %440 = vmatpush1.xpose.msra.mxu0 0.0
    %441 = vmatprep.subr.mxu0 0.0
    %442 = vmatpush1.xpose.msra.mxu0 0.0
    %443 = vmatprep.subr.mxu0 0.0
    %444 = vmatpush1.xpose.msra.mxu0 0.0
    %445 = vmatprep.subr.mxu0 0.0
    %446 = vmatpush1.xpose.msra.mxu0 0.0
    %447 = vmatprep.subr.mxu0 0.0
    %448 = vmatpush1.xpose.msra.mxu0 0.0
    %449 = vmatprep.subr.mxu0 0.0
    %450 = vmatpush1.xpose.msra.mxu0 0.0
    %451 = vmatprep.subr.mxu0 0.0
    %452 = vmatpush1.xpose.msra.mxu0 0.0
    %453 = vmatprep.subr.mxu0 0.0
    %454 = vmatpush1.xpose.msra.mxu0 0.0
    %455 = vmatprep.subr.mxu0 0.0
    %456 = vmatpush1.xpose.msra.mxu0 0.0
    %457 = vmatprep.subr.mxu0 0.0
    %458 = vmatpush1.xpose.msra.mxu0 0.0
    %459 = vmatprep.subr.mxu0 0.0
    %460 = vmatpush1.xpose.msra.mxu0 0.0
    %461 = vmatprep.subr.mxu0 0.0
    %462 = vmatpush1.xpose.msra.mxu0 0.0
    %463 = vmatprep.subr.mxu0 0.0
    %464 = vmatpush1.xpose.msra.mxu0 0.0
    %465 = vmatprep.subr.mxu0 0.0
    %466 = vmatpush1.xpose.msra.mxu0 0.0
    %467 = vmatprep.subr.mxu0 0.0
    %468 = vmatpush1.xpose.msra.mxu0 0.0
    %469 = vmatprep.subr.mxu0 0.0
    %470 = vmatpush1.xpose.msra.mxu0 0.0
    %471 = vmatprep.subr.mxu0 0.0
    %472 = vmatpush1.xpose.msra.mxu0 0.0
    %473 = vmatprep.subr.mxu0 0.0
    %474 = vmatpush1.xpose.msra.mxu0 0.0
    %475 = vmatprep.subr.mxu0 0.0
    %476 = vmatpush1.xpose.msra.mxu0 0.0
    %477 = vmatprep.subr.mxu0 0.0
    %478 = vmatpush1.xpose.msra.mxu0 0.0
    %479 = vmatprep.subr.mxu0 0.0
    %480 = vmatpush1.xpose.msra.mxu0 0.0
    %481 = vmatprep.subr.mxu0 0.0
    %482 = vmatpush1.xpose.msra.mxu0 0.0
    %483 = vmatprep.subr.mxu0 0.0
    %484 = vmatpush1.xpose.msra.mxu0 0.0
    %485 = vmatprep.subr.mxu0 0.0
    %486 = vmatpush1.xpose.msra.mxu0 0.0
    %487 = vmatprep.subr.mxu0 0.0
    %488 = vmatpush1.xpose.msra.mxu0 0.0
    %489 = vmatprep.subr.mxu0 0.0
    %490 = vmatpush1.xpose.msra.mxu0 0.0
    %491 = vmatprep.subr.mxu0 0.0
    %492 = vmatpush1.xpose.msra.mxu0 0.0
    %493 = vmatprep.mubr.f32.mxu0 0.0
    %494 = vmatmul.mubr.f32.gmra.mrb[0].mxu0 %v424
    %v495 = vpop.f32.mrb[0].mxu0
    %v496 = vadd.f32 0.0, %v495
    %v497 = vpop.f32.mrb[0].mxu0
    %498 = vdwg.mxu0
    %v499 = vsel %vm346, %v420, -inf
    %500 = vmax.xlane.f32.xlu0 %v499
    %v501 = vpop.xlane.xlu0 %500
    %v502 = vsel %vm346, %v496, -inf
    %503 = vmax.xlane.f32.xlu0 %v502
    %v504 = vpop.xlane.xlu0 %503
    %v505 = vsub.f32 %v420, %v501
    %v506 = vsub.f32 %v496, %v504
    %v507 = vmul.f32 %v505, 1.442695
    %v508 = vpow.pop %v507
    %v509 = vmul.f32 %v506, 1.442695
    %v510 = vpow.pop %v509
    %v511 = vsel %vm346, %v508, 0.0
    %512 = vadd.xlane.f32.xlu0 %v511
    %v513 = vpop.xlane.xlu0 %512
    %v514 = vsel %vm346, %v510, 0.0
    %515 = vadd.xlane.f32.xlu0 %v514
    %v516 = vpop.xlane.xlu0 %515
    %v517 = vrcp.pop %v513
    %v518 = vmul.f32 %v508, %v517
    %v519 = vrcp.pop %v516
    %v520 = vmul.f32 %v510, %v519
    %v522 = vsel %vm346, %v518, 0
    %524 = vmatprep.subr.mxu0 0.0
    %525 = vmatpush1.msra.mxu0 %v333
    %526 = vmatprep.subr.mxu0 0.0
    %527 = vmatpush1.msra.mxu0 0.0
    %528 = vmatprep.subr.mxu0 0.0
    %529 = vmatpush1.msra.mxu0 0.0
    %530 = vmatprep.subr.mxu0 0.0
    %531 = vmatpush1.msra.mxu0 0.0
    %532 = vmatprep.subr.mxu0 0.0
    %533 = vmatpush1.msra.mxu0 0.0
    %534 = vmatprep.subr.mxu0 0.0
    %535 = vmatpush1.msra.mxu0 0.0
    %536 = vmatprep.subr.mxu0 0.0
    %537 = vmatpush1.msra.mxu0 0.0
    %538 = vmatprep.subr.mxu0 0.0
    %539 = vmatpush1.msra.mxu0 0.0
    %540 = vmatprep.subr.mxu0 0.0
    %541 = vmatpush1.msra.mxu0 0.0
    %542 = vmatprep.subr.mxu0 0.0
    %543 = vmatpush1.msra.mxu0 0.0
    %544 = vmatprep.subr.mxu0 0.0
    %545 = vmatpush1.msra.mxu0 0.0
    %546 = vmatprep.subr.mxu0 0.0
    %547 = vmatpush1.msra.mxu0 0.0
    %548 = vmatprep.subr.mxu0 0.0
    %549 = vmatpush1.msra.mxu0 0.0
    %550 = vmatprep.subr.mxu0 0.0
    %551 = vmatpush1.msra.mxu0 0.0
    %552 = vmatprep.subr.mxu0 0.0
    %553 = vmatpush1.msra.mxu0 0.0
    %554 = vmatprep.subr.mxu0 0.0
    %555 = vmatpush1.msra.mxu0 0.0
    %556 = vmatprep.subr.mxu0 0.0
    %557 = vmatpush1.msra.mxu0 0.0
    %558 = vmatprep.subr.mxu0 0.0
    %559 = vmatpush1.msra.mxu0 0.0
    %560 = vmatprep.subr.mxu0 0.0
    %561 = vmatpush1.msra.mxu0 0.0
    %562 = vmatprep.subr.mxu0 0.0
    %563 = vmatpush1.msra.mxu0 0.0
    %564 = vmatprep.subr.mxu0 0.0
    %565 = vmatpush1.msra.mxu0 0.0
    %566 = vmatprep.subr.mxu0 0.0
    %567 = vmatpush1.msra.mxu0 0.0
    %568 = vmatprep.subr.mxu0 0.0
    %569 = vmatpush1.msra.mxu0 0.0
    %570 = vmatprep.subr.mxu0 0.0
    %571 = vmatpush1.msra.mxu0 0.0
    %572 = vmatprep.subr.mxu0 0.0
    %573 = vmatpush1.msra.mxu0 0.0
    %574 = vmatprep.subr.mxu0 0.0
    %575 = vmatpush1.msra.mxu0 0.0
    %576 = vmatprep.subr.mxu0 0.0
    %577 = vmatpush1.msra.mxu0 0.0
    %578 = vmatprep.subr.mxu0 0.0
    %579 = vmatpush1.msra.mxu0 0.0
    %580 = vmatprep.subr.mxu0 0.0
    %581 = vmatpush1.msra.mxu0 0.0
    %582 = vmatprep.subr.mxu0 0.0
    %583 = vmatpush1.msra.mxu0 0.0
    %584 = vmatprep.subr.mxu0 0.0
    %585 = vmatpush1.msra.mxu0 0.0
    %586 = vmatprep.subr.mxu0 0.0
    %587 = vmatpush1.msra.mxu0 0.0
    %588 = vmatprep.mubr.f32.mxu0 0.0
    %589 = vmatmul.mubr.f32.gmra.mrb[0].mxu0 %v522
    %v590 = vpop.f32.mrb[0].mxu0
    %v591 = vadd.f32 0.0, %v590
    %v592 = vpop.f32.mrb[0].mxu0
    %593 = vdwg.mxu0
    %v595 = vsel %vm346, %v520, 0
    %597 = vmatprep.subr.mxu0 0.0
    %598 = vmatpush1.msra.mxu0 %v338
    %599 = vmatprep.subr.mxu0 0.0
    %600 = vmatpush1.msra.mxu0 0.0
    %601 = vmatprep.subr.mxu0 0.0
    %602 = vmatpush1.msra.mxu0 0.0
    %603 = vmatprep.subr.mxu0 0.0
    %604 = vmatpush1.msra.mxu0 0.0
    %605 = vmatprep.subr.mxu0 0.0
    %606 = vmatpush1.msra.mxu0 0.0
    %607 = vmatprep.subr.mxu0 0.0
    %608 = vmatpush1.msra.mxu0 0.0
    %609 = vmatprep.subr.mxu0 0.0
    %610 = vmatpush1.msra.mxu0 0.0
    %611 = vmatprep.subr.mxu0 0.0
    %612 = vmatpush1.msra.mxu0 0.0
    %613 = vmatprep.subr.mxu0 0.0
    %614 = vmatpush1.msra.mxu0 0.0
    %615 = vmatprep.subr.mxu0 0.0
    %616 = vmatpush1.msra.mxu0 0.0
    %617 = vmatprep.subr.mxu0 0.0
    %618 = vmatpush1.msra.mxu0 0.0
    %619 = vmatprep.subr.mxu0 0.0
    %620 = vmatpush1.msra.mxu0 0.0
    %621 = vmatprep.subr.mxu0 0.0
    %622 = vmatpush1.msra.mxu0 0.0
    %623 = vmatprep.subr.mxu0 0.0
    %624 = vmatpush1.msra.mxu0 0.0
    %625 = vmatprep.subr.mxu0 0.0
    %626 = vmatpush1.msra.mxu0 0.0
    %627 = vmatprep.subr.mxu0 0.0
    %628 = vmatpush1.msra.mxu0 0.0
    %629 = vmatprep.subr.mxu0 0.0
    %630 = vmatpush1.msra.mxu0 0.0
    %631 = vmatprep.subr.mxu0 0.0
    %632 = vmatpush1.msra.mxu0 0.0
    %633 = vmatprep.subr.mxu0 0.0
    %634 = vmatpush1.msra.mxu0 0.0
    %635 = vmatprep.subr.mxu0 0.0
    %636 = vmatpush1.msra.mxu0 0.0
    %637 = vmatprep.subr.mxu0 0.0
    %638 = vmatpush1.msra.mxu0 0.0
    %639 = vmatprep.subr.mxu0 0.0
    %640 = vmatpush1.msra.mxu0 0.0
    %641 = vmatprep.subr.mxu0 0.0
    %642 = vmatpush1.msra.mxu0 0.0
    %643 = vmatprep.subr.mxu0 0.0
    %644 = vmatpush1.msra.mxu0 0.0
    %645 = vmatprep.subr.mxu0 0.0
    %646 = vmatpush1.msra.mxu0 0.0
    %647 = vmatprep.subr.mxu0 0.0
    %648 = vmatpush1.msra.mxu0 0.0
    %649 = vmatprep.subr.mxu0 0.0
    %650 = vmatpush1.msra.mxu0 0.0
    %651 = vmatprep.subr.mxu0 0.0
    %652 = vmatpush1.msra.mxu0 0.0
    %653 = vmatprep.subr.mxu0 0.0
    %654 = vmatpush1.msra.mxu0 0.0
    %655 = vmatprep.subr.mxu0 0.0
    %656 = vmatpush1.msra.mxu0 0.0
    %657 = vmatprep.subr.mxu0 0.0
    %658 = vmatpush1.msra.mxu0 0.0
    %659 = vmatprep.subr.mxu0 0.0
    %660 = vmatpush1.msra.mxu0 0.0
    %661 = vmatprep.mubr.f32.mxu0 0.0
    %662 = vmatmul.mubr.f32.gmra.mrb[0].mxu0 %v595
    %v663 = vpop.f32.mrb[0].mxu0
    %v664 = vadd.f32 0.0, %v663
    %v665 = vpop.f32.mrb[0].mxu0
    %666 = vdwg.mxu0
    %667 = vrot.lane.b32.xlu0 %v163, 120
    %v668 = vpop.permute.xlu0 %667
    %669 = vrot.lane.b32.xlu0 %v242, 120
    %v670 = vpop.permute.xlu0 %669
    %v671 = vsel %vm346, %v668, 0
    %v673 = vsel %vm346, %v670, 0
    %675 = vmatprep.subr.mxu0 0.0
    %676 = vmatpush1.xpose.msra.mxu0 %v673
    %677 = vmatprep.subr.mxu0 0.0
    %678 = vmatpush1.xpose.msra.mxu0 0.0
    %679 = vmatprep.subr.mxu0 0.0
    %680 = vmatpush1.xpose.msra.mxu0 0.0
    %681 = vmatprep.subr.mxu0 0.0
    %682 = vmatpush1.xpose.msra.mxu0 0.0
    %683 = vmatprep.subr.mxu0 0.0
    %684 = vmatpush1.xpose.msra.mxu0 0.0
    %685 = vmatprep.subr.mxu0 0.0
    %686 = vmatpush1.xpose.msra.mxu0 0.0
    %687 = vmatprep.subr.mxu0 0.0
    %688 = vmatpush1.xpose.msra.mxu0 0.0
    %689 = vmatprep.subr.mxu0 0.0
    %690 = vmatpush1.xpose.msra.mxu0 0.0
    %691 = vmatprep.subr.mxu0 0.0
    %692 = vmatpush1.xpose.msra.mxu0 0.0
    %693 = vmatprep.subr.mxu0 0.0
    %694 = vmatpush1.xpose.msra.mxu0 0.0
    %695 = vmatprep.subr.mxu0 0.0
    %696 = vmatpush1.xpose.msra.mxu0 0.0
    %697 = vmatprep.subr.mxu0 0.0
    %698 = vmatpush1.xpose.msra.mxu0 0.0
    %699 = vmatprep.subr.mxu0 0.0
    %700 = vmatpush1.xpose.msra.mxu0 0.0
    %701 = vmatprep.subr.mxu0 0.0
    %702 = vmatpush1.xpose.msra.mxu0 0.0
    %703 = vmatprep.subr.mxu0 0.0
    %704 = vmatpush1.xpose.msra.mxu0 0.0
    %705 = vmatprep.subr.mxu0 0.0
    %706 = vmatpush1.xpose.msra.mxu0 0.0
    %707 = vmatprep.subr.mxu0 0.0
    %708 = vmatpush1.xpose.msra.mxu0 0.0
    %709 = vmatprep.subr.mxu0 0.0
    %710 = vmatpush1.xpose.msra.mxu0 0.0
    %711 = vmatprep.subr.mxu0 0.0
    %712 = vmatpush1.xpose.msra.mxu0 0.0
    %713 = vmatprep.subr.mxu0 0.0
    %714 = vmatpush1.xpose.msra.mxu0 0.0
    %715 = vmatprep.subr.mxu0 0.0
    %716 = vmatpush1.xpose.msra.mxu0 0.0
    %717 = vmatprep.subr.mxu0 0.0
    %718 = vmatpush1.xpose.msra.mxu0 0.0
    %719 = vmatprep.subr.mxu0 0.0
    %720 = vmatpush1.xpose.msra.mxu0 0.0
    %721 = vmatprep.subr.mxu0 0.0
    %722 = vmatpush1.xpose.msra.mxu0 0.0
    %723 = vmatprep.subr.mxu0 0.0
    %724 = vmatpush1.xpose.msra.mxu0 0.0
    %725 = vmatprep.subr.mxu0 0.0
    %726 = vmatpush1.xpose.msra.mxu0 0.0
    %727 = vmatprep.subr.mxu0 0.0
    %728 = vmatpush1.xpose.msra.mxu0 0.0
    %729 = vmatprep.subr.mxu0 0.0
    %730 = vmatpush1.xpose.msra.mxu0 0.0
    %731 = vmatprep.subr.mxu0 0.0
    %732 = vmatpush1.xpose.msra.mxu0 0.0
    %733 = vmatprep.subr.mxu0 0.0
    %734 = vmatpush1.xpose.msra.mxu0 0.0
    %735 = vmatprep.subr.mxu0 0.0
    %736 = vmatpush1.xpose.msra.mxu0 0.0
    %737 = vmatprep.subr.mxu0 0.0
    %738 = vmatpush1.xpose.msra.mxu0 0.0
    %739 = vmatprep.mubr.f32.mxu0 0.0
    %740 = vmatmul.mubr.f32.gmra.mrb[0].mxu0 %v671
    %v741 = vpop.f32.mrb[0].mxu0
    %v742 = vadd.f32 0.0, %v741
    %v743 = vpop.f32.mrb[0].mxu0
    %744 = vdwg.mxu0
    %745 = vrot.lane.b32.xlu0 %v164, 120
    %v746 = vpop.permute.xlu0 %745
    %747 = vrot.lane.b32.xlu0 %v247, 120
    %v748 = vpop.permute.xlu0 %747
    %v749 = vsel %vm346, %v746, 0
    %v751 = vsel %vm346, %v748, 0
    %753 = vmatprep.subr.mxu0 0.0
    %754 = vmatpush1.xpose.msra.mxu0 %v751
    %755 = vmatprep.subr.mxu0 0.0
    %756 = vmatpush1.xpose.msra.mxu0 0.0
    %757 = vmatprep.subr.mxu0 0.0
    %758 = vmatpush1.xpose.msra.mxu0 0.0
    %759 = vmatprep.subr.mxu0 0.0
    %760 = vmatpush1.xpose.msra.mxu0 0.0
    %761 = vmatprep.subr.mxu0 0.0
    %762 = vmatpush1.xpose.msra.mxu0 0.0
    %763 = vmatprep.subr.mxu0 0.0
    %764 = vmatpush1.xpose.msra.mxu0 0.0
    %765 = vmatprep.subr.mxu0 0.0
    %766 = vmatpush1.xpose.msra.mxu0 0.0
    %767 = vmatprep.subr.mxu0 0.0
    %768 = vmatpush1.xpose.msra.mxu0 0.0
    %769 = vmatprep.subr.mxu0 0.0
    %770 = vmatpush1.xpose.msra.mxu0 0.0
    %771 = vmatprep.subr.mxu0 0.0
    %772 = vmatpush1.xpose.msra.mxu0 0.0
    %773 = vmatprep.subr.mxu0 0.0
    %774 = vmatpush1.xpose.msra.mxu0 0.0
    %775 = vmatprep.subr.mxu0 0.0
    %776 = vmatpush1.xpose.msra.mxu0 0.0
    %777 = vmatprep.subr.mxu0 0.0
    %778 = vmatpush1.xpose.msra.mxu0 0.0
    %779 = vmatprep.subr.mxu0 0.0
    %780 = vmatpush1.xpose.msra.mxu0 0.0
    %781 = vmatprep.subr.mxu0 0.0
    %782 = vmatpush1.xpose.msra.mxu0 0.0
    %783 = vmatprep.subr.mxu0 0.0
    %784 = vmatpush1.xpose.msra.mxu0 0.0
    %785 = vmatprep.subr.mxu0 0.0
    %786 = vmatpush1.xpose.msra.mxu0 0.0
    %787 = vmatprep.subr.mxu0 0.0
    %788 = vmatpush1.xpose.msra.mxu0 0.0
    %789 = vmatprep.subr.mxu0 0.0
    %790 = vmatpush1.xpose.msra.mxu0 0.0
    %791 = vmatprep.subr.mxu0 0.0
    %792 = vmatpush1.xpose.msra.mxu0 0.0
    %793 = vmatprep.subr.mxu0 0.0
    %794 = vmatpush1.xpose.msra.mxu0 0.0
    %795 = vmatprep.subr.mxu0 0.0
    %796 = vmatpush1.xpose.msra.mxu0 0.0
    %797 = vmatprep.subr.mxu0 0.0
    %798 = vmatpush1.xpose.msra.mxu0 0.0
    %799 = vmatprep.subr.mxu0 0.0
    %800 = vmatpush1.xpose.msra.mxu0 0.0
    %801 = vmatprep.subr.mxu0 0.0
    %802 = vmatpush1.xpose.msra.mxu0 0.0
    %803 = vmatprep.subr.mxu0 0.0
    %804 = vmatpush1.xpose.msra.mxu0 0.0
    %805 = vmatprep.subr.mxu0 0.0
    %806 = vmatpush1.xpose.msra.mxu0 0.0
    %807 = vmatprep.subr.mxu0 0.0
    %808 = vmatpush1.xpose.msra.mxu0 0.0
    %809 = vmatprep.subr.mxu0 0.0
    %810 = vmatpush1.xpose.msra.mxu0 0.0
    %811 = vmatprep.subr.mxu0 0.0
    %812 = vmatpush1.xpose.msra.mxu0 0.0
    %813 = vmatprep.subr.mxu0 0.0
    %814 = vmatpush1.xpose.msra.mxu0 0.0
    %815 = vmatprep.subr.mxu0 0.0
    %816 = vmatpush1.xpose.msra.mxu0 0.0
    %817 = vmatprep.mubr.f32.mxu0 0.0
    %818 = vmatmul.mubr.f32.gmra.mrb[0].mxu0 %v749
    %v819 = vpop.f32.mrb[0].mxu0
    %v820 = vadd.f32 0.0, %v819
    %v821 = vpop.f32.mrb[0].mxu0
    %822 = vdwg.mxu0
    %v823 = vsel %vm346, %v742, -inf
    %824 = vmax.xlane.f32.xlu0 %v823
    %v825 = vpop.xlane.xlu0 %824
    %v826 = vsel %vm346, %v820, -inf
    %827 = vmax.xlane.f32.xlu0 %v826
    %v828 = vpop.xlane.xlu0 %827
    %v829 = vsub.f32 %v742, %v825
    %v830 = vsub.f32 %v820, %v828
    %v831 = vmul.f32 %v829, 1.442695
    %v832 = vpow.pop %v831
    %v833 = vmul.f32 %v830, 1.442695
    %v834 = vpow.pop %v833
    %v835 = vsel %vm346, %v832, 0.0
    %836 = vadd.xlane.f32.xlu0 %v835
    %v837 = vpop.xlane.xlu0 %836
    %v838 = vsel %vm346, %v834, 0.0
    %839 = vadd.xlane.f32.xlu0 %v838
    %v840 = vpop.xlane.xlu0 %839
    %v841 = vrcp.pop %v837
    %v842 = vmul.f32 %v832, %v841
    %v843 = vrcp.pop %v840
    %v844 = vmul.f32 %v834, %v843
    %846 = vrot.lane.b32.xlu0 %v333, 120
    %v847 = vpop.permute.xlu0 %846
    %v850 = vsel %vm346, %v842, 0
    %852 = vmatprep.subr.mxu0 0.0
    %853 = vmatpush1.msra.mxu0 %v847
    %854 = vmatprep.subr.mxu0 0.0
    %855 = vmatpush1.msra.mxu0 0.0
    %856 = vmatprep.subr.mxu0 0.0
    %857 = vmatpush1.msra.mxu0 0.0
    %858 = vmatprep.subr.mxu0 0.0
    %859 = vmatpush1.msra.mxu0 0.0
    %860 = vmatprep.subr.mxu0 0.0
    %861 = vmatpush1.msra.mxu0 0.0
    %862 = vmatprep.subr.mxu0 0.0
    %863 = vmatpush1.msra.mxu0 0.0
    %864 = vmatprep.subr.mxu0 0.0
    %865 = vmatpush1.msra.mxu0 0.0
    %866 = vmatprep.subr.mxu0 0.0
    %867 = vmatpush1.msra.mxu0 0.0
    %868 = vmatprep.subr.mxu0 0.0
    %869 = vmatpush1.msra.mxu0 0.0
    %870 = vmatprep.subr.mxu0 0.0
    %871 = vmatpush1.msra.mxu0 0.0
    %872 = vmatprep.subr.mxu0 0.0
    %873 = vmatpush1.msra.mxu0 0.0
    %874 = vmatprep.subr.mxu0 0.0
    %875 = vmatpush1.msra.mxu0 0.0
    %876 = vmatprep.subr.mxu0 0.0
    %877 = vmatpush1.msra.mxu0 0.0
    %878 = vmatprep.subr.mxu0 0.0
    %879 = vmatpush1.msra.mxu0 0.0
    %880 = vmatprep.subr.mxu0 0.0
    %881 = vmatpush1.msra.mxu0 0.0
    %882 = vmatprep.subr.mxu0 0.0
    %883 = vmatpush1.msra.mxu0 0.0
    %884 = vmatprep.subr.mxu0 0.0
    %885 = vmatpush1.msra.mxu0 0.0
    %886 = vmatprep.subr.mxu0 0.0
    %887 = vmatpush1.msra.mxu0 0.0
    %888 = vmatprep.subr.mxu0 0.0
    %889 = vmatpush1.msra.mxu0 0.0
    %890 = vmatprep.subr.mxu0 0.0
    %891 = vmatpush1.msra.mxu0 0.0
    %892 = vmatprep.subr.mxu0 0.0
    %893 = vmatpush1.msra.mxu0 0.0
    %894 = vmatprep.subr.mxu0 0.0
    %895 = vmatpush1.msra.mxu0 0.0
    %896 = vmatprep.subr.mxu0 0.0
    %897 = vmatpush1.msra.mxu0 0.0
    %898 = vmatprep.subr.mxu0 0.0
    %899 = vmatpush1.msra.mxu0 0.0
    %900 = vmatprep.subr.mxu0 0.0
    %901 = vmatpush1.msra.mxu0 0.0
    %902 = vmatprep.subr.mxu0 0.0
    %903 = vmatpush1.msra.mxu0 0.0
    %904 = vmatprep.subr.mxu0 0.0
    %905 = vmatpush1.msra.mxu0 0.0
    %906 = vmatprep.subr.mxu0 0.0
    %907 = vmatpush1.msra.mxu0 0.0
    %908 = vmatprep.subr.mxu0 0.0
    %909 = vmatpush1.msra.mxu0 0.0
    %910 = vmatprep.subr.mxu0 0.0
    %911 = vmatpush1.msra.mxu0 0.0
    %912 = vmatprep.subr.mxu0 0.0
    %913 = vmatpush1.msra.mxu0 0.0
    %914 = vmatprep.subr.mxu0 0.0
    %915 = vmatpush1.msra.mxu0 0.0
    %916 = vmatprep.mubr.f32.mxu0 0.0
    %917 = vmatmul.mubr.f32.gmra.mrb[0].mxu0 %v850
    %v918 = vpop.f32.mrb[0].mxu0
    %v919 = vadd.f32 0.0, %v918
    %v920 = vpop.f32.mrb[0].mxu0
    %921 = vdwg.mxu0
    %923 = vrot.lane.b32.xlu0 %v338, 120
    %v924 = vpop.permute.xlu0 %923
    %v927 = vsel %vm346, %v844, 0
    %929 = vmatprep.subr.mxu0 0.0
    %930 = vmatpush1.msra.mxu0 %v924
    %931 = vmatprep.subr.mxu0 0.0
    %932 = vmatpush1.msra.mxu0 0.0
    %933 = vmatprep.subr.mxu0 0.0
    %934 = vmatpush1.msra.mxu0 0.0
    %935 = vmatprep.subr.mxu0 0.0
    %936 = vmatpush1.msra.mxu0 0.0
    %937 = vmatprep.subr.mxu0 0.0
    %938 = vmatpush1.msra.mxu0 0.0
    %939 = vmatprep.subr.mxu0 0.0
    %940 = vmatpush1.msra.mxu0 0.0
    %941 = vmatprep.subr.mxu0 0.0
    %942 = vmatpush1.msra.mxu0 0.0
    %943 = vmatprep.subr.mxu0 0.0
    %944 = vmatpush1.msra.mxu0 0.0
    %945 = vmatprep.subr.mxu0 0.0
    %946 = vmatpush1.msra.mxu0 0.0
    %947 = vmatprep.subr.mxu0 0.0
    %948 = vmatpush1.msra.mxu0 0.0
    %949 = vmatprep.subr.mxu0 0.0
    %950 = vmatpush1.msra.mxu0 0.0
    %951 = vmatprep.subr.mxu0 0.0
    %952 = vmatpush1.msra.mxu0 0.0
    %953 = vmatprep.subr.mxu0 0.0
    %954 = vmatpush1.msra.mxu0 0.0
    %955 = vmatprep.subr.mxu0 0.0
    %956 = vmatpush1.msra.mxu0 0.0
    %957 = vmatprep.subr.mxu0 0.0
    %958 = vmatpush1.msra.mxu0 0.0
    %959 = vmatprep.subr.mxu0 0.0
    %960 = vmatpush1.msra.mxu0 0.0
    %961 = vmatprep.subr.mxu0 0.0
    %962 = vmatpush1.msra.mxu0 0.0
    %963 = vmatprep.subr.mxu0 0.0
    %964 = vmatpush1.msra.mxu0 0.0
    %965 = vmatprep.subr.mxu0 0.0
    %966 = vmatpush1.msra.mxu0 0.0
    %967 = vmatprep.subr.mxu0 0.0
    %968 = vmatpush1.msra.mxu0 0.0
    %969 = vmatprep.subr.mxu0 0.0
    %970 = vmatpush1.msra.mxu0 0.0
    %971 = vmatprep.subr.mxu0 0.0
    %972 = vmatpush1.msra.mxu0 0.0
    %973 = vmatprep.subr.mxu0 0.0
    %974 = vmatpush1.msra.mxu0 0.0
    %975 = vmatprep.subr.mxu0 0.0
    %976 = vmatpush1.msra.mxu0 0.0
    %977 = vmatprep.subr.mxu0 0.0
    %978 = vmatpush1.msra.mxu0 0.0
    %979 = vmatprep.subr.mxu0 0.0
    %980 = vmatpush1.msra.mxu0 0.0
    %981 = vmatprep.subr.mxu0 0.0
    %982 = vmatpush1.msra.mxu0 0.0
    %983 = vmatprep.subr.mxu0 0.0
    %984 = vmatpush1.msra.mxu0 0.0
    %985 = vmatprep.subr.mxu0 0.0
    %986 = vmatpush1.msra.mxu0 0.0
    %987 = vmatprep.subr.mxu0 0.0
    %988 = vmatpush1.msra.mxu0 0.0
    %989 = vmatprep.subr.mxu0 0.0
    %990 = vmatpush1.msra.mxu0 0.0
    %991 = vmatprep.subr.mxu0 0.0
    %992 = vmatpush1.msra.mxu0 0.0
    %993 = vmatprep.mubr.f32.mxu0 0.0
    %994 = vmatmul.mubr.f32.gmra.mrb[0].mxu0 %v927
    %v995 = vpop.f32.mrb[0].mxu0
    %v996 = vadd.f32 0.0, %v995
    %v997 = vpop.f32.mrb[0].mxu0
    %998 = vdwg.mxu0
    %v1000 = vsel %vm346, %v919, 0
    %v1003 = vsel %vm346, %v996, 0
    %1005 = vmatprep.subr.mxu0 0.0
    %1006 = vmatpush1.msra.mxu0 %v343
    %1007 = vmatprep.subr.mxu0 0.0
    %1008 = vmatpush1.msra.mxu0 0.0
    %1009 = vmatprep.subr.mxu0 0.0
    %1010 = vmatpush1.msra.mxu0 0.0
    %1011 = vmatprep.subr.mxu0 0.0
    %1012 = vmatpush1.msra.mxu0 0.0
    %1013 = vmatprep.subr.mxu0 0.0
    %1014 = vmatpush1.msra.mxu0 0.0
    %1015 = vmatprep.subr.mxu0 0.0
    %1016 = vmatpush1.msra.mxu0 0.0
    %1017 = vmatprep.subr.mxu0 0.0
    %1018 = vmatpush1.msra.mxu0 0.0
    %1019 = vmatprep.subr.mxu0 0.0
    %1020 = vmatpush1.msra.mxu0 0.0
    %1021 = vmatprep.subr.mxu0 0.0
    %1022 = vmatpush1.msra.mxu0 0.0
    %1023 = vmatprep.subr.mxu0 0.0
    %1024 = vmatpush1.msra.mxu0 0.0
    %1025 = vmatprep.subr.mxu0 0.0
    %1026 = vmatpush1.msra.mxu0 0.0
    %1027 = vmatprep.subr.mxu0 0.0
    %1028 = vmatpush1.msra.mxu0 0.0
    %1029 = vmatprep.subr.mxu0 0.0
    %1030 = vmatpush1.msra.mxu0 0.0
    %1031 = vmatprep.subr.mxu0 0.0
    %1032 = vmatpush1.msra.mxu0 0.0
    %1033 = vmatprep.subr.mxu0 0.0
    %1034 = vmatpush1.msra.mxu0 0.0
    %1035 = vmatprep.subr.mxu0 0.0
    %1036 = vmatpush1.msra.mxu0 0.0
    %1037 = vmatprep.subr.mxu0 0.0
    %1038 = vmatpush1.msra.mxu0 0.0
    %1039 = vmatprep.subr.mxu0 0.0
    %1040 = vmatpush1.msra.mxu0 0.0
    %1041 = vmatprep.subr.mxu0 0.0
    %1042 = vmatpush1.msra.mxu0 0.0
    %1043 = vmatprep.subr.mxu0 0.0
    %1044 = vmatpush1.msra.mxu0 0.0
    %1045 = vmatprep.subr.mxu0 0.0
    %1046 = vmatpush1.msra.mxu0 0.0
    %1047 = vmatprep.subr.mxu0 0.0
    %1048 = vmatpush1.msra.mxu0 0.0
    %1049 = vmatprep.subr.mxu0 0.0
    %1050 = vmatpush1.msra.mxu0 0.0
    %1051 = vmatprep.subr.mxu0 0.0
    %1052 = vmatpush1.msra.mxu0 0.0
    %1053 = vmatprep.subr.mxu0 0.0
    %1054 = vmatpush1.msra.mxu0 0.0
    %1055 = vmatprep.subr.mxu0 0.0
    %1056 = vmatpush1.msra.mxu0 0.0
    %1057 = vmatprep.subr.mxu0 0.0
    %1058 = vmatpush1.msra.mxu0 0.0
    %1059 = vmatprep.subr.mxu0 0.0
    %1060 = vmatpush1.msra.mxu0 0.0
    %1061 = vmatprep.subr.mxu0 0.0
    %1062 = vmatpush1.msra.mxu0 0.0
    %1063 = vmatprep.subr.mxu0 0.0
    %1064 = vmatpush1.msra.mxu0 0.0
    %1065 = vmatprep.subr.mxu0 0.0
    %1066 = vmatpush1.msra.mxu0 0.0
    %1067 = vmatprep.subr.mxu0 0.0
    %1068 = vmatpush1.msra.mxu0 0.0
    %1069 = vmatprep.mubr.f32.mxu0 0.0
    %1070 = vmatmul.mubr.f32.gmra.mrb[0].mxu0 %v1000
    %v1071 = vpop.f32.mrb[0].mxu0
    %v1072 = vadd.f32 0.0, %v1071
    %v1073 = vpop.f32.mrb[0].mxu0
    %1074 = vmatprep.mubr.f32.mxu0 0.0
    %1075 = vmatmul.mubr.f32.gmra.mrb[0].mxu0 %v1003
    %v1076 = vpop.f32.mrb[0].mxu0
    %v1077 = vadd.f32 0.0, %v1076
    %v1078 = vpop.f32.mrb[0].mxu0
    %1079 = vdwg.mxu0
    %v1081 = vsel %vm346, %v591, 0
    %v1084 = vsel %vm346, %v664, 0
    %1086 = vmatprep.subr.mxu0 0.0
    %1087 = vmatpush1.msra.mxu0 %v342
    %1088 = vmatprep.subr.mxu0 0.0
    %1089 = vmatpush1.msra.mxu0 0.0
    %1090 = vmatprep.subr.mxu0 0.0
    %1091 = vmatpush1.msra.mxu0 0.0
    %1092 = vmatprep.subr.mxu0 0.0
    %1093 = vmatpush1.msra.mxu0 0.0
    %1094 = vmatprep.subr.mxu0 0.0
    %1095 = vmatpush1.msra.mxu0 0.0
    %1096 = vmatprep.subr.mxu0 0.0
    %1097 = vmatpush1.msra.mxu0 0.0
    %1098 = vmatprep.subr.mxu0 0.0
    %1099 = vmatpush1.msra.mxu0 0.0
    %1100 = vmatprep.subr.mxu0 0.0
    %1101 = vmatpush1.msra.mxu0 0.0
    %1102 = vmatprep.subr.mxu0 0.0
    %1103 = vmatpush1.msra.mxu0 0.0
    %1104 = vmatprep.subr.mxu0 0.0
    %1105 = vmatpush1.msra.mxu0 0.0
    %1106 = vmatprep.subr.mxu0 0.0
    %1107 = vmatpush1.msra.mxu0 0.0
    %1108 = vmatprep.subr.mxu0 0.0
    %1109 = vmatpush1.msra.mxu0 0.0
    %1110 = vmatprep.subr.mxu0 0.0
    %1111 = vmatpush1.msra.mxu0 0.0
    %1112 = vmatprep.subr.mxu0 0.0
    %1113 = vmatpush1.msra.mxu0 0.0
    %1114 = vmatprep.subr.mxu0 0.0
    %1115 = vmatpush1.msra.mxu0 0.0
    %1116 = vmatprep.subr.mxu0 0.0
    %1117 = vmatpush1.msra.mxu0 0.0
    %1118 = vmatprep.subr.mxu0 0.0
    %1119 = vmatpush1.msra.mxu0 0.0
    %1120 = vmatprep.subr.mxu0 0.0
    %1121 = vmatpush1.msra.mxu0 0.0
    %1122 = vmatprep.subr.mxu0 0.0
    %1123 = vmatpush1.msra.mxu0 0.0
    %1124 = vmatprep.subr.mxu0 0.0
    %1125 = vmatpush1.msra.mxu0 0.0
    %1126 = vmatprep.subr.mxu0 0.0
    %1127 = vmatpush1.msra.mxu0 0.0
    %1128 = vmatprep.subr.mxu0 0.0
    %1129 = vmatpush1.msra.mxu0 0.0
    %1130 = vmatprep.subr.mxu0 0.0
    %1131 = vmatpush1.msra.mxu0 0.0
    %1132 = vmatprep.subr.mxu0 0.0
    %1133 = vmatpush1.msra.mxu0 0.0
    %1134 = vmatprep.subr.mxu0 0.0
    %1135 = vmatpush1.msra.mxu0 0.0
    %1136 = vmatprep.subr.mxu0 0.0
    %1137 = vmatpush1.msra.mxu0 0.0
    %1138 = vmatprep.subr.mxu0 0.0
    %1139 = vmatpush1.msra.mxu0 0.0
    %1140 = vmatprep.subr.mxu0 0.0
    %1141 = vmatpush1.msra.mxu0 0.0
    %1142 = vmatprep.subr.mxu0 0.0
    %1143 = vmatpush1.msra.mxu0 0.0
    %1144 = vmatprep.subr.mxu0 0.0
    %1145 = vmatpush1.msra.mxu0 0.0
    %1146 = vmatprep.subr.mxu0 0.0
    %1147 = vmatpush1.msra.mxu0 0.0
    %1148 = vmatprep.subr.mxu0 0.0
    %1149 = vmatpush1.msra.mxu0 0.0
    %1150 = vmatprep.mubr.f32.mxu0 0.0
    %1151 = vmatmul.mubr.f32.gmra.mrb[0].mxu0 %v1081
    %v1152 = vpop.f32.mrb[0].mxu0
    %v1153 = vadd.f32 %v1072, %v1152
    %v1154 = vpop.f32.mrb[0].mxu0
    %1155 = vmatprep.mubr.f32.mxu0 0.0
    %1156 = vmatmul.mubr.f32.gmra.mrb[0].mxu0 %v1084
    %v1157 = vpop.f32.mrb[0].mxu0
    %v1158 = vadd.f32 %v1077, %v1157
    %v1159 = vpop.f32.mrb[0].mxu0
    %1160 = vdwg.mxu0
    %1161 = vrot.lane.b32.xlu0 %v163, 112
    %v1162 = vpop.permute.xlu0 %1161
    %1163 = vrot.lane.b32.xlu0 %v242, 112
    %v1164 = vpop.permute.xlu0 %1163
    %v1165 = vsel %vm346, %v1162, 0
    %v1167 = vsel %vm346, %v1164, 0
    %1169 = vmatprep.subr.mxu0 0.0
    %1170 = vmatpush1.xpose.msra.mxu0 %v1167
    %1171 = vmatprep.subr.mxu0 0.0
    %1172 = vmatpush1.xpose.msra.mxu0 0.0
    %1173 = vmatprep.subr.mxu0 0.0
    %1174 = vmatpush1.xpose.msra.mxu0 0.0
    %1175 = vmatprep.subr.mxu0 0.0
    %1176 = vmatpush1.xpose.msra.mxu0 0.0
    %1177 = vmatprep.subr.mxu0 0.0
    %1178 = vmatpush1.xpose.msra.mxu0 0.0
    %1179 = vmatprep.subr.mxu0 0.0
    %1180 = vmatpush1.xpose.msra.mxu0 0.0
    %1181 = vmatprep.subr.mxu0 0.0
    %1182 = vmatpush1.xpose.msra.mxu0 0.0
    %1183 = vmatprep.subr.mxu0 0.0
    %1184 = vmatpush1.xpose.msra.mxu0 0.0
    %1185 = vmatprep.subr.mxu0 0.0
    %1186 = vmatpush1.xpose.msra.mxu0 0.0
    %1187 = vmatprep.subr.mxu0 0.0
    %1188 = vmatpush1.xpose.msra.mxu0 0.0
    %1189 = vmatprep.subr.mxu0 0.0
    %1190 = vmatpush1.xpose.msra.mxu0 0.0
    %1191 = vmatprep.subr.mxu0 0.0
    %1192 = vmatpush1.xpose.msra.mxu0 0.0
    %1193 = vmatprep.subr.mxu0 0.0
    %1194 = vmatpush1.xpose.msra.mxu0 0.0
    %1195 = vmatprep.subr.mxu0 0.0
    %1196 = vmatpush1.xpose.msra.mxu0 0.0
    %1197 = vmatprep.subr.mxu0 0.0
    %1198 = vmatpush1.xpose.msra.mxu0 0.0
    %1199 = vmatprep.subr.mxu0 0.0
    %1200 = vmatpush1.xpose.msra.mxu0 0.0
    %1201 = vmatprep.subr.mxu0 0.0
    %1202 = vmatpush1.xpose.msra.mxu0 0.0
    %1203 = vmatprep.subr.mxu0 0.0
    %1204 = vmatpush1.xpose.msra.mxu0 0.0
    %1205 = vmatprep.subr.mxu0 0.0
    %1206 = vmatpush1.xpose.msra.mxu0 0.0
    %1207 = vmatprep.subr.mxu0 0.0
    %1208 = vmatpush1.xpose.msra.mxu0 0.0
    %1209 = vmatprep.subr.mxu0 0.0
    %1210 = vmatpush1.xpose.msra.mxu0 0.0
    %1211 = vmatprep.subr.mxu0 0.0
    %1212 = vmatpush1.xpose.msra.mxu0 0.0
    %1213 = vmatprep.subr.mxu0 0.0
    %1214 = vmatpush1.xpose.msra.mxu0 0.0
    %1215 = vmatprep.subr.mxu0 0.0
    %1216 = vmatpush1.xpose.msra.mxu0 0.0
    %1217 = vmatprep.subr.mxu0 0.0
    %1218 = vmatpush1.xpose.msra.mxu0 0.0
    %1219 = vmatprep.subr.mxu0 0.0
    %1220 = vmatpush1.xpose.msra.mxu0 0.0
    %1221 = vmatprep.subr.mxu0 0.0
    %1222 = vmatpush1.xpose.msra.mxu0 0.0
    %1223 = vmatprep.subr.mxu0 0.0
    %1224 = vmatpush1.xpose.msra.mxu0 0.0
    %1225 = vmatprep.subr.mxu0 0.0
    %1226 = vmatpush1.xpose.msra.mxu0 0.0
    %1227 = vmatprep.subr.mxu0 0.0
    %1228 = vmatpush1.xpose.msra.mxu0 0.0
    %1229 = vmatprep.subr.mxu0 0.0
    %1230 = vmatpush1.xpose.msra.mxu0 0.0
    %1231 = vmatprep.subr.mxu0 0.0
    %1232 = vmatpush1.xpose.msra.mxu0 0.0
    %1233 = vmatprep.mubr.f32.mxu0 0.0
    %1234 = vmatmul.mubr.f32.gmra.mrb[0].mxu0 %v1165
    %v1235 = vpop.f32.mrb[0].mxu0
    %v1236 = vadd.f32 0.0, %v1235
    %v1237 = vpop.f32.mrb[0].mxu0
    %1238 = vdwg.mxu0
    %1239 = vrot.lane.b32.xlu0 %v164, 112
    %v1240 = vpop.permute.xlu0 %1239
    %1241 = vrot.lane.b32.xlu0 %v247, 112
    %v1242 = vpop.permute.xlu0 %1241
    %v1243 = vsel %vm346, %v1240, 0
    %v1245 = vsel %vm346, %v1242, 0
    %1247 = vmatprep.subr.mxu0 0.0
    %1248 = vmatpush1.xpose.msra.mxu0 %v1245
    %1249 = vmatprep.subr.mxu0 0.0
    %1250 = vmatpush1.xpose.msra.mxu0 0.0
    %1251 = vmatprep.subr.mxu0 0.0
    %1252 = vmatpush1.xpose.msra.mxu0 0.0
    %1253 = vmatprep.subr.mxu0 0.0
    %1254 = vmatpush1.xpose.msra.mxu0 0.0
    %1255 = vmatprep.subr.mxu0 0.0
    %1256 = vmatpush1.xpose.msra.mxu0 0.0
    %1257 = vmatprep.subr.mxu0 0.0
    %1258 = vmatpush1.xpose.msra.mxu0 0.0
    %1259 = vmatprep.subr.mxu0 0.0
    %1260 = vmatpush1.xpose.msra.mxu0 0.0
    %1261 = vmatprep.subr.mxu0 0.0
    %1262 = vmatpush1.xpose.msra.mxu0 0.0
    %1263 = vmatprep.subr.mxu0 0.0
    %1264 = vmatpush1.xpose.msra.mxu0 0.0
    %1265 = vmatprep.subr.mxu0 0.0
    %1266 = vmatpush1.xpose.msra.mxu0 0.0
    %1267 = vmatprep.subr.mxu0 0.0
    %1268 = vmatpush1.xpose.msra.mxu0 0.0
    %1269 = vmatprep.subr.mxu0 0.0
    %1270 = vmatpush1.xpose.msra.mxu0 0.0
    %1271 = vmatprep.subr.mxu0 0.0
    %1272 = vmatpush1.xpose.msra.mxu0 0.0
    %1273 = vmatprep.subr.mxu0 0.0
    %1274 = vmatpush1.xpose.msra.mxu0 0.0
    %1275 = vmatprep.subr.mxu0 0.0
    %1276 = vmatpush1.xpose.msra.mxu0 0.0
    %1277 = vmatprep.subr.mxu0 0.0
    %1278 = vmatpush1.xpose.msra.mxu0 0.0
    %1279 = vmatprep.subr.mxu0 0.0
    %1280 = vmatpush1.xpose.msra.mxu0 0.0
    %1281 = vmatprep.subr.mxu0 0.0
    %1282 = vmatpush1.xpose.msra.mxu0 0.0
    %1283 = vmatprep.subr.mxu0 0.0
    %1284 = vmatpush1.xpose.msra.mxu0 0.0
    %1285 = vmatprep.subr.mxu0 0.0
    %1286 = vmatpush1.xpose.msra.mxu0 0.0
    %1287 = vmatprep.subr.mxu0 0.0
    %1288 = vmatpush1.xpose.msra.mxu0 0.0
    %1289 = vmatprep.subr.mxu0 0.0
    %1290 = vmatpush1.xpose.msra.mxu0 0.0
    %1291 = vmatprep.subr.mxu0 0.0
    %1292 = vmatpush1.xpose.msra.mxu0 0.0
    %1293 = vmatprep.subr.mxu0 0.0
    %1294 = vmatpush1.xpose.msra.mxu0 0.0
    %1295 = vmatprep.subr.mxu0 0.0
    %1296 = vmatpush1.xpose.msra.mxu0 0.0
    %1297 = vmatprep.subr.mxu0 0.0
    %1298 = vmatpush1.xpose.msra.mxu0 0.0
    %1299 = vmatprep.subr.mxu0 0.0
    %1300 = vmatpush1.xpose.msra.mxu0 0.0
    %1301 = vmatprep.subr.mxu0 0.0
    %1302 = vmatpush1.xpose.msra.mxu0 0.0
    %1303 = vmatprep.subr.mxu0 0.0
    %1304 = vmatpush1.xpose.msra.mxu0 0.0
    %1305 = vmatprep.subr.mxu0 0.0
    %1306 = vmatpush1.xpose.msra.mxu0 0.0
    %1307 = vmatprep.subr.mxu0 0.0
    %1308 = vmatpush1.xpose.msra.mxu0 0.0
    %1309 = vmatprep.subr.mxu0 0.0
    %1310 = vmatpush1.xpose.msra.mxu0 0.0
    %1311 = vmatprep.mubr.f32.mxu0 0.0
    %1312 = vmatmul.mubr.f32.gmra.mrb[0].mxu0 %v1243
    %v1313 = vpop.f32.mrb[0].mxu0
    %v1314 = vadd.f32 0.0, %v1313
    %v1315 = vpop.f32.mrb[0].mxu0
    %1316 = vdwg.mxu0
    %v1317 = vsel %vm346, %v1236, -inf
    %1318 = vmax.xlane.f32.xlu0 %v1317
    %v1319 = vpop.xlane.xlu0 %1318
    %v1320 = vsel %vm346, %v1314, -inf
    %1321 = vmax.xlane.f32.xlu0 %v1320
    %v1322 = vpop.xlane.xlu0 %1321
    %v1323 = vsub.f32 %v1236, %v1319
    %v1324 = vsub.f32 %v1314, %v1322
    %v1325 = vmul.f32 %v1323, 1.442695
    %v1326 = vpow.pop %v1325
    %v1327 = vmul.f32 %v1324, 1.442695
    %v1328 = vpow.pop %v1327
    %v1329 = vsel %vm346, %v1326, 0.0
    %1330 = vadd.xlane.f32.xlu0 %v1329
    %v1331 = vpop.xlane.xlu0 %1330
    %v1332 = vsel %vm346, %v1328, 0.0
    %1333 = vadd.xlane.f32.xlu0 %v1332
    %v1334 = vpop.xlane.xlu0 %1333
    %v1335 = vrcp.pop %v1331
    %v1336 = vmul.f32 %v1326, %v1335
    %v1337 = vrcp.pop %v1334
    %v1338 = vmul.f32 %v1328, %v1337
    %1339 = vrot.lane.b32.xlu0 %v333, 112
    %v1340 = vpop.permute.xlu0 %1339
    %v1343 = vsel %vm346, %v1336, 0
    %1345 = vmatprep.subr.mxu0 0.0
    %1346 = vmatpush1.msra.mxu0 %v1340
    %1347 = vmatprep.subr.mxu0 0.0
    %1348 = vmatpush1.msra.mxu0 0.0
    %1349 = vmatprep.subr.mxu0 0.0
    %1350 = vmatpush1.msra.mxu0 0.0
    %1351 = vmatprep.subr.mxu0 0.0
    %1352 = vmatpush1.msra.mxu0 0.0
    %1353 = vmatprep.subr.mxu0 0.0
    %1354 = vmatpush1.msra.mxu0 0.0
    %1355 = vmatprep.subr.mxu0 0.0
    %1356 = vmatpush1.msra.mxu0 0.0
    %1357 = vmatprep.subr.mxu0 0.0
    %1358 = vmatpush1.msra.mxu0 0.0
    %1359 = vmatprep.subr.mxu0 0.0
    %1360 = vmatpush1.msra.mxu0 0.0
    %1361 = vmatprep.subr.mxu0 0.0
    %1362 = vmatpush1.msra.mxu0 0.0
    %1363 = vmatprep.subr.mxu0 0.0
    %1364 = vmatpush1.msra.mxu0 0.0
    %1365 = vmatprep.subr.mxu0 0.0
    %1366 = vmatpush1.msra.mxu0 0.0
    %1367 = vmatprep.subr.mxu0 0.0
    %1368 = vmatpush1.msra.mxu0 0.0
    %1369 = vmatprep.subr.mxu0 0.0
    %1370 = vmatpush1.msra.mxu0 0.0
    %1371 = vmatprep.subr.mxu0 0.0
    %1372 = vmatpush1.msra.mxu0 0.0
    %1373 = vmatprep.subr.mxu0 0.0
    %1374 = vmatpush1.msra.mxu0 0.0
    %1375 = vmatprep.subr.mxu0 0.0
    %1376 = vmatpush1.msra.mxu0 0.0
    %1377 = vmatprep.subr.mxu0 0.0
    %1378 = vmatpush1.msra.mxu0 0.0
    %1379 = vmatprep.subr.mxu0 0.0
    %1380 = vmatpush1.msra.mxu0 0.0
    %1381 = vmatprep.subr.mxu0 0.0
    %1382 = vmatpush1.msra.mxu0 0.0
    %1383 = vmatprep.subr.mxu0 0.0
    %1384 = vmatpush1.msra.mxu0 0.0
    %1385 = vmatprep.subr.mxu0 0.0
    %1386 = vmatpush1.msra.mxu0 0.0
    %1387 = vmatprep.subr.mxu0 0.0
    %1388 = vmatpush1.msra.mxu0 0.0
    %1389 = vmatprep.subr.mxu0 0.0
    %1390 = vmatpush1.msra.mxu0 0.0
    %1391 = vmatprep.subr.mxu0 0.0
    %1392 = vmatpush1.msra.mxu0 0.0
    %1393 = vmatprep.subr.mxu0 0.0
    %1394 = vmatpush1.msra.mxu0 0.0
    %1395 = vmatprep.subr.mxu0 0.0
    %1396 = vmatpush1.msra.mxu0 0.0
    %1397 = vmatprep.subr.mxu0 0.0
    %1398 = vmatpush1.msra.mxu0 0.0
    %1399 = vmatprep.subr.mxu0 0.0
    %1400 = vmatpush1.msra.mxu0 0.0
    %1401 = vmatprep.subr.mxu0 0.0
    %1402 = vmatpush1.msra.mxu0 0.0
    %1403 = vmatprep.subr.mxu0 0.0
    %1404 = vmatpush1.msra.mxu0 0.0
    %1405 = vmatprep.subr.mxu0 0.0
    %1406 = vmatpush1.msra.mxu0 0.0
    %1407 = vmatprep.subr.mxu0 0.0
    %1408 = vmatpush1.msra.mxu0 0.0
    %1409 = vmatprep.mubr.f32.mxu0 0.0
    %1410 = vmatmul.mubr.f32.gmra.mrb[0].mxu0 %v1343
    %v1411 = vpop.f32.mrb[0].mxu0
    %v1412 = vadd.f32 0.0, %v1411
    %v1413 = vpop.f32.mrb[0].mxu0
    %1414 = vdwg.mxu0
    %1415 = vrot.lane.b32.xlu0 %v338, 112
    %v1416 = vpop.permute.xlu0 %1415
    %v1419 = vsel %vm346, %v1338, 0
    %1421 = vmatprep.subr.mxu0 0.0
    %1422 = vmatpush1.msra.mxu0 %v1416
    %1423 = vmatprep.subr.mxu0 0.0
    %1424 = vmatpush1.msra.mxu0 0.0
    %1425 = vmatprep.subr.mxu0 0.0
    %1426 = vmatpush1.msra.mxu0 0.0
    %1427 = vmatprep.subr.mxu0 0.0
    %1428 = vmatpush1.msra.mxu0 0.0
    %1429 = vmatprep.subr.mxu0 0.0
    %1430 = vmatpush1.msra.mxu0 0.0
    %1431 = vmatprep.subr.mxu0 0.0
    %1432 = vmatpush1.msra.mxu0 0.0
    %1433 = vmatprep.subr.mxu0 0.0
    %1434 = vmatpush1.msra.mxu0 0.0
    %1435 = vmatprep.subr.mxu0 0.0
    %1436 = vmatpush1.msra.mxu0 0.0
    %1437 = vmatprep.subr.mxu0 0.0
    %1438 = vmatpush1.msra.mxu0 0.0
    %1439 = vmatprep.subr.mxu0 0.0
    %1440 = vmatpush1.msra.mxu0 0.0
    %1441 = vmatprep.subr.mxu0 0.0
    %1442 = vmatpush1.msra.mxu0 0.0
    %1443 = vmatprep.subr.mxu0 0.0
    %1444 = vmatpush1.msra.mxu0 0.0
    %1445 = vmatprep.subr.mxu0 0.0
    %1446 = vmatpush1.msra.mxu0 0.0
    %1447 = vmatprep.subr.mxu0 0.0
    %1448 = vmatpush1.msra.mxu0 0.0
    %1449 = vmatprep.subr.mxu0 0.0
    %1450 = vmatpush1.msra.mxu0 0.0
    %1451 = vmatprep.subr.mxu0 0.0
    %1452 = vmatpush1.msra.mxu0 0.0
    %1453 = vmatprep.subr.mxu0 0.0
    %1454 = vmatpush1.msra.mxu0 0.0
    %1455 = vmatprep.subr.mxu0 0.0
    %1456 = vmatpush1.msra.mxu0 0.0
    %1457 = vmatprep.subr.mxu0 0.0
    %1458 = vmatpush1.msra.mxu0 0.0
    %1459 = vmatprep.subr.mxu0 0.0
    %1460 = vmatpush1.msra.mxu0 0.0
    %1461 = vmatprep.subr.mxu0 0.0
    %1462 = vmatpush1.msra.mxu0 0.0
    %1463 = vmatprep.subr.mxu0 0.0
    %1464 = vmatpush1.msra.mxu0 0.0
    %1465 = vmatprep.subr.mxu0 0.0
    %1466 = vmatpush1.msra.mxu0 0.0
    %1467 = vmatprep.subr.mxu0 0.0
    %1468 = vmatpush1.msra.mxu0 0.0
    %1469 = vmatprep.subr.mxu0 0.0
    %1470 = vmatpush1.msra.mxu0 0.0
    %1471 = vmatprep.subr.mxu0 0.0
    %1472 = vmatpush1.msra.mxu0 0.0
    %1473 = vmatprep.subr.mxu0 0.0
    %1474 = vmatpush1.msra.mxu0 0.0
    %1475 = vmatprep.subr.mxu0 0.0
    %1476 = vmatpush1.msra.mxu0 0.0
    %1477 = vmatprep.subr.mxu0 0.0
    %1478 = vmatpush1.msra.mxu0 0.0
    %1479 = vmatprep.subr.mxu0 0.0
    %1480 = vmatpush1.msra.mxu0 0.0
    %1481 = vmatprep.subr.mxu0 0.0
    %1482 = vmatpush1.msra.mxu0 0.0
    %1483 = vmatprep.subr.mxu0 0.0
    %1484 = vmatpush1.msra.mxu0 0.0
    %1485 = vmatprep.mubr.f32.mxu0 0.0
    %1486 = vmatmul.mubr.f32.gmra.mrb[0].mxu0 %v1419
    %v1487 = vpop.f32.mrb[0].mxu0
    %v1488 = vadd.f32 0.0, %v1487
    %v1489 = vpop.f32.mrb[0].mxu0
    %1490 = vdwg.mxu0
    %v1492 = vsel %vm346, %v1412, 0
    %v1495 = vsel %vm346, %v1488, 0
    %1497 = vmatprep.subr.mxu0 0.0
    %1498 = vmatpush1.msra.mxu0 %v344
    %1499 = vmatprep.subr.mxu0 0.0
    %1500 = vmatpush1.msra.mxu0 0.0
    %1501 = vmatprep.subr.mxu0 0.0
    %1502 = vmatpush1.msra.mxu0 0.0
    %1503 = vmatprep.subr.mxu0 0.0
    %1504 = vmatpush1.msra.mxu0 0.0
    %1505 = vmatprep.subr.mxu0 0.0
    %1506 = vmatpush1.msra.mxu0 0.0
    %1507 = vmatprep.subr.mxu0 0.0
    %1508 = vmatpush1.msra.mxu0 0.0
    %1509 = vmatprep.subr.mxu0 0.0
    %1510 = vmatpush1.msra.mxu0 0.0
    %1511 = vmatprep.subr.mxu0 0.0
    %1512 = vmatpush1.msra.mxu0 0.0
    %1513 = vmatprep.subr.mxu0 0.0
    %1514 = vmatpush1.msra.mxu0 0.0
    %1515 = vmatprep.subr.mxu0 0.0
    %1516 = vmatpush1.msra.mxu0 0.0
    %1517 = vmatprep.subr.mxu0 0.0
    %1518 = vmatpush1.msra.mxu0 0.0
    %1519 = vmatprep.subr.mxu0 0.0
    %1520 = vmatpush1.msra.mxu0 0.0
    %1521 = vmatprep.subr.mxu0 0.0
    %1522 = vmatpush1.msra.mxu0 0.0
    %1523 = vmatprep.subr.mxu0 0.0
    %1524 = vmatpush1.msra.mxu0 0.0
    %1525 = vmatprep.subr.mxu0 0.0
    %1526 = vmatpush1.msra.mxu0 0.0
    %1527 = vmatprep.subr.mxu0 0.0
    %1528 = vmatpush1.msra.mxu0 0.0
    %1529 = vmatprep.subr.mxu0 0.0
    %1530 = vmatpush1.msra.mxu0 0.0
    %1531 = vmatprep.subr.mxu0 0.0
    %1532 = vmatpush1.msra.mxu0 0.0
    %1533 = vmatprep.subr.mxu0 0.0
    %1534 = vmatpush1.msra.mxu0 0.0
    %1535 = vmatprep.subr.mxu0 0.0
    %1536 = vmatpush1.msra.mxu0 0.0
    %1537 = vmatprep.subr.mxu0 0.0
    %1538 = vmatpush1.msra.mxu0 0.0
    %1539 = vmatprep.subr.mxu0 0.0
    %1540 = vmatpush1.msra.mxu0 0.0
    %1541 = vmatprep.subr.mxu0 0.0
    %1542 = vmatpush1.msra.mxu0 0.0
    %1543 = vmatprep.subr.mxu0 0.0
    %1544 = vmatpush1.msra.mxu0 0.0
    %1545 = vmatprep.subr.mxu0 0.0
    %1546 = vmatpush1.msra.mxu0 0.0
    %1547 = vmatprep.subr.mxu0 0.0
    %1548 = vmatpush1.msra.mxu0 0.0
    %1549 = vmatprep.subr.mxu0 0.0
    %1550 = vmatpush1.msra.mxu0 0.0
    %1551 = vmatprep.subr.mxu0 0.0
    %1552 = vmatpush1.msra.mxu0 0.0
    %1553 = vmatprep.subr.mxu0 0.0
    %1554 = vmatpush1.msra.mxu0 0.0
    %1555 = vmatprep.subr.mxu0 0.0
    %1556 = vmatpush1.msra.mxu0 0.0
    %1557 = vmatprep.subr.mxu0 0.0
    %1558 = vmatpush1.msra.mxu0 0.0
    %1559 = vmatprep.subr.mxu0 0.0
    %1560 = vmatpush1.msra.mxu0 0.0
    %1561 = vmatprep.mubr.f32.mxu0 0.0
    %1562 = vmatmul.mubr.f32.gmra.mrb[0].mxu0 %v1492
    %v1563 = vpop.f32.mrb[0].mxu0
    %v1564 = vadd.f32 0.0, %v1563
    %v1565 = vpop.f32.mrb[0].mxu0
    %1566 = vmatprep.mubr.f32.mxu0 0.0
    %1567 = vmatmul.mubr.f32.gmra.mrb[0].mxu0 %v1495
    %v1568 = vpop.f32.mrb[0].mxu0
    %v1569 = vadd.f32 0.0, %v1568
    %v1570 = vpop.f32.mrb[0].mxu0
    %1571 = vdwg.mxu0
    %v1572 = vadd.f32 %v1153, %v1564
    %v1573 = vadd.f32 %v1158, %v1569
    %1574 = vrot.lane.b32.xlu0 %v163, 104
    %v1575 = vpop.permute.xlu0 %1574
    %1576 = vrot.lane.b32.xlu0 %v242, 104
    %v1577 = vpop.permute.xlu0 %1576
    %v1578 = vsel %vm346, %v1575, 0
    %v1580 = vsel %vm346, %v1577, 0
    %1582 = vmatprep.subr.mxu0 0.0
    %1583 = vmatpush1.xpose.msra.mxu0 %v1580
    %1584 = vmatprep.subr.mxu0 0.0
    %1585 = vmatpush1.xpose.msra.mxu0 0.0
    %1586 = vmatprep.subr.mxu0 0.0
    %1587 = vmatpush1.xpose.msra.mxu0 0.0
    %1588 = vmatprep.subr.mxu0 0.0
    %1589 = vmatpush1.xpose.msra.mxu0 0.0
    %1590 = vmatprep.subr.mxu0 0.0
    %1591 = vmatpush1.xpose.msra.mxu0 0.0
    %1592 = vmatprep.subr.mxu0 0.0
    %1593 = vmatpush1.xpose.msra.mxu0 0.0
    %1594 = vmatprep.subr.mxu0 0.0
    %1595 = vmatpush1.xpose.msra.mxu0 0.0
    %1596 = vmatprep.subr.mxu0 0.0
    %1597 = vmatpush1.xpose.msra.mxu0 0.0
    %1598 = vmatprep.subr.mxu0 0.0
    %1599 = vmatpush1.xpose.msra.mxu0 0.0
    %1600 = vmatprep.subr.mxu0 0.0
    %1601 = vmatpush1.xpose.msra.mxu0 0.0
    %1602 = vmatprep.subr.mxu0 0.0
    %1603 = vmatpush1.xpose.msra.mxu0 0.0
    %1604 = vmatprep.subr.mxu0 0.0
    %1605 = vmatpush1.xpose.msra.mxu0 0.0
    %1606 = vmatprep.subr.mxu0 0.0
    %1607 = vmatpush1.xpose.msra.mxu0 0.0
    %1608 = vmatprep.subr.mxu0 0.0
    %1609 = vmatpush1.xpose.msra.mxu0 0.0
    %1610 = vmatprep.subr.mxu0 0.0
    %1611 = vmatpush1.xpose.msra.mxu0 0.0
    %1612 = vmatprep.subr.mxu0 0.0
    %1613 = vmatpush1.xpose.msra.mxu0 0.0
    %1614 = vmatprep.subr.mxu0 0.0
    %1615 = vmatpush1.xpose.msra.mxu0 0.0
    %1616 = vmatprep.subr.mxu0 0.0
    %1617 = vmatpush1.xpose.msra.mxu0 0.0
    %1618 = vmatprep.subr.mxu0 0.0
    %1619 = vmatpush1.xpose.msra.mxu0 0.0
    %1620 = vmatprep.subr.mxu0 0.0
    %1621 = vmatpush1.xpose.msra.mxu0 0.0
    %1622 = vmatprep.subr.mxu0 0.0
    %1623 = vmatpush1.xpose.msra.mxu0 0.0
    %1624 = vmatprep.subr.mxu0 0.0
    %1625 = vmatpush1.xpose.msra.mxu0 0.0
    %1626 = vmatprep.subr.mxu0 0.0
    %1627 = vmatpush1.xpose.msra.mxu0 0.0
    %1628 = vmatprep.subr.mxu0 0.0
    %1629 = vmatpush1.xpose.msra.mxu0 0.0
    %1630 = vmatprep.subr.mxu0 0.0
    %1631 = vmatpush1.xpose.msra.mxu0 0.0
    %1632 = vmatprep.subr.mxu0 0.0
    %1633 = vmatpush1.xpose.msra.mxu0 0.0
    %1634 = vmatprep.subr.mxu0 0.0
    %1635 = vmatpush1.xpose.msra.mxu0 0.0
    %1636 = vmatprep.subr.mxu0 0.0
    %1637 = vmatpush1.xpose.msra.mxu0 0.0
    %1638 = vmatprep.subr.mxu0 0.0
    %1639 = vmatpush1.xpose.msra.mxu0 0.0
    %1640 = vmatprep.subr.mxu0 0.0
    %1641 = vmatpush1.xpose.msra.mxu0 0.0
    %1642 = vmatprep.subr.mxu0 0.0
    %1643 = vmatpush1.xpose.msra.mxu0 0.0
    %1644 = vmatprep.subr.mxu0 0.0
    %1645 = vmatpush1.xpose.msra.mxu0 0.0
    %1646 = vmatprep.mubr.f32.mxu0 0.0
    %1647 = vmatmul.mubr.f32.gmra.mrb[0].mxu0 %v1578
    %v1648 = vpop.f32.mrb[0].mxu0
    %v1649 = vadd.f32 0.0, %v1648
    %v1650 = vpop.f32.mrb[0].mxu0
    %1651 = vdwg.mxu0
    %1652 = vrot.lane.b32.xlu0 %v164, 104
    %v1653 = vpop.permute.xlu0 %1652
    %1654 = vrot.lane.b32.xlu0 %v247, 104
    %v1655 = vpop.permute.xlu0 %1654
    %v1656 = vsel %vm346, %v1653, 0
    %v1658 = vsel %vm346, %v1655, 0
    %1660 = vmatprep.subr.mxu0 0.0
    %1661 = vmatpush1.xpose.msra.mxu0 %v1658
    %1662 = vmatprep.subr.mxu0 0.0
    %1663 = vmatpush1.xpose.msra.mxu0 0.0
    %1664 = vmatprep.subr.mxu0 0.0
    %1665 = vmatpush1.xpose.msra.mxu0 0.0
    %1666 = vmatprep.subr.mxu0 0.0
    %1667 = vmatpush1.xpose.msra.mxu0 0.0
    %1668 = vmatprep.subr.mxu0 0.0
    %1669 = vmatpush1.xpose.msra.mxu0 0.0
    %1670 = vmatprep.subr.mxu0 0.0
    %1671 = vmatpush1.xpose.msra.mxu0 0.0
    %1672 = vmatprep.subr.mxu0 0.0
    %1673 = vmatpush1.xpose.msra.mxu0 0.0
    %1674 = vmatprep.subr.mxu0 0.0
    %1675 = vmatpush1.xpose.msra.mxu0 0.0
    %1676 = vmatprep.subr.mxu0 0.0
    %1677 = vmatpush1.xpose.msra.mxu0 0.0
    %1678 = vmatprep.subr.mxu0 0.0
    %1679 = vmatpush1.xpose.msra.mxu0 0.0
    %1680 = vmatprep.subr.mxu0 0.0
    %1681 = vmatpush1.xpose.msra.mxu0 0.0
    %1682 = vmatprep.subr.mxu0 0.0
    %1683 = vmatpush1.xpose.msra.mxu0 0.0
    %1684 = vmatprep.subr.mxu0 0.0
    %1685 = vmatpush1.xpose.msra.mxu0 0.0
    %1686 = vmatprep.subr.mxu0 0.0
    %1687 = vmatpush1.xpose.msra.mxu0 0.0
    %1688 = vmatprep.subr.mxu0 0.0
    %1689 = vmatpush1.xpose.msra.mxu0 0.0
    %1690 = vmatprep.subr.mxu0 0.0
    %1691 = vmatpush1.xpose.msra.mxu0 0.0
    %1692 = vmatprep.subr.mxu0 0.0
    %1693 = vmatpush1.xpose.msra.mxu0 0.0
    %1694 = vmatprep.subr.mxu0 0.0
    %1695 = vmatpush1.xpose.msra.mxu0 0.0
    %1696 = vmatprep.subr.mxu0 0.0
    %1697 = vmatpush1.xpose.msra.mxu0 0.0
    %1698 = vmatprep.subr.mxu0 0.0
    %1699 = vmatpush1.xpose.msra.mxu0 0.0
    %1700 = vmatprep.subr.mxu0 0.0
    %1701 = vmatpush1.xpose.msra.mxu0 0.0
    %1702 = vmatprep.subr.mxu0 0.0
    %1703 = vmatpush1.xpose.msra.mxu0 0.0
    %1704 = vmatprep.subr.mxu0 0.0
    %1705 = vmatpush1.xpose.msra.mxu0 0.0
    %1706 = vmatprep.subr.mxu0 0.0
    %1707 = vmatpush1.xpose.msra.mxu0 0.0
    %1708 = vmatprep.subr.mxu0 0.0
    %1709 = vmatpush1.xpose.msra.mxu0 0.0
    %1710 = vmatprep.subr.mxu0 0.0
    %1711 = vmatpush1.xpose.msra.mxu0 0.0
    %1712 = vmatprep.subr.mxu0 0.0
    %1713 = vmatpush1.xpose.msra.mxu0 0.0
    %1714 = vmatprep.subr.mxu0 0.0
    %1715 = vmatpush1.xpose.msra.mxu0 0.0
    %1716 = vmatprep.subr.mxu0 0.0
    %1717 = vmatpush1.xpose.msra.mxu0 0.0
    %1718 = vmatprep.subr.mxu0 0.0
    %1719 = vmatpush1.xpose.msra.mxu0 0.0
    %1720 = vmatprep.subr.mxu0 0.0
    %1721 = vmatpush1.xpose.msra.mxu0 0.0
    %1722 = vmatprep.subr.mxu0 0.0
    %1723 = vmatpush1.xpose.msra.mxu0 0.0
    %1724 = vmatprep.mubr.f32.mxu0 0.0
    %1725 = vmatmul.mubr.f32.gmra.mrb[0].mxu0 %v1656
    %v1726 = vpop.f32.mrb[0].mxu0
    %v1727 = vadd.f32 0.0, %v1726
    %v1728 = vpop.f32.mrb[0].mxu0
    %1729 = vdwg.mxu0
    %v1730 = vsel %vm346, %v1649, -inf
    %1731 = vmax.xlane.f32.xlu0 %v1730
    %v1732 = vpop.xlane.xlu0 %1731
    %v1733 = vsel %vm346, %v1727, -inf
    %1734 = vmax.xlane.f32.xlu0 %v1733
    %v1735 = vpop.xlane.xlu0 %1734
    %v1736 = vsub.f32 %v1649, %v1732
    %v1737 = vsub.f32 %v1727, %v1735
    %v1738 = vmul.f32 %v1736, 1.442695
    %v1739 = vpow.pop %v1738
    %v1740 = vmul.f32 %v1737, 1.442695
    %v1741 = vpow.pop %v1740
    %v1742 = vsel %vm346, %v1739, 0.0
    %1743 = vadd.xlane.f32.xlu0 %v1742
    %v1744 = vpop.xlane.xlu0 %1743
    %v1745 = vsel %vm346, %v1741, 0.0
    %1746 = vadd.xlane.f32.xlu0 %v1745
    %v1747 = vpop.xlane.xlu0 %1746
    %v1748 = vrcp.pop %v1744
    %v1749 = vmul.f32 %v1739, %v1748
    %v1750 = vrcp.pop %v1747
    %v1751 = vmul.f32 %v1741, %v1750
    %1752 = vrot.lane.b32.xlu0 %v333, 104
    %v1753 = vpop.permute.xlu0 %1752
    %v1756 = vsel %vm346, %v1749, 0
    %1758 = vmatprep.subr.mxu0 0.0
    %1759 = vmatpush1.msra.mxu0 %v1753
    %1760 = vmatprep.subr.mxu0 0.0
    %1761 = vmatpush1.msra.mxu0 0.0
    %1762 = vmatprep.subr.mxu0 0.0
    %1763 = vmatpush1.msra.mxu0 0.0
    %1764 = vmatprep.subr.mxu0 0.0
    %1765 = vmatpush1.msra.mxu0 0.0
    %1766 = vmatprep.subr.mxu0 0.0
    %1767 = vmatpush1.msra.mxu0 0.0
    %1768 = vmatprep.subr.mxu0 0.0
    %1769 = vmatpush1.msra.mxu0 0.0
    %1770 = vmatprep.subr.mxu0 0.0
    %1771 = vmatpush1.msra.mxu0 0.0
    %1772 = vmatprep.subr.mxu0 0.0
    %1773 = vmatpush1.msra.mxu0 0.0
    %1774 = vmatprep.subr.mxu0 0.0
    %1775 = vmatpush1.msra.mxu0 0.0
    %1776 = vmatprep.subr.mxu0 0.0
    %1777 = vmatpush1.msra.mxu0 0.0
    %1778 = vmatprep.subr.mxu0 0.0
    %1779 = vmatpush1.msra.mxu0 0.0
    %1780 = vmatprep.subr.mxu0 0.0
    %1781 = vmatpush1.msra.mxu0 0.0
    %1782 = vmatprep.subr.mxu0 0.0
    %1783 = vmatpush1.msra.mxu0 0.0
    %1784 = vmatprep.subr.mxu0 0.0
    %1785 = vmatpush1.msra.mxu0 0.0
    %1786 = vmatprep.subr.mxu0 0.0
    %1787 = vmatpush1.msra.mxu0 0.0
    %1788 = vmatprep.subr.mxu0 0.0
    %1789 = vmatpush1.msra.mxu0 0.0
    %1790 = vmatprep.subr.mxu0 0.0
    %1791 = vmatpush1.msra.mxu0 0.0
    %1792 = vmatprep.subr.mxu0 0.0
    %1793 = vmatpush1.msra.mxu0 0.0
    %1794 = vmatprep.subr.mxu0 0.0
    %1795 = vmatpush1.msra.mxu0 0.0
    %1796 = vmatprep.subr.mxu0 0.0
    %1797 = vmatpush1.msra.mxu0 0.0
    %1798 = vmatprep.subr.mxu0 0.0
    %1799 = vmatpush1.msra.mxu0 0.0
    %1800 = vmatprep.subr.mxu0 0.0
    %1801 = vmatpush1.msra.mxu0 0.0
    %1802 = vmatprep.subr.mxu0 0.0
    %1803 = vmatpush1.msra.mxu0 0.0
    %1804 = vmatprep.subr.mxu0 0.0
    %1805 = vmatpush1.msra.mxu0 0.0
    %1806 = vmatprep.subr.mxu0 0.0
    %1807 = vmatpush1.msra.mxu0 0.0
    %1808 = vmatprep.subr.mxu0 0.0
    %1809 = vmatpush1.msra.mxu0 0.0
    %1810 = vmatprep.subr.mxu0 0.0
    %1811 = vmatpush1.msra.mxu0 0.0
    %1812 = vmatprep.subr.mxu0 0.0
    %1813 = vmatpush1.msra.mxu0 0.0
    %1814 = vmatprep.subr.mxu0 0.0
    %1815 = vmatpush1.msra.mxu0 0.0
    %1816 = vmatprep.subr.mxu0 0.0
    %1817 = vmatpush1.msra.mxu0 0.0
    %1818 = vmatprep.subr.mxu0 0.0
    %1819 = vmatpush1.msra.mxu0 0.0
    %1820 = vmatprep.subr.mxu0 0.0
    %1821 = vmatpush1.msra.mxu0 0.0
    %1822 = vmatprep.mubr.f32.mxu0 0.0
    %1823 = vmatmul.mubr.f32.gmra.mrb[0].mxu0 %v1756
    %v1824 = vpop.f32.mrb[0].mxu0
    %v1825 = vadd.f32 0.0, %v1824
    %v1826 = vpop.f32.mrb[0].mxu0
    %1827 = vdwg.mxu0
    %1828 = vrot.lane.b32.xlu0 %v338, 104
    %v1829 = vpop.permute.xlu0 %1828
    %v1832 = vsel %vm346, %v1751, 0
    %1834 = vmatprep.subr.mxu0 0.0
    %1835 = vmatpush1.msra.mxu0 %v1829
    %1836 = vmatprep.subr.mxu0 0.0
    %1837 = vmatpush1.msra.mxu0 0.0
    %1838 = vmatprep.subr.mxu0 0.0
    %1839 = vmatpush1.msra.mxu0 0.0
    %1840 = vmatprep.subr.mxu0 0.0
    %1841 = vmatpush1.msra.mxu0 0.0
    %1842 = vmatprep.subr.mxu0 0.0
    %1843 = vmatpush1.msra.mxu0 0.0
    %1844 = vmatprep.subr.mxu0 0.0
    %1845 = vmatpush1.msra.mxu0 0.0
    %1846 = vmatprep.subr.mxu0 0.0
    %1847 = vmatpush1.msra.mxu0 0.0
    %1848 = vmatprep.subr.mxu0 0.0
    %1849 = vmatpush1.msra.mxu0 0.0
    %1850 = vmatprep.subr.mxu0 0.0
    %1851 = vmatpush1.msra.mxu0 0.0
    %1852 = vmatprep.subr.mxu0 0.0
    %1853 = vmatpush1.msra.mxu0 0.0
    %1854 = vmatprep.subr.mxu0 0.0
    %1855 = vmatpush1.msra.mxu0 0.0
    %1856 = vmatprep.subr.mxu0 0.0
    %1857 = vmatpush1.msra.mxu0 0.0
    %1858 = vmatprep.subr.mxu0 0.0
    %1859 = vmatpush1.msra.mxu0 0.0
    %1860 = vmatprep.subr.mxu0 0.0
    %1861 = vmatpush1.msra.mxu0 0.0
    %1862 = vmatprep.subr.mxu0 0.0
    %1863 = vmatpush1.msra.mxu0 0.0
    %1864 = vmatprep.subr.mxu0 0.0
    %1865 = vmatpush1.msra.mxu0 0.0
    %1866 = vmatprep.subr.mxu0 0.0
    %1867 = vmatpush1.msra.mxu0 0.0
    %1868 = vmatprep.subr.mxu0 0.0
    %1869 = vmatpush1.msra.mxu0 0.0
    %1870 = vmatprep.subr.mxu0 0.0
    %1871 = vmatpush1.msra.mxu0 0.0
    %1872 = vmatprep.subr.mxu0 0.0
    %1873 = vmatpush1.msra.mxu0 0.0
    %1874 = vmatprep.subr.mxu0 0.0
    %1875 = vmatpush1.msra.mxu0 0.0
    %1876 = vmatprep.subr.mxu0 0.0
    %1877 = vmatpush1.msra.mxu0 0.0
    %1878 = vmatprep.subr.mxu0 0.0
    %1879 = vmatpush1.msra.mxu0 0.0
    %1880 = vmatprep.subr.mxu0 0.0
    %1881 = vmatpush1.msra.mxu0 0.0
    %1882 = vmatprep.subr.mxu0 0.0
    %1883 = vmatpush1.msra.mxu0 0.0
    %1884 = vmatprep.subr.mxu0 0.0
    %1885 = vmatpush1.msra.mxu0 0.0
    %1886 = vmatprep.subr.mxu0 0.0
    %1887 = vmatpush1.msra.mxu0 0.0
    %1888 = vmatprep.subr.mxu0 0.0
    %1889 = vmatpush1.msra.mxu0 0.0
    %1890 = vmatprep.subr.mxu0 0.0
    %1891 = vmatpush1.msra.mxu0 0.0
    %1892 = vmatprep.subr.mxu0 0.0
    %1893 = vmatpush1.msra.mxu0 0.0
    %1894 = vmatprep.subr.mxu0 0.0
    %1895 = vmatpush1.msra.mxu0 0.0
    %1896 = vmatprep.subr.mxu0 0.0
    %1897 = vmatpush1.msra.mxu0 0.0
    %1898 = vmatprep.mubr.f32.mxu0 0.0
    %1899 = vmatmul.mubr.f32.gmra.mrb[0].mxu0 %v1832
    %v1900 = vpop.f32.mrb[0].mxu0
    %v1901 = vadd.f32 0.0, %v1900
    %v1902 = vpop.f32.mrb[0].mxu0
    %1903 = vdwg.mxu0
    %v1905 = vsel %vm346, %v1825, 0
    %v1908 = vsel %vm346, %v1901, 0
    %1910 = vmatprep.subr.mxu0 0.0
    %1911 = vmatpush1.msra.mxu0 %v345
    %1912 = vmatprep.subr.mxu0 0.0
    %1913 = vmatpush1.msra.mxu0 0.0
    %1914 = vmatprep.subr.mxu0 0.0
    %1915 = vmatpush1.msra.mxu0 0.0
    %1916 = vmatprep.subr.mxu0 0.0
    %1917 = vmatpush1.msra.mxu0 0.0
    %1918 = vmatprep.subr.mxu0 0.0
    %1919 = vmatpush1.msra.mxu0 0.0
    %1920 = vmatprep.subr.mxu0 0.0
    %1921 = vmatpush1.msra.mxu0 0.0
    %1922 = vmatprep.subr.mxu0 0.0
    %1923 = vmatpush1.msra.mxu0 0.0
    %1924 = vmatprep.subr.mxu0 0.0
    %1925 = vmatpush1.msra.mxu0 0.0
    %1926 = vmatprep.subr.mxu0 0.0
    %1927 = vmatpush1.msra.mxu0 0.0
    %1928 = vmatprep.subr.mxu0 0.0
    %1929 = vmatpush1.msra.mxu0 0.0
    %1930 = vmatprep.subr.mxu0 0.0
    %1931 = vmatpush1.msra.mxu0 0.0
    %1932 = vmatprep.subr.mxu0 0.0
    %1933 = vmatpush1.msra.mxu0 0.0
    %1934 = vmatprep.subr.mxu0 0.0
    %1935 = vmatpush1.msra.mxu0 0.0
    %1936 = vmatprep.subr.mxu0 0.0
    %1937 = vmatpush1.msra.mxu0 0.0
    %1938 = vmatprep.subr.mxu0 0.0
    %1939 = vmatpush1.msra.mxu0 0.0
    %1940 = vmatprep.subr.mxu0 0.0
    %1941 = vmatpush1.msra.mxu0 0.0
    %1942 = vmatprep.subr.mxu0 0.0
    %1943 = vmatpush1.msra.mxu0 0.0
    %1944 = vmatprep.subr.mxu0 0.0
    %1945 = vmatpush1.msra.mxu0 0.0
    %1946 = vmatprep.subr.mxu0 0.0
    %1947 = vmatpush1.msra.mxu0 0.0
    %1948 = vmatprep.subr.mxu0 0.0
    %1949 = vmatpush1.msra.mxu0 0.0
    %1950 = vmatprep.subr.mxu0 0.0
    %1951 = vmatpush1.msra.mxu0 0.0
    %1952 = vmatprep.subr.mxu0 0.0
    %1953 = vmatpush1.msra.mxu0 0.0
    %1954 = vmatprep.subr.mxu0 0.0
    %1955 = vmatpush1.msra.mxu0 0.0
    %1956 = vmatprep.subr.mxu0 0.0
    %1957 = vmatpush1.msra.mxu0 0.0
    %1958 = vmatprep.subr.mxu0 0.0
    %1959 = vmatpush1.msra.mxu0 0.0
    %1960 = vmatprep.subr.mxu0 0.0
    %1961 = vmatpush1.msra.mxu0 0.0
    %1962 = vmatprep.subr.mxu0 0.0
    %1963 = vmatpush1.msra.mxu0 0.0
    %1964 = vmatprep.subr.mxu0 0.0
    %1965 = vmatpush1.msra.mxu0 0.0
    %1966 = vmatprep.subr.mxu0 0.0
    %1967 = vmatpush1.msra.mxu0 0.0
    %1968 = vmatprep.subr.mxu0 0.0
    %1969 = vmatpush1.msra.mxu0 0.0
    %1970 = vmatprep.subr.mxu0 0.0
    %1971 = vmatpush1.msra.mxu0 0.0
    %1972 = vmatprep.subr.mxu0 0.0
    %1973 = vmatpush1.msra.mxu0 0.0
    %1974 = vmatprep.mubr.f32.mxu0 0.0
    %1975 = vmatmul.mubr.f32.gmra.mrb[0].mxu0 %v1905
    %v1976 = vpop.f32.mrb[0].mxu0
    %v1977 = vadd.f32 0.0, %v1976
    %v1978 = vpop.f32.mrb[0].mxu0
    %1979 = vmatprep.mubr.f32.mxu0 0.0
    %1980 = vmatmul.mubr.f32.gmra.mrb[0].mxu0 %v1908
    %v1981 = vpop.f32.mrb[0].mxu0
    %v1982 = vadd.f32 0.0, %v1981
    %v1983 = vpop.f32.mrb[0].mxu0
    %1984 = vdwg.mxu0
    %v1985 = vadd.f32 %v1572, %v1977
    %v1986 = vadd.f32 %v1573, %v1982
    %v1987 = vld [vmem:[%s5 + $0x3] sm:$0x1]
    %v1988 = vlaneseq
    %v1989 = vshrl.u32 %v1988, 7
    %v1990 = vsub.s32 0, %v1989
    %v1991 = vrot.slane %v1987, %v1990
    %v1992 = vadd.f32 %v1985, %v1991
    %v1993 = vadd.f32 %v1986, %v1991
    %v1994 = vadd.f32 %v54, %v1992
    %v1995 = vadd.f32 %v55, %v1993
    %v1996 = vld [vmem:[%s12] sm:$0x1]
    %v1997 = vld [vmem:[%s13] sm:$0x1]
    %v1998 = vsel %vm81, %v1994, 0.0
    %1999 = vadd.xlane.f32.xlu0 %v1998
    %v2000 = vpop.xlane.xlu0 %1999
    %v2001 = vsel %vm81, %v1995, 0.0
    %2002 = vadd.xlane.f32.xlu0 %v2001
    %v2003 = vpop.xlane.xlu0 %2002
    %v2004 = vrcp.pop 32.0
    %v2005 = vmul.f32 %v2000, %v2004
    %v2006 = vmul.f32 %v2003, %v2004
    %v2007 = vsub.f32 %v1994, %v2005
    %v2008 = vsub.f32 %v1995, %v2006
    %v2009 = vmul.f32 %v2007, %v2007
    %v2010 = vmul.f32 %v2008, %v2008
    %v2011 = vsel %vm81, %v2009, 0.0
    %2012 = vadd.xlane.f32.xlu0 %v2011
    %v2013 = vpop.xlane.xlu0 %2012
    %v2014 = vsel %vm81, %v2010, 0.0
    %2015 = vadd.xlane.f32.xlu0 %v2014
    %v2016 = vpop.xlane.xlu0 %2015
    %v2017 = vmul.f32 %v2013, %v2004
    %v2018 = vmul.f32 %v2016, %v2004
    %v2019 = vadd.f32 %v2017, 1e-05
    %v2020 = vadd.f32 %v2018, 1e-05
    %v2021 = vrsqrt.pop %v2019
    %v2022 = vrsqrt.pop %v2020
    %v2023 = vmul.f32 %v2007, %v2021
    %v2024 = vmul.f32 %v2008, %v2022
    %v2025 = vlaneseq
    %v2026 = vshrl.u32 %v2025, 7
    %v2027 = vsub.s32 0, %v2026
    %v2028 = vrot.slane %v1996, %v2027
    %v2029 = vmul.f32 %v2023, %v2028
    %v2030 = vmul.f32 %v2024, %v2028
    %v2031 = vlaneseq
    %v2032 = vshrl.u32 %v2031, 7
    %v2033 = vsub.s32 0, %v2032
    %v2034 = vrot.slane %v1997, %v2033
    %v2035 = vadd.f32 %v2029, %v2034
    %v2036 = vadd.f32 %v2030, %v2034
    %v2037 = vadd.f32 %v2035, %v56
    %v2038 = vadd.f32 %v2036, %v57
    %v2039 = vld [vmem:[%s6] sm:$0xff]
    %v2040 = vld [vmem:[%s6 + $0x8] sm:$0xff]
    %v2041 = vld [vmem:[%s6 + $0x10] sm:$0xff]
    %v2042 = vld [vmem:[%s6 + $0x18] sm:$0xff]
    %v2043 = vld [vmem:[%s7] sm:$0x1]
    %v2044 = vlaneseq
    %v2045 = vshrl.u32 %v2044, 7
    %v2046 = vsub.s32 0, %v2045
    %v2047 = vrot.slane %v2043, %v2046
    %v2049 = vsel %vm81, %v2037, 0
    %v2052 = vsel %vm81, %v2038, 0
    %2054 = vmatprep.subr.mxu0 0.0
    %2055 = vmatpush1.msra.mxu0 %v2039
    %2056 = vmatprep.subr.mxu0 0.0
    %2057 = vmatpush1.msra.mxu0 %v2040
    %2058 = vmatprep.subr.mxu0 0.0
    %2059 = vmatpush1.msra.mxu0 %v2041
    %2060 = vmatprep.subr.mxu0 0.0
    %2061 = vmatpush1.msra.mxu0 %v2042
    %2062 = vmatprep.subr.mxu0 0.0
    %2063 = vmatpush1.msra.mxu0 0.0
    %2064 = vmatprep.subr.mxu0 0.0
    %2065 = vmatpush1.msra.mxu0 0.0
    %2066 = vmatprep.subr.mxu0 0.0
    %2067 = vmatpush1.msra.mxu0 0.0
    %2068 = vmatprep.subr.mxu0 0.0
    %2069 = vmatpush1.msra.mxu0 0.0
    %2070 = vmatprep.subr.mxu0 0.0
    %2071 = vmatpush1.msra.mxu0 0.0
    %2072 = vmatprep.subr.mxu0 0.0
    %2073 = vmatpush1.msra.mxu0 0.0
    %2074 = vmatprep.subr.mxu0 0.0
    %2075 = vmatpush1.msra.mxu0 0.0
    %2076 = vmatprep.subr.mxu0 0.0
    %2077 = vmatpush1.msra.mxu0 0.0
    %2078 = vmatprep.subr.mxu0 0.0
    %2079 = vmatpush1.msra.mxu0 0.0
    %2080 = vmatprep.subr.mxu0 0.0
    %2081 = vmatpush1.msra.mxu0 0.0
    %2082 = vmatprep.subr.mxu0 0.0
    %2083 = vmatpush1.msra.mxu0 0.0
    %2084 = vmatprep.subr.mxu0 0.0
    %2085 = vmatpush1.msra.mxu0 0.0
    %2086 = vmatprep.subr.mxu0 0.0
    %2087 = vmatpush1.msra.mxu0 0.0
    %2088 = vmatprep.subr.mxu0 0.0
    %2089 = vmatpush1.msra.mxu0 0.0
    %2090 = vmatprep.subr.mxu0 0.0
    %2091 = vmatpush1.msra.mxu0 0.0
    %2092 = vmatprep.subr.mxu0 0.0
    %2093 = vmatpush1.msra.mxu0 0.0
    %2094 = vmatprep.subr.mxu0 0.0
    %2095 = vmatpush1.msra.mxu0 0.0
    %2096 = vmatprep.subr.mxu0 0.0
    %2097 = vmatpush1.msra.mxu0 0.0
    %2098 = vmatprep.subr.mxu0 0.0
    %2099 = vmatpush1.msra.mxu0 0.0
    %2100 = vmatprep.subr.mxu0 0.0
    %2101 = vmatpush1.msra.mxu0 0.0
    %2102 = vmatprep.subr.mxu0 0.0
    %2103 = vmatpush1.msra.mxu0 0.0
    %2104 = vmatprep.subr.mxu0 0.0
    %2105 = vmatpush1.msra.mxu0 0.0
    %2106 = vmatprep.subr.mxu0 0.0
    %2107 = vmatpush1.msra.mxu0 0.0
    %2108 = vmatprep.subr.mxu0 0.0
    %2109 = vmatpush1.msra.mxu0 0.0
    %2110 = vmatprep.subr.mxu0 0.0
    %2111 = vmatpush1.msra.mxu0 0.0
    %2112 = vmatprep.subr.mxu0 0.0
    %2113 = vmatpush1.msra.mxu0 0.0
    %2114 = vmatprep.subr.mxu0 0.0
    %2115 = vmatpush1.msra.mxu0 0.0
    %2116 = vmatprep.subr.mxu0 0.0
    %2117 = vmatpush1.msra.mxu0 0.0
    %2118 = vmatprep.mubr.f32.mxu0 0.0
    %2119 = vmatmul.mubr.f32.gmra.mrb[0].mxu0 %v2049
    %v2120 = vpop.f32.mrb[0].mxu0
    %v2121 = vadd.f32 %v2047, %v2120
    %v2122 = vpop.f32.mrb[0].mxu0
    %2123 = vmatprep.mubr.f32.mxu0 0.0
    %2124 = vmatmul.mubr.f32.gmra.mrb[0].mxu0 %v2052
    %v2125 = vpop.f32.mrb[0].mxu0
    %v2126 = vadd.f32 %v2047, %v2125
    %v2127 = vpop.f32.mrb[0].mxu0
    %2128 = vdwg.mxu0
    %v2129 = vmul.f32 %v2121, 0.35355338
    %v2130 = vmul.f32 %v2126, 0.35355338
    %s2131 = scalar_lea.vmem %s6, 32
    %v2132 = vld [vmem:[%s2131] sm:$0xff]
    %v2133 = vld [vmem:[%s2131 + $0x8] sm:$0xff]
    %v2134 = vld [vmem:[%s2131 + $0x10] sm:$0xff]
    %v2135 = vld [vmem:[%s2131 + $0x18] sm:$0xff]
    %v2136 = vld [vmem:[%s7 + $0x1] sm:$0x1]
    %v2137 = vlaneseq
    %v2138 = vshrl.u32 %v2137, 7
    %v2139 = vsub.s32 0, %v2138
    %v2140 = vrot.slane %v2136, %v2139
    %v2142 = vsel %vm81, %v66, 0
    %v2145 = vsel %vm81, %v67, 0
    %v2148 = vsel %vm81, %v68, 0
    %v2151 = vsel %vm81, %v69, 0
    %2153 = vmatprep.subr.mxu0 0.0
    %2154 = vmatpush1.msra.mxu0 %v2132
    %2155 = vmatprep.subr.mxu0 0.0
    %2156 = vmatpush1.msra.mxu0 %v2133
    %2157 = vmatprep.subr.mxu0 0.0
    %2158 = vmatpush1.msra.mxu0 %v2134
    %2159 = vmatprep.subr.mxu0 0.0
    %2160 = vmatpush1.msra.mxu0 %v2135
    %2161 = vmatprep.subr.mxu0 0.0
    %2162 = vmatpush1.msra.mxu0 0.0
    %2163 = vmatprep.subr.mxu0 0.0
    %2164 = vmatpush1.msra.mxu0 0.0
    %2165 = vmatprep.subr.mxu0 0.0
    %2166 = vmatpush1.msra.mxu0 0.0
    %2167 = vmatprep.subr.mxu0 0.0
    %2168 = vmatpush1.msra.mxu0 0.0
    %2169 = vmatprep.subr.mxu0 0.0
    %2170 = vmatpush1.msra.mxu0 0.0
    %2171 = vmatprep.subr.mxu0 0.0
    %2172 = vmatpush1.msra.mxu0 0.0
    %2173 = vmatprep.subr.mxu0 0.0
    %2174 = vmatpush1.msra.mxu0 0.0
    %2175 = vmatprep.subr.mxu0 0.0
    %2176 = vmatpush1.msra.mxu0 0.0
    %2177 = vmatprep.subr.mxu0 0.0
    %2178 = vmatpush1.msra.mxu0 0.0
    %2179 = vmatprep.subr.mxu0 0.0
    %2180 = vmatpush1.msra.mxu0 0.0
    %2181 = vmatprep.subr.mxu0 0.0
    %2182 = vmatpush1.msra.mxu0 0.0
    %2183 = vmatprep.subr.mxu0 0.0
    %2184 = vmatpush1.msra.mxu0 0.0
    %2185 = vmatprep.subr.mxu0 0.0
    %2186 = vmatpush1.msra.mxu0 0.0
    %2187 = vmatprep.subr.mxu0 0.0
    %2188 = vmatpush1.msra.mxu0 0.0
    %2189 = vmatprep.subr.mxu0 0.0
    %2190 = vmatpush1.msra.mxu0 0.0
    %2191 = vmatprep.subr.mxu0 0.0
    %2192 = vmatpush1.msra.mxu0 0.0
    %2193 = vmatprep.subr.mxu0 0.0
    %2194 = vmatpush1.msra.mxu0 0.0
    %2195 = vmatprep.subr.mxu0 0.0
    %2196 = vmatpush1.msra.mxu0 0.0
    %2197 = vmatprep.subr.mxu0 0.0
    %2198 = vmatpush1.msra.mxu0 0.0
    %2199 = vmatprep.subr.mxu0 0.0
    %2200 = vmatpush1.msra.mxu0 0.0
    %2201 = vmatprep.subr.mxu0 0.0
    %2202 = vmatpush1.msra.mxu0 0.0
    %2203 = vmatprep.subr.mxu0 0.0
    %2204 = vmatpush1.msra.mxu0 0.0
    %2205 = vmatprep.subr.mxu0 0.0
    %2206 = vmatpush1.msra.mxu0 0.0
    %2207 = vmatprep.subr.mxu0 0.0
    %2208 = vmatpush1.msra.mxu0 0.0
    %2209 = vmatprep.subr.mxu0 0.0
    %2210 = vmatpush1.msra.mxu0 0.0
    %2211 = vmatprep.subr.mxu0 0.0
    %2212 = vmatpush1.msra.mxu0 0.0
    %2213 = vmatprep.subr.mxu0 0.0
    %2214 = vmatpush1.msra.mxu0 0.0
    %2215 = vmatprep.subr.mxu0 0.0
    %2216 = vmatpush1.msra.mxu0 0.0
    %2217 = vmatprep.mubr.f32.mxu0 0.0
    %2218 = vmatmul.mubr.f32.gmra.mrb[0].mxu0 %v2142
    %v2219 = vpop.f32.mrb[0].mxu0
    %v2220 = vadd.f32 %v2140, %v2219
    %v2221 = vpop.f32.mrb[0].mxu0
    %2222 = vmatprep.mubr.f32.mxu0 0.0
    %2223 = vmatmul.mubr.f32.gmra.mrb[0].mxu0 %v2145
    %v2224 = vpop.f32.mrb[0].mxu0
    %v2225 = vadd.f32 %v2140, %v2224
    %v2226 = vpop.f32.mrb[0].mxu0
    %2227 = vmatprep.mubr.f32.mxu0 0.0
    %2228 = vmatmul.mubr.f32.gmra.mrb[0].mxu0 %v2148
    %v2229 = vpop.f32.mrb[0].mxu0
    %v2230 = vadd.f32 %v2140, %v2229
    %v2231 = vpop.f32.mrb[0].mxu0
    %2232 = vmatprep.mubr.f32.mxu0 0.0
    %2233 = vmatmul.mubr.f32.gmra.mrb[0].mxu0 %v2151
    %v2234 = vpop.f32.mrb[0].mxu0
    %v2235 = vadd.f32 %v2140, %v2234
    %v2236 = vpop.f32.mrb[0].mxu0
    %2237 = vdwg.mxu0
    %s2238 = scalar_lea.vmem %s6, 64
    %v2239 = vld [vmem:[%s2238] sm:$0xff]
    %v2240 = vld [vmem:[%s2238 + $0x8] sm:$0xff]
    %v2241 = vld [vmem:[%s2238 + $0x10] sm:$0xff]
    %v2242 = vld [vmem:[%s2238 + $0x18] sm:$0xff]
    %v2243 = vld [vmem:[%s7 + $0x2] sm:$0x1]
    %v2244 = vlaneseq
    %v2245 = vshrl.u32 %v2244, 7
    %v2246 = vsub.s32 0, %v2245
    %v2247 = vrot.slane %v2243, %v2246
    %v2249 = vsel %vm81, %v58, 0
    %v2252 = vsel %vm81, %v59, 0
    %v2255 = vsel %vm81, %v60, 0
    %v2258 = vsel %vm81, %v61, 0
    %2260 = vmatprep.subr.mxu0 0.0
    %2261 = vmatpush1.msra.mxu0 %v2239
    %2262 = vmatprep.subr.mxu0 0.0
    %2263 = vmatpush1.msra.mxu0 %v2240
    %2264 = vmatprep.subr.mxu0 0.0
    %2265 = vmatpush1.msra.mxu0 %v2241
    %2266 = vmatprep.subr.mxu0 0.0
    %2267 = vmatpush1.msra.mxu0 %v2242
    %2268 = vmatprep.subr.mxu0 0.0
    %2269 = vmatpush1.msra.mxu0 0.0
    %2270 = vmatprep.subr.mxu0 0.0
    %2271 = vmatpush1.msra.mxu0 0.0
    %2272 = vmatprep.subr.mxu0 0.0
    %2273 = vmatpush1.msra.mxu0 0.0
    %2274 = vmatprep.subr.mxu0 0.0
    %2275 = vmatpush1.msra.mxu0 0.0
    %2276 = vmatprep.subr.mxu0 0.0
    %2277 = vmatpush1.msra.mxu0 0.0
    %2278 = vmatprep.subr.mxu0 0.0
    %2279 = vmatpush1.msra.mxu0 0.0
    %2280 = vmatprep.subr.mxu0 0.0
    %2281 = vmatpush1.msra.mxu0 0.0
    %2282 = vmatprep.subr.mxu0 0.0
    %2283 = vmatpush1.msra.mxu0 0.0
    %2284 = vmatprep.subr.mxu0 0.0
    %2285 = vmatpush1.msra.mxu0 0.0
    %2286 = vmatprep.subr.mxu0 0.0
    %2287 = vmatpush1.msra.mxu0 0.0
    %2288 = vmatprep.subr.mxu0 0.0
    %2289 = vmatpush1.msra.mxu0 0.0
    %2290 = vmatprep.subr.mxu0 0.0
    %2291 = vmatpush1.msra.mxu0 0.0
    %2292 = vmatprep.subr.mxu0 0.0
    %2293 = vmatpush1.msra.mxu0 0.0
    %2294 = vmatprep.subr.mxu0 0.0
    %2295 = vmatpush1.msra.mxu0 0.0
    %2296 = vmatprep.subr.mxu0 0.0
    %2297 = vmatpush1.msra.mxu0 0.0
    %2298 = vmatprep.subr.mxu0 0.0
    %2299 = vmatpush1.msra.mxu0 0.0
    %2300 = vmatprep.subr.mxu0 0.0
    %2301 = vmatpush1.msra.mxu0 0.0
    %2302 = vmatprep.subr.mxu0 0.0
    %2303 = vmatpush1.msra.mxu0 0.0
    %2304 = vmatprep.subr.mxu0 0.0
    %2305 = vmatpush1.msra.mxu0 0.0
    %2306 = vmatprep.subr.mxu0 0.0
    %2307 = vmatpush1.msra.mxu0 0.0
    %2308 = vmatprep.subr.mxu0 0.0
    %2309 = vmatpush1.msra.mxu0 0.0
    %2310 = vmatprep.subr.mxu0 0.0
    %2311 = vmatpush1.msra.mxu0 0.0
    %2312 = vmatprep.subr.mxu0 0.0
    %2313 = vmatpush1.msra.mxu0 0.0
    %2314 = vmatprep.subr.mxu0 0.0
    %2315 = vmatpush1.msra.mxu0 0.0
    %2316 = vmatprep.subr.mxu0 0.0
    %2317 = vmatpush1.msra.mxu0 0.0
    %2318 = vmatprep.subr.mxu0 0.0
    %2319 = vmatpush1.msra.mxu0 0.0
    %2320 = vmatprep.subr.mxu0 0.0
    %2321 = vmatpush1.msra.mxu0 0.0
    %2322 = vmatprep.subr.mxu0 0.0
    %2323 = vmatpush1.msra.mxu0 0.0
    %2324 = vmatprep.mubr.f32.mxu0 0.0
    %2325 = vmatmul.mubr.f32.gmra.mrb[0].mxu0 %v2249
    %v2326 = vpop.f32.mrb[0].mxu0
    %v2327 = vadd.f32 %v2247, %v2326
    %v2328 = vpop.f32.mrb[0].mxu0
    %2329 = vmatprep.mubr.f32.mxu0 0.0
    %2330 = vmatmul.mubr.f32.gmra.mrb[0].mxu0 %v2252
    %v2331 = vpop.f32.mrb[0].mxu0
    %v2332 = vadd.f32 %v2247, %v2331
    %v2333 = vpop.f32.mrb[0].mxu0
    %2334 = vmatprep.mubr.f32.mxu0 0.0
    %2335 = vmatmul.mubr.f32.gmra.mrb[0].mxu0 %v2255
    %v2336 = vpop.f32.mrb[0].mxu0
    %v2337 = vadd.f32 %v2247, %v2336
    %v2338 = vpop.f32.mrb[0].mxu0
    %2339 = vmatprep.mubr.f32.mxu0 0.0
    %2340 = vmatmul.mubr.f32.gmra.mrb[0].mxu0 %v2258
    %v2341 = vpop.f32.mrb[0].mxu0
    %v2342 = vadd.f32 %v2247, %v2341
    %v2343 = vpop.f32.mrb[0].mxu0
    %2344 = vdwg.mxu0
    %s2345 = scalar_lea.vmem %s6, 96
    %v2346 = vld [vmem:[%s2345] sm:$0xff]
    %v2347 = vld [vmem:[%s2345 + $0x8] sm:$0xff]
    %v2348 = vld [vmem:[%s2345 + $0x10] sm:$0xff]
    %v2349 = vld [vmem:[%s2345 + $0x18] sm:$0xff]
    %v2351 = vsel %vm346, %v2129, 0
    %v2354 = vsel %vm346, %v2220, 0
    %v2357 = vsel %vm346, %v2225, 0
    %2359 = vmatprep.subr.mxu0 0.0
    %2360 = vmatpush1.xpose.msra.mxu0 %v2354
    %2361 = vmatprep.subr.mxu0 0.0
    %2362 = vmatpush1.xpose.msra.mxu0 %v2357
    %2363 = vmatprep.subr.mxu0 0.0
    %2364 = vmatpush1.xpose.msra.mxu0 0.0
    %2365 = vmatprep.subr.mxu0 0.0
    %2366 = vmatpush1.xpose.msra.mxu0 0.0
    %2367 = vmatprep.subr.mxu0 0.0
    %2368 = vmatpush1.xpose.msra.mxu0 0.0
    %2369 = vmatprep.subr.mxu0 0.0
    %2370 = vmatpush1.xpose.msra.mxu0 0.0
    %2371 = vmatprep.subr.mxu0 0.0
    %2372 = vmatpush1.xpose.msra.mxu0 0.0
    %2373 = vmatprep.subr.mxu0 0.0
    %2374 = vmatpush1.xpose.msra.mxu0 0.0
    %2375 = vmatprep.subr.mxu0 0.0
    %2376 = vmatpush1.xpose.msra.mxu0 0.0
    %2377 = vmatprep.subr.mxu0 0.0
    %2378 = vmatpush1.xpose.msra.mxu0 0.0
    %2379 = vmatprep.subr.mxu0 0.0
    %2380 = vmatpush1.xpose.msra.mxu0 0.0
    %2381 = vmatprep.subr.mxu0 0.0
    %2382 = vmatpush1.xpose.msra.mxu0 0.0
    %2383 = vmatprep.subr.mxu0 0.0
    %2384 = vmatpush1.xpose.msra.mxu0 0.0
    %2385 = vmatprep.subr.mxu0 0.0
    %2386 = vmatpush1.xpose.msra.mxu0 0.0
    %2387 = vmatprep.subr.mxu0 0.0
    %2388 = vmatpush1.xpose.msra.mxu0 0.0
    %2389 = vmatprep.subr.mxu0 0.0
    %2390 = vmatpush1.xpose.msra.mxu0 0.0
    %2391 = vmatprep.subr.mxu0 0.0
    %2392 = vmatpush1.xpose.msra.mxu0 0.0
    %2393 = vmatprep.subr.mxu0 0.0
    %2394 = vmatpush1.xpose.msra.mxu0 0.0
    %2395 = vmatprep.subr.mxu0 0.0
    %2396 = vmatpush1.xpose.msra.mxu0 0.0
    %2397 = vmatprep.subr.mxu0 0.0
    %2398 = vmatpush1.xpose.msra.mxu0 0.0
    %2399 = vmatprep.subr.mxu0 0.0
    %2400 = vmatpush1.xpose.msra.mxu0 0.0
    %2401 = vmatprep.subr.mxu0 0.0
    %2402 = vmatpush1.xpose.msra.mxu0 0.0
    %2403 = vmatprep.subr.mxu0 0.0
    %2404 = vmatpush1.xpose.msra.mxu0 0.0
    %2405 = vmatprep.subr.mxu0 0.0
    %2406 = vmatpush1.xpose.msra.mxu0 0.0
    %2407 = vmatprep.subr.mxu0 0.0
    %2408 = vmatpush1.xpose.msra.mxu0 0.0
    %2409 = vmatprep.subr.mxu0 0.0
    %2410 = vmatpush1.xpose.msra.mxu0 0.0
    %2411 = vmatprep.subr.mxu0 0.0
    %2412 = vmatpush1.xpose.msra.mxu0 0.0
    %2413 = vmatprep.subr.mxu0 0.0
    %2414 = vmatpush1.xpose.msra.mxu0 0.0
    %2415 = vmatprep.subr.mxu0 0.0
    %2416 = vmatpush1.xpose.msra.mxu0 0.0
    %2417 = vmatprep.subr.mxu0 0.0
    %2418 = vmatpush1.xpose.msra.mxu0 0.0
    %2419 = vmatprep.subr.mxu0 0.0
    %2420 = vmatpush1.xpose.msra.mxu0 0.0
    %2421 = vmatprep.subr.mxu0 0.0
    %2422 = vmatpush1.xpose.msra.mxu0 0.0
    %2423 = vmatprep.mubr.f32.mxu0 0.0
    %2424 = vmatmul.mubr.f32.gmra.mrb[0].mxu0 %v2351
    %v2425 = vpop.f32.mrb[0].mxu0
    %v2426 = vadd.f32 0.0, %v2425
    %v2427 = vpop.f32.mrb[0].mxu0
    %2428 = vdwg.mxu0
    %v2430 = vsel %vm346, %v2130, 0
    %v2433 = vsel %vm346, %v2230, 0
    %v2436 = vsel %vm346, %v2235, 0
    %2438 = vmatprep.subr.mxu0 0.0
    %2439 = vmatpush1.xpose.msra.mxu0 %v2433
    %2440 = vmatprep.subr.mxu0 0.0
    %2441 = vmatpush1.xpose.msra.mxu0 %v2436
    %2442 = vmatprep.subr.mxu0 0.0
    %2443 = vmatpush1.xpose.msra.mxu0 0.0
    %2444 = vmatprep.subr.mxu0 0.0
    %2445 = vmatpush1.xpose.msra.mxu0 0.0
    %2446 = vmatprep.subr.mxu0 0.0
    %2447 = vmatpush1.xpose.msra.mxu0 0.0
    %2448 = vmatprep.subr.mxu0 0.0
    %2449 = vmatpush1.xpose.msra.mxu0 0.0
    %2450 = vmatprep.subr.mxu0 0.0
    %2451 = vmatpush1.xpose.msra.mxu0 0.0
    %2452 = vmatprep.subr.mxu0 0.0
    %2453 = vmatpush1.xpose.msra.mxu0 0.0
    %2454 = vmatprep.subr.mxu0 0.0
    %2455 = vmatpush1.xpose.msra.mxu0 0.0
    %2456 = vmatprep.subr.mxu0 0.0
    %2457 = vmatpush1.xpose.msra.mxu0 0.0
    %2458 = vmatprep.subr.mxu0 0.0
    %2459 = vmatpush1.xpose.msra.mxu0 0.0
    %2460 = vmatprep.subr.mxu0 0.0
    %2461 = vmatpush1.xpose.msra.mxu0 0.0
    %2462 = vmatprep.subr.mxu0 0.0
    %2463 = vmatpush1.xpose.msra.mxu0 0.0
    %2464 = vmatprep.subr.mxu0 0.0
    %2465 = vmatpush1.xpose.msra.mxu0 0.0
    %2466 = vmatprep.subr.mxu0 0.0
    %2467 = vmatpush1.xpose.msra.mxu0 0.0
    %2468 = vmatprep.subr.mxu0 0.0
    %2469 = vmatpush1.xpose.msra.mxu0 0.0
    %2470 = vmatprep.subr.mxu0 0.0
    %2471 = vmatpush1.xpose.msra.mxu0 0.0
    %2472 = vmatprep.subr.mxu0 0.0
    %2473 = vmatpush1.xpose.msra.mxu0 0.0
    %2474 = vmatprep.subr.mxu0 0.0
    %2475 = vmatpush1.xpose.msra.mxu0 0.0
    %2476 = vmatprep.subr.mxu0 0.0
    %2477 = vmatpush1.xpose.msra.mxu0 0.0
    %2478 = vmatprep.subr.mxu0 0.0
    %2479 = vmatpush1.xpose.msra.mxu0 0.0
    %2480 = vmatprep.subr.mxu0 0.0
    %2481 = vmatpush1.xpose.msra.mxu0 0.0
    %2482 = vmatprep.subr.mxu0 0.0
    %2483 = vmatpush1.xpose.msra.mxu0 0.0
    %2484 = vmatprep.subr.mxu0 0.0
    %2485 = vmatpush1.xpose.msra.mxu0 0.0
    %2486 = vmatprep.subr.mxu0 0.0
    %2487 = vmatpush1.xpose.msra.mxu0 0.0
    %2488 = vmatprep.subr.mxu0 0.0
    %2489 = vmatpush1.xpose.msra.mxu0 0.0
    %2490 = vmatprep.subr.mxu0 0.0
    %2491 = vmatpush1.xpose.msra.mxu0 0.0
    %2492 = vmatprep.subr.mxu0 0.0
    %2493 = vmatpush1.xpose.msra.mxu0 0.0
    %2494 = vmatprep.subr.mxu0 0.0
    %2495 = vmatpush1.xpose.msra.mxu0 0.0
    %2496 = vmatprep.subr.mxu0 0.0
    %2497 = vmatpush1.xpose.msra.mxu0 0.0
    %2498 = vmatprep.subr.mxu0 0.0
    %2499 = vmatpush1.xpose.msra.mxu0 0.0
    %2500 = vmatprep.subr.mxu0 0.0
    %2501 = vmatpush1.xpose.msra.mxu0 0.0
    %2502 = vmatprep.mubr.f32.mxu0 0.0
    %2503 = vmatmul.mubr.f32.gmra.mrb[0].mxu0 %v2430
    %v2504 = vpop.f32.mrb[0].mxu0
    %v2505 = vadd.f32 0.0, %v2504
    %v2506 = vpop.f32.mrb[0].mxu0
    %2507 = vdwg.mxu0
    %vm2508 = vcmask 130048
    %v2509 = vsel %vm2508, %v2426, -inf
    %2510 = vmax.xlane.f32.xlu0 %v2509
    %v2511 = vpop.xlane.xlu0 %2510
    %v2512 = vsel %vm2508, %v2505, -inf
    %2513 = vmax.xlane.f32.xlu0 %v2512
    %v2514 = vpop.xlane.xlu0 %2513
    %v2515 = vsub.f32 %v2426, %v2511
    %v2516 = vsub.f32 %v2505, %v2514
    %v2517 = vmul.f32 %v2515, 1.442695
    %v2518 = vpow.pop %v2517
    %v2519 = vmul.f32 %v2516, 1.442695
    %v2520 = vpow.pop %v2519
    %v2521 = vsel %vm2508, %v2518, 0.0
    %2522 = vadd.xlane.f32.xlu0 %v2521
    %v2523 = vpop.xlane.xlu0 %2522
    %v2524 = vsel %vm2508, %v2520, 0.0
    %2525 = vadd.xlane.f32.xlu0 %v2524
    %v2526 = vpop.xlane.xlu0 %2525
    %v2527 = vrcp.pop %v2523
    %v2528 = vmul.f32 %v2518, %v2527
    %v2529 = vrcp.pop %v2526
    %v2530 = vmul.f32 %v2520, %v2529
    %v2532 = vsel %vm2508, %v2528, 0
    %2534 = vmatprep.subr.mxu0 0.0
    %2535 = vmatpush1.msra.mxu0 %v2327
    %2536 = vmatprep.subr.mxu0 0.0
    %2537 = vmatpush1.msra.mxu0 %v2332
    %2538 = vmatprep.subr.mxu0 0.0
    %2539 = vmatpush1.msra.mxu0 0.0
    %2540 = vmatprep.subr.mxu0 0.0
    %2541 = vmatpush1.msra.mxu0 0.0
    %2542 = vmatprep.subr.mxu0 0.0
    %2543 = vmatpush1.msra.mxu0 0.0
    %2544 = vmatprep.subr.mxu0 0.0
    %2545 = vmatpush1.msra.mxu0 0.0
    %2546 = vmatprep.subr.mxu0 0.0
    %2547 = vmatpush1.msra.mxu0 0.0
    %2548 = vmatprep.subr.mxu0 0.0
    %2549 = vmatpush1.msra.mxu0 0.0
    %2550 = vmatprep.subr.mxu0 0.0
    %2551 = vmatpush1.msra.mxu0 0.0
    %2552 = vmatprep.subr.mxu0 0.0
    %2553 = vmatpush1.msra.mxu0 0.0
    %2554 = vmatprep.subr.mxu0 0.0
    %2555 = vmatpush1.msra.mxu0 0.0
    %2556 = vmatprep.subr.mxu0 0.0
    %2557 = vmatpush1.msra.mxu0 0.0
    %2558 = vmatprep.subr.mxu0 0.0
    %2559 = vmatpush1.msra.mxu0 0.0
    %2560 = vmatprep.subr.mxu0 0.0
    %2561 = vmatpush1.msra.mxu0 0.0
    %2562 = vmatprep.subr.mxu0 0.0
    %2563 = vmatpush1.msra.mxu0 0.0
    %2564 = vmatprep.subr.mxu0 0.0
    %2565 = vmatpush1.msra.mxu0 0.0
    %2566 = vmatprep.subr.mxu0 0.0
    %2567 = vmatpush1.msra.mxu0 0.0
    %2568 = vmatprep.subr.mxu0 0.0
    %2569 = vmatpush1.msra.mxu0 0.0
    %2570 = vmatprep.subr.mxu0 0.0
    %2571 = vmatpush1.msra.mxu0 0.0
    %2572 = vmatprep.subr.mxu0 0.0
    %2573 = vmatpush1.msra.mxu0 0.0
    %2574 = vmatprep.subr.mxu0 0.0
    %2575 = vmatpush1.msra.mxu0 0.0
    %2576 = vmatprep.subr.mxu0 0.0
    %2577 = vmatpush1.msra.mxu0 0.0
    %2578 = vmatprep.subr.mxu0 0.0
    %2579 = vmatpush1.msra.mxu0 0.0
    %2580 = vmatprep.subr.mxu0 0.0
    %2581 = vmatpush1.msra.mxu0 0.0
    %2582 = vmatprep.subr.mxu0 0.0
    %2583 = vmatpush1.msra.mxu0 0.0
    %2584 = vmatprep.subr.mxu0 0.0
    %2585 = vmatpush1.msra.mxu0 0.0
    %2586 = vmatprep.subr.mxu0 0.0
    %2587 = vmatpush1.msra.mxu0 0.0
    %2588 = vmatprep.subr.mxu0 0.0
    %2589 = vmatpush1.msra.mxu0 0.0
    %2590 = vmatprep.subr.mxu0 0.0
    %2591 = vmatpush1.msra.mxu0 0.0
    %2592 = vmatprep.subr.mxu0 0.0
    %2593 = vmatpush1.msra.mxu0 0.0
    %2594 = vmatprep.subr.mxu0 0.0
    %2595 = vmatpush1.msra.mxu0 0.0
    %2596 = vmatprep.subr.mxu0 0.0
    %2597 = vmatpush1.msra.mxu0 0.0
    %2598 = vmatprep.mubr.f32.mxu0 0.0
    %2599 = vmatmul.mubr.f32.gmra.mrb[0].mxu0 %v2532
    %v2600 = vpop.f32.mrb[0].mxu0
    %v2601 = vadd.f32 0.0, %v2600
    %v2602 = vpop.f32.mrb[0].mxu0
    %2603 = vdwg.mxu0
    %v2605 = vsel %vm2508, %v2530, 0
    %2607 = vmatprep.subr.mxu0 0.0
    %2608 = vmatpush1.msra.mxu0 %v2337
    %2609 = vmatprep.subr.mxu0 0.0
    %2610 = vmatpush1.msra.mxu0 %v2342
    %2611 = vmatprep.subr.mxu0 0.0
    %2612 = vmatpush1.msra.mxu0 0.0
    %2613 = vmatprep.subr.mxu0 0.0
    %2614 = vmatpush1.msra.mxu0 0.0
    %2615 = vmatprep.subr.mxu0 0.0
    %2616 = vmatpush1.msra.mxu0 0.0
    %2617 = vmatprep.subr.mxu0 0.0
    %2618 = vmatpush1.msra.mxu0 0.0
    %2619 = vmatprep.subr.mxu0 0.0
    %2620 = vmatpush1.msra.mxu0 0.0
    %2621 = vmatprep.subr.mxu0 0.0
    %2622 = vmatpush1.msra.mxu0 0.0
    %2623 = vmatprep.subr.mxu0 0.0
    %2624 = vmatpush1.msra.mxu0 0.0
    %2625 = vmatprep.subr.mxu0 0.0
    %2626 = vmatpush1.msra.mxu0 0.0
    %2627 = vmatprep.subr.mxu0 0.0
    %2628 = vmatpush1.msra.mxu0 0.0
    %2629 = vmatprep.subr.mxu0 0.0
    %2630 = vmatpush1.msra.mxu0 0.0
    %2631 = vmatprep.subr.mxu0 0.0
    %2632 = vmatpush1.msra.mxu0 0.0
    %2633 = vmatprep.subr.mxu0 0.0
    %2634 = vmatpush1.msra.mxu0 0.0
    %2635 = vmatprep.subr.mxu0 0.0
    %2636 = vmatpush1.msra.mxu0 0.0
    %2637 = vmatprep.subr.mxu0 0.0
    %2638 = vmatpush1.msra.mxu0 0.0
    %2639 = vmatprep.subr.mxu0 0.0
    %2640 = vmatpush1.msra.mxu0 0.0
    %2641 = vmatprep.subr.mxu0 0.0
    %2642 = vmatpush1.msra.mxu0 0.0
    %2643 = vmatprep.subr.mxu0 0.0
    %2644 = vmatpush1.msra.mxu0 0.0
    %2645 = vmatprep.subr.mxu0 0.0
    %2646 = vmatpush1.msra.mxu0 0.0
    %2647 = vmatprep.subr.mxu0 0.0
    %2648 = vmatpush1.msra.mxu0 0.0
    %2649 = vmatprep.subr.mxu0 0.0
    %2650 = vmatpush1.msra.mxu0 0.0
    %2651 = vmatprep.subr.mxu0 0.0
    %2652 = vmatpush1.msra.mxu0 0.0
    %2653 = vmatprep.subr.mxu0 0.0
    %2654 = vmatpush1.msra.mxu0 0.0
    %2655 = vmatprep.subr.mxu0 0.0
    %2656 = vmatpush1.msra.mxu0 0.0
    %2657 = vmatprep.subr.mxu0 0.0
    %2658 = vmatpush1.msra.mxu0 0.0
    %2659 = vmatprep.subr.mxu0 0.0
    %2660 = vmatpush1.msra.mxu0 0.0
    %2661 = vmatprep.subr.mxu0 0.0
    %2662 = vmatpush1.msra.mxu0 0.0
    %2663 = vmatprep.subr.mxu0 0.0
    %2664 = vmatpush1.msra.mxu0 0.0
    %2665 = vmatprep.subr.mxu0 0.0
    %2666 = vmatpush1.msra.mxu0 0.0
    %2667 = vmatprep.subr.mxu0 0.0
    %2668 = vmatpush1.msra.mxu0 0.0
    %2669 = vmatprep.subr.mxu0 0.0
    %2670 = vmatpush1.msra.mxu0 0.0
    %2671 = vmatprep.mubr.f32.mxu0 0.0
    %2672 = vmatmul.mubr.f32.gmra.mrb[0].mxu0 %v2605
    %v2673 = vpop.f32.mrb[0].mxu0
    %v2674 = vadd.f32 0.0, %v2673
    %v2675 = vpop.f32.mrb[0].mxu0
    %2676 = vdwg.mxu0
    %2677 = vrot.lane.b32.xlu0 %v2129, 120
    %v2678 = vpop.permute.xlu0 %2677
    %2679 = vrot.lane.b32.xlu0 %v2220, 120
    %v2680 = vpop.permute.xlu0 %2679
    %2681 = vrot.lane.b32.xlu0 %v2225, 120
    %v2682 = vpop.permute.xlu0 %2681
    %v2683 = vsel %vm346, %v2678, 0
    %v2685 = vsel %vm346, %v2680, 0
    %v2687 = vsel %vm346, %v2682, 0
    %2689 = vmatprep.subr.mxu0 0.0
    %2690 = vmatpush1.xpose.msra.mxu0 %v2685
    %2691 = vmatprep.subr.mxu0 0.0
    %2692 = vmatpush1.xpose.msra.mxu0 %v2687
    %2693 = vmatprep.subr.mxu0 0.0
    %2694 = vmatpush1.xpose.msra.mxu0 0.0
    %2695 = vmatprep.subr.mxu0 0.0
    %2696 = vmatpush1.xpose.msra.mxu0 0.0
    %2697 = vmatprep.subr.mxu0 0.0
    %2698 = vmatpush1.xpose.msra.mxu0 0.0
    %2699 = vmatprep.subr.mxu0 0.0
    %2700 = vmatpush1.xpose.msra.mxu0 0.0
    %2701 = vmatprep.subr.mxu0 0.0
    %2702 = vmatpush1.xpose.msra.mxu0 0.0
    %2703 = vmatprep.subr.mxu0 0.0
    %2704 = vmatpush1.xpose.msra.mxu0 0.0
    %2705 = vmatprep.subr.mxu0 0.0
    %2706 = vmatpush1.xpose.msra.mxu0 0.0
    %2707 = vmatprep.subr.mxu0 0.0
    %2708 = vmatpush1.xpose.msra.mxu0 0.0
    %2709 = vmatprep.subr.mxu0 0.0
    %2710 = vmatpush1.xpose.msra.mxu0 0.0
    %2711 = vmatprep.subr.mxu0 0.0
    %2712 = vmatpush1.xpose.msra.mxu0 0.0
    %2713 = vmatprep.subr.mxu0 0.0
    %2714 = vmatpush1.xpose.msra.mxu0 0.0
    %2715 = vmatprep.subr.mxu0 0.0
    %2716 = vmatpush1.xpose.msra.mxu0 0.0
    %2717 = vmatprep.subr.mxu0 0.0
    %2718 = vmatpush1.xpose.msra.mxu0 0.0
    %2719 = vmatprep.subr.mxu0 0.0
    %2720 = vmatpush1.xpose.msra.mxu0 0.0
    %2721 = vmatprep.subr.mxu0 0.0
    %2722 = vmatpush1.xpose.msra.mxu0 0.0
    %2723 = vmatprep.subr.mxu0 0.0
    %2724 = vmatpush1.xpose.msra.mxu0 0.0
    %2725 = vmatprep.subr.mxu0 0.0
    %2726 = vmatpush1.xpose.msra.mxu0 0.0
    %2727 = vmatprep.subr.mxu0 0.0
    %2728 = vmatpush1.xpose.msra.mxu0 0.0
    %2729 = vmatprep.subr.mxu0 0.0
    %2730 = vmatpush1.xpose.msra.mxu0 0.0
    %2731 = vmatprep.subr.mxu0 0.0
    %2732 = vmatpush1.xpose.msra.mxu0 0.0
    %2733 = vmatprep.subr.mxu0 0.0
    %2734 = vmatpush1.xpose.msra.mxu0 0.0
    %2735 = vmatprep.subr.mxu0 0.0
    %2736 = vmatpush1.xpose.msra.mxu0 0.0
    %2737 = vmatprep.subr.mxu0 0.0
    %2738 = vmatpush1.xpose.msra.mxu0 0.0
    %2739 = vmatprep.subr.mxu0 0.0
    %2740 = vmatpush1.xpose.msra.mxu0 0.0
    %2741 = vmatprep.subr.mxu0 0.0
    %2742 = vmatpush1.xpose.msra.mxu0 0.0
    %2743 = vmatprep.subr.mxu0 0.0
    %2744 = vmatpush1.xpose.msra.mxu0 0.0
    %2745 = vmatprep.subr.mxu0 0.0
    %2746 = vmatpush1.xpose.msra.mxu0 0.0
    %2747 = vmatprep.subr.mxu0 0.0
    %2748 = vmatpush1.xpose.msra.mxu0 0.0
    %2749 = vmatprep.subr.mxu0 0.0
    %2750 = vmatpush1.xpose.msra.mxu0 0.0
    %2751 = vmatprep.subr.mxu0 0.0
    %2752 = vmatpush1.xpose.msra.mxu0 0.0
    %2753 = vmatprep.mubr.f32.mxu0 0.0
    %2754 = vmatmul.mubr.f32.gmra.mrb[0].mxu0 %v2683
    %v2755 = vpop.f32.mrb[0].mxu0
    %v2756 = vadd.f32 0.0, %v2755
    %v2757 = vpop.f32.mrb[0].mxu0
    %2758 = vdwg.mxu0
    %2759 = vrot.lane.b32.xlu0 %v2130, 120
    %v2760 = vpop.permute.xlu0 %2759
    %2761 = vrot.lane.b32.xlu0 %v2230, 120
    %v2762 = vpop.permute.xlu0 %2761
    %2763 = vrot.lane.b32.xlu0 %v2235, 120
    %v2764 = vpop.permute.xlu0 %2763
    %v2765 = vsel %vm346, %v2760, 0
    %v2767 = vsel %vm346, %v2762, 0
    %v2769 = vsel %vm346, %v2764, 0
    %2771 = vmatprep.subr.mxu0 0.0
    %2772 = vmatpush1.xpose.msra.mxu0 %v2767
    %2773 = vmatprep.subr.mxu0 0.0
    %2774 = vmatpush1.xpose.msra.mxu0 %v2769
    %2775 = vmatprep.subr.mxu0 0.0
    %2776 = vmatpush1.xpose.msra.mxu0 0.0
    %2777 = vmatprep.subr.mxu0 0.0
    %2778 = vmatpush1.xpose.msra.mxu0 0.0
    %2779 = vmatprep.subr.mxu0 0.0
    %2780 = vmatpush1.xpose.msra.mxu0 0.0
    %2781 = vmatprep.subr.mxu0 0.0
    %2782 = vmatpush1.xpose.msra.mxu0 0.0
    %2783 = vmatprep.subr.mxu0 0.0
    %2784 = vmatpush1.xpose.msra.mxu0 0.0
    %2785 = vmatprep.subr.mxu0 0.0
    %2786 = vmatpush1.xpose.msra.mxu0 0.0
    %2787 = vmatprep.subr.mxu0 0.0
    %2788 = vmatpush1.xpose.msra.mxu0 0.0
    %2789 = vmatprep.subr.mxu0 0.0
    %2790 = vmatpush1.xpose.msra.mxu0 0.0
    %2791 = vmatprep.subr.mxu0 0.0
    %2792 = vmatpush1.xpose.msra.mxu0 0.0
    %2793 = vmatprep.subr.mxu0 0.0
    %2794 = vmatpush1.xpose.msra.mxu0 0.0
    %2795 = vmatprep.subr.mxu0 0.0
    %2796 = vmatpush1.xpose.msra.mxu0 0.0
    %2797 = vmatprep.subr.mxu0 0.0
    %2798 = vmatpush1.xpose.msra.mxu0 0.0
    %2799 = vmatprep.subr.mxu0 0.0
    %2800 = vmatpush1.xpose.msra.mxu0 0.0
    %2801 = vmatprep.subr.mxu0 0.0
    %2802 = vmatpush1.xpose.msra.mxu0 0.0
    %2803 = vmatprep.subr.mxu0 0.0
    %2804 = vmatpush1.xpose.msra.mxu0 0.0
    %2805 = vmatprep.subr.mxu0 0.0
    %2806 = vmatpush1.xpose.msra.mxu0 0.0
    %2807 = vmatprep.subr.mxu0 0.0
    %2808 = vmatpush1.xpose.msra.mxu0 0.0
    %2809 = vmatprep.subr.mxu0 0.0
    %2810 = vmatpush1.xpose.msra.mxu0 0.0
    %2811 = vmatprep.subr.mxu0 0.0
    %2812 = vmatpush1.xpose.msra.mxu0 0.0
    %2813 = vmatprep.subr.mxu0 0.0
    %2814 = vmatpush1.xpose.msra.mxu0 0.0
    %2815 = vmatprep.subr.mxu0 0.0
    %2816 = vmatpush1.xpose.msra.mxu0 0.0
    %2817 = vmatprep.subr.mxu0 0.0
    %2818 = vmatpush1.xpose.msra.mxu0 0.0
    %2819 = vmatprep.subr.mxu0 0.0
    %2820 = vmatpush1.xpose.msra.mxu0 0.0
    %2821 = vmatprep.subr.mxu0 0.0
    %2822 = vmatpush1.xpose.msra.mxu0 0.0
    %2823 = vmatprep.subr.mxu0 0.0
    %2824 = vmatpush1.xpose.msra.mxu0 0.0
    %2825 = vmatprep.subr.mxu0 0.0
    %2826 = vmatpush1.xpose.msra.mxu0 0.0
    %2827 = vmatprep.subr.mxu0 0.0
    %2828 = vmatpush1.xpose.msra.mxu0 0.0
    %2829 = vmatprep.subr.mxu0 0.0
    %2830 = vmatpush1.xpose.msra.mxu0 0.0
    %2831 = vmatprep.subr.mxu0 0.0
    %2832 = vmatpush1.xpose.msra.mxu0 0.0
    %2833 = vmatprep.subr.mxu0 0.0
    %2834 = vmatpush1.xpose.msra.mxu0 0.0
    %2835 = vmatprep.mubr.f32.mxu0 0.0
    %2836 = vmatmul.mubr.f32.gmra.mrb[0].mxu0 %v2765
    %v2837 = vpop.f32.mrb[0].mxu0
    %v2838 = vadd.f32 0.0, %v2837
    %v2839 = vpop.f32.mrb[0].mxu0
    %2840 = vdwg.mxu0
    %v2841 = vsel %vm2508, %v2756, -inf
    %2842 = vmax.xlane.f32.xlu0 %v2841
    %v2843 = vpop.xlane.xlu0 %2842
    %v2844 = vsel %vm2508, %v2838, -inf
    %2845 = vmax.xlane.f32.xlu0 %v2844
    %v2846 = vpop.xlane.xlu0 %2845
    %v2847 = vsub.f32 %v2756, %v2843
    %v2848 = vsub.f32 %v2838, %v2846
    %v2849 = vmul.f32 %v2847, 1.442695
    %v2850 = vpow.pop %v2849
    %v2851 = vmul.f32 %v2848, 1.442695
    %v2852 = vpow.pop %v2851
    %v2853 = vsel %vm2508, %v2850, 0.0
    %2854 = vadd.xlane.f32.xlu0 %v2853
    %v2855 = vpop.xlane.xlu0 %2854
    %v2856 = vsel %vm2508, %v2852, 0.0
    %2857 = vadd.xlane.f32.xlu0 %v2856
    %v2858 = vpop.xlane.xlu0 %2857
    %v2859 = vrcp.pop %v2855
    %v2860 = vmul.f32 %v2850, %v2859
    %v2861 = vrcp.pop %v2858
    %v2862 = vmul.f32 %v2852, %v2861
    %2865 = vrot.lane.b32.xlu0 %v2327, 120
    %v2866 = vpop.permute.xlu0 %2865
    %2867 = vrot.lane.b32.xlu0 %v2332, 120
    %v2868 = vpop.permute.xlu0 %2867
    %v2872 = vsel %vm2508, %v2860, 0
    %2874 = vmatprep.subr.mxu0 0.0
    %2875 = vmatpush1.msra.mxu0 %v2866
    %2876 = vmatprep.subr.mxu0 0.0
    %2877 = vmatpush1.msra.mxu0 %v2868
    %2878 = vmatprep.subr.mxu0 0.0
    %2879 = vmatpush1.msra.mxu0 0.0
    %2880 = vmatprep.subr.mxu0 0.0
    %2881 = vmatpush1.msra.mxu0 0.0
    %2882 = vmatprep.subr.mxu0 0.0
    %2883 = vmatpush1.msra.mxu0 0.0
    %2884 = vmatprep.subr.mxu0 0.0
    %2885 = vmatpush1.msra.mxu0 0.0
    %2886 = vmatprep.subr.mxu0 0.0
    %2887 = vmatpush1.msra.mxu0 0.0
    %2888 = vmatprep.subr.mxu0 0.0
    %2889 = vmatpush1.msra.mxu0 0.0
    %2890 = vmatprep.subr.mxu0 0.0
    %2891 = vmatpush1.msra.mxu0 0.0
    %2892 = vmatprep.subr.mxu0 0.0
    %2893 = vmatpush1.msra.mxu0 0.0
    %2894 = vmatprep.subr.mxu0 0.0
    %2895 = vmatpush1.msra.mxu0 0.0
    %2896 = vmatprep.subr.mxu0 0.0
    %2897 = vmatpush1.msra.mxu0 0.0
    %2898 = vmatprep.subr.mxu0 0.0
    %2899 = vmatpush1.msra.mxu0 0.0
    %2900 = vmatprep.subr.mxu0 0.0
    %2901 = vmatpush1.msra.mxu0 0.0
    %2902 = vmatprep.subr.mxu0 0.0
    %2903 = vmatpush1.msra.mxu0 0.0
    %2904 = vmatprep.subr.mxu0 0.0
    %2905 = vmatpush1.msra.mxu0 0.0
    %2906 = vmatprep.subr.mxu0 0.0
    %2907 = vmatpush1.msra.mxu0 0.0
    %2908 = vmatprep.subr.mxu0 0.0
    %2909 = vmatpush1.msra.mxu0 0.0
    %2910 = vmatprep.subr.mxu0 0.0
    %2911 = vmatpush1.msra.mxu0 0.0
    %2912 = vmatprep.subr.mxu0 0.0
    %2913 = vmatpush1.msra.mxu0 0.0
    %2914 = vmatprep.subr.mxu0 0.0
    %2915 = vmatpush1.msra.mxu0 0.0
    %2916 = vmatprep.subr.mxu0 0.0
    %2917 = vmatpush1.msra.mxu0 0.0
    %2918 = vmatprep.subr.mxu0 0.0
    %2919 = vmatpush1.msra.mxu0 0.0
    %2920 = vmatprep.subr.mxu0 0.0
    %2921 = vmatpush1.msra.mxu0 0.0
    %2922 = vmatprep.subr.mxu0 0.0
    %2923 = vmatpush1.msra.mxu0 0.0
    %2924 = vmatprep.subr.mxu0 0.0
    %2925 = vmatpush1.msra.mxu0 0.0
    %2926 = vmatprep.subr.mxu0 0.0
    %2927 = vmatpush1.msra.mxu0 0.0
    %2928 = vmatprep.subr.mxu0 0.0
    %2929 = vmatpush1.msra.mxu0 0.0
    %2930 = vmatprep.subr.mxu0 0.0
    %2931 = vmatpush1.msra.mxu0 0.0
    %2932 = vmatprep.subr.mxu0 0.0
    %2933 = vmatpush1.msra.mxu0 0.0
    %2934 = vmatprep.subr.mxu0 0.0
    %2935 = vmatpush1.msra.mxu0 0.0
    %2936 = vmatprep.subr.mxu0 0.0
    %2937 = vmatpush1.msra.mxu0 0.0
    %2938 = vmatprep.mubr.f32.mxu0 0.0
    %2939 = vmatmul.mubr.f32.gmra.mrb[0].mxu0 %v2872
    %v2940 = vpop.f32.mrb[0].mxu0
    %v2941 = vadd.f32 0.0, %v2940
    %v2942 = vpop.f32.mrb[0].mxu0
    %2943 = vdwg.mxu0
    %2946 = vrot.lane.b32.xlu0 %v2337, 120
    %v2947 = vpop.permute.xlu0 %2946
    %2948 = vrot.lane.b32.xlu0 %v2342, 120
    %v2949 = vpop.permute.xlu0 %2948
    %v2953 = vsel %vm2508, %v2862, 0
    %2955 = vmatprep.subr.mxu0 0.0
    %2956 = vmatpush1.msra.mxu0 %v2947
    %2957 = vmatprep.subr.mxu0 0.0
    %2958 = vmatpush1.msra.mxu0 %v2949
    %2959 = vmatprep.subr.mxu0 0.0
    %2960 = vmatpush1.msra.mxu0 0.0
    %2961 = vmatprep.subr.mxu0 0.0
    %2962 = vmatpush1.msra.mxu0 0.0
    %2963 = vmatprep.subr.mxu0 0.0
    %2964 = vmatpush1.msra.mxu0 0.0
    %2965 = vmatprep.subr.mxu0 0.0
    %2966 = vmatpush1.msra.mxu0 0.0
    %2967 = vmatprep.subr.mxu0 0.0
    %2968 = vmatpush1.msra.mxu0 0.0
    %2969 = vmatprep.subr.mxu0 0.0
    %2970 = vmatpush1.msra.mxu0 0.0
    %2971 = vmatprep.subr.mxu0 0.0
    %2972 = vmatpush1.msra.mxu0 0.0
    %2973 = vmatprep.subr.mxu0 0.0
    %2974 = vmatpush1.msra.mxu0 0.0
    %2975 = vmatprep.subr.mxu0 0.0
    %2976 = vmatpush1.msra.mxu0 0.0
    %2977 = vmatprep.subr.mxu0 0.0
    %2978 = vmatpush1.msra.mxu0 0.0
    %2979 = vmatprep.subr.mxu0 0.0
    %2980 = vmatpush1.msra.mxu0 0.0
    %2981 = vmatprep.subr.mxu0 0.0
    %2982 = vmatpush1.msra.mxu0 0.0
    %2983 = vmatprep.subr.mxu0 0.0
    %2984 = vmatpush1.msra.mxu0 0.0
    %2985 = vmatprep.subr.mxu0 0.0
    %2986 = vmatpush1.msra.mxu0 0.0
    %2987 = vmatprep.subr.mxu0 0.0
    %2988 = vmatpush1.msra.mxu0 0.0
    %2989 = vmatprep.subr.mxu0 0.0
    %2990 = vmatpush1.msra.mxu0 0.0
    %2991 = vmatprep.subr.mxu0 0.0
    %2992 = vmatpush1.msra.mxu0 0.0
    %2993 = vmatprep.subr.mxu0 0.0
    %2994 = vmatpush1.msra.mxu0 0.0
    %2995 = vmatprep.subr.mxu0 0.0
    %2996 = vmatpush1.msra.mxu0 0.0
    %2997 = vmatprep.subr.mxu0 0.0
    %2998 = vmatpush1.msra.mxu0 0.0
    %2999 = vmatprep.subr.mxu0 0.0
    %3000 = vmatpush1.msra.mxu0 0.0
    %3001 = vmatprep.subr.mxu0 0.0
    %3002 = vmatpush1.msra.mxu0 0.0
    %3003 = vmatprep.subr.mxu0 0.0
    %3004 = vmatpush1.msra.mxu0 0.0
    %3005 = vmatprep.subr.mxu0 0.0
    %3006 = vmatpush1.msra.mxu0 0.0
    %3007 = vmatprep.subr.mxu0 0.0
    %3008 = vmatpush1.msra.mxu0 0.0
    %3009 = vmatprep.subr.mxu0 0.0
    %3010 = vmatpush1.msra.mxu0 0.0
    %3011 = vmatprep.subr.mxu0 0.0
    %3012 = vmatpush1.msra.mxu0 0.0
    %3013 = vmatprep.subr.mxu0 0.0
    %3014 = vmatpush1.msra.mxu0 0.0
    %3015 = vmatprep.subr.mxu0 0.0
    %3016 = vmatpush1.msra.mxu0 0.0
    %3017 = vmatprep.subr.mxu0 0.0
    %3018 = vmatpush1.msra.mxu0 0.0
    %3019 = vmatprep.mubr.f32.mxu0 0.0
    %3020 = vmatmul.mubr.f32.gmra.mrb[0].mxu0 %v2953
    %v3021 = vpop.f32.mrb[0].mxu0
    %v3022 = vadd.f32 0.0, %v3021
    %v3023 = vpop.f32.mrb[0].mxu0
    %3024 = vdwg.mxu0
    %v3026 = vsel %vm346, %v2941, 0
    %v3029 = vsel %vm346, %v3022, 0
    %3031 = vmatprep.subr.mxu0 0.0
    %3032 = vmatpush1.msra.mxu0 %v2347
    %3033 = vmatprep.subr.mxu0 0.0
    %3034 = vmatpush1.msra.mxu0 0.0
    %3035 = vmatprep.subr.mxu0 0.0
    %3036 = vmatpush1.msra.mxu0 0.0
    %3037 = vmatprep.subr.mxu0 0.0
    %3038 = vmatpush1.msra.mxu0 0.0
    %3039 = vmatprep.subr.mxu0 0.0
    %3040 = vmatpush1.msra.mxu0 0.0
    %3041 = vmatprep.subr.mxu0 0.0
    %3042 = vmatpush1.msra.mxu0 0.0
    %3043 = vmatprep.subr.mxu0 0.0
    %3044 = vmatpush1.msra.mxu0 0.0
    %3045 = vmatprep.subr.mxu0 0.0
    %3046 = vmatpush1.msra.mxu0 0.0
    %3047 = vmatprep.subr.mxu0 0.0
    %3048 = vmatpush1.msra.mxu0 0.0
    %3049 = vmatprep.subr.mxu0 0.0
    %3050 = vmatpush1.msra.mxu0 0.0
    %3051 = vmatprep.subr.mxu0 0.0
    %3052 = vmatpush1.msra.mxu0 0.0
    %3053 = vmatprep.subr.mxu0 0.0
    %3054 = vmatpush1.msra.mxu0 0.0
    %3055 = vmatprep.subr.mxu0 0.0
    %3056 = vmatpush1.msra.mxu0 0.0
    %3057 = vmatprep.subr.mxu0 0.0
    %3058 = vmatpush1.msra.mxu0 0.0
    %3059 = vmatprep.subr.mxu0 0.0
    %3060 = vmatpush1.msra.mxu0 0.0
    %3061 = vmatprep.subr.mxu0 0.0
    %3062 = vmatpush1.msra.mxu0 0.0
    %3063 = vmatprep.subr.mxu0 0.0
    %3064 = vmatpush1.msra.mxu0 0.0
    %3065 = vmatprep.subr.mxu0 0.0
    %3066 = vmatpush1.msra.mxu0 0.0
    %3067 = vmatprep.subr.mxu0 0.0
    %3068 = vmatpush1.msra.mxu0 0.0
    %3069 = vmatprep.subr.mxu0 0.0
    %3070 = vmatpush1.msra.mxu0 0.0
    %3071 = vmatprep.subr.mxu0 0.0
    %3072 = vmatpush1.msra.mxu0 0.0
    %3073 = vmatprep.subr.mxu0 0.0
    %3074 = vmatpush1.msra.mxu0 0.0
    %3075 = vmatprep.subr.mxu0 0.0
    %3076 = vmatpush1.msra.mxu0 0.0
    %3077 = vmatprep.subr.mxu0 0.0
    %3078 = vmatpush1.msra.mxu0 0.0
    %3079 = vmatprep.subr.mxu0 0.0
    %3080 = vmatpush1.msra.mxu0 0.0
    %3081 = vmatprep.subr.mxu0 0.0
    %3082 = vmatpush1.msra.mxu0 0.0
    %3083 = vmatprep.subr.mxu0 0.0
    %3084 = vmatpush1.msra.mxu0 0.0
    %3085 = vmatprep.subr.mxu0 0.0
    %3086 = vmatpush1.msra.mxu0 0.0
    %3087 = vmatprep.subr.mxu0 0.0
    %3088 = vmatpush1.msra.mxu0 0.0
    %3089 = vmatprep.subr.mxu0 0.0
    %3090 = vmatpush1.msra.mxu0 0.0
    %3091 = vmatprep.subr.mxu0 0.0
    %3092 = vmatpush1.msra.mxu0 0.0
    %3093 = vmatprep.subr.mxu0 0.0
    %3094 = vmatpush1.msra.mxu0 0.0
    %3095 = vmatprep.mubr.f32.mxu0 0.0
    %3096 = vmatmul.mubr.f32.gmra.mrb[0].mxu0 %v3026
    %v3097 = vpop.f32.mrb[0].mxu0
    %v3098 = vadd.f32 0.0, %v3097
    %v3099 = vpop.f32.mrb[0].mxu0
    %3100 = vmatprep.mubr.f32.mxu0 0.0
    %3101 = vmatmul.mubr.f32.gmra.mrb[0].mxu0 %v3029
    %v3102 = vpop.f32.mrb[0].mxu0
    %v3103 = vadd.f32 0.0, %v3102
    %v3104 = vpop.f32.mrb[0].mxu0
    %3105 = vdwg.mxu0
    %v3107 = vsel %vm346, %v2601, 0
    %v3110 = vsel %vm346, %v2674, 0
    %3112 = vmatprep.subr.mxu0 0.0
    %3113 = vmatpush1.msra.mxu0 %v2346
    %3114 = vmatprep.subr.mxu0 0.0
    %3115 = vmatpush1.msra.mxu0 0.0
    %3116 = vmatprep.subr.mxu0 0.0
    %3117 = vmatpush1.msra.mxu0 0.0
    %3118 = vmatprep.subr.mxu0 0.0
    %3119 = vmatpush1.msra.mxu0 0.0
    %3120 = vmatprep.subr.mxu0 0.0
    %3121 = vmatpush1.msra.mxu0 0.0
    %3122 = vmatprep.subr.mxu0 0.0
    %3123 = vmatpush1.msra.mxu0 0.0
    %3124 = vmatprep.subr.mxu0 0.0
    %3125 = vmatpush1.msra.mxu0 0.0
    %3126 = vmatprep.subr.mxu0 0.0
    %3127 = vmatpush1.msra.mxu0 0.0
    %3128 = vmatprep.subr.mxu0 0.0
    %3129 = vmatpush1.msra.mxu0 0.0
    %3130 = vmatprep.subr.mxu0 0.0
    %3131 = vmatpush1.msra.mxu0 0.0
    %3132 = vmatprep.subr.mxu0 0.0
    %3133 = vmatpush1.msra.mxu0 0.0
    %3134 = vmatprep.subr.mxu0 0.0
    %3135 = vmatpush1.msra.mxu0 0.0
    %3136 = vmatprep.subr.mxu0 0.0
    %3137 = vmatpush1.msra.mxu0 0.0
    %3138 = vmatprep.subr.mxu0 0.0
    %3139 = vmatpush1.msra.mxu0 0.0
    %3140 = vmatprep.subr.mxu0 0.0
    %3141 = vmatpush1.msra.mxu0 0.0
    %3142 = vmatprep.subr.mxu0 0.0
    %3143 = vmatpush1.msra.mxu0 0.0
    %3144 = vmatprep.subr.mxu0 0.0
    %3145 = vmatpush1.msra.mxu0 0.0
    %3146 = vmatprep.subr.mxu0 0.0
    %3147 = vmatpush1.msra.mxu0 0.0
    %3148 = vmatprep.subr.mxu0 0.0
    %3149 = vmatpush1.msra.mxu0 0.0
    %3150 = vmatprep.subr.mxu0 0.0
    %3151 = vmatpush1.msra.mxu0 0.0
    %3152 = vmatprep.subr.mxu0 0.0
    %3153 = vmatpush1.msra.mxu0 0.0
    %3154 = vmatprep.subr.mxu0 0.0
    %3155 = vmatpush1.msra.mxu0 0.0
    %3156 = vmatprep.subr.mxu0 0.0
    %3157 = vmatpush1.msra.mxu0 0.0
    %3158 = vmatprep.subr.mxu0 0.0
    %3159 = vmatpush1.msra.mxu0 0.0
    %3160 = vmatprep.subr.mxu0 0.0
    %3161 = vmatpush1.msra.mxu0 0.0
    %3162 = vmatprep.subr.mxu0 0.0
    %3163 = vmatpush1.msra.mxu0 0.0
    %3164 = vmatprep.subr.mxu0 0.0
    %3165 = vmatpush1.msra.mxu0 0.0
    %3166 = vmatprep.subr.mxu0 0.0
    %3167 = vmatpush1.msra.mxu0 0.0
    %3168 = vmatprep.subr.mxu0 0.0
    %3169 = vmatpush1.msra.mxu0 0.0
    %3170 = vmatprep.subr.mxu0 0.0
    %3171 = vmatpush1.msra.mxu0 0.0
    %3172 = vmatprep.subr.mxu0 0.0
    %3173 = vmatpush1.msra.mxu0 0.0
    %3174 = vmatprep.subr.mxu0 0.0
    %3175 = vmatpush1.msra.mxu0 0.0
    %3176 = vmatprep.mubr.f32.mxu0 0.0
    %3177 = vmatmul.mubr.f32.gmra.mrb[0].mxu0 %v3107
    %v3178 = vpop.f32.mrb[0].mxu0
    %v3179 = vadd.f32 %v3098, %v3178
    %v3180 = vpop.f32.mrb[0].mxu0
    %3181 = vmatprep.mubr.f32.mxu0 0.0
    %3182 = vmatmul.mubr.f32.gmra.mrb[0].mxu0 %v3110
    %v3183 = vpop.f32.mrb[0].mxu0
    %v3184 = vadd.f32 %v3103, %v3183
    %v3185 = vpop.f32.mrb[0].mxu0
    %3186 = vdwg.mxu0
    %3187 = vrot.lane.b32.xlu0 %v2129, 112
    %v3188 = vpop.permute.xlu0 %3187
    %3189 = vrot.lane.b32.xlu0 %v2220, 112
    %v3190 = vpop.permute.xlu0 %3189
    %3191 = vrot.lane.b32.xlu0 %v2225, 112
    %v3192 = vpop.permute.xlu0 %3191
    %v3193 = vsel %vm346, %v3188, 0
    %v3195 = vsel %vm346, %v3190, 0
    %v3197 = vsel %vm346, %v3192, 0
    %3199 = vmatprep.subr.mxu0 0.0
    %3200 = vmatpush1.xpose.msra.mxu0 %v3195
    %3201 = vmatprep.subr.mxu0 0.0
    %3202 = vmatpush1.xpose.msra.mxu0 %v3197
    %3203 = vmatprep.subr.mxu0 0.0
    %3204 = vmatpush1.xpose.msra.mxu0 0.0
    %3205 = vmatprep.subr.mxu0 0.0
    %3206 = vmatpush1.xpose.msra.mxu0 0.0
    %3207 = vmatprep.subr.mxu0 0.0
    %3208 = vmatpush1.xpose.msra.mxu0 0.0
    %3209 = vmatprep.subr.mxu0 0.0
    %3210 = vmatpush1.xpose.msra.mxu0 0.0
    %3211 = vmatprep.subr.mxu0 0.0
    %3212 = vmatpush1.xpose.msra.mxu0 0.0
    %3213 = vmatprep.subr.mxu0 0.0
    %3214 = vmatpush1.xpose.msra.mxu0 0.0
    %3215 = vmatprep.subr.mxu0 0.0
    %3216 = vmatpush1.xpose.msra.mxu0 0.0
    %3217 = vmatprep.subr.mxu0 0.0
    %3218 = vmatpush1.xpose.msra.mxu0 0.0
    %3219 = vmatprep.subr.mxu0 0.0
    %3220 = vmatpush1.xpose.msra.mxu0 0.0
    %3221 = vmatprep.subr.mxu0 0.0
    %3222 = vmatpush1.xpose.msra.mxu0 0.0
    %3223 = vmatprep.subr.mxu0 0.0
    %3224 = vmatpush1.xpose.msra.mxu0 0.0
    %3225 = vmatprep.subr.mxu0 0.0
    %3226 = vmatpush1.xpose.msra.mxu0 0.0
    %3227 = vmatprep.subr.mxu0 0.0
    %3228 = vmatpush1.xpose.msra.mxu0 0.0
    %3229 = vmatprep.subr.mxu0 0.0
    %3230 = vmatpush1.xpose.msra.mxu0 0.0
    %3231 = vmatprep.subr.mxu0 0.0
    %3232 = vmatpush1.xpose.msra.mxu0 0.0
    %3233 = vmatprep.subr.mxu0 0.0
    %3234 = vmatpush1.xpose.msra.mxu0 0.0
    %3235 = vmatprep.subr.mxu0 0.0
    %3236 = vmatpush1.xpose.msra.mxu0 0.0
    %3237 = vmatprep.subr.mxu0 0.0
    %3238 = vmatpush1.xpose.msra.mxu0 0.0
    %3239 = vmatprep.subr.mxu0 0.0
    %3240 = vmatpush1.xpose.msra.mxu0 0.0
    %3241 = vmatprep.subr.mxu0 0.0
    %3242 = vmatpush1.xpose.msra.mxu0 0.0
    %3243 = vmatprep.subr.mxu0 0.0
    %3244 = vmatpush1.xpose.msra.mxu0 0.0
    %3245 = vmatprep.subr.mxu0 0.0
    %3246 = vmatpush1.xpose.msra.mxu0 0.0
    %3247 = vmatprep.subr.mxu0 0.0
    %3248 = vmatpush1.xpose.msra.mxu0 0.0
    %3249 = vmatprep.subr.mxu0 0.0
    %3250 = vmatpush1.xpose.msra.mxu0 0.0
    %3251 = vmatprep.subr.mxu0 0.0
    %3252 = vmatpush1.xpose.msra.mxu0 0.0
    %3253 = vmatprep.subr.mxu0 0.0
    %3254 = vmatpush1.xpose.msra.mxu0 0.0
    %3255 = vmatprep.subr.mxu0 0.0
    %3256 = vmatpush1.xpose.msra.mxu0 0.0
    %3257 = vmatprep.subr.mxu0 0.0
    %3258 = vmatpush1.xpose.msra.mxu0 0.0
    %3259 = vmatprep.subr.mxu0 0.0
    %3260 = vmatpush1.xpose.msra.mxu0 0.0
    %3261 = vmatprep.subr.mxu0 0.0
    %3262 = vmatpush1.xpose.msra.mxu0 0.0
    %3263 = vmatprep.mubr.f32.mxu0 0.0
    %3264 = vmatmul.mubr.f32.gmra.mrb[0].mxu0 %v3193
    %v3265 = vpop.f32.mrb[0].mxu0
    %v3266 = vadd.f32 0.0, %v3265
    %v3267 = vpop.f32.mrb[0].mxu0
    %3268 = vdwg.mxu0
    %3269 = vrot.lane.b32.xlu0 %v2130, 112
    %v3270 = vpop.permute.xlu0 %3269
    %3271 = vrot.lane.b32.xlu0 %v2230, 112
    %v3272 = vpop.permute.xlu0 %3271
    %3273 = vrot.lane.b32.xlu0 %v2235, 112
    %v3274 = vpop.permute.xlu0 %3273
    %v3275 = vsel %vm346, %v3270, 0
    %v3277 = vsel %vm346, %v3272, 0
    %v3279 = vsel %vm346, %v3274, 0
    %3281 = vmatprep.subr.mxu0 0.0
    %3282 = vmatpush1.xpose.msra.mxu0 %v3277
    %3283 = vmatprep.subr.mxu0 0.0
    %3284 = vmatpush1.xpose.msra.mxu0 %v3279
    %3285 = vmatprep.subr.mxu0 0.0
    %3286 = vmatpush1.xpose.msra.mxu0 0.0
    %3287 = vmatprep.subr.mxu0 0.0
    %3288 = vmatpush1.xpose.msra.mxu0 0.0
    %3289 = vmatprep.subr.mxu0 0.0
    %3290 = vmatpush1.xpose.msra.mxu0 0.0
    %3291 = vmatprep.subr.mxu0 0.0
    %3292 = vmatpush1.xpose.msra.mxu0 0.0
    %3293 = vmatprep.subr.mxu0 0.0
    %3294 = vmatpush1.xpose.msra.mxu0 0.0
    %3295 = vmatprep.subr.mxu0 0.0
    %3296 = vmatpush1.xpose.msra.mxu0 0.0
    %3297 = vmatprep.subr.mxu0 0.0
    %3298 = vmatpush1.xpose.msra.mxu0 0.0
    %3299 = vmatprep.subr.mxu0 0.0
    %3300 = vmatpush1.xpose.msra.mxu0 0.0
    %3301 = vmatprep.subr.mxu0 0.0
    %3302 = vmatpush1.xpose.msra.mxu0 0.0
    %3303 = vmatprep.subr.mxu0 0.0
    %3304 = vmatpush1.xpose.msra.mxu0 0.0
    %3305 = vmatprep.subr.mxu0 0.0
    %3306 = vmatpush1.xpose.msra.mxu0 0.0
    %3307 = vmatprep.subr.mxu0 0.0
    %3308 = vmatpush1.xpose.msra.mxu0 0.0
    %3309 = vmatprep.subr.mxu0 0.0
    %3310 = vmatpush1.xpose.msra.mxu0 0.0
    %3311 = vmatprep.subr.mxu0 0.0
    %3312 = vmatpush1.xpose.msra.mxu0 0.0
    %3313 = vmatprep.subr.mxu0 0.0
    %3314 = vmatpush1.xpose.msra.mxu0 0.0
    %3315 = vmatprep.subr.mxu0 0.0
    %3316 = vmatpush1.xpose.msra.mxu0 0.0
    %3317 = vmatprep.subr.mxu0 0.0
    %3318 = vmatpush1.xpose.msra.mxu0 0.0
    %3319 = vmatprep.subr.mxu0 0.0
    %3320 = vmatpush1.xpose.msra.mxu0 0.0
    %3321 = vmatprep.subr.mxu0 0.0
    %3322 = vmatpush1.xpose.msra.mxu0 0.0
    %3323 = vmatprep.subr.mxu0 0.0
    %3324 = vmatpush1.xpose.msra.mxu0 0.0
    %3325 = vmatprep.subr.mxu0 0.0
    %3326 = vmatpush1.xpose.msra.mxu0 0.0
    %3327 = vmatprep.subr.mxu0 0.0
    %3328 = vmatpush1.xpose.msra.mxu0 0.0
    %3329 = vmatprep.subr.mxu0 0.0
    %3330 = vmatpush1.xpose.msra.mxu0 0.0
    %3331 = vmatprep.subr.mxu0 0.0
    %3332 = vmatpush1.xpose.msra.mxu0 0.0
    %3333 = vmatprep.subr.mxu0 0.0
    %3334 = vmatpush1.xpose.msra.mxu0 0.0
    %3335 = vmatprep.subr.mxu0 0.0
    %3336 = vmatpush1.xpose.msra.mxu0 0.0
    %3337 = vmatprep.subr.mxu0 0.0
    %3338 = vmatpush1.xpose.msra.mxu0 0.0
    %3339 = vmatprep.subr.mxu0 0.0
    %3340 = vmatpush1.xpose.msra.mxu0 0.0
    %3341 = vmatprep.subr.mxu0 0.0
    %3342 = vmatpush1.xpose.msra.mxu0 0.0
    %3343 = vmatprep.subr.mxu0 0.0
    %3344 = vmatpush1.xpose.msra.mxu0 0.0
    %3345 = vmatprep.mubr.f32.mxu0 0.0
    %3346 = vmatmul.mubr.f32.gmra.mrb[0].mxu0 %v3275
    %v3347 = vpop.f32.mrb[0].mxu0
    %v3348 = vadd.f32 0.0, %v3347
    %v3349 = vpop.f32.mrb[0].mxu0
    %3350 = vdwg.mxu0
    %v3351 = vsel %vm2508, %v3266, -inf
    %3352 = vmax.xlane.f32.xlu0 %v3351
    %v3353 = vpop.xlane.xlu0 %3352
    %v3354 = vsel %vm2508, %v3348, -inf
    %3355 = vmax.xlane.f32.xlu0 %v3354
    %v3356 = vpop.xlane.xlu0 %3355
    %v3357 = vsub.f32 %v3266, %v3353
    %v3358 = vsub.f32 %v3348, %v3356
    %v3359 = vmul.f32 %v3357, 1.442695
    %v3360 = vpow.pop %v3359
    %v3361 = vmul.f32 %v3358, 1.442695
    %v3362 = vpow.pop %v3361
    %v3363 = vsel %vm2508, %v3360, 0.0
    %3364 = vadd.xlane.f32.xlu0 %v3363
    %v3365 = vpop.xlane.xlu0 %3364
    %v3366 = vsel %vm2508, %v3362, 0.0
    %3367 = vadd.xlane.f32.xlu0 %v3366
    %v3368 = vpop.xlane.xlu0 %3367
    %v3369 = vrcp.pop %v3365
    %v3370 = vmul.f32 %v3360, %v3369
    %v3371 = vrcp.pop %v3368
    %v3372 = vmul.f32 %v3362, %v3371
    %3373 = vrot.lane.b32.xlu0 %v2327, 112
    %v3374 = vpop.permute.xlu0 %3373
    %3375 = vrot.lane.b32.xlu0 %v2332, 112
    %v3376 = vpop.permute.xlu0 %3375
    %v3380 = vsel %vm2508, %v3370, 0
    %3382 = vmatprep.subr.mxu0 0.0
    %3383 = vmatpush1.msra.mxu0 %v3374
    %3384 = vmatprep.subr.mxu0 0.0
    %3385 = vmatpush1.msra.mxu0 %v3376
    %3386 = vmatprep.subr.mxu0 0.0
    %3387 = vmatpush1.msra.mxu0 0.0
    %3388 = vmatprep.subr.mxu0 0.0
    %3389 = vmatpush1.msra.mxu0 0.0
    %3390 = vmatprep.subr.mxu0 0.0
    %3391 = vmatpush1.msra.mxu0 0.0
    %3392 = vmatprep.subr.mxu0 0.0
    %3393 = vmatpush1.msra.mxu0 0.0
    %3394 = vmatprep.subr.mxu0 0.0
    %3395 = vmatpush1.msra.mxu0 0.0
    %3396 = vmatprep.subr.mxu0 0.0
    %3397 = vmatpush1.msra.mxu0 0.0
    %3398 = vmatprep.subr.mxu0 0.0
    %3399 = vmatpush1.msra.mxu0 0.0
    %3400 = vmatprep.subr.mxu0 0.0
    %3401 = vmatpush1.msra.mxu0 0.0
    %3402 = vmatprep.subr.mxu0 0.0
    %3403 = vmatpush1.msra.mxu0 0.0
    %3404 = vmatprep.subr.mxu0 0.0
    %3405 = vmatpush1.msra.mxu0 0.0
    %3406 = vmatprep.subr.mxu0 0.0
    %3407 = vmatpush1.msra.mxu0 0.0
    %3408 = vmatprep.subr.mxu0 0.0
    %3409 = vmatpush1.msra.mxu0 0.0
    %3410 = vmatprep.subr.mxu0 0.0
    %3411 = vmatpush1.msra.mxu0 0.0
    %3412 = vmatprep.subr.mxu0 0.0
    %3413 = vmatpush1.msra.mxu0 0.0
    %3414 = vmatprep.subr.mxu0 0.0
    %3415 = vmatpush1.msra.mxu0 0.0
    %3416 = vmatprep.subr.mxu0 0.0
    %3417 = vmatpush1.msra.mxu0 0.0
    %3418 = vmatprep.subr.mxu0 0.0
    %3419 = vmatpush1.msra.mxu0 0.0
    %3420 = vmatprep.subr.mxu0 0.0
    %3421 = vmatpush1.msra.mxu0 0.0
    %3422 = vmatprep.subr.mxu0 0.0
    %3423 = vmatpush1.msra.mxu0 0.0
    %3424 = vmatprep.subr.mxu0 0.0
    %3425 = vmatpush1.msra.mxu0 0.0
    %3426 = vmatprep.subr.mxu0 0.0
    %3427 = vmatpush1.msra.mxu0 0.0
    %3428 = vmatprep.subr.mxu0 0.0
    %3429 = vmatpush1.msra.mxu0 0.0
    %3430 = vmatprep.subr.mxu0 0.0
    %3431 = vmatpush1.msra.mxu0 0.0
    %3432 = vmatprep.subr.mxu0 0.0
    %3433 = vmatpush1.msra.mxu0 0.0
    %3434 = vmatprep.subr.mxu0 0.0
    %3435 = vmatpush1.msra.mxu0 0.0
    %3436 = vmatprep.subr.mxu0 0.0
    %3437 = vmatpush1.msra.mxu0 0.0
    %3438 = vmatprep.subr.mxu0 0.0
    %3439 = vmatpush1.msra.mxu0 0.0
    %3440 = vmatprep.subr.mxu0 0.0
    %3441 = vmatpush1.msra.mxu0 0.0
    %3442 = vmatprep.subr.mxu0 0.0
    %3443 = vmatpush1.msra.mxu0 0.0
    %3444 = vmatprep.subr.mxu0 0.0
    %3445 = vmatpush1.msra.mxu0 0.0
    %3446 = vmatprep.mubr.f32.mxu0 0.0
    %3447 = vmatmul.mubr.f32.gmra.mrb[0].mxu0 %v3380
    %v3448 = vpop.f32.mrb[0].mxu0
    %v3449 = vadd.f32 0.0, %v3448
    %v3450 = vpop.f32.mrb[0].mxu0
    %3451 = vdwg.mxu0
    %3452 = vrot.lane.b32.xlu0 %v2337, 112
    %v3453 = vpop.permute.xlu0 %3452
    %3454 = vrot.lane.b32.xlu0 %v2342, 112
    %v3455 = vpop.permute.xlu0 %3454
    %v3459 = vsel %vm2508, %v3372, 0
    %3461 = vmatprep.subr.mxu0 0.0
    %3462 = vmatpush1.msra.mxu0 %v3453
    %3463 = vmatprep.subr.mxu0 0.0
    %3464 = vmatpush1.msra.mxu0 %v3455
    %3465 = vmatprep.subr.mxu0 0.0
    %3466 = vmatpush1.msra.mxu0 0.0
    %3467 = vmatprep.subr.mxu0 0.0
    %3468 = vmatpush1.msra.mxu0 0.0
    %3469 = vmatprep.subr.mxu0 0.0
    %3470 = vmatpush1.msra.mxu0 0.0
    %3471 = vmatprep.subr.mxu0 0.0
    %3472 = vmatpush1.msra.mxu0 0.0
    %3473 = vmatprep.subr.mxu0 0.0
    %3474 = vmatpush1.msra.mxu0 0.0
    %3475 = vmatprep.subr.mxu0 0.0
    %3476 = vmatpush1.msra.mxu0 0.0
    %3477 = vmatprep.subr.mxu0 0.0
    %3478 = vmatpush1.msra.mxu0 0.0
    %3479 = vmatprep.subr.mxu0 0.0
    %3480 = vmatpush1.msra.mxu0 0.0
    %3481 = vmatprep.subr.mxu0 0.0
    %3482 = vmatpush1.msra.mxu0 0.0
    %3483 = vmatprep.subr.mxu0 0.0
    %3484 = vmatpush1.msra.mxu0 0.0
    %3485 = vmatprep.subr.mxu0 0.0
    %3486 = vmatpush1.msra.mxu0 0.0
    %3487 = vmatprep.subr.mxu0 0.0
    %3488 = vmatpush1.msra.mxu0 0.0
    %3489 = vmatprep.subr.mxu0 0.0
    %3490 = vmatpush1.msra.mxu0 0.0
    %3491 = vmatprep.subr.mxu0 0.0
    %3492 = vmatpush1.msra.mxu0 0.0
    %3493 = vmatprep.subr.mxu0 0.0
    %3494 = vmatpush1.msra.mxu0 0.0
    %3495 = vmatprep.subr.mxu0 0.0
    %3496 = vmatpush1.msra.mxu0 0.0
    %3497 = vmatprep.subr.mxu0 0.0
    %3498 = vmatpush1.msra.mxu0 0.0
    %3499 = vmatprep.subr.mxu0 0.0
    %3500 = vmatpush1.msra.mxu0 0.0
    %3501 = vmatprep.subr.mxu0 0.0
    %3502 = vmatpush1.msra.mxu0 0.0
    %3503 = vmatprep.subr.mxu0 0.0
    %3504 = vmatpush1.msra.mxu0 0.0
    %3505 = vmatprep.subr.mxu0 0.0
    %3506 = vmatpush1.msra.mxu0 0.0
    %3507 = vmatprep.subr.mxu0 0.0
    %3508 = vmatpush1.msra.mxu0 0.0
    %3509 = vmatprep.subr.mxu0 0.0
    %3510 = vmatpush1.msra.mxu0 0.0
    %3511 = vmatprep.subr.mxu0 0.0
    %3512 = vmatpush1.msra.mxu0 0.0
    %3513 = vmatprep.subr.mxu0 0.0
    %3514 = vmatpush1.msra.mxu0 0.0
    %3515 = vmatprep.subr.mxu0 0.0
    %3516 = vmatpush1.msra.mxu0 0.0
    %3517 = vmatprep.subr.mxu0 0.0
    %3518 = vmatpush1.msra.mxu0 0.0
    %3519 = vmatprep.subr.mxu0 0.0
    %3520 = vmatpush1.msra.mxu0 0.0
    %3521 = vmatprep.subr.mxu0 0.0
    %3522 = vmatpush1.msra.mxu0 0.0
    %3523 = vmatprep.subr.mxu0 0.0
    %3524 = vmatpush1.msra.mxu0 0.0
    %3525 = vmatprep.mubr.f32.mxu0 0.0
    %3526 = vmatmul.mubr.f32.gmra.mrb[0].mxu0 %v3459
    %v3527 = vpop.f32.mrb[0].mxu0
    %v3528 = vadd.f32 0.0, %v3527
    %v3529 = vpop.f32.mrb[0].mxu0
    %3530 = vdwg.mxu0
    %v3532 = vsel %vm346, %v3449, 0
    %v3535 = vsel %vm346, %v3528, 0
    %3537 = vmatprep.subr.mxu0 0.0
    %3538 = vmatpush1.msra.mxu0 %v2348
    %3539 = vmatprep.subr.mxu0 0.0
    %3540 = vmatpush1.msra.mxu0 0.0
    %3541 = vmatprep.subr.mxu0 0.0
    %3542 = vmatpush1.msra.mxu0 0.0
    %3543 = vmatprep.subr.mxu0 0.0
    %3544 = vmatpush1.msra.mxu0 0.0
    %3545 = vmatprep.subr.mxu0 0.0
    %3546 = vmatpush1.msra.mxu0 0.0
    %3547 = vmatprep.subr.mxu0 0.0
    %3548 = vmatpush1.msra.mxu0 0.0
    %3549 = vmatprep.subr.mxu0 0.0
    %3550 = vmatpush1.msra.mxu0 0.0
    %3551 = vmatprep.subr.mxu0 0.0
    %3552 = vmatpush1.msra.mxu0 0.0
    %3553 = vmatprep.subr.mxu0 0.0
    %3554 = vmatpush1.msra.mxu0 0.0
    %3555 = vmatprep.subr.mxu0 0.0
    %3556 = vmatpush1.msra.mxu0 0.0
    %3557 = vmatprep.subr.mxu0 0.0
    %3558 = vmatpush1.msra.mxu0 0.0
    %3559 = vmatprep.subr.mxu0 0.0
    %3560 = vmatpush1.msra.mxu0 0.0
    %3561 = vmatprep.subr.mxu0 0.0
    %3562 = vmatpush1.msra.mxu0 0.0
    %3563 = vmatprep.subr.mxu0 0.0
    %3564 = vmatpush1.msra.mxu0 0.0
    %3565 = vmatprep.subr.mxu0 0.0
    %3566 = vmatpush1.msra.mxu0 0.0
    %3567 = vmatprep.subr.mxu0 0.0
    %3568 = vmatpush1.msra.mxu0 0.0
    %3569 = vmatprep.subr.mxu0 0.0
    %3570 = vmatpush1.msra.mxu0 0.0
    %3571 = vmatprep.subr.mxu0 0.0
    %3572 = vmatpush1.msra.mxu0 0.0
    %3573 = vmatprep.subr.mxu0 0.0
    %3574 = vmatpush1.msra.mxu0 0.0
    %3575 = vmatprep.subr.mxu0 0.0
    %3576 = vmatpush1.msra.mxu0 0.0
    %3577 = vmatprep.subr.mxu0 0.0
    %3578 = vmatpush1.msra.mxu0 0.0
    %3579 = vmatprep.subr.mxu0 0.0
    %3580 = vmatpush1.msra.mxu0 0.0
    %3581 = vmatprep.subr.mxu0 0.0
    %3582 = vmatpush1.msra.mxu0 0.0
    %3583 = vmatprep.subr.mxu0 0.0
    %3584 = vmatpush1.msra.mxu0 0.0
    %3585 = vmatprep.subr.mxu0 0.0
    %3586 = vmatpush1.msra.mxu0 0.0
    %3587 = vmatprep.subr.mxu0 0.0
    %3588 = vmatpush1.msra.mxu0 0.0
    %3589 = vmatprep.subr.mxu0 0.0
    %3590 = vmatpush1.msra.mxu0 0.0
    %3591 = vmatprep.subr.mxu0 0.0
    %3592 = vmatpush1.msra.mxu0 0.0
    %3593 = vmatprep.subr.mxu0 0.0
    %3594 = vmatpush1.msra.mxu0 0.0
    %3595 = vmatprep.subr.mxu0 0.0
    %3596 = vmatpush1.msra.mxu0 0.0
    %3597 = vmatprep.subr.mxu0 0.0
    %3598 = vmatpush1.msra.mxu0 0.0
    %3599 = vmatprep.subr.mxu0 0.0
    %3600 = vmatpush1.msra.mxu0 0.0
    %3601 = vmatprep.mubr.f32.mxu0 0.0
    %3602 = vmatmul.mubr.f32.gmra.mrb[0].mxu0 %v3532
    %v3603 = vpop.f32.mrb[0].mxu0
    %v3604 = vadd.f32 0.0, %v3603
    %v3605 = vpop.f32.mrb[0].mxu0
    %3606 = vmatprep.mubr.f32.mxu0 0.0
    %3607 = vmatmul.mubr.f32.gmra.mrb[0].mxu0 %v3535
    %v3608 = vpop.f32.mrb[0].mxu0
    %v3609 = vadd.f32 0.0, %v3608
    %v3610 = vpop.f32.mrb[0].mxu0
    %3611 = vdwg.mxu0
    %v3612 = vadd.f32 %v3179, %v3604
    %v3613 = vadd.f32 %v3184, %v3609
    %3614 = vrot.lane.b32.xlu0 %v2129, 104
    %v3615 = vpop.permute.xlu0 %3614
    %3616 = vrot.lane.b32.xlu0 %v2220, 104
    %v3617 = vpop.permute.xlu0 %3616
    %3618 = vrot.lane.b32.xlu0 %v2225, 104
    %v3619 = vpop.permute.xlu0 %3618
    %v3620 = vsel %vm346, %v3615, 0
    %v3622 = vsel %vm346, %v3617, 0
    %v3624 = vsel %vm346, %v3619, 0
    %3626 = vmatprep.subr.mxu0 0.0
    %3627 = vmatpush1.xpose.msra.mxu0 %v3622
    %3628 = vmatprep.subr.mxu0 0.0
    %3629 = vmatpush1.xpose.msra.mxu0 %v3624
    %3630 = vmatprep.subr.mxu0 0.0
    %3631 = vmatpush1.xpose.msra.mxu0 0.0
    %3632 = vmatprep.subr.mxu0 0.0
    %3633 = vmatpush1.xpose.msra.mxu0 0.0
    %3634 = vmatprep.subr.mxu0 0.0
    %3635 = vmatpush1.xpose.msra.mxu0 0.0
    %3636 = vmatprep.subr.mxu0 0.0
    %3637 = vmatpush1.xpose.msra.mxu0 0.0
    %3638 = vmatprep.subr.mxu0 0.0
    %3639 = vmatpush1.xpose.msra.mxu0 0.0
    %3640 = vmatprep.subr.mxu0 0.0
    %3641 = vmatpush1.xpose.msra.mxu0 0.0
    %3642 = vmatprep.subr.mxu0 0.0
    %3643 = vmatpush1.xpose.msra.mxu0 0.0
    %3644 = vmatprep.subr.mxu0 0.0
    %3645 = vmatpush1.xpose.msra.mxu0 0.0
    %3646 = vmatprep.subr.mxu0 0.0
    %3647 = vmatpush1.xpose.msra.mxu0 0.0
    %3648 = vmatprep.subr.mxu0 0.0
    %3649 = vmatpush1.xpose.msra.mxu0 0.0
    %3650 = vmatprep.subr.mxu0 0.0
    %3651 = vmatpush1.xpose.msra.mxu0 0.0
    %3652 = vmatprep.subr.mxu0 0.0
    %3653 = vmatpush1.xpose.msra.mxu0 0.0
    %3654 = vmatprep.subr.mxu0 0.0
    %3655 = vmatpush1.xpose.msra.mxu0 0.0
    %3656 = vmatprep.subr.mxu0 0.0
    %3657 = vmatpush1.xpose.msra.mxu0 0.0
    %3658 = vmatprep.subr.mxu0 0.0
    %3659 = vmatpush1.xpose.msra.mxu0 0.0
    %3660 = vmatprep.subr.mxu0 0.0
    %3661 = vmatpush1.xpose.msra.mxu0 0.0
    %3662 = vmatprep.subr.mxu0 0.0
    %3663 = vmatpush1.xpose.msra.mxu0 0.0
    %3664 = vmatprep.subr.mxu0 0.0
    %3665 = vmatpush1.xpose.msra.mxu0 0.0
    %3666 = vmatprep.subr.mxu0 0.0
    %3667 = vmatpush1.xpose.msra.mxu0 0.0
    %3668 = vmatprep.subr.mxu0 0.0
    %3669 = vmatpush1.xpose.msra.mxu0 0.0
    %3670 = vmatprep.subr.mxu0 0.0
    %3671 = vmatpush1.xpose.msra.mxu0 0.0
    %3672 = vmatprep.subr.mxu0 0.0
    %3673 = vmatpush1.xpose.msra.mxu0 0.0
    %3674 = vmatprep.subr.mxu0 0.0
    %3675 = vmatpush1.xpose.msra.mxu0 0.0
    %3676 = vmatprep.subr.mxu0 0.0
    %3677 = vmatpush1.xpose.msra.mxu0 0.0
    %3678 = vmatprep.subr.mxu0 0.0
    %3679 = vmatpush1.xpose.msra.mxu0 0.0
    %3680 = vmatprep.subr.mxu0 0.0
    %3681 = vmatpush1.xpose.msra.mxu0 0.0
    %3682 = vmatprep.subr.mxu0 0.0
    %3683 = vmatpush1.xpose.msra.mxu0 0.0
    %3684 = vmatprep.subr.mxu0 0.0
    %3685 = vmatpush1.xpose.msra.mxu0 0.0
    %3686 = vmatprep.subr.mxu0 0.0
    %3687 = vmatpush1.xpose.msra.mxu0 0.0
    %3688 = vmatprep.subr.mxu0 0.0
    %3689 = vmatpush1.xpose.msra.mxu0 0.0
    %3690 = vmatprep.mubr.f32.mxu0 0.0
    %3691 = vmatmul.mubr.f32.gmra.mrb[0].mxu0 %v3620
    %v3692 = vpop.f32.mrb[0].mxu0
    %v3693 = vadd.f32 0.0, %v3692
    %v3694 = vpop.f32.mrb[0].mxu0
    %3695 = vdwg.mxu0
    %3696 = vrot.lane.b32.xlu0 %v2130, 104
    %v3697 = vpop.permute.xlu0 %3696
    %3698 = vrot.lane.b32.xlu0 %v2230, 104
    %v3699 = vpop.permute.xlu0 %3698
    %3700 = vrot.lane.b32.xlu0 %v2235, 104
    %v3701 = vpop.permute.xlu0 %3700
    %v3702 = vsel %vm346, %v3697, 0
    %v3704 = vsel %vm346, %v3699, 0
    %v3706 = vsel %vm346, %v3701, 0
    %3708 = vmatprep.subr.mxu0 0.0
    %3709 = vmatpush1.xpose.msra.mxu0 %v3704
    %3710 = vmatprep.subr.mxu0 0.0
    %3711 = vmatpush1.xpose.msra.mxu0 %v3706
    %3712 = vmatprep.subr.mxu0 0.0
    %3713 = vmatpush1.xpose.msra.mxu0 0.0
    %3714 = vmatprep.subr.mxu0 0.0
    %3715 = vmatpush1.xpose.msra.mxu0 0.0
    %3716 = vmatprep.subr.mxu0 0.0
    %3717 = vmatpush1.xpose.msra.mxu0 0.0
    %3718 = vmatprep.subr.mxu0 0.0
    %3719 = vmatpush1.xpose.msra.mxu0 0.0
    %3720 = vmatprep.subr.mxu0 0.0
    %3721 = vmatpush1.xpose.msra.mxu0 0.0
    %3722 = vmatprep.subr.mxu0 0.0
    %3723 = vmatpush1.xpose.msra.mxu0 0.0
    %3724 = vmatprep.subr.mxu0 0.0
    %3725 = vmatpush1.xpose.msra.mxu0 0.0
    %3726 = vmatprep.subr.mxu0 0.0
    %3727 = vmatpush1.xpose.msra.mxu0 0.0
    %3728 = vmatprep.subr.mxu0 0.0
    %3729 = vmatpush1.xpose.msra.mxu0 0.0
    %3730 = vmatprep.subr.mxu0 0.0
    %3731 = vmatpush1.xpose.msra.mxu0 0.0
    %3732 = vmatprep.subr.mxu0 0.0
    %3733 = vmatpush1.xpose.msra.mxu0 0.0
    %3734 = vmatprep.subr.mxu0 0.0
    %3735 = vmatpush1.xpose.msra.mxu0 0.0
    %3736 = vmatprep.subr.mxu0 0.0
    %3737 = vmatpush1.xpose.msra.mxu0 0.0
    %3738 = vmatprep.subr.mxu0 0.0
    %3739 = vmatpush1.xpose.msra.mxu0 0.0
    %3740 = vmatprep.subr.mxu0 0.0
    %3741 = vmatpush1.xpose.msra.mxu0 0.0
    %3742 = vmatprep.subr.mxu0 0.0
    %3743 = vmatpush1.xpose.msra.mxu0 0.0
    %3744 = vmatprep.subr.mxu0 0.0
    %3745 = vmatpush1.xpose.msra.mxu0 0.0
    %3746 = vmatprep.subr.mxu0 0.0
    %3747 = vmatpush1.xpose.msra.mxu0 0.0
    %3748 = vmatprep.subr.mxu0 0.0
    %3749 = vmatpush1.xpose.msra.mxu0 0.0
    %3750 = vmatprep.subr.mxu0 0.0
    %3751 = vmatpush1.xpose.msra.mxu0 0.0
    %3752 = vmatprep.subr.mxu0 0.0
    %3753 = vmatpush1.xpose.msra.mxu0 0.0
    %3754 = vmatprep.subr.mxu0 0.0
    %3755 = vmatpush1.xpose.msra.mxu0 0.0
    %3756 = vmatprep.subr.mxu0 0.0
    %3757 = vmatpush1.xpose.msra.mxu0 0.0
    %3758 = vmatprep.subr.mxu0 0.0
    %3759 = vmatpush1.xpose.msra.mxu0 0.0
    %3760 = vmatprep.subr.mxu0 0.0
    %3761 = vmatpush1.xpose.msra.mxu0 0.0
    %3762 = vmatprep.subr.mxu0 0.0
    %3763 = vmatpush1.xpose.msra.mxu0 0.0
    %3764 = vmatprep.subr.mxu0 0.0
    %3765 = vmatpush1.xpose.msra.mxu0 0.0
    %3766 = vmatprep.subr.mxu0 0.0
    %3767 = vmatpush1.xpose.msra.mxu0 0.0
    %3768 = vmatprep.subr.mxu0 0.0
    %3769 = vmatpush1.xpose.msra.mxu0 0.0
    %3770 = vmatprep.subr.mxu0 0.0
    %3771 = vmatpush1.xpose.msra.mxu0 0.0
    %3772 = vmatprep.mubr.f32.mxu0 0.0
    %3773 = vmatmul.mubr.f32.gmra.mrb[0].mxu0 %v3702
    %v3774 = vpop.f32.mrb[0].mxu0
    %v3775 = vadd.f32 0.0, %v3774
    %v3776 = vpop.f32.mrb[0].mxu0
    %3777 = vdwg.mxu0
    %v3778 = vsel %vm2508, %v3693, -inf
    %3779 = vmax.xlane.f32.xlu0 %v3778
    %v3780 = vpop.xlane.xlu0 %3779
    %v3781 = vsel %vm2508, %v3775, -inf
    %3782 = vmax.xlane.f32.xlu0 %v3781
    %v3783 = vpop.xlane.xlu0 %3782
    %v3784 = vsub.f32 %v3693, %v3780
    %v3785 = vsub.f32 %v3775, %v3783
    %v3786 = vmul.f32 %v3784, 1.442695
    %v3787 = vpow.pop %v3786
    %v3788 = vmul.f32 %v3785, 1.442695
    %v3789 = vpow.pop %v3788
    %v3790 = vsel %vm2508, %v3787, 0.0
    %3791 = vadd.xlane.f32.xlu0 %v3790
    %v3792 = vpop.xlane.xlu0 %3791
    %v3793 = vsel %vm2508, %v3789, 0.0
    %3794 = vadd.xlane.f32.xlu0 %v3793
    %v3795 = vpop.xlane.xlu0 %3794
    %v3796 = vrcp.pop %v3792
    %v3797 = vmul.f32 %v3787, %v3796
    %v3798 = vrcp.pop %v3795
    %v3799 = vmul.f32 %v3789, %v3798
    %3800 = vrot.lane.b32.xlu0 %v2327, 104
    %v3801 = vpop.permute.xlu0 %3800
    %3802 = vrot.lane.b32.xlu0 %v2332, 104
    %v3803 = vpop.permute.xlu0 %3802
    %v3807 = vsel %vm2508, %v3797, 0
    %3809 = vmatprep.subr.mxu0 0.0
    %3810 = vmatpush1.msra.mxu0 %v3801
    %3811 = vmatprep.subr.mxu0 0.0
    %3812 = vmatpush1.msra.mxu0 %v3803
    %3813 = vmatprep.subr.mxu0 0.0
    %3814 = vmatpush1.msra.mxu0 0.0
    %3815 = vmatprep.subr.mxu0 0.0
    %3816 = vmatpush1.msra.mxu0 0.0
    %3817 = vmatprep.subr.mxu0 0.0
    %3818 = vmatpush1.msra.mxu0 0.0
    %3819 = vmatprep.subr.mxu0 0.0
    %3820 = vmatpush1.msra.mxu0 0.0
    %3821 = vmatprep.subr.mxu0 0.0
    %3822 = vmatpush1.msra.mxu0 0.0
    %3823 = vmatprep.subr.mxu0 0.0
    %3824 = vmatpush1.msra.mxu0 0.0
    %3825 = vmatprep.subr.mxu0 0.0
    %3826 = vmatpush1.msra.mxu0 0.0
    %3827 = vmatprep.subr.mxu0 0.0
    %3828 = vmatpush1.msra.mxu0 0.0
    %3829 = vmatprep.subr.mxu0 0.0
    %3830 = vmatpush1.msra.mxu0 0.0
    %3831 = vmatprep.subr.mxu0 0.0
    %3832 = vmatpush1.msra.mxu0 0.0
    %3833 = vmatprep.subr.mxu0 0.0
    %3834 = vmatpush1.msra.mxu0 0.0
    %3835 = vmatprep.subr.mxu0 0.0
    %3836 = vmatpush1.msra.mxu0 0.0
    %3837 = vmatprep.subr.mxu0 0.0
    %3838 = vmatpush1.msra.mxu0 0.0
    %3839 = vmatprep.subr.mxu0 0.0
    %3840 = vmatpush1.msra.mxu0 0.0
    %3841 = vmatprep.subr.mxu0 0.0
    %3842 = vmatpush1.msra.mxu0 0.0
    %3843 = vmatprep.subr.mxu0 0.0
    %3844 = vmatpush1.msra.mxu0 0.0
    %3845 = vmatprep.subr.mxu0 0.0
    %3846 = vmatpush1.msra.mxu0 0.0
    %3847 = vmatprep.subr.mxu0 0.0
    %3848 = vmatpush1.msra.mxu0 0.0
    %3849 = vmatprep.subr.mxu0 0.0
    %3850 = vmatpush1.msra.mxu0 0.0
    %3851 = vmatprep.subr.mxu0 0.0
    %3852 = vmatpush1.msra.mxu0 0.0
    %3853 = vmatprep.subr.mxu0 0.0
    %3854 = vmatpush1.msra.mxu0 0.0
    %3855 = vmatprep.subr.mxu0 0.0
    %3856 = vmatpush1.msra.mxu0 0.0
    %3857 = vmatprep.subr.mxu0 0.0
    %3858 = vmatpush1.msra.mxu0 0.0
    %3859 = vmatprep.subr.mxu0 0.0
    %3860 = vmatpush1.msra.mxu0 0.0
    %3861 = vmatprep.subr.mxu0 0.0
    %3862 = vmatpush1.msra.mxu0 0.0
    %3863 = vmatprep.subr.mxu0 0.0
    %3864 = vmatpush1.msra.mxu0 0.0
    %3865 = vmatprep.subr.mxu0 0.0
    %3866 = vmatpush1.msra.mxu0 0.0
    %3867 = vmatprep.subr.mxu0 0.0
    %3868 = vmatpush1.msra.mxu0 0.0
    %3869 = vmatprep.subr.mxu0 0.0
    %3870 = vmatpush1.msra.mxu0 0.0
    %3871 = vmatprep.subr.mxu0 0.0
    %3872 = vmatpush1.msra.mxu0 0.0
    %3873 = vmatprep.mubr.f32.mxu0 0.0
    %3874 = vmatmul.mubr.f32.gmra.mrb[0].mxu0 %v3807
    %v3875 = vpop.f32.mrb[0].mxu0
    %v3876 = vadd.f32 0.0, %v3875
    %v3877 = vpop.f32.mrb[0].mxu0
    %3878 = vdwg.mxu0
    %3879 = vrot.lane.b32.xlu0 %v2337, 104
    %v3880 = vpop.permute.xlu0 %3879
    %3881 = vrot.lane.b32.xlu0 %v2342, 104
    %v3882 = vpop.permute.xlu0 %3881
    %v3886 = vsel %vm2508, %v3799, 0
    %3888 = vmatprep.subr.mxu0 0.0
    %3889 = vmatpush1.msra.mxu0 %v3880
    %3890 = vmatprep.subr.mxu0 0.0
    %3891 = vmatpush1.msra.mxu0 %v3882
    %3892 = vmatprep.subr.mxu0 0.0
    %3893 = vmatpush1.msra.mxu0 0.0
    %3894 = vmatprep.subr.mxu0 0.0
    %3895 = vmatpush1.msra.mxu0 0.0
    %3896 = vmatprep.subr.mxu0 0.0
    %3897 = vmatpush1.msra.mxu0 0.0
    %3898 = vmatprep.subr.mxu0 0.0
    %3899 = vmatpush1.msra.mxu0 0.0
    %3900 = vmatprep.subr.mxu0 0.0
    %3901 = vmatpush1.msra.mxu0 0.0
    %3902 = vmatprep.subr.mxu0 0.0
    %3903 = vmatpush1.msra.mxu0 0.0
    %3904 = vmatprep.subr.mxu0 0.0
    %3905 = vmatpush1.msra.mxu0 0.0
    %3906 = vmatprep.subr.mxu0 0.0
    %3907 = vmatpush1.msra.mxu0 0.0
    %3908 = vmatprep.subr.mxu0 0.0
    %3909 = vmatpush1.msra.mxu0 0.0
    %3910 = vmatprep.subr.mxu0 0.0
    %3911 = vmatpush1.msra.mxu0 0.0
    %3912 = vmatprep.subr.mxu0 0.0
    %3913 = vmatpush1.msra.mxu0 0.0
    %3914 = vmatprep.subr.mxu0 0.0
    %3915 = vmatpush1.msra.mxu0 0.0
    %3916 = vmatprep.subr.mxu0 0.0
    %3917 = vmatpush1.msra.mxu0 0.0
    %3918 = vmatprep.subr.mxu0 0.0
    %3919 = vmatpush1.msra.mxu0 0.0
    %3920 = vmatprep.subr.mxu0 0.0
    %3921 = vmatpush1.msra.mxu0 0.0
    %3922 = vmatprep.subr.mxu0 0.0
    %3923 = vmatpush1.msra.mxu0 0.0
    %3924 = vmatprep.subr.mxu0 0.0
    %3925 = vmatpush1.msra.mxu0 0.0
    %3926 = vmatprep.subr.mxu0 0.0
    %3927 = vmatpush1.msra.mxu0 0.0
    %3928 = vmatprep.subr.mxu0 0.0
    %3929 = vmatpush1.msra.mxu0 0.0
    %3930 = vmatprep.subr.mxu0 0.0
    %3931 = vmatpush1.msra.mxu0 0.0
    %3932 = vmatprep.subr.mxu0 0.0
    %3933 = vmatpush1.msra.mxu0 0.0
    %3934 = vmatprep.subr.mxu0 0.0
    %3935 = vmatpush1.msra.mxu0 0.0
    %3936 = vmatprep.subr.mxu0 0.0
    %3937 = vmatpush1.msra.mxu0 0.0
    %3938 = vmatprep.subr.mxu0 0.0
    %3939 = vmatpush1.msra.mxu0 0.0
    %3940 = vmatprep.subr.mxu0 0.0
    %3941 = vmatpush1.msra.mxu0 0.0
    %3942 = vmatprep.subr.mxu0 0.0
    %3943 = vmatpush1.msra.mxu0 0.0
    %3944 = vmatprep.subr.mxu0 0.0
    %3945 = vmatpush1.msra.mxu0 0.0
    %3946 = vmatprep.subr.mxu0 0.0
    %3947 = vmatpush1.msra.mxu0 0.0
    %3948 = vmatprep.subr.mxu0 0.0
    %3949 = vmatpush1.msra.mxu0 0.0
    %3950 = vmatprep.subr.mxu0 0.0
    %3951 = vmatpush1.msra.mxu0 0.0
    %3952 = vmatprep.mubr.f32.mxu0 0.0
    %3953 = vmatmul.mubr.f32.gmra.mrb[0].mxu0 %v3886
    %v3954 = vpop.f32.mrb[0].mxu0
    %v3955 = vadd.f32 0.0, %v3954
    %v3956 = vpop.f32.mrb[0].mxu0
    %3957 = vdwg.mxu0
    %v3959 = vsel %vm346, %v3876, 0
    %v3962 = vsel %vm346, %v3955, 0
    %3964 = vmatprep.subr.mxu0 0.0
    %3965 = vmatpush1.msra.mxu0 %v2349
    %3966 = vmatprep.subr.mxu0 0.0
    %3967 = vmatpush1.msra.mxu0 0.0
    %3968 = vmatprep.subr.mxu0 0.0
    %3969 = vmatpush1.msra.mxu0 0.0
    %3970 = vmatprep.subr.mxu0 0.0
    %3971 = vmatpush1.msra.mxu0 0.0
    %3972 = vmatprep.subr.mxu0 0.0
    %3973 = vmatpush1.msra.mxu0 0.0
    %3974 = vmatprep.subr.mxu0 0.0
    %3975 = vmatpush1.msra.mxu0 0.0
    %3976 = vmatprep.subr.mxu0 0.0
    %3977 = vmatpush1.msra.mxu0 0.0
    %3978 = vmatprep.subr.mxu0 0.0
    %3979 = vmatpush1.msra.mxu0 0.0
    %3980 = vmatprep.subr.mxu0 0.0
    %3981 = vmatpush1.msra.mxu0 0.0
    %3982 = vmatprep.subr.mxu0 0.0
    %3983 = vmatpush1.msra.mxu0 0.0
    %3984 = vmatprep.subr.mxu0 0.0
    %3985 = vmatpush1.msra.mxu0 0.0
    %3986 = vmatprep.subr.mxu0 0.0
    %3987 = vmatpush1.msra.mxu0 0.0
    %3988 = vmatprep.subr.mxu0 0.0
    %3989 = vmatpush1.msra.mxu0 0.0
    %3990 = vmatprep.subr.mxu0 0.0
    %3991 = vmatpush1.msra.mxu0 0.0
    %3992 = vmatprep.subr.mxu0 0.0
    %3993 = vmatpush1.msra.mxu0 0.0
    %3994 = vmatprep.subr.mxu0 0.0
    %3995 = vmatpush1.msra.mxu0 0.0
    %3996 = vmatprep.subr.mxu0 0.0
    %3997 = vmatpush1.msra.mxu0 0.0
    %3998 = vmatprep.subr.mxu0 0.0
    %3999 = vmatpush1.msra.mxu0 0.0
    %4000 = vmatprep.subr.mxu0 0.0
    %4001 = vmatpush1.msra.mxu0 0.0
    %4002 = vmatprep.subr.mxu0 0.0
    %4003 = vmatpush1.msra.mxu0 0.0
    %4004 = vmatprep.subr.mxu0 0.0
    %4005 = vmatpush1.msra.mxu0 0.0
    %4006 = vmatprep.subr.mxu0 0.0
    %4007 = vmatpush1.msra.mxu0 0.0
    %4008 = vmatprep.subr.mxu0 0.0
    %4009 = vmatpush1.msra.mxu0 0.0
    %4010 = vmatprep.subr.mxu0 0.0
    %4011 = vmatpush1.msra.mxu0 0.0
    %4012 = vmatprep.subr.mxu0 0.0
    %4013 = vmatpush1.msra.mxu0 0.0
    %4014 = vmatprep.subr.mxu0 0.0
    %4015 = vmatpush1.msra.mxu0 0.0
    %4016 = vmatprep.subr.mxu0 0.0
    %4017 = vmatpush1.msra.mxu0 0.0
    %4018 = vmatprep.subr.mxu0 0.0
    %4019 = vmatpush1.msra.mxu0 0.0
    %4020 = vmatprep.subr.mxu0 0.0
    %4021 = vmatpush1.msra.mxu0 0.0
    %4022 = vmatprep.subr.mxu0 0.0
    %4023 = vmatpush1.msra.mxu0 0.0
    %4024 = vmatprep.subr.mxu0 0.0
    %4025 = vmatpush1.msra.mxu0 0.0
    %4026 = vmatprep.subr.mxu0 0.0
    %4027 = vmatpush1.msra.mxu0 0.0
    %4028 = vmatprep.mubr.f32.mxu0 0.0
    %4029 = vmatmul.mubr.f32.gmra.mrb[0].mxu0 %v3959
    %v4030 = vpop.f32.mrb[0].mxu0
    %v4031 = vadd.f32 0.0, %v4030
    %v4032 = vpop.f32.mrb[0].mxu0
    %4033 = vmatprep.mubr.f32.mxu0 0.0
    %4034 = vmatmul.mubr.f32.gmra.mrb[0].mxu0 %v3962
    %v4035 = vpop.f32.mrb[0].mxu0
    %v4036 = vadd.f32 0.0, %v4035
    %v4037 = vpop.f32.mrb[0].mxu0
    %4038 = vdwg.mxu0
    %v4039 = vadd.f32 %v3612, %v4031
    %v4040 = vadd.f32 %v3613, %v4036
    %v4041 = vld [vmem:[%s7 + $0x3] sm:$0x1]
    %v4042 = vlaneseq
    %v4043 = vshrl.u32 %v4042, 7
    %v4044 = vsub.s32 0, %v4043
    %v4045 = vrot.slane %v4041, %v4044
    %v4046 = vadd.f32 %v4039, %v4045
    %v4047 = vadd.f32 %v4040, %v4045
    %v4048 = vadd.f32 %v2035, %v4046
    %v4049 = vadd.f32 %v2036, %v4047
    %v4050 = vld [vmem:[%s12 + $0x1] sm:$0x1]
    %v4051 = vld [vmem:[%s13 + $0x1] sm:$0x1]
    %v4052 = vsel %vm81, %v4048, 0.0
    %4053 = vadd.xlane.f32.xlu0 %v4052
    %v4054 = vpop.xlane.xlu0 %4053
    %v4055 = vsel %vm81, %v4049, 0.0
    %4056 = vadd.xlane.f32.xlu0 %v4055
    %v4057 = vpop.xlane.xlu0 %4056
    %v4058 = vmul.f32 %v4054, %v2004
    %v4059 = vmul.f32 %v4057, %v2004
    %v4060 = vsub.f32 %v4048, %v4058
    %v4061 = vsub.f32 %v4049, %v4059
    %v4062 = vmul.f32 %v4060, %v4060
    %v4063 = vmul.f32 %v4061, %v4061
    %v4064 = vsel %vm81, %v4062, 0.0
    %4065 = vadd.xlane.f32.xlu0 %v4064
    %v4066 = vpop.xlane.xlu0 %4065
    %v4067 = vsel %vm81, %v4063, 0.0
    %4068 = vadd.xlane.f32.xlu0 %v4067
    %v4069 = vpop.xlane.xlu0 %4068
    %v4070 = vmul.f32 %v4066, %v2004
    %v4071 = vmul.f32 %v4069, %v2004
    %v4072 = vadd.f32 %v4070, 1e-05
    %v4073 = vadd.f32 %v4071, 1e-05
    %v4074 = vrsqrt.pop %v4072
    %v4075 = vrsqrt.pop %v4073
    %v4076 = vmul.f32 %v4060, %v4074
    %v4077 = vmul.f32 %v4061, %v4075
    %v4078 = vlaneseq
    %v4079 = vshrl.u32 %v4078, 7
    %v4080 = vsub.s32 0, %v4079
    %v4081 = vrot.slane %v4050, %v4080
    %v4082 = vmul.f32 %v4076, %v4081
    %v4083 = vmul.f32 %v4077, %v4081
    %v4084 = vlaneseq
    %v4085 = vshrl.u32 %v4084, 7
    %v4086 = vsub.s32 0, %v4085
    %v4087 = vrot.slane %v4051, %v4086
    %v4088 = vadd.f32 %v4082, %v4087
    %v4089 = vadd.f32 %v4083, %v4087
    %v4090 = vld [vmem:[%s8] sm:$0xff]
    %v4091 = vld [vmem:[%s8 + $0x8] sm:$0xff]
    %v4092 = vld [vmem:[%s8 + $0x10] sm:$0xff]
    %v4093 = vld [vmem:[%s8 + $0x18] sm:$0xff]
    %v4094 = vld [vmem:[%s9] sm:$0x1]
    %v4095 = vlaneseq
    %v4096 = vshrl.u32 %v4095, 7
    %v4097 = vsub.s32 0, %v4096
    %v4098 = vrot.slane %v4094, %v4097
    %v4100 = vsel %vm81, %v4088, 0
    %v4103 = vsel %vm81, %v4089, 0
    %4105 = vmatprep.subr.mxu0 0.0
    %4106 = vmatpush1.msra.mxu0 %v4090
    %4107 = vmatprep.subr.mxu0 0.0
    %4108 = vmatpush1.msra.mxu0 %v4091
    %4109 = vmatprep.subr.mxu0 0.0
    %4110 = vmatpush1.msra.mxu0 %v4092
    %4111 = vmatprep.subr.mxu0 0.0
    %4112 = vmatpush1.msra.mxu0 %v4093
    %4113 = vmatprep.subr.mxu0 0.0
    %4114 = vmatpush1.msra.mxu0 0.0
    %4115 = vmatprep.subr.mxu0 0.0
    %4116 = vmatpush1.msra.mxu0 0.0
    %4117 = vmatprep.subr.mxu0 0.0
    %4118 = vmatpush1.msra.mxu0 0.0
    %4119 = vmatprep.subr.mxu0 0.0
    %4120 = vmatpush1.msra.mxu0 0.0
    %4121 = vmatprep.subr.mxu0 0.0
    %4122 = vmatpush1.msra.mxu0 0.0
    %4123 = vmatprep.subr.mxu0 0.0
    %4124 = vmatpush1.msra.mxu0 0.0
    %4125 = vmatprep.subr.mxu0 0.0
    %4126 = vmatpush1.msra.mxu0 0.0
    %4127 = vmatprep.subr.mxu0 0.0
    %4128 = vmatpush1.msra.mxu0 0.0
    %4129 = vmatprep.subr.mxu0 0.0
    %4130 = vmatpush1.msra.mxu0 0.0
    %4131 = vmatprep.subr.mxu0 0.0
    %4132 = vmatpush1.msra.mxu0 0.0
    %4133 = vmatprep.subr.mxu0 0.0
    %4134 = vmatpush1.msra.mxu0 0.0
    %4135 = vmatprep.subr.mxu0 0.0
    %4136 = vmatpush1.msra.mxu0 0.0
    %4137 = vmatprep.subr.mxu0 0.0
    %4138 = vmatpush1.msra.mxu0 0.0
    %4139 = vmatprep.subr.mxu0 0.0
    %4140 = vmatpush1.msra.mxu0 0.0
    %4141 = vmatprep.subr.mxu0 0.0
    %4142 = vmatpush1.msra.mxu0 0.0
    %4143 = vmatprep.subr.mxu0 0.0
    %4144 = vmatpush1.msra.mxu0 0.0
    %4145 = vmatprep.subr.mxu0 0.0
    %4146 = vmatpush1.msra.mxu0 0.0
    %4147 = vmatprep.subr.mxu0 0.0
    %4148 = vmatpush1.msra.mxu0 0.0
    %4149 = vmatprep.subr.mxu0 0.0
    %4150 = vmatpush1.msra.mxu0 0.0
    %4151 = vmatprep.subr.mxu0 0.0
    %4152 = vmatpush1.msra.mxu0 0.0
    %4153 = vmatprep.subr.mxu0 0.0
    %4154 = vmatpush1.msra.mxu0 0.0
    %4155 = vmatprep.subr.mxu0 0.0
    %4156 = vmatpush1.msra.mxu0 0.0
    %4157 = vmatprep.subr.mxu0 0.0
    %4158 = vmatpush1.msra.mxu0 0.0
    %4159 = vmatprep.subr.mxu0 0.0
    %4160 = vmatpush1.msra.mxu0 0.0
    %4161 = vmatprep.subr.mxu0 0.0
    %4162 = vmatpush1.msra.mxu0 0.0
    %4163 = vmatprep.subr.mxu0 0.0
    %4164 = vmatpush1.msra.mxu0 0.0
    %4165 = vmatprep.subr.mxu0 0.0
    %4166 = vmatpush1.msra.mxu0 0.0
    %4167 = vmatprep.subr.mxu0 0.0
    %4168 = vmatpush1.msra.mxu0 0.0
    %4169 = vmatprep.mubr.f32.mxu0 0.0
    %4170 = vmatmul.mubr.f32.gmra.mrb[0].mxu0 %v4100
    %v4171 = vpop.f32.mrb[0].mxu0
    %v4172 = vadd.f32 %v4098, %v4171
    %v4173 = vpop.f32.mrb[0].mxu0
    %4174 = vmatprep.mubr.f32.mxu0 0.0
    %4175 = vmatmul.mubr.f32.gmra.mrb[0].mxu0 %v4103
    %v4176 = vpop.f32.mrb[0].mxu0
    %v4177 = vadd.f32 %v4098, %v4176
    %v4178 = vpop.f32.mrb[0].mxu0
    %4179 = vdwg.mxu0
    %v4180 = vmax.f32 %v4172, 0.0
    %v4181 = vmax.f32 %v4177, 0.0
    %v4182 = vld [vmem:[%s10] sm:$0xff]
    %v4183 = vld [vmem:[%s10 + $0x8] sm:$0xff]
    %v4184 = vld [vmem:[%s10 + $0x10] sm:$0xff]
    %v4185 = vld [vmem:[%s10 + $0x18] sm:$0xff]
    %v4186 = vld [vmem:[%s10 + $0x20] sm:$0xff]
    %v4187 = vld [vmem:[%s10 + $0x28] sm:$0xff]
    %v4188 = vld [vmem:[%s10 + $0x30] sm:$0xff]
    %v4189 = vld [vmem:[%s10 + $0x38] sm:$0xff]
    %v4190 = vld [vmem:[%s11] sm:$0x1]
    %v4191 = vlaneseq
    %v4192 = vshrl.u32 %v4191, 7
    %v4193 = vsub.s32 0, %v4192
    %v4194 = vrot.slane %v4190, %v4193
    %vm4195 = vcmask 523264
    %v4197 = vsel %vm4195, %v4180, 0
    %v4200 = vsel %vm4195, %v4181, 0
    %4202 = vmatprep.subr.mxu0 0.0
    %4203 = vmatpush1.msra.mxu0 %v4182
    %4204 = vmatprep.subr.mxu0 0.0
    %4205 = vmatpush1.msra.mxu0 %v4183
    %4206 = vmatprep.subr.mxu0 0.0
    %4207 = vmatpush1.msra.mxu0 %v4184
    %4208 = vmatprep.subr.mxu0 0.0
    %4209 = vmatpush1.msra.mxu0 %v4185
    %4210 = vmatprep.subr.mxu0 0.0
    %4211 = vmatpush1.msra.mxu0 %v4186
    %4212 = vmatprep.subr.mxu0 0.0
    %4213 = vmatpush1.msra.mxu0 %v4187
    %4214 = vmatprep.subr.mxu0 0.0
    %4215 = vmatpush1.msra.mxu0 %v4188
    %4216 = vmatprep.subr.mxu0 0.0
    %4217 = vmatpush1.msra.mxu0 %v4189
    %4218 = vmatprep.subr.mxu0 0.0
    %4219 = vmatpush1.msra.mxu0 0.0
    %4220 = vmatprep.subr.mxu0 0.0
    %4221 = vmatpush1.msra.mxu0 0.0
    %4222 = vmatprep.subr.mxu0 0.0
    %4223 = vmatpush1.msra.mxu0 0.0
    %4224 = vmatprep.subr.mxu0 0.0
    %4225 = vmatpush1.msra.mxu0 0.0
    %4226 = vmatprep.subr.mxu0 0.0
    %4227 = vmatpush1.msra.mxu0 0.0
    %4228 = vmatprep.subr.mxu0 0.0
    %4229 = vmatpush1.msra.mxu0 0.0
    %4230 = vmatprep.subr.mxu0 0.0
    %4231 = vmatpush1.msra.mxu0 0.0
    %4232 = vmatprep.subr.mxu0 0.0
    %4233 = vmatpush1.msra.mxu0 0.0
    %4234 = vmatprep.subr.mxu0 0.0
    %4235 = vmatpush1.msra.mxu0 0.0
    %4236 = vmatprep.subr.mxu0 0.0
    %4237 = vmatpush1.msra.mxu0 0.0
    %4238 = vmatprep.subr.mxu0 0.0
    %4239 = vmatpush1.msra.mxu0 0.0
    %4240 = vmatprep.subr.mxu0 0.0
    %4241 = vmatpush1.msra.mxu0 0.0
    %4242 = vmatprep.subr.mxu0 0.0
    %4243 = vmatpush1.msra.mxu0 0.0
    %4244 = vmatprep.subr.mxu0 0.0
    %4245 = vmatpush1.msra.mxu0 0.0
    %4246 = vmatprep.subr.mxu0 0.0
    %4247 = vmatpush1.msra.mxu0 0.0
    %4248 = vmatprep.subr.mxu0 0.0
    %4249 = vmatpush1.msra.mxu0 0.0
    %4250 = vmatprep.subr.mxu0 0.0
    %4251 = vmatpush1.msra.mxu0 0.0
    %4252 = vmatprep.subr.mxu0 0.0
    %4253 = vmatpush1.msra.mxu0 0.0
    %4254 = vmatprep.subr.mxu0 0.0
    %4255 = vmatpush1.msra.mxu0 0.0
    %4256 = vmatprep.subr.mxu0 0.0
    %4257 = vmatpush1.msra.mxu0 0.0
    %4258 = vmatprep.subr.mxu0 0.0
    %4259 = vmatpush1.msra.mxu0 0.0
    %4260 = vmatprep.subr.mxu0 0.0
    %4261 = vmatpush1.msra.mxu0 0.0
    %4262 = vmatprep.subr.mxu0 0.0
    %4263 = vmatpush1.msra.mxu0 0.0
    %4264 = vmatprep.subr.mxu0 0.0
    %4265 = vmatpush1.msra.mxu0 0.0
    %4266 = vmatprep.mubr.f32.mxu0 0.0
    %4267 = vmatmul.mubr.f32.gmra.mrb[0].mxu0 %v4197
    %v4268 = vpop.f32.mrb[0].mxu0
    %v4269 = vadd.f32 %v4194, %v4268
    %v4270 = vpop.f32.mrb[0].mxu0
    %4271 = vmatprep.mubr.f32.mxu0 0.0
    %4272 = vmatmul.mubr.f32.gmra.mrb[0].mxu0 %v4200
    %v4273 = vpop.f32.mrb[0].mxu0
    %v4274 = vadd.f32 %v4194, %v4273
    %v4275 = vpop.f32.mrb[0].mxu0
    %4276 = vdwg.mxu0
    %v4277 = vadd.f32 %v4088, %v4269
    %v4278 = vadd.f32 %v4089, %v4274
    %v4279 = vld [vmem:[%s12 + $0x2] sm:$0x1]
    %v4280 = vld [vmem:[%s13 + $0x2] sm:$0x1]
    %v4281 = vsel %vm81, %v4277, 0.0
    %4282 = vadd.xlane.f32.xlu0 %v4281
    %v4283 = vpop.xlane.xlu0 %4282
    %v4284 = vsel %vm81, %v4278, 0.0
    %4285 = vadd.xlane.f32.xlu0 %v4284
    %v4286 = vpop.xlane.xlu0 %4285
    %v4287 = vmul.f32 %v4283, %v2004
    %v4288 = vmul.f32 %v4286, %v2004
    %v4289 = vsub.f32 %v4277, %v4287
    %v4290 = vsub.f32 %v4278, %v4288
    %v4291 = vmul.f32 %v4289, %v4289
    %v4292 = vmul.f32 %v4290, %v4290
    %v4293 = vsel %vm81, %v4291, 0.0
    %4294 = vadd.xlane.f32.xlu0 %v4293
    %v4295 = vpop.xlane.xlu0 %4294
    %v4296 = vsel %vm81, %v4292, 0.0
    %4297 = vadd.xlane.f32.xlu0 %v4296
    %v4298 = vpop.xlane.xlu0 %4297
    %v4299 = vmul.f32 %v4295, %v2004
    %v4300 = vmul.f32 %v4298, %v2004
    %v4301 = vadd.f32 %v4299, 1e-05
    %v4302 = vadd.f32 %v4300, 1e-05
    %v4303 = vrsqrt.pop %v4301
    %v4304 = vrsqrt.pop %v4302
    %v4305 = vmul.f32 %v4289, %v4303
    %v4306 = vmul.f32 %v4290, %v4304
    %v4307 = vlaneseq
    %v4308 = vshrl.u32 %v4307, 7
    %v4309 = vsub.s32 0, %v4308
    %v4310 = vrot.slane %v4279, %v4309
    %v4311 = vmul.f32 %v4305, %v4310
    %v4312 = vmul.f32 %v4306, %v4310
    %v4313 = vlaneseq
    %v4314 = vshrl.u32 %v4313, 7
    %v4315 = vsub.s32 0, %v4314
    %v4316 = vrot.slane %v4280, %v4315
    %v4317 = vadd.f32 %v4311, %v4316
    %v4318 = vadd.f32 %v4312, %v4316
    %v4319 = vadd.f32 %v4317, %v56
    %v4320 = vadd.f32 %v4318, %v57
    %s4321 = scalar_lea.vmem %s4, 128
    %v4322 = vld [vmem:[%s4321] sm:$0xff]
    %v4323 = vld [vmem:[%s4321 + $0x8] sm:$0xff]
    %v4324 = vld [vmem:[%s4321 + $0x10] sm:$0xff]
    %v4325 = vld [vmem:[%s4321 + $0x18] sm:$0xff]
    %s4326 = scalar_lea.vmem %s5, 4
    %v4327 = vld [vmem:[%s4326] sm:$0x1]
    %v4328 = vlaneseq
    %v4329 = vshrl.u32 %v4328, 7
    %v4330 = vsub.s32 0, %v4329
    %v4331 = vrot.slane %v4327, %v4330
    %v4333 = vsel %vm81, %v4319, 0
    %v4336 = vsel %vm81, %v4320, 0
    %4338 = vmatprep.subr.mxu0 0.0
    %4339 = vmatpush1.msra.mxu0 %v4322
    %4340 = vmatprep.subr.mxu0 0.0
    %4341 = vmatpush1.msra.mxu0 %v4323
    %4342 = vmatprep.subr.mxu0 0.0
    %4343 = vmatpush1.msra.mxu0 %v4324
    %4344 = vmatprep.subr.mxu0 0.0
    %4345 = vmatpush1.msra.mxu0 %v4325
    %4346 = vmatprep.subr.mxu0 0.0
    %4347 = vmatpush1.msra.mxu0 0.0
    %4348 = vmatprep.subr.mxu0 0.0
    %4349 = vmatpush1.msra.mxu0 0.0
    %4350 = vmatprep.subr.mxu0 0.0
    %4351 = vmatpush1.msra.mxu0 0.0
    %4352 = vmatprep.subr.mxu0 0.0
    %4353 = vmatpush1.msra.mxu0 0.0
    %4354 = vmatprep.subr.mxu0 0.0
    %4355 = vmatpush1.msra.mxu0 0.0
    %4356 = vmatprep.subr.mxu0 0.0
    %4357 = vmatpush1.msra.mxu0 0.0
    %4358 = vmatprep.subr.mxu0 0.0
    %4359 = vmatpush1.msra.mxu0 0.0
    %4360 = vmatprep.subr.mxu0 0.0
    %4361 = vmatpush1.msra.mxu0 0.0
    %4362 = vmatprep.subr.mxu0 0.0
    %4363 = vmatpush1.msra.mxu0 0.0
    %4364 = vmatprep.subr.mxu0 0.0
    %4365 = vmatpush1.msra.mxu0 0.0
    %4366 = vmatprep.subr.mxu0 0.0
    %4367 = vmatpush1.msra.mxu0 0.0
    %4368 = vmatprep.subr.mxu0 0.0
    %4369 = vmatpush1.msra.mxu0 0.0
    %4370 = vmatprep.subr.mxu0 0.0
    %4371 = vmatpush1.msra.mxu0 0.0
    %4372 = vmatprep.subr.mxu0 0.0
    %4373 = vmatpush1.msra.mxu0 0.0
    %4374 = vmatprep.subr.mxu0 0.0
    %4375 = vmatpush1.msra.mxu0 0.0
    %4376 = vmatprep.subr.mxu0 0.0
    %4377 = vmatpush1.msra.mxu0 0.0
    %4378 = vmatprep.subr.mxu0 0.0
    %4379 = vmatpush1.msra.mxu0 0.0
    %4380 = vmatprep.subr.mxu0 0.0
    %4381 = vmatpush1.msra.mxu0 0.0
    %4382 = vmatprep.subr.mxu0 0.0
    %4383 = vmatpush1.msra.mxu0 0.0
    %4384 = vmatprep.subr.mxu0 0.0
    %4385 = vmatpush1.msra.mxu0 0.0
    %4386 = vmatprep.subr.mxu0 0.0
    %4387 = vmatpush1.msra.mxu0 0.0
    %4388 = vmatprep.subr.mxu0 0.0
    %4389 = vmatpush1.msra.mxu0 0.0
    %4390 = vmatprep.subr.mxu0 0.0
    %4391 = vmatpush1.msra.mxu0 0.0
    %4392 = vmatprep.subr.mxu0 0.0
    %4393 = vmatpush1.msra.mxu0 0.0
    %4394 = vmatprep.subr.mxu0 0.0
    %4395 = vmatpush1.msra.mxu0 0.0
    %4396 = vmatprep.subr.mxu0 0.0
    %4397 = vmatpush1.msra.mxu0 0.0
    %4398 = vmatprep.subr.mxu0 0.0
    %4399 = vmatpush1.msra.mxu0 0.0
    %4400 = vmatprep.subr.mxu0 0.0
    %4401 = vmatpush1.msra.mxu0 0.0
    %4402 = vmatprep.mubr.f32.mxu0 0.0
    %4403 = vmatmul.mubr.f32.gmra.mrb[0].mxu0 %v4333
    %v4404 = vpop.f32.mrb[0].mxu0
    %v4405 = vadd.f32 %v4331, %v4404
    %v4406 = vpop.f32.mrb[0].mxu0
    %4407 = vmatprep.mubr.f32.mxu0 0.0
    %4408 = vmatmul.mubr.f32.gmra.mrb[0].mxu0 %v4336
    %v4409 = vpop.f32.mrb[0].mxu0
    %v4410 = vadd.f32 %v4331, %v4409
    %v4411 = vpop.f32.mrb[0].mxu0
    %4412 = vdwg.mxu0
    %v4413 = vmul.f32 %v4405, 0.35355338
    %v4414 = vmul.f32 %v4410, 0.35355338
    %s4415 = scalar_lea.vmem %s4, 160
    %v4416 = vld [vmem:[%s4415] sm:$0xff]
    %v4417 = vld [vmem:[%s4415 + $0x8] sm:$0xff]
    %v4418 = vld [vmem:[%s4415 + $0x10] sm:$0xff]
    %v4419 = vld [vmem:[%s4415 + $0x18] sm:$0xff]
    %v4420 = vld [vmem:[%s4326 + $0x1] sm:$0x1]
    %v4421 = vlaneseq
    %v4422 = vshrl.u32 %v4421, 7
    %v4423 = vsub.s32 0, %v4422
    %v4424 = vrot.slane %v4420, %v4423
    %4425 = vmatprep.subr.mxu0 0.0
    %4426 = vmatpush1.msra.mxu0 %v4416
    %4427 = vmatprep.subr.mxu0 0.0
    %4428 = vmatpush1.msra.mxu0 %v4417
    %4429 = vmatprep.subr.mxu0 0.0
    %4430 = vmatpush1.msra.mxu0 %v4418
    %4431 = vmatprep.subr.mxu0 0.0
    %4432 = vmatpush1.msra.mxu0 %v4419
    %4433 = vmatprep.subr.mxu0 0.0
    %4434 = vmatpush1.msra.mxu0 0.0
    %4435 = vmatprep.subr.mxu0 0.0
    %4436 = vmatpush1.msra.mxu0 0.0
    %4437 = vmatprep.subr.mxu0 0.0
    %4438 = vmatpush1.msra.mxu0 0.0
    %4439 = vmatprep.subr.mxu0 0.0
    %4440 = vmatpush1.msra.mxu0 0.0
    %4441 = vmatprep.subr.mxu0 0.0
    %4442 = vmatpush1.msra.mxu0 0.0
    %4443 = vmatprep.subr.mxu0 0.0
    %4444 = vmatpush1.msra.mxu0 0.0
    %4445 = vmatprep.subr.mxu0 0.0
    %4446 = vmatpush1.msra.mxu0 0.0
    %4447 = vmatprep.subr.mxu0 0.0
    %4448 = vmatpush1.msra.mxu0 0.0
    %4449 = vmatprep.subr.mxu0 0.0
    %4450 = vmatpush1.msra.mxu0 0.0
    %4451 = vmatprep.subr.mxu0 0.0
    %4452 = vmatpush1.msra.mxu0 0.0
    %4453 = vmatprep.subr.mxu0 0.0
    %4454 = vmatpush1.msra.mxu0 0.0
    %4455 = vmatprep.subr.mxu0 0.0
    %4456 = vmatpush1.msra.mxu0 0.0
    %4457 = vmatprep.subr.mxu0 0.0
    %4458 = vmatpush1.msra.mxu0 0.0
    %4459 = vmatprep.subr.mxu0 0.0
    %4460 = vmatpush1.msra.mxu0 0.0
    %4461 = vmatprep.subr.mxu0 0.0
    %4462 = vmatpush1.msra.mxu0 0.0
    %4463 = vmatprep.subr.mxu0 0.0
    %4464 = vmatpush1.msra.mxu0 0.0
    %4465 = vmatprep.subr.mxu0 0.0
    %4466 = vmatpush1.msra.mxu0 0.0
    %4467 = vmatprep.subr.mxu0 0.0
    %4468 = vmatpush1.msra.mxu0 0.0
    %4469 = vmatprep.subr.mxu0 0.0
    %4470 = vmatpush1.msra.mxu0 0.0
    %4471 = vmatprep.subr.mxu0 0.0
    %4472 = vmatpush1.msra.mxu0 0.0
    %4473 = vmatprep.subr.mxu0 0.0
    %4474 = vmatpush1.msra.mxu0 0.0
    %4475 = vmatprep.subr.mxu0 0.0
    %4476 = vmatpush1.msra.mxu0 0.0
    %4477 = vmatprep.subr.mxu0 0.0
    %4478 = vmatpush1.msra.mxu0 0.0
    %4479 = vmatprep.subr.mxu0 0.0
    %4480 = vmatpush1.msra.mxu0 0.0
    %4481 = vmatprep.subr.mxu0 0.0
    %4482 = vmatpush1.msra.mxu0 0.0
    %4483 = vmatprep.subr.mxu0 0.0
    %4484 = vmatpush1.msra.mxu0 0.0
    %4485 = vmatprep.subr.mxu0 0.0
    %4486 = vmatpush1.msra.mxu0 0.0
    %4487 = vmatprep.subr.mxu0 0.0
    %4488 = vmatpush1.msra.mxu0 0.0
    %4489 = vmatprep.mubr.f32.mxu0 0.0
    %4490 = vmatmul.mubr.f32.gmra.mrb[0].mxu0 %v4333
    %v4491 = vpop.f32.mrb[0].mxu0
    %v4492 = vadd.f32 %v4424, %v4491
    %v4493 = vpop.f32.mrb[0].mxu0
    %4494 = vmatprep.mubr.f32.mxu0 0.0
    %4495 = vmatmul.mubr.f32.gmra.mrb[0].mxu0 %v4336
    %v4496 = vpop.f32.mrb[0].mxu0
    %v4497 = vadd.f32 %v4424, %v4496
    %v4498 = vpop.f32.mrb[0].mxu0
    %4499 = vdwg.mxu0
    %s4500 = scalar_lea.vmem %s4, 192
    %v4501 = vld [vmem:[%s4500] sm:$0xff]
    %v4502 = vld [vmem:[%s4500 + $0x8] sm:$0xff]
    %v4503 = vld [vmem:[%s4500 + $0x10] sm:$0xff]
    %v4504 = vld [vmem:[%s4500 + $0x18] sm:$0xff]
    %v4505 = vld [vmem:[%s4326 + $0x2] sm:$0x1]
    %v4506 = vlaneseq
    %v4507 = vshrl.u32 %v4506, 7
    %v4508 = vsub.s32 0, %v4507
    %v4509 = vrot.slane %v4505, %v4508
    %v4511 = vsel %vm81, %v4317, 0
    %v4514 = vsel %vm81, %v4318, 0
    %4516 = vmatprep.subr.mxu0 0.0
    %4517 = vmatpush1.msra.mxu0 %v4501
    %4518 = vmatprep.subr.mxu0 0.0
    %4519 = vmatpush1.msra.mxu0 %v4502
    %4520 = vmatprep.subr.mxu0 0.0
    %4521 = vmatpush1.msra.mxu0 %v4503
    %4522 = vmatprep.subr.mxu0 0.0
    %4523 = vmatpush1.msra.mxu0 %v4504
    %4524 = vmatprep.subr.mxu0 0.0
    %4525 = vmatpush1.msra.mxu0 0.0
    %4526 = vmatprep.subr.mxu0 0.0
    %4527 = vmatpush1.msra.mxu0 0.0
    %4528 = vmatprep.subr.mxu0 0.0
    %4529 = vmatpush1.msra.mxu0 0.0
    %4530 = vmatprep.subr.mxu0 0.0
    %4531 = vmatpush1.msra.mxu0 0.0
    %4532 = vmatprep.subr.mxu0 0.0
    %4533 = vmatpush1.msra.mxu0 0.0
    %4534 = vmatprep.subr.mxu0 0.0
    %4535 = vmatpush1.msra.mxu0 0.0
    %4536 = vmatprep.subr.mxu0 0.0
    %4537 = vmatpush1.msra.mxu0 0.0
    %4538 = vmatprep.subr.mxu0 0.0
    %4539 = vmatpush1.msra.mxu0 0.0
    %4540 = vmatprep.subr.mxu0 0.0
    %4541 = vmatpush1.msra.mxu0 0.0
    %4542 = vmatprep.subr.mxu0 0.0
    %4543 = vmatpush1.msra.mxu0 0.0
    %4544 = vmatprep.subr.mxu0 0.0
    %4545 = vmatpush1.msra.mxu0 0.0
    %4546 = vmatprep.subr.mxu0 0.0
    %4547 = vmatpush1.msra.mxu0 0.0
    %4548 = vmatprep.subr.mxu0 0.0
    %4549 = vmatpush1.msra.mxu0 0.0
    %4550 = vmatprep.subr.mxu0 0.0
    %4551 = vmatpush1.msra.mxu0 0.0
    %4552 = vmatprep.subr.mxu0 0.0
    %4553 = vmatpush1.msra.mxu0 0.0
    %4554 = vmatprep.subr.mxu0 0.0
    %4555 = vmatpush1.msra.mxu0 0.0
    %4556 = vmatprep.subr.mxu0 0.0
    %4557 = vmatpush1.msra.mxu0 0.0
    %4558 = vmatprep.subr.mxu0 0.0
    %4559 = vmatpush1.msra.mxu0 0.0
    %4560 = vmatprep.subr.mxu0 0.0
    %4561 = vmatpush1.msra.mxu0 0.0
    %4562 = vmatprep.subr.mxu0 0.0
    %4563 = vmatpush1.msra.mxu0 0.0
    %4564 = vmatprep.subr.mxu0 0.0
    %4565 = vmatpush1.msra.mxu0 0.0
    %4566 = vmatprep.subr.mxu0 0.0
    %4567 = vmatpush1.msra.mxu0 0.0
    %4568 = vmatprep.subr.mxu0 0.0
    %4569 = vmatpush1.msra.mxu0 0.0
    %4570 = vmatprep.subr.mxu0 0.0
    %4571 = vmatpush1.msra.mxu0 0.0
    %4572 = vmatprep.subr.mxu0 0.0
    %4573 = vmatpush1.msra.mxu0 0.0
    %4574 = vmatprep.subr.mxu0 0.0
    %4575 = vmatpush1.msra.mxu0 0.0
    %4576 = vmatprep.subr.mxu0 0.0
    %4577 = vmatpush1.msra.mxu0 0.0
    %4578 = vmatprep.subr.mxu0 0.0
    %4579 = vmatpush1.msra.mxu0 0.0
    %4580 = vmatprep.mubr.f32.mxu0 0.0
    %4581 = vmatmul.mubr.f32.gmra.mrb[0].mxu0 %v4511
    %v4582 = vpop.f32.mrb[0].mxu0
    %v4583 = vadd.f32 %v4509, %v4582
    %v4584 = vpop.f32.mrb[0].mxu0
    %4585 = vmatprep.mubr.f32.mxu0 0.0
    %4586 = vmatmul.mubr.f32.gmra.mrb[0].mxu0 %v4514
    %v4587 = vpop.f32.mrb[0].mxu0
    %v4588 = vadd.f32 %v4509, %v4587
    %v4589 = vpop.f32.mrb[0].mxu0
    %4590 = vdwg.mxu0
    %s4591 = scalar_lea.vmem %s4, 224
    %v4592 = vld [vmem:[%s4591] sm:$0xff]
    %v4593 = vld [vmem:[%s4591 + $0x8] sm:$0xff]
    %v4594 = vld [vmem:[%s4591 + $0x10] sm:$0xff]
    %v4595 = vld [vmem:[%s4591 + $0x18] sm:$0xff]
    %v4597 = vsel %vm346, %v4413, 0
    %v4600 = vsel %vm346, %v4492, 0
    %4602 = vmatprep.subr.mxu0 0.0
    %4603 = vmatpush1.xpose.msra.mxu0 %v4600
    %4604 = vmatprep.subr.mxu0 0.0
    %4605 = vmatpush1.xpose.msra.mxu0 0.0
    %4606 = vmatprep.subr.mxu0 0.0
    %4607 = vmatpush1.xpose.msra.mxu0 0.0
    %4608 = vmatprep.subr.mxu0 0.0
    %4609 = vmatpush1.xpose.msra.mxu0 0.0
    %4610 = vmatprep.subr.mxu0 0.0
    %4611 = vmatpush1.xpose.msra.mxu0 0.0
    %4612 = vmatprep.subr.mxu0 0.0
    %4613 = vmatpush1.xpose.msra.mxu0 0.0
    %4614 = vmatprep.subr.mxu0 0.0
    %4615 = vmatpush1.xpose.msra.mxu0 0.0
    %4616 = vmatprep.subr.mxu0 0.0
    %4617 = vmatpush1.xpose.msra.mxu0 0.0
    %4618 = vmatprep.subr.mxu0 0.0
    %4619 = vmatpush1.xpose.msra.mxu0 0.0
    %4620 = vmatprep.subr.mxu0 0.0
    %4621 = vmatpush1.xpose.msra.mxu0 0.0
    %4622 = vmatprep.subr.mxu0 0.0
    %4623 = vmatpush1.xpose.msra.mxu0 0.0
    %4624 = vmatprep.subr.mxu0 0.0
    %4625 = vmatpush1.xpose.msra.mxu0 0.0
    %4626 = vmatprep.subr.mxu0 0.0
    %4627 = vmatpush1.xpose.msra.mxu0 0.0
    %4628 = vmatprep.subr.mxu0 0.0
    %4629 = vmatpush1.xpose.msra.mxu0 0.0
    %4630 = vmatprep.subr.mxu0 0.0
    %4631 = vmatpush1.xpose.msra.mxu0 0.0
    %4632 = vmatprep.subr.mxu0 0.0
    %4633 = vmatpush1.xpose.msra.mxu0 0.0
    %4634 = vmatprep.subr.mxu0 0.0
    %4635 = vmatpush1.xpose.msra.mxu0 0.0
    %4636 = vmatprep.subr.mxu0 0.0
    %4637 = vmatpush1.xpose.msra.mxu0 0.0
    %4638 = vmatprep.subr.mxu0 0.0
    %4639 = vmatpush1.xpose.msra.mxu0 0.0
    %4640 = vmatprep.subr.mxu0 0.0
    %4641 = vmatpush1.xpose.msra.mxu0 0.0
    %4642 = vmatprep.subr.mxu0 0.0
    %4643 = vmatpush1.xpose.msra.mxu0 0.0
    %4644 = vmatprep.subr.mxu0 0.0
    %4645 = vmatpush1.xpose.msra.mxu0 0.0
    %4646 = vmatprep.subr.mxu0 0.0
    %4647 = vmatpush1.xpose.msra.mxu0 0.0
    %4648 = vmatprep.subr.mxu0 0.0
    %4649 = vmatpush1.xpose.msra.mxu0 0.0
    %4650 = vmatprep.subr.mxu0 0.0
    %4651 = vmatpush1.xpose.msra.mxu0 0.0
    %4652 = vmatprep.subr.mxu0 0.0
    %4653 = vmatpush1.xpose.msra.mxu0 0.0
    %4654 = vmatprep.subr.mxu0 0.0
    %4655 = vmatpush1.xpose.msra.mxu0 0.0
    %4656 = vmatprep.subr.mxu0 0.0
    %4657 = vmatpush1.xpose.msra.mxu0 0.0
    %4658 = vmatprep.subr.mxu0 0.0
    %4659 = vmatpush1.xpose.msra.mxu0 0.0
    %4660 = vmatprep.subr.mxu0 0.0
    %4661 = vmatpush1.xpose.msra.mxu0 0.0
    %4662 = vmatprep.subr.mxu0 0.0
    %4663 = vmatpush1.xpose.msra.mxu0 0.0
    %4664 = vmatprep.subr.mxu0 0.0
    %4665 = vmatpush1.xpose.msra.mxu0 0.0
    %4666 = vmatprep.mubr.f32.mxu0 0.0
    %4667 = vmatmul.mubr.f32.gmra.mrb[0].mxu0 %v4597
    %v4668 = vpop.f32.mrb[0].mxu0
    %v4669 = vadd.f32 0.0, %v4668
    %v4670 = vpop.f32.mrb[0].mxu0
    %4671 = vdwg.mxu0
    %v4673 = vsel %vm346, %v4414, 0
    %v4676 = vsel %vm346, %v4497, 0
    %4678 = vmatprep.subr.mxu0 0.0
    %4679 = vmatpush1.xpose.msra.mxu0 %v4676
    %4680 = vmatprep.subr.mxu0 0.0
    %4681 = vmatpush1.xpose.msra.mxu0 0.0
    %4682 = vmatprep.subr.mxu0 0.0
    %4683 = vmatpush1.xpose.msra.mxu0 0.0
    %4684 = vmatprep.subr.mxu0 0.0
    %4685 = vmatpush1.xpose.msra.mxu0 0.0
    %4686 = vmatprep.subr.mxu0 0.0
    %4687 = vmatpush1.xpose.msra.mxu0 0.0
    %4688 = vmatprep.subr.mxu0 0.0
    %4689 = vmatpush1.xpose.msra.mxu0 0.0
    %4690 = vmatprep.subr.mxu0 0.0
    %4691 = vmatpush1.xpose.msra.mxu0 0.0
    %4692 = vmatprep.subr.mxu0 0.0
    %4693 = vmatpush1.xpose.msra.mxu0 0.0
    %4694 = vmatprep.subr.mxu0 0.0
    %4695 = vmatpush1.xpose.msra.mxu0 0.0
    %4696 = vmatprep.subr.mxu0 0.0
    %4697 = vmatpush1.xpose.msra.mxu0 0.0
    %4698 = vmatprep.subr.mxu0 0.0
    %4699 = vmatpush1.xpose.msra.mxu0 0.0
    %4700 = vmatprep.subr.mxu0 0.0
    %4701 = vmatpush1.xpose.msra.mxu0 0.0
    %4702 = vmatprep.subr.mxu0 0.0
    %4703 = vmatpush1.xpose.msra.mxu0 0.0
    %4704 = vmatprep.subr.mxu0 0.0
    %4705 = vmatpush1.xpose.msra.mxu0 0.0
    %4706 = vmatprep.subr.mxu0 0.0
    %4707 = vmatpush1.xpose.msra.mxu0 0.0
    %4708 = vmatprep.subr.mxu0 0.0
    %4709 = vmatpush1.xpose.msra.mxu0 0.0
    %4710 = vmatprep.subr.mxu0 0.0
    %4711 = vmatpush1.xpose.msra.mxu0 0.0
    %4712 = vmatprep.subr.mxu0 0.0
    %4713 = vmatpush1.xpose.msra.mxu0 0.0
    %4714 = vmatprep.subr.mxu0 0.0
    %4715 = vmatpush1.xpose.msra.mxu0 0.0
    %4716 = vmatprep.subr.mxu0 0.0
    %4717 = vmatpush1.xpose.msra.mxu0 0.0
    %4718 = vmatprep.subr.mxu0 0.0
    %4719 = vmatpush1.xpose.msra.mxu0 0.0
    %4720 = vmatprep.subr.mxu0 0.0
    %4721 = vmatpush1.xpose.msra.mxu0 0.0
    %4722 = vmatprep.subr.mxu0 0.0
    %4723 = vmatpush1.xpose.msra.mxu0 0.0
    %4724 = vmatprep.subr.mxu0 0.0
    %4725 = vmatpush1.xpose.msra.mxu0 0.0
    %4726 = vmatprep.subr.mxu0 0.0
    %4727 = vmatpush1.xpose.msra.mxu0 0.0
    %4728 = vmatprep.subr.mxu0 0.0
    %4729 = vmatpush1.xpose.msra.mxu0 0.0
    %4730 = vmatprep.subr.mxu0 0.0
    %4731 = vmatpush1.xpose.msra.mxu0 0.0
    %4732 = vmatprep.subr.mxu0 0.0
    %4733 = vmatpush1.xpose.msra.mxu0 0.0
    %4734 = vmatprep.subr.mxu0 0.0
    %4735 = vmatpush1.xpose.msra.mxu0 0.0
    %4736 = vmatprep.subr.mxu0 0.0
    %4737 = vmatpush1.xpose.msra.mxu0 0.0
    %4738 = vmatprep.subr.mxu0 0.0
    %4739 = vmatpush1.xpose.msra.mxu0 0.0
    %4740 = vmatprep.subr.mxu0 0.0
    %4741 = vmatpush1.xpose.msra.mxu0 0.0
    %4742 = vmatprep.mubr.f32.mxu0 0.0
    %4743 = vmatmul.mubr.f32.gmra.mrb[0].mxu0 %v4673
    %v4744 = vpop.f32.mrb[0].mxu0
    %v4745 = vadd.f32 0.0, %v4744
    %v4746 = vpop.f32.mrb[0].mxu0
    %4747 = vdwg.mxu0
    %v4748 = vsel %vm346, %v4669, -inf
    %4749 = vmax.xlane.f32.xlu0 %v4748
    %v4750 = vpop.xlane.xlu0 %4749
    %v4751 = vsel %vm346, %v4745, -inf
    %4752 = vmax.xlane.f32.xlu0 %v4751
    %v4753 = vpop.xlane.xlu0 %4752
    %v4754 = vsub.f32 %v4669, %v4750
    %v4755 = vsub.f32 %v4745, %v4753
    %v4756 = vmul.f32 %v4754, 1.442695
    %v4757 = vpow.pop %v4756
    %v4758 = vmul.f32 %v4755, 1.442695
    %v4759 = vpow.pop %v4758
    %v4760 = vsel %vm346, %v4757, 0.0
    %4761 = vadd.xlane.f32.xlu0 %v4760
    %v4762 = vpop.xlane.xlu0 %4761
    %v4763 = vsel %vm346, %v4759, 0.0
    %4764 = vadd.xlane.f32.xlu0 %v4763
    %v4765 = vpop.xlane.xlu0 %4764
    %v4766 = vrcp.pop %v4762
    %v4767 = vmul.f32 %v4757, %v4766
    %v4768 = vrcp.pop %v4765
    %v4769 = vmul.f32 %v4759, %v4768
    %v4771 = vsel %vm346, %v4767, 0
    %4773 = vmatprep.subr.mxu0 0.0
    %4774 = vmatpush1.msra.mxu0 %v4583
    %4775 = vmatprep.subr.mxu0 0.0
    %4776 = vmatpush1.msra.mxu0 0.0
    %4777 = vmatprep.subr.mxu0 0.0
    %4778 = vmatpush1.msra.mxu0 0.0
    %4779 = vmatprep.subr.mxu0 0.0
    %4780 = vmatpush1.msra.mxu0 0.0
    %4781 = vmatprep.subr.mxu0 0.0
    %4782 = vmatpush1.msra.mxu0 0.0
    %4783 = vmatprep.subr.mxu0 0.0
    %4784 = vmatpush1.msra.mxu0 0.0
    %4785 = vmatprep.subr.mxu0 0.0
    %4786 = vmatpush1.msra.mxu0 0.0
    %4787 = vmatprep.subr.mxu0 0.0
    %4788 = vmatpush1.msra.mxu0 0.0
    %4789 = vmatprep.subr.mxu0 0.0
    %4790 = vmatpush1.msra.mxu0 0.0
    %4791 = vmatprep.subr.mxu0 0.0
    %4792 = vmatpush1.msra.mxu0 0.0
    %4793 = vmatprep.subr.mxu0 0.0
    %4794 = vmatpush1.msra.mxu0 0.0
    %4795 = vmatprep.subr.mxu0 0.0
    %4796 = vmatpush1.msra.mxu0 0.0
    %4797 = vmatprep.subr.mxu0 0.0
    %4798 = vmatpush1.msra.mxu0 0.0
    %4799 = vmatprep.subr.mxu0 0.0
    %4800 = vmatpush1.msra.mxu0 0.0
    %4801 = vmatprep.subr.mxu0 0.0
    %4802 = vmatpush1.msra.mxu0 0.0
    %4803 = vmatprep.subr.mxu0 0.0
    %4804 = vmatpush1.msra.mxu0 0.0
    %4805 = vmatprep.subr.mxu0 0.0
    %4806 = vmatpush1.msra.mxu0 0.0
    %4807 = vmatprep.subr.mxu0 0.0
    %4808 = vmatpush1.msra.mxu0 0.0
    %4809 = vmatprep.subr.mxu0 0.0
    %4810 = vmatpush1.msra.mxu0 0.0
    %4811 = vmatprep.subr.mxu0 0.0
    %4812 = vmatpush1.msra.mxu0 0.0
    %4813 = vmatprep.subr.mxu0 0.0
    %4814 = vmatpush1.msra.mxu0 0.0
    %4815 = vmatprep.subr.mxu0 0.0
    %4816 = vmatpush1.msra.mxu0 0.0
    %4817 = vmatprep.subr.mxu0 0.0
    %4818 = vmatpush1.msra.mxu0 0.0
    %4819 = vmatprep.subr.mxu0 0.0
    %4820 = vmatpush1.msra.mxu0 0.0
    %4821 = vmatprep.subr.mxu0 0.0
    %4822 = vmatpush1.msra.mxu0 0.0
    %4823 = vmatprep.subr.mxu0 0.0
    %4824 = vmatpush1.msra.mxu0 0.0
    %4825 = vmatprep.subr.mxu0 0.0
    %4826 = vmatpush1.msra.mxu0 0.0
    %4827 = vmatprep.subr.mxu0 0.0
    %4828 = vmatpush1.msra.mxu0 0.0
    %4829 = vmatprep.subr.mxu0 0.0
    %4830 = vmatpush1.msra.mxu0 0.0
    %4831 = vmatprep.subr.mxu0 0.0
    %4832 = vmatpush1.msra.mxu0 0.0
    %4833 = vmatprep.subr.mxu0 0.0
    %4834 = vmatpush1.msra.mxu0 0.0
    %4835 = vmatprep.subr.mxu0 0.0
    %4836 = vmatpush1.msra.mxu0 0.0
    %4837 = vmatprep.mubr.f32.mxu0 0.0
    %4838 = vmatmul.mubr.f32.gmra.mrb[0].mxu0 %v4771
    %v4839 = vpop.f32.mrb[0].mxu0
    %v4840 = vadd.f32 0.0, %v4839
    %v4841 = vpop.f32.mrb[0].mxu0
    %4842 = vdwg.mxu0
    %v4844 = vsel %vm346, %v4769, 0
    %4846 = vmatprep.subr.mxu0 0.0
    %4847 = vmatpush1.msra.mxu0 %v4588
    %4848 = vmatprep.subr.mxu0 0.0
    %4849 = vmatpush1.msra.mxu0 0.0
    %4850 = vmatprep.subr.mxu0 0.0
    %4851 = vmatpush1.msra.mxu0 0.0
    %4852 = vmatprep.subr.mxu0 0.0
    %4853 = vmatpush1.msra.mxu0 0.0
    %4854 = vmatprep.subr.mxu0 0.0
    %4855 = vmatpush1.msra.mxu0 0.0
    %4856 = vmatprep.subr.mxu0 0.0
    %4857 = vmatpush1.msra.mxu0 0.0
    %4858 = vmatprep.subr.mxu0 0.0
    %4859 = vmatpush1.msra.mxu0 0.0
    %4860 = vmatprep.subr.mxu0 0.0
    %4861 = vmatpush1.msra.mxu0 0.0
    %4862 = vmatprep.subr.mxu0 0.0
    %4863 = vmatpush1.msra.mxu0 0.0
    %4864 = vmatprep.subr.mxu0 0.0
    %4865 = vmatpush1.msra.mxu0 0.0
    %4866 = vmatprep.subr.mxu0 0.0
    %4867 = vmatpush1.msra.mxu0 0.0
    %4868 = vmatprep.subr.mxu0 0.0
    %4869 = vmatpush1.msra.mxu0 0.0
    %4870 = vmatprep.subr.mxu0 0.0
    %4871 = vmatpush1.msra.mxu0 0.0
    %4872 = vmatprep.subr.mxu0 0.0
    %4873 = vmatpush1.msra.mxu0 0.0
    %4874 = vmatprep.subr.mxu0 0.0
    %4875 = vmatpush1.msra.mxu0 0.0
    %4876 = vmatprep.subr.mxu0 0.0
    %4877 = vmatpush1.msra.mxu0 0.0
    %4878 = vmatprep.subr.mxu0 0.0
    %4879 = vmatpush1.msra.mxu0 0.0
    %4880 = vmatprep.subr.mxu0 0.0
    %4881 = vmatpush1.msra.mxu0 0.0
    %4882 = vmatprep.subr.mxu0 0.0
    %4883 = vmatpush1.msra.mxu0 0.0
    %4884 = vmatprep.subr.mxu0 0.0
    %4885 = vmatpush1.msra.mxu0 0.0
    %4886 = vmatprep.subr.mxu0 0.0
    %4887 = vmatpush1.msra.mxu0 0.0
    %4888 = vmatprep.subr.mxu0 0.0
    %4889 = vmatpush1.msra.mxu0 0.0
    %4890 = vmatprep.subr.mxu0 0.0
    %4891 = vmatpush1.msra.mxu0 0.0
    %4892 = vmatprep.subr.mxu0 0.0
    %4893 = vmatpush1.msra.mxu0 0.0
    %4894 = vmatprep.subr.mxu0 0.0
    %4895 = vmatpush1.msra.mxu0 0.0
    %4896 = vmatprep.subr.mxu0 0.0
    %4897 = vmatpush1.msra.mxu0 0.0
    %4898 = vmatprep.subr.mxu0 0.0
    %4899 = vmatpush1.msra.mxu0 0.0
    %4900 = vmatprep.subr.mxu0 0.0
    %4901 = vmatpush1.msra.mxu0 0.0
    %4902 = vmatprep.subr.mxu0 0.0
    %4903 = vmatpush1.msra.mxu0 0.0
    %4904 = vmatprep.subr.mxu0 0.0
    %4905 = vmatpush1.msra.mxu0 0.0
    %4906 = vmatprep.subr.mxu0 0.0
    %4907 = vmatpush1.msra.mxu0 0.0
    %4908 = vmatprep.subr.mxu0 0.0
    %4909 = vmatpush1.msra.mxu0 0.0
    %4910 = vmatprep.mubr.f32.mxu0 0.0
    %4911 = vmatmul.mubr.f32.gmra.mrb[0].mxu0 %v4844
    %v4912 = vpop.f32.mrb[0].mxu0
    %v4913 = vadd.f32 0.0, %v4912
    %v4914 = vpop.f32.mrb[0].mxu0
    %4915 = vdwg.mxu0
    %4916 = vrot.lane.b32.xlu0 %v4413, 120
    %v4917 = vpop.permute.xlu0 %4916
    %4918 = vrot.lane.b32.xlu0 %v4492, 120
    %v4919 = vpop.permute.xlu0 %4918
    %v4920 = vsel %vm346, %v4917, 0
    %v4922 = vsel %vm346, %v4919, 0
    %4924 = vmatprep.subr.mxu0 0.0
    %4925 = vmatpush1.xpose.msra.mxu0 %v4922
    %4926 = vmatprep.subr.mxu0 0.0
    %4927 = vmatpush1.xpose.msra.mxu0 0.0
    %4928 = vmatprep.subr.mxu0 0.0
    %4929 = vmatpush1.xpose.msra.mxu0 0.0
    %4930 = vmatprep.subr.mxu0 0.0
    %4931 = vmatpush1.xpose.msra.mxu0 0.0
    %4932 = vmatprep.subr.mxu0 0.0
    %4933 = vmatpush1.xpose.msra.mxu0 0.0
    %4934 = vmatprep.subr.mxu0 0.0
    %4935 = vmatpush1.xpose.msra.mxu0 0.0
    %4936 = vmatprep.subr.mxu0 0.0
    %4937 = vmatpush1.xpose.msra.mxu0 0.0
    %4938 = vmatprep.subr.mxu0 0.0
    %4939 = vmatpush1.xpose.msra.mxu0 0.0
    %4940 = vmatprep.subr.mxu0 0.0
    %4941 = vmatpush1.xpose.msra.mxu0 0.0
    %4942 = vmatprep.subr.mxu0 0.0
    %4943 = vmatpush1.xpose.msra.mxu0 0.0
    %4944 = vmatprep.subr.mxu0 0.0
    %4945 = vmatpush1.xpose.msra.mxu0 0.0
    %4946 = vmatprep.subr.mxu0 0.0
    %4947 = vmatpush1.xpose.msra.mxu0 0.0
    %4948 = vmatprep.subr.mxu0 0.0
    %4949 = vmatpush1.xpose.msra.mxu0 0.0
    %4950 = vmatprep.subr.mxu0 0.0
    %4951 = vmatpush1.xpose.msra.mxu0 0.0
    %4952 = vmatprep.subr.mxu0 0.0
    %4953 = vmatpush1.xpose.msra.mxu0 0.0
    %4954 = vmatprep.subr.mxu0 0.0
    %4955 = vmatpush1.xpose.msra.mxu0 0.0
    %4956 = vmatprep.subr.mxu0 0.0
    %4957 = vmatpush1.xpose.msra.mxu0 0.0
    %4958 = vmatprep.subr.mxu0 0.0
    %4959 = vmatpush1.xpose.msra.mxu0 0.0
    %4960 = vmatprep.subr.mxu0 0.0
    %4961 = vmatpush1.xpose.msra.mxu0 0.0
    %4962 = vmatprep.subr.mxu0 0.0
    %4963 = vmatpush1.xpose.msra.mxu0 0.0
    %4964 = vmatprep.subr.mxu0 0.0
    %4965 = vmatpush1.xpose.msra.mxu0 0.0
    %4966 = vmatprep.subr.mxu0 0.0
    %4967 = vmatpush1.xpose.msra.mxu0 0.0
    %4968 = vmatprep.subr.mxu0 0.0
    %4969 = vmatpush1.xpose.msra.mxu0 0.0
    %4970 = vmatprep.subr.mxu0 0.0
    %4971 = vmatpush1.xpose.msra.mxu0 0.0
    %4972 = vmatprep.subr.mxu0 0.0
    %4973 = vmatpush1.xpose.msra.mxu0 0.0
    %4974 = vmatprep.subr.mxu0 0.0
    %4975 = vmatpush1.xpose.msra.mxu0 0.0
    %4976 = vmatprep.subr.mxu0 0.0
    %4977 = vmatpush1.xpose.msra.mxu0 0.0
    %4978 = vmatprep.subr.mxu0 0.0
    %4979 = vmatpush1.xpose.msra.mxu0 0.0
    %4980 = vmatprep.subr.mxu0 0.0
    %4981 = vmatpush1.xpose.msra.mxu0 0.0
    %4982 = vmatprep.subr.mxu0 0.0
    %4983 = vmatpush1.xpose.msra.mxu0 0.0
    %4984 = vmatprep.subr.mxu0 0.0
    %4985 = vmatpush1.xpose.msra.mxu0 0.0
    %4986 = vmatprep.subr.mxu0 0.0
    %4987 = vmatpush1.xpose.msra.mxu0 0.0
    %4988 = vmatprep.mubr.f32.mxu0 0.0
    %4989 = vmatmul.mubr.f32.gmra.mrb[0].mxu0 %v4920
    %v4990 = vpop.f32.mrb[0].mxu0
    %v4991 = vadd.f32 0.0, %v4990
    %v4992 = vpop.f32.mrb[0].mxu0
    %4993 = vdwg.mxu0
    %4994 = vrot.lane.b32.xlu0 %v4414, 120
    %v4995 = vpop.permute.xlu0 %4994
    %4996 = vrot.lane.b32.xlu0 %v4497, 120
    %v4997 = vpop.permute.xlu0 %4996
    %v4998 = vsel %vm346, %v4995, 0
    %v5000 = vsel %vm346, %v4997, 0
    %5002 = vmatprep.subr.mxu0 0.0
    %5003 = vmatpush1.xpose.msra.mxu0 %v5000
    %5004 = vmatprep.subr.mxu0 0.0
    %5005 = vmatpush1.xpose.msra.mxu0 0.0
    %5006 = vmatprep.subr.mxu0 0.0
    %5007 = vmatpush1.xpose.msra.mxu0 0.0
    %5008 = vmatprep.subr.mxu0 0.0
    %5009 = vmatpush1.xpose.msra.mxu0 0.0
    %5010 = vmatprep.subr.mxu0 0.0
    %5011 = vmatpush1.xpose.msra.mxu0 0.0
    %5012 = vmatprep.subr.mxu0 0.0
    %5013 = vmatpush1.xpose.msra.mxu0 0.0
    %5014 = vmatprep.subr.mxu0 0.0
    %5015 = vmatpush1.xpose.msra.mxu0 0.0
    %5016 = vmatprep.subr.mxu0 0.0
    %5017 = vmatpush1.xpose.msra.mxu0 0.0
    %5018 = vmatprep.subr.mxu0 0.0
    %5019 = vmatpush1.xpose.msra.mxu0 0.0
    %5020 = vmatprep.subr.mxu0 0.0
    %5021 = vmatpush1.xpose.msra.mxu0 0.0
    %5022 = vmatprep.subr.mxu0 0.0
    %5023 = vmatpush1.xpose.msra.mxu0 0.0
    %5024 = vmatprep.subr.mxu0 0.0
    %5025 = vmatpush1.xpose.msra.mxu0 0.0
    %5026 = vmatprep.subr.mxu0 0.0
    %5027 = vmatpush1.xpose.msra.mxu0 0.0
    %5028 = vmatprep.subr.mxu0 0.0
    %5029 = vmatpush1.xpose.msra.mxu0 0.0
    %5030 = vmatprep.subr.mxu0 0.0
    %5031 = vmatpush1.xpose.msra.mxu0 0.0
    %5032 = vmatprep.subr.mxu0 0.0
    %5033 = vmatpush1.xpose.msra.mxu0 0.0
    %5034 = vmatprep.subr.mxu0 0.0
    %5035 = vmatpush1.xpose.msra.mxu0 0.0
    %5036 = vmatprep.subr.mxu0 0.0
    %5037 = vmatpush1.xpose.msra.mxu0 0.0
    %5038 = vmatprep.subr.mxu0 0.0
    %5039 = vmatpush1.xpose.msra.mxu0 0.0
    %5040 = vmatprep.subr.mxu0 0.0
    %5041 = vmatpush1.xpose.msra.mxu0 0.0
    %5042 = vmatprep.subr.mxu0 0.0
    %5043 = vmatpush1.xpose.msra.mxu0 0.0
    %5044 = vmatprep.subr.mxu0 0.0
    %5045 = vmatpush1.xpose.msra.mxu0 0.0
    %5046 = vmatprep.subr.mxu0 0.0
    %5047 = vmatpush1.xpose.msra.mxu0 0.0
    %5048 = vmatprep.subr.mxu0 0.0
    %5049 = vmatpush1.xpose.msra.mxu0 0.0
    %5050 = vmatprep.subr.mxu0 0.0
    %5051 = vmatpush1.xpose.msra.mxu0 0.0
    %5052 = vmatprep.subr.mxu0 0.0
    %5053 = vmatpush1.xpose.msra.mxu0 0.0
    %5054 = vmatprep.subr.mxu0 0.0
    %5055 = vmatpush1.xpose.msra.mxu0 0.0
    %5056 = vmatprep.subr.mxu0 0.0
    %5057 = vmatpush1.xpose.msra.mxu0 0.0
    %5058 = vmatprep.subr.mxu0 0.0
    %5059 = vmatpush1.xpose.msra.mxu0 0.0
    %5060 = vmatprep.subr.mxu0 0.0
    %5061 = vmatpush1.xpose.msra.mxu0 0.0
    %5062 = vmatprep.subr.mxu0 0.0
    %5063 = vmatpush1.xpose.msra.mxu0 0.0
    %5064 = vmatprep.subr.mxu0 0.0
    %5065 = vmatpush1.xpose.msra.mxu0 0.0
    %5066 = vmatprep.mubr.f32.mxu0 0.0
    %5067 = vmatmul.mubr.f32.gmra.mrb[0].mxu0 %v4998
    %v5068 = vpop.f32.mrb[0].mxu0
    %v5069 = vadd.f32 0.0, %v5068
    %v5070 = vpop.f32.mrb[0].mxu0
    %5071 = vdwg.mxu0
    %v5072 = vsel %vm346, %v4991, -inf
    %5073 = vmax.xlane.f32.xlu0 %v5072
    %v5074 = vpop.xlane.xlu0 %5073
    %v5075 = vsel %vm346, %v5069, -inf
    %5076 = vmax.xlane.f32.xlu0 %v5075
    %v5077 = vpop.xlane.xlu0 %5076
    %v5078 = vsub.f32 %v4991, %v5074
    %v5079 = vsub.f32 %v5069, %v5077
    %v5080 = vmul.f32 %v5078, 1.442695
    %v5081 = vpow.pop %v5080
    %v5082 = vmul.f32 %v5079, 1.442695
    %v5083 = vpow.pop %v5082
    %v5084 = vsel %vm346, %v5081, 0.0
    %5085 = vadd.xlane.f32.xlu0 %v5084
    %v5086 = vpop.xlane.xlu0 %5085
    %v5087 = vsel %vm346, %v5083, 0.0
    %5088 = vadd.xlane.f32.xlu0 %v5087
    %v5089 = vpop.xlane.xlu0 %5088
    %v5090 = vrcp.pop %v5086
    %v5091 = vmul.f32 %v5081, %v5090
    %v5092 = vrcp.pop %v5089
    %v5093 = vmul.f32 %v5083, %v5092
    %5095 = vrot.lane.b32.xlu0 %v4583, 120
    %v5096 = vpop.permute.xlu0 %5095
    %v5099 = vsel %vm346, %v5091, 0
    %5101 = vmatprep.subr.mxu0 0.0
    %5102 = vmatpush1.msra.mxu0 %v5096
    %5103 = vmatprep.subr.mxu0 0.0
    %5104 = vmatpush1.msra.mxu0 0.0
    %5105 = vmatprep.subr.mxu0 0.0
    %5106 = vmatpush1.msra.mxu0 0.0
    %5107 = vmatprep.subr.mxu0 0.0
    %5108 = vmatpush1.msra.mxu0 0.0
    %5109 = vmatprep.subr.mxu0 0.0
    %5110 = vmatpush1.msra.mxu0 0.0
    %5111 = vmatprep.subr.mxu0 0.0
    %5112 = vmatpush1.msra.mxu0 0.0
    %5113 = vmatprep.subr.mxu0 0.0
    %5114 = vmatpush1.msra.mxu0 0.0
    %5115 = vmatprep.subr.mxu0 0.0
    %5116 = vmatpush1.msra.mxu0 0.0
    %5117 = vmatprep.subr.mxu0 0.0
    %5118 = vmatpush1.msra.mxu0 0.0
    %5119 = vmatprep.subr.mxu0 0.0
    %5120 = vmatpush1.msra.mxu0 0.0
    %5121 = vmatprep.subr.mxu0 0.0
    %5122 = vmatpush1.msra.mxu0 0.0
    %5123 = vmatprep.subr.mxu0 0.0
    %5124 = vmatpush1.msra.mxu0 0.0
    %5125 = vmatprep.subr.mxu0 0.0
    %5126 = vmatpush1.msra.mxu0 0.0
    %5127 = vmatprep.subr.mxu0 0.0
    %5128 = vmatpush1.msra.mxu0 0.0
    %5129 = vmatprep.subr.mxu0 0.0
    %5130 = vmatpush1.msra.mxu0 0.0
    %5131 = vmatprep.subr.mxu0 0.0
    %5132 = vmatpush1.msra.mxu0 0.0
    %5133 = vmatprep.subr.mxu0 0.0
    %5134 = vmatpush1.msra.mxu0 0.0
    %5135 = vmatprep.subr.mxu0 0.0
    %5136 = vmatpush1.msra.mxu0 0.0
    %5137 = vmatprep.subr.mxu0 0.0
    %5138 = vmatpush1.msra.mxu0 0.0
    %5139 = vmatprep.subr.mxu0 0.0
    %5140 = vmatpush1.msra.mxu0 0.0
    %5141 = vmatprep.subr.mxu0 0.0
    %5142 = vmatpush1.msra.mxu0 0.0
    %5143 = vmatprep.subr.mxu0 0.0
    %5144 = vmatpush1.msra.mxu0 0.0
    %5145 = vmatprep.subr.mxu0 0.0
    %5146 = vmatpush1.msra.mxu0 0.0
    %5147 = vmatprep.subr.mxu0 0.0
    %5148 = vmatpush1.msra.mxu0 0.0
    %5149 = vmatprep.subr.mxu0 0.0
    %5150 = vmatpush1.msra.mxu0 0.0
    %5151 = vmatprep.subr.mxu0 0.0
    %5152 = vmatpush1.msra.mxu0 0.0
    %5153 = vmatprep.subr.mxu0 0.0
    %5154 = vmatpush1.msra.mxu0 0.0
    %5155 = vmatprep.subr.mxu0 0.0
    %5156 = vmatpush1.msra.mxu0 0.0
    %5157 = vmatprep.subr.mxu0 0.0
    %5158 = vmatpush1.msra.mxu0 0.0
    %5159 = vmatprep.subr.mxu0 0.0
    %5160 = vmatpush1.msra.mxu0 0.0
    %5161 = vmatprep.subr.mxu0 0.0
    %5162 = vmatpush1.msra.mxu0 0.0
    %5163 = vmatprep.subr.mxu0 0.0
    %5164 = vmatpush1.msra.mxu0 0.0
    %5165 = vmatprep.mubr.f32.mxu0 0.0
    %5166 = vmatmul.mubr.f32.gmra.mrb[0].mxu0 %v5099
    %v5167 = vpop.f32.mrb[0].mxu0
    %v5168 = vadd.f32 0.0, %v5167
    %v5169 = vpop.f32.mrb[0].mxu0
    %5170 = vdwg.mxu0
    %5172 = vrot.lane.b32.xlu0 %v4588, 120
    %v5173 = vpop.permute.xlu0 %5172
    %v5176 = vsel %vm346, %v5093, 0
    %5178 = vmatprep.subr.mxu0 0.0
    %5179 = vmatpush1.msra.mxu0 %v5173
    %5180 = vmatprep.subr.mxu0 0.0
    %5181 = vmatpush1.msra.mxu0 0.0
    %5182 = vmatprep.subr.mxu0 0.0
    %5183 = vmatpush1.msra.mxu0 0.0
    %5184 = vmatprep.subr.mxu0 0.0
    %5185 = vmatpush1.msra.mxu0 0.0
    %5186 = vmatprep.subr.mxu0 0.0
    %5187 = vmatpush1.msra.mxu0 0.0
    %5188 = vmatprep.subr.mxu0 0.0
    %5189 = vmatpush1.msra.mxu0 0.0
    %5190 = vmatprep.subr.mxu0 0.0
    %5191 = vmatpush1.msra.mxu0 0.0
    %5192 = vmatprep.subr.mxu0 0.0
    %5193 = vmatpush1.msra.mxu0 0.0
    %5194 = vmatprep.subr.mxu0 0.0
    %5195 = vmatpush1.msra.mxu0 0.0
    %5196 = vmatprep.subr.mxu0 0.0
    %5197 = vmatpush1.msra.mxu0 0.0
    %5198 = vmatprep.subr.mxu0 0.0
    %5199 = vmatpush1.msra.mxu0 0.0
    %5200 = vmatprep.subr.mxu0 0.0
    %5201 = vmatpush1.msra.mxu0 0.0
    %5202 = vmatprep.subr.mxu0 0.0
    %5203 = vmatpush1.msra.mxu0 0.0
    %5204 = vmatprep.subr.mxu0 0.0
    %5205 = vmatpush1.msra.mxu0 0.0
    %5206 = vmatprep.subr.mxu0 0.0
    %5207 = vmatpush1.msra.mxu0 0.0
    %5208 = vmatprep.subr.mxu0 0.0
    %5209 = vmatpush1.msra.mxu0 0.0
    %5210 = vmatprep.subr.mxu0 0.0
    %5211 = vmatpush1.msra.mxu0 0.0
    %5212 = vmatprep.subr.mxu0 0.0
    %5213 = vmatpush1.msra.mxu0 0.0
    %5214 = vmatprep.subr.mxu0 0.0
    %5215 = vmatpush1.msra.mxu0 0.0
    %5216 = vmatprep.subr.mxu0 0.0
    %5217 = vmatpush1.msra.mxu0 0.0
    %5218 = vmatprep.subr.mxu0 0.0
    %5219 = vmatpush1.msra.mxu0 0.0
    %5220 = vmatprep.subr.mxu0 0.0
    %5221 = vmatpush1.msra.mxu0 0.0
    %5222 = vmatprep.subr.mxu0 0.0
    %5223 = vmatpush1.msra.mxu0 0.0
    %5224 = vmatprep.subr.mxu0 0.0
    %5225 = vmatpush1.msra.mxu0 0.0
    %5226 = vmatprep.subr.mxu0 0.0
    %5227 = vmatpush1.msra.mxu0 0.0
    %5228 = vmatprep.subr.mxu0 0.0
    %5229 = vmatpush1.msra.mxu0 0.0
    %5230 = vmatprep.subr.mxu0 0.0
    %5231 = vmatpush1.msra.mxu0 0.0
    %5232 = vmatprep.subr.mxu0 0.0
    %5233 = vmatpush1.msra.mxu0 0.0
    %5234 = vmatprep.subr.mxu0 0.0
    %5235 = vmatpush1.msra.mxu0 0.0
    %5236 = vmatprep.subr.mxu0 0.0
    %5237 = vmatpush1.msra.mxu0 0.0
    %5238 = vmatprep.subr.mxu0 0.0
    %5239 = vmatpush1.msra.mxu0 0.0
    %5240 = vmatprep.subr.mxu0 0.0
    %5241 = vmatpush1.msra.mxu0 0.0
    %5242 = vmatprep.mubr.f32.mxu0 0.0
    %5243 = vmatmul.mubr.f32.gmra.mrb[0].mxu0 %v5176
    %v5244 = vpop.f32.mrb[0].mxu0
    %v5245 = vadd.f32 0.0, %v5244
    %v5246 = vpop.f32.mrb[0].mxu0
    %5247 = vdwg.mxu0
    %v5249 = vsel %vm346, %v5168, 0
    %v5252 = vsel %vm346, %v5245, 0
    %5254 = vmatprep.subr.mxu0 0.0
    %5255 = vmatpush1.msra.mxu0 %v4593
    %5256 = vmatprep.subr.mxu0 0.0
    %5257 = vmatpush1.msra.mxu0 0.0
    %5258 = vmatprep.subr.mxu0 0.0
    %5259 = vmatpush1.msra.mxu0 0.0
    %5260 = vmatprep.subr.mxu0 0.0
    %5261 = vmatpush1.msra.mxu0 0.0
    %5262 = vmatprep.subr.mxu0 0.0
    %5263 = vmatpush1.msra.mxu0 0.0
    %5264 = vmatprep.subr.mxu0 0.0
    %5265 = vmatpush1.msra.mxu0 0.0
    %5266 = vmatprep.subr.mxu0 0.0
    %5267 = vmatpush1.msra.mxu0 0.0
    %5268 = vmatprep.subr.mxu0 0.0
    %5269 = vmatpush1.msra.mxu0 0.0
    %5270 = vmatprep.subr.mxu0 0.0
    %5271 = vmatpush1.msra.mxu0 0.0
    %5272 = vmatprep.subr.mxu0 0.0
    %5273 = vmatpush1.msra.mxu0 0.0
    %5274 = vmatprep.subr.mxu0 0.0
    %5275 = vmatpush1.msra.mxu0 0.0
    %5276 = vmatprep.subr.mxu0 0.0
    %5277 = vmatpush1.msra.mxu0 0.0
    %5278 = vmatprep.subr.mxu0 0.0
    %5279 = vmatpush1.msra.mxu0 0.0
    %5280 = vmatprep.subr.mxu0 0.0
    %5281 = vmatpush1.msra.mxu0 0.0
    %5282 = vmatprep.subr.mxu0 0.0
    %5283 = vmatpush1.msra.mxu0 0.0
    %5284 = vmatprep.subr.mxu0 0.0
    %5285 = vmatpush1.msra.mxu0 0.0
    %5286 = vmatprep.subr.mxu0 0.0
    %5287 = vmatpush1.msra.mxu0 0.0
    %5288 = vmatprep.subr.mxu0 0.0
    %5289 = vmatpush1.msra.mxu0 0.0
    %5290 = vmatprep.subr.mxu0 0.0
    %5291 = vmatpush1.msra.mxu0 0.0
    %5292 = vmatprep.subr.mxu0 0.0
    %5293 = vmatpush1.msra.mxu0 0.0
    %5294 = vmatprep.subr.mxu0 0.0
    %5295 = vmatpush1.msra.mxu0 0.0
    %5296 = vmatprep.subr.mxu0 0.0
    %5297 = vmatpush1.msra.mxu0 0.0
    %5298 = vmatprep.subr.mxu0 0.0
    %5299 = vmatpush1.msra.mxu0 0.0
    %5300 = vmatprep.subr.mxu0 0.0
    %5301 = vmatpush1.msra.mxu0 0.0
    %5302 = vmatprep.subr.mxu0 0.0
    %5303 = vmatpush1.msra.mxu0 0.0
    %5304 = vmatprep.subr.mxu0 0.0
    %5305 = vmatpush1.msra.mxu0 0.0
    %5306 = vmatprep.subr.mxu0 0.0
    %5307 = vmatpush1.msra.mxu0 0.0
    %5308 = vmatprep.subr.mxu0 0.0
    %5309 = vmatpush1.msra.mxu0 0.0
    %5310 = vmatprep.subr.mxu0 0.0
    %5311 = vmatpush1.msra.mxu0 0.0
    %5312 = vmatprep.subr.mxu0 0.0
    %5313 = vmatpush1.msra.mxu0 0.0
    %5314 = vmatprep.subr.mxu0 0.0
    %5315 = vmatpush1.msra.mxu0 0.0
    %5316 = vmatprep.subr.mxu0 0.0
    %5317 = vmatpush1.msra.mxu0 0.0
    %5318 = vmatprep.mubr.f32.mxu0 0.0
    %5319 = vmatmul.mubr.f32.gmra.mrb[0].mxu0 %v5249
    %v5320 = vpop.f32.mrb[0].mxu0
    %v5321 = vadd.f32 0.0, %v5320
    %v5322 = vpop.f32.mrb[0].mxu0
    %5323 = vmatprep.mubr.f32.mxu0 0.0
    %5324 = vmatmul.mubr.f32.gmra.mrb[0].mxu0 %v5252
    %v5325 = vpop.f32.mrb[0].mxu0
    %v5326 = vadd.f32 0.0, %v5325
    %v5327 = vpop.f32.mrb[0].mxu0
    %5328 = vdwg.mxu0
    %v5330 = vsel %vm346, %v4840, 0
    %v5333 = vsel %vm346, %v4913, 0
    %5335 = vmatprep.subr.mxu0 0.0
    %5336 = vmatpush1.msra.mxu0 %v4592
    %5337 = vmatprep.subr.mxu0 0.0
    %5338 = vmatpush1.msra.mxu0 0.0
    %5339 = vmatprep.subr.mxu0 0.0
    %5340 = vmatpush1.msra.mxu0 0.0
    %5341 = vmatprep.subr.mxu0 0.0
    %5342 = vmatpush1.msra.mxu0 0.0
    %5343 = vmatprep.subr.mxu0 0.0
    %5344 = vmatpush1.msra.mxu0 0.0
    %5345 = vmatprep.subr.mxu0 0.0
    %5346 = vmatpush1.msra.mxu0 0.0
    %5347 = vmatprep.subr.mxu0 0.0
    %5348 = vmatpush1.msra.mxu0 0.0
    %5349 = vmatprep.subr.mxu0 0.0
    %5350 = vmatpush1.msra.mxu0 0.0
    %5351 = vmatprep.subr.mxu0 0.0
    %5352 = vmatpush1.msra.mxu0 0.0
    %5353 = vmatprep.subr.mxu0 0.0
    %5354 = vmatpush1.msra.mxu0 0.0
    %5355 = vmatprep.subr.mxu0 0.0
    %5356 = vmatpush1.msra.mxu0 0.0
    %5357 = vmatprep.subr.mxu0 0.0
    %5358 = vmatpush1.msra.mxu0 0.0
    %5359 = vmatprep.subr.mxu0 0.0
    %5360 = vmatpush1.msra.mxu0 0.0
    %5361 = vmatprep.subr.mxu0 0.0
    %5362 = vmatpush1.msra.mxu0 0.0
    %5363 = vmatprep.subr.mxu0 0.0
    %5364 = vmatpush1.msra.mxu0 0.0
    %5365 = vmatprep.subr.mxu0 0.0
    %5366 = vmatpush1.msra.mxu0 0.0
    %5367 = vmatprep.subr.mxu0 0.0
    %5368 = vmatpush1.msra.mxu0 0.0
    %5369 = vmatprep.subr.mxu0 0.0
    %5370 = vmatpush1.msra.mxu0 0.0
    %5371 = vmatprep.subr.mxu0 0.0
    %5372 = vmatpush1.msra.mxu0 0.0
    %5373 = vmatprep.subr.mxu0 0.0
    %5374 = vmatpush1.msra.mxu0 0.0
    %5375 = vmatprep.subr.mxu0 0.0
    %5376 = vmatpush1.msra.mxu0 0.0
    %5377 = vmatprep.subr.mxu0 0.0
    %5378 = vmatpush1.msra.mxu0 0.0
    %5379 = vmatprep.subr.mxu0 0.0
    %5380 = vmatpush1.msra.mxu0 0.0
    %5381 = vmatprep.subr.mxu0 0.0
    %5382 = vmatpush1.msra.mxu0 0.0
    %5383 = vmatprep.subr.mxu0 0.0
    %5384 = vmatpush1.msra.mxu0 0.0
    %5385 = vmatprep.subr.mxu0 0.0
    %5386 = vmatpush1.msra.mxu0 0.0
    %5387 = vmatprep.subr.mxu0 0.0
    %5388 = vmatpush1.msra.mxu0 0.0
    %5389 = vmatprep.subr.mxu0 0.0
    %5390 = vmatpush1.msra.mxu0 0.0
    %5391 = vmatprep.subr.mxu0 0.0
    %5392 = vmatpush1.msra.mxu0 0.0
    %5393 = vmatprep.subr.mxu0 0.0
    %5394 = vmatpush1.msra.mxu0 0.0
    %5395 = vmatprep.subr.mxu0 0.0
    %5396 = vmatpush1.msra.mxu0 0.0
    %5397 = vmatprep.subr.mxu0 0.0
    %5398 = vmatpush1.msra.mxu0 0.0
    %5399 = vmatprep.mubr.f32.mxu0 0.0
    %5400 = vmatmul.mubr.f32.gmra.mrb[0].mxu0 %v5330
    %v5401 = vpop.f32.mrb[0].mxu0
    %v5402 = vadd.f32 %v5321, %v5401
    %v5403 = vpop.f32.mrb[0].mxu0
    %5404 = vmatprep.mubr.f32.mxu0 0.0
    %5405 = vmatmul.mubr.f32.gmra.mrb[0].mxu0 %v5333
    %v5406 = vpop.f32.mrb[0].mxu0
    %v5407 = vadd.f32 %v5326, %v5406
    %v5408 = vpop.f32.mrb[0].mxu0
    %5409 = vdwg.mxu0
    %5410 = vrot.lane.b32.xlu0 %v4413, 112
    %v5411 = vpop.permute.xlu0 %5410
    %5412 = vrot.lane.b32.xlu0 %v4492, 112
    %v5413 = vpop.permute.xlu0 %5412
    %v5414 = vsel %vm346, %v5411, 0
    %v5416 = vsel %vm346, %v5413, 0
    %5418 = vmatprep.subr.mxu0 0.0
    %5419 = vmatpush1.xpose.msra.mxu0 %v5416
    %5420 = vmatprep.subr.mxu0 0.0
    %5421 = vmatpush1.xpose.msra.mxu0 0.0
    %5422 = vmatprep.subr.mxu0 0.0
    %5423 = vmatpush1.xpose.msra.mxu0 0.0
    %5424 = vmatprep.subr.mxu0 0.0
    %5425 = vmatpush1.xpose.msra.mxu0 0.0
    %5426 = vmatprep.subr.mxu0 0.0
    %5427 = vmatpush1.xpose.msra.mxu0 0.0
    %5428 = vmatprep.subr.mxu0 0.0
    %5429 = vmatpush1.xpose.msra.mxu0 0.0
    %5430 = vmatprep.subr.mxu0 0.0
    %5431 = vmatpush1.xpose.msra.mxu0 0.0
    %5432 = vmatprep.subr.mxu0 0.0
    %5433 = vmatpush1.xpose.msra.mxu0 0.0
    %5434 = vmatprep.subr.mxu0 0.0
    %5435 = vmatpush1.xpose.msra.mxu0 0.0
    %5436 = vmatprep.subr.mxu0 0.0
    %5437 = vmatpush1.xpose.msra.mxu0 0.0
    %5438 = vmatprep.subr.mxu0 0.0
    %5439 = vmatpush1.xpose.msra.mxu0 0.0
    %5440 = vmatprep.subr.mxu0 0.0
    %5441 = vmatpush1.xpose.msra.mxu0 0.0
    %5442 = vmatprep.subr.mxu0 0.0
    %5443 = vmatpush1.xpose.msra.mxu0 0.0
    %5444 = vmatprep.subr.mxu0 0.0
    %5445 = vmatpush1.xpose.msra.mxu0 0.0
    %5446 = vmatprep.subr.mxu0 0.0
    %5447 = vmatpush1.xpose.msra.mxu0 0.0
    %5448 = vmatprep.subr.mxu0 0.0
    %5449 = vmatpush1.xpose.msra.mxu0 0.0
    %5450 = vmatprep.subr.mxu0 0.0
    %5451 = vmatpush1.xpose.msra.mxu0 0.0
    %5452 = vmatprep.subr.mxu0 0.0
    %5453 = vmatpush1.xpose.msra.mxu0 0.0
    %5454 = vmatprep.subr.mxu0 0.0
    %5455 = vmatpush1.xpose.msra.mxu0 0.0
    %5456 = vmatprep.subr.mxu0 0.0
    %5457 = vmatpush1.xpose.msra.mxu0 0.0
    %5458 = vmatprep.subr.mxu0 0.0
    %5459 = vmatpush1.xpose.msra.mxu0 0.0
    %5460 = vmatprep.subr.mxu0 0.0
    %5461 = vmatpush1.xpose.msra.mxu0 0.0
    %5462 = vmatprep.subr.mxu0 0.0
    %5463 = vmatpush1.xpose.msra.mxu0 0.0
    %5464 = vmatprep.subr.mxu0 0.0
    %5465 = vmatpush1.xpose.msra.mxu0 0.0
    %5466 = vmatprep.subr.mxu0 0.0
    %5467 = vmatpush1.xpose.msra.mxu0 0.0
    %5468 = vmatprep.subr.mxu0 0.0
    %5469 = vmatpush1.xpose.msra.mxu0 0.0
    %5470 = vmatprep.subr.mxu0 0.0
    %5471 = vmatpush1.xpose.msra.mxu0 0.0
    %5472 = vmatprep.subr.mxu0 0.0
    %5473 = vmatpush1.xpose.msra.mxu0 0.0
    %5474 = vmatprep.subr.mxu0 0.0
    %5475 = vmatpush1.xpose.msra.mxu0 0.0
    %5476 = vmatprep.subr.mxu0 0.0
    %5477 = vmatpush1.xpose.msra.mxu0 0.0
    %5478 = vmatprep.subr.mxu0 0.0
    %5479 = vmatpush1.xpose.msra.mxu0 0.0
    %5480 = vmatprep.subr.mxu0 0.0
    %5481 = vmatpush1.xpose.msra.mxu0 0.0
    %5482 = vmatprep.mubr.f32.mxu0 0.0
    %5483 = vmatmul.mubr.f32.gmra.mrb[0].mxu0 %v5414
    %v5484 = vpop.f32.mrb[0].mxu0
    %v5485 = vadd.f32 0.0, %v5484
    %v5486 = vpop.f32.mrb[0].mxu0
    %5487 = vdwg.mxu0
    %5488 = vrot.lane.b32.xlu0 %v4414, 112
    %v5489 = vpop.permute.xlu0 %5488
    %5490 = vrot.lane.b32.xlu0 %v4497, 112
    %v5491 = vpop.permute.xlu0 %5490
    %v5492 = vsel %vm346, %v5489, 0
    %v5494 = vsel %vm346, %v5491, 0
    %5496 = vmatprep.subr.mxu0 0.0
    %5497 = vmatpush1.xpose.msra.mxu0 %v5494
    %5498 = vmatprep.subr.mxu0 0.0
    %5499 = vmatpush1.xpose.msra.mxu0 0.0
    %5500 = vmatprep.subr.mxu0 0.0
    %5501 = vmatpush1.xpose.msra.mxu0 0.0
    %5502 = vmatprep.subr.mxu0 0.0
    %5503 = vmatpush1.xpose.msra.mxu0 0.0
    %5504 = vmatprep.subr.mxu0 0.0
    %5505 = vmatpush1.xpose.msra.mxu0 0.0
    %5506 = vmatprep.subr.mxu0 0.0
    %5507 = vmatpush1.xpose.msra.mxu0 0.0
    %5508 = vmatprep.subr.mxu0 0.0
    %5509 = vmatpush1.xpose.msra.mxu0 0.0
    %5510 = vmatprep.subr.mxu0 0.0
    %5511 = vmatpush1.xpose.msra.mxu0 0.0
    %5512 = vmatprep.subr.mxu0 0.0
    %5513 = vmatpush1.xpose.msra.mxu0 0.0
    %5514 = vmatprep.subr.mxu0 0.0
    %5515 = vmatpush1.xpose.msra.mxu0 0.0
    %5516 = vmatprep.subr.mxu0 0.0
    %5517 = vmatpush1.xpose.msra.mxu0 0.0
    %5518 = vmatprep.subr.mxu0 0.0
    %5519 = vmatpush1.xpose.msra.mxu0 0.0
    %5520 = vmatprep.subr.mxu0 0.0
    %5521 = vmatpush1.xpose.msra.mxu0 0.0
    %5522 = vmatprep.subr.mxu0 0.0
    %5523 = vmatpush1.xpose.msra.mxu0 0.0
    %5524 = vmatprep.subr.mxu0 0.0
    %5525 = vmatpush1.xpose.msra.mxu0 0.0
    %5526 = vmatprep.subr.mxu0 0.0
    %5527 = vmatpush1.xpose.msra.mxu0 0.0
    %5528 = vmatprep.subr.mxu0 0.0
    %5529 = vmatpush1.xpose.msra.mxu0 0.0
    %5530 = vmatprep.subr.mxu0 0.0
    %5531 = vmatpush1.xpose.msra.mxu0 0.0
    %5532 = vmatprep.subr.mxu0 0.0
    %5533 = vmatpush1.xpose.msra.mxu0 0.0
    %5534 = vmatprep.subr.mxu0 0.0
    %5535 = vmatpush1.xpose.msra.mxu0 0.0
    %5536 = vmatprep.subr.mxu0 0.0
    %5537 = vmatpush1.xpose.msra.mxu0 0.0
    %5538 = vmatprep.subr.mxu0 0.0
    %5539 = vmatpush1.xpose.msra.mxu0 0.0
    %5540 = vmatprep.subr.mxu0 0.0
    %5541 = vmatpush1.xpose.msra.mxu0 0.0
    %5542 = vmatprep.subr.mxu0 0.0
    %5543 = vmatpush1.xpose.msra.mxu0 0.0
    %5544 = vmatprep.subr.mxu0 0.0
    %5545 = vmatpush1.xpose.msra.mxu0 0.0
    %5546 = vmatprep.subr.mxu0 0.0
    %5547 = vmatpush1.xpose.msra.mxu0 0.0
    %5548 = vmatprep.subr.mxu0 0.0
    %5549 = vmatpush1.xpose.msra.mxu0 0.0
    %5550 = vmatprep.subr.mxu0 0.0
    %5551 = vmatpush1.xpose.msra.mxu0 0.0
    %5552 = vmatprep.subr.mxu0 0.0
    %5553 = vmatpush1.xpose.msra.mxu0 0.0
    %5554 = vmatprep.subr.mxu0 0.0
    %5555 = vmatpush1.xpose.msra.mxu0 0.0
    %5556 = vmatprep.subr.mxu0 0.0
    %5557 = vmatpush1.xpose.msra.mxu0 0.0
    %5558 = vmatprep.subr.mxu0 0.0
    %5559 = vmatpush1.xpose.msra.mxu0 0.0
    %5560 = vmatprep.mubr.f32.mxu0 0.0
    %5561 = vmatmul.mubr.f32.gmra.mrb[0].mxu0 %v5492
    %v5562 = vpop.f32.mrb[0].mxu0
    %v5563 = vadd.f32 0.0, %v5562
    %v5564 = vpop.f32.mrb[0].mxu0
    %5565 = vdwg.mxu0
    %v5566 = vsel %vm346, %v5485, -inf
    %5567 = vmax.xlane.f32.xlu0 %v5566
    %v5568 = vpop.xlane.xlu0 %5567
    %v5569 = vsel %vm346, %v5563, -inf
    %5570 = vmax.xlane.f32.xlu0 %v5569
    %v5571 = vpop.xlane.xlu0 %5570
    %v5572 = vsub.f32 %v5485, %v5568
    %v5573 = vsub.f32 %v5563, %v5571
    %v5574 = vmul.f32 %v5572, 1.442695
    %v5575 = vpow.pop %v5574
    %v5576 = vmul.f32 %v5573, 1.442695
    %v5577 = vpow.pop %v5576
    %v5578 = vsel %vm346, %v5575, 0.0
    %5579 = vadd.xlane.f32.xlu0 %v5578
    %v5580 = vpop.xlane.xlu0 %5579
    %v5581 = vsel %vm346, %v5577, 0.0
    %5582 = vadd.xlane.f32.xlu0 %v5581
    %v5583 = vpop.xlane.xlu0 %5582
    %v5584 = vrcp.pop %v5580
    %v5585 = vmul.f32 %v5575, %v5584
    %v5586 = vrcp.pop %v5583
    %v5587 = vmul.f32 %v5577, %v5586
    %5588 = vrot.lane.b32.xlu0 %v4583, 112
    %v5589 = vpop.permute.xlu0 %5588
    %v5592 = vsel %vm346, %v5585, 0
    %5594 = vmatprep.subr.mxu0 0.0
    %5595 = vmatpush1.msra.mxu0 %v5589
    %5596 = vmatprep.subr.mxu0 0.0
    %5597 = vmatpush1.msra.mxu0 0.0
    %5598 = vmatprep.subr.mxu0 0.0
    %5599 = vmatpush1.msra.mxu0 0.0
    %5600 = vmatprep.subr.mxu0 0.0
    %5601 = vmatpush1.msra.mxu0 0.0
    %5602 = vmatprep.subr.mxu0 0.0
    %5603 = vmatpush1.msra.mxu0 0.0
    %5604 = vmatprep.subr.mxu0 0.0
    %5605 = vmatpush1.msra.mxu0 0.0
    %5606 = vmatprep.subr.mxu0 0.0
    %5607 = vmatpush1.msra.mxu0 0.0
    %5608 = vmatprep.subr.mxu0 0.0
    %5609 = vmatpush1.msra.mxu0 0.0
    %5610 = vmatprep.subr.mxu0 0.0
    %5611 = vmatpush1.msra.mxu0 0.0
    %5612 = vmatprep.subr.mxu0 0.0
    %5613 = vmatpush1.msra.mxu0 0.0
    %5614 = vmatprep.subr.mxu0 0.0
    %5615 = vmatpush1.msra.mxu0 0.0
    %5616 = vmatprep.subr.mxu0 0.0
    %5617 = vmatpush1.msra.mxu0 0.0
    %5618 = vmatprep.subr.mxu0 0.0
    %5619 = vmatpush1.msra.mxu0 0.0
    %5620 = vmatprep.subr.mxu0 0.0
    %5621 = vmatpush1.msra.mxu0 0.0
    %5622 = vmatprep.subr.mxu0 0.0
    %5623 = vmatpush1.msra.mxu0 0.0
    %5624 = vmatprep.subr.mxu0 0.0
    %5625 = vmatpush1.msra.mxu0 0.0
    %5626 = vmatprep.subr.mxu0 0.0
    %5627 = vmatpush1.msra.mxu0 0.0
    %5628 = vmatprep.subr.mxu0 0.0
    %5629 = vmatpush1.msra.mxu0 0.0
    %5630 = vmatprep.subr.mxu0 0.0
    %5631 = vmatpush1.msra.mxu0 0.0
    %5632 = vmatprep.subr.mxu0 0.0
    %5633 = vmatpush1.msra.mxu0 0.0
    %5634 = vmatprep.subr.mxu0 0.0
    %5635 = vmatpush1.msra.mxu0 0.0
    %5636 = vmatprep.subr.mxu0 0.0
    %5637 = vmatpush1.msra.mxu0 0.0
    %5638 = vmatprep.subr.mxu0 0.0
    %5639 = vmatpush1.msra.mxu0 0.0
    %5640 = vmatprep.subr.mxu0 0.0
    %5641 = vmatpush1.msra.mxu0 0.0
    %5642 = vmatprep.subr.mxu0 0.0
    %5643 = vmatpush1.msra.mxu0 0.0
    %5644 = vmatprep.subr.mxu0 0.0
    %5645 = vmatpush1.msra.mxu0 0.0
    %5646 = vmatprep.subr.mxu0 0.0
    %5647 = vmatpush1.msra.mxu0 0.0
    %5648 = vmatprep.subr.mxu0 0.0
    %5649 = vmatpush1.msra.mxu0 0.0
    %5650 = vmatprep.subr.mxu0 0.0
    %5651 = vmatpush1.msra.mxu0 0.0
    %5652 = vmatprep.subr.mxu0 0.0
    %5653 = vmatpush1.msra.mxu0 0.0
    %5654 = vmatprep.subr.mxu0 0.0
    %5655 = vmatpush1.msra.mxu0 0.0
    %5656 = vmatprep.subr.mxu0 0.0
    %5657 = vmatpush1.msra.mxu0 0.0
    %5658 = vmatprep.mubr.f32.mxu0 0.0
    %5659 = vmatmul.mubr.f32.gmra.mrb[0].mxu0 %v5592
    %v5660 = vpop.f32.mrb[0].mxu0
    %v5661 = vadd.f32 0.0, %v5660
    %v5662 = vpop.f32.mrb[0].mxu0
    %5663 = vdwg.mxu0
    %5664 = vrot.lane.b32.xlu0 %v4588, 112
    %v5665 = vpop.permute.xlu0 %5664
    %v5668 = vsel %vm346, %v5587, 0
    %5670 = vmatprep.subr.mxu0 0.0
    %5671 = vmatpush1.msra.mxu0 %v5665
    %5672 = vmatprep.subr.mxu0 0.0
    %5673 = vmatpush1.msra.mxu0 0.0
    %5674 = vmatprep.subr.mxu0 0.0
    %5675 = vmatpush1.msra.mxu0 0.0
    %5676 = vmatprep.subr.mxu0 0.0
    %5677 = vmatpush1.msra.mxu0 0.0
    %5678 = vmatprep.subr.mxu0 0.0
    %5679 = vmatpush1.msra.mxu0 0.0
    %5680 = vmatprep.subr.mxu0 0.0
    %5681 = vmatpush1.msra.mxu0 0.0
    %5682 = vmatprep.subr.mxu0 0.0
    %5683 = vmatpush1.msra.mxu0 0.0
    %5684 = vmatprep.subr.mxu0 0.0
    %5685 = vmatpush1.msra.mxu0 0.0
    %5686 = vmatprep.subr.mxu0 0.0
    %5687 = vmatpush1.msra.mxu0 0.0
    %5688 = vmatprep.subr.mxu0 0.0
    %5689 = vmatpush1.msra.mxu0 0.0
    %5690 = vmatprep.subr.mxu0 0.0
    %5691 = vmatpush1.msra.mxu0 0.0
    %5692 = vmatprep.subr.mxu0 0.0
    %5693 = vmatpush1.msra.mxu0 0.0
    %5694 = vmatprep.subr.mxu0 0.0
    %5695 = vmatpush1.msra.mxu0 0.0
    %5696 = vmatprep.subr.mxu0 0.0
    %5697 = vmatpush1.msra.mxu0 0.0
    %5698 = vmatprep.subr.mxu0 0.0
    %5699 = vmatpush1.msra.mxu0 0.0
    %5700 = vmatprep.subr.mxu0 0.0
    %5701 = vmatpush1.msra.mxu0 0.0
    %5702 = vmatprep.subr.mxu0 0.0
    %5703 = vmatpush1.msra.mxu0 0.0
    %5704 = vmatprep.subr.mxu0 0.0
    %5705 = vmatpush1.msra.mxu0 0.0
    %5706 = vmatprep.subr.mxu0 0.0
    %5707 = vmatpush1.msra.mxu0 0.0
    %5708 = vmatprep.subr.mxu0 0.0
    %5709 = vmatpush1.msra.mxu0 0.0
    %5710 = vmatprep.subr.mxu0 0.0
    %5711 = vmatpush1.msra.mxu0 0.0
    %5712 = vmatprep.subr.mxu0 0.0
    %5713 = vmatpush1.msra.mxu0 0.0
    %5714 = vmatprep.subr.mxu0 0.0
    %5715 = vmatpush1.msra.mxu0 0.0
    %5716 = vmatprep.subr.mxu0 0.0
    %5717 = vmatpush1.msra.mxu0 0.0
    %5718 = vmatprep.subr.mxu0 0.0
    %5719 = vmatpush1.msra.mxu0 0.0
    %5720 = vmatprep.subr.mxu0 0.0
    %5721 = vmatpush1.msra.mxu0 0.0
    %5722 = vmatprep.subr.mxu0 0.0
    %5723 = vmatpush1.msra.mxu0 0.0
    %5724 = vmatprep.subr.mxu0 0.0
    %5725 = vmatpush1.msra.mxu0 0.0
    %5726 = vmatprep.subr.mxu0 0.0
    %5727 = vmatpush1.msra.mxu0 0.0
    %5728 = vmatprep.subr.mxu0 0.0
    %5729 = vmatpush1.msra.mxu0 0.0
    %5730 = vmatprep.subr.mxu0 0.0
    %5731 = vmatpush1.msra.mxu0 0.0
    %5732 = vmatprep.subr.mxu0 0.0
    %5733 = vmatpush1.msra.mxu0 0.0
    %5734 = vmatprep.mubr.f32.mxu0 0.0
    %5735 = vmatmul.mubr.f32.gmra.mrb[0].mxu0 %v5668
    %v5736 = vpop.f32.mrb[0].mxu0
    %v5737 = vadd.f32 0.0, %v5736
    %v5738 = vpop.f32.mrb[0].mxu0
    %5739 = vdwg.mxu0
    %v5741 = vsel %vm346, %v5661, 0
    %v5744 = vsel %vm346, %v5737, 0
    %5746 = vmatprep.subr.mxu0 0.0
    %5747 = vmatpush1.msra.mxu0 %v4594
    %5748 = vmatprep.subr.mxu0 0.0
    %5749 = vmatpush1.msra.mxu0 0.0
    %5750 = vmatprep.subr.mxu0 0.0
    %5751 = vmatpush1.msra.mxu0 0.0
    %5752 = vmatprep.subr.mxu0 0.0
    %5753 = vmatpush1.msra.mxu0 0.0
    %5754 = vmatprep.subr.mxu0 0.0
    %5755 = vmatpush1.msra.mxu0 0.0
    %5756 = vmatprep.subr.mxu0 0.0
    %5757 = vmatpush1.msra.mxu0 0.0
    %5758 = vmatprep.subr.mxu0 0.0
    %5759 = vmatpush1.msra.mxu0 0.0
    %5760 = vmatprep.subr.mxu0 0.0
    %5761 = vmatpush1.msra.mxu0 0.0
    %5762 = vmatprep.subr.mxu0 0.0
    %5763 = vmatpush1.msra.mxu0 0.0
    %5764 = vmatprep.subr.mxu0 0.0
    %5765 = vmatpush1.msra.mxu0 0.0
    %5766 = vmatprep.subr.mxu0 0.0
    %5767 = vmatpush1.msra.mxu0 0.0
    %5768 = vmatprep.subr.mxu0 0.0
    %5769 = vmatpush1.msra.mxu0 0.0
    %5770 = vmatprep.subr.mxu0 0.0
    %5771 = vmatpush1.msra.mxu0 0.0
    %5772 = vmatprep.subr.mxu0 0.0
    %5773 = vmatpush1.msra.mxu0 0.0
    %5774 = vmatprep.subr.mxu0 0.0
    %5775 = vmatpush1.msra.mxu0 0.0
    %5776 = vmatprep.subr.mxu0 0.0
    %5777 = vmatpush1.msra.mxu0 0.0
    %5778 = vmatprep.subr.mxu0 0.0
    %5779 = vmatpush1.msra.mxu0 0.0
    %5780 = vmatprep.subr.mxu0 0.0
    %5781 = vmatpush1.msra.mxu0 0.0
    %5782 = vmatprep.subr.mxu0 0.0
    %5783 = vmatpush1.msra.mxu0 0.0
    %5784 = vmatprep.subr.mxu0 0.0
    %5785 = vmatpush1.msra.mxu0 0.0
    %5786 = vmatprep.subr.mxu0 0.0
    %5787 = vmatpush1.msra.mxu0 0.0
    %5788 = vmatprep.subr.mxu0 0.0
    %5789 = vmatpush1.msra.mxu0 0.0
    %5790 = vmatprep.subr.mxu0 0.0
    %5791 = vmatpush1.msra.mxu0 0.0
    %5792 = vmatprep.subr.mxu0 0.0
    %5793 = vmatpush1.msra.mxu0 0.0
    %5794 = vmatprep.subr.mxu0 0.0
    %5795 = vmatpush1.msra.mxu0 0.0
    %5796 = vmatprep.subr.mxu0 0.0
    %5797 = vmatpush1.msra.mxu0 0.0
    %5798 = vmatprep.subr.mxu0 0.0
    %5799 = vmatpush1.msra.mxu0 0.0
    %5800 = vmatprep.subr.mxu0 0.0
    %5801 = vmatpush1.msra.mxu0 0.0
    %5802 = vmatprep.subr.mxu0 0.0
    %5803 = vmatpush1.msra.mxu0 0.0
    %5804 = vmatprep.subr.mxu0 0.0
    %5805 = vmatpush1.msra.mxu0 0.0
    %5806 = vmatprep.subr.mxu0 0.0
    %5807 = vmatpush1.msra.mxu0 0.0
    %5808 = vmatprep.subr.mxu0 0.0
    %5809 = vmatpush1.msra.mxu0 0.0
    %5810 = vmatprep.mubr.f32.mxu0 0.0
    %5811 = vmatmul.mubr.f32.gmra.mrb[0].mxu0 %v5741
    %v5812 = vpop.f32.mrb[0].mxu0
    %v5813 = vadd.f32 0.0, %v5812
    %v5814 = vpop.f32.mrb[0].mxu0
    %5815 = vmatprep.mubr.f32.mxu0 0.0
    %5816 = vmatmul.mubr.f32.gmra.mrb[0].mxu0 %v5744
    %v5817 = vpop.f32.mrb[0].mxu0
    %v5818 = vadd.f32 0.0, %v5817
    %v5819 = vpop.f32.mrb[0].mxu0
    %5820 = vdwg.mxu0
    %v5821 = vadd.f32 %v5402, %v5813
    %v5822 = vadd.f32 %v5407, %v5818
    %5823 = vrot.lane.b32.xlu0 %v4413, 104
    %v5824 = vpop.permute.xlu0 %5823
    %5825 = vrot.lane.b32.xlu0 %v4492, 104
    %v5826 = vpop.permute.xlu0 %5825
    %v5827 = vsel %vm346, %v5824, 0
    %v5829 = vsel %vm346, %v5826, 0
    %5831 = vmatprep.subr.mxu0 0.0
    %5832 = vmatpush1.xpose.msra.mxu0 %v5829
    %5833 = vmatprep.subr.mxu0 0.0
    %5834 = vmatpush1.xpose.msra.mxu0 0.0
    %5835 = vmatprep.subr.mxu0 0.0
    %5836 = vmatpush1.xpose.msra.mxu0 0.0
    %5837 = vmatprep.subr.mxu0 0.0
    %5838 = vmatpush1.xpose.msra.mxu0 0.0
    %5839 = vmatprep.subr.mxu0 0.0
    %5840 = vmatpush1.xpose.msra.mxu0 0.0
    %5841 = vmatprep.subr.mxu0 0.0
    %5842 = vmatpush1.xpose.msra.mxu0 0.0
    %5843 = vmatprep.subr.mxu0 0.0
    %5844 = vmatpush1.xpose.msra.mxu0 0.0
    %5845 = vmatprep.subr.mxu0 0.0
    %5846 = vmatpush1.xpose.msra.mxu0 0.0
    %5847 = vmatprep.subr.mxu0 0.0
    %5848 = vmatpush1.xpose.msra.mxu0 0.0
    %5849 = vmatprep.subr.mxu0 0.0
    %5850 = vmatpush1.xpose.msra.mxu0 0.0
    %5851 = vmatprep.subr.mxu0 0.0
    %5852 = vmatpush1.xpose.msra.mxu0 0.0
    %5853 = vmatprep.subr.mxu0 0.0
    %5854 = vmatpush1.xpose.msra.mxu0 0.0
    %5855 = vmatprep.subr.mxu0 0.0
    %5856 = vmatpush1.xpose.msra.mxu0 0.0
    %5857 = vmatprep.subr.mxu0 0.0
    %5858 = vmatpush1.xpose.msra.mxu0 0.0
    %5859 = vmatprep.subr.mxu0 0.0
    %5860 = vmatpush1.xpose.msra.mxu0 0.0
    %5861 = vmatprep.subr.mxu0 0.0
    %5862 = vmatpush1.xpose.msra.mxu0 0.0
    %5863 = vmatprep.subr.mxu0 0.0
    %5864 = vmatpush1.xpose.msra.mxu0 0.0
    %5865 = vmatprep.subr.mxu0 0.0
    %5866 = vmatpush1.xpose.msra.mxu0 0.0
    %5867 = vmatprep.subr.mxu0 0.0
    %5868 = vmatpush1.xpose.msra.mxu0 0.0
    %5869 = vmatprep.subr.mxu0 0.0
    %5870 = vmatpush1.xpose.msra.mxu0 0.0
    %5871 = vmatprep.subr.mxu0 0.0
    %5872 = vmatpush1.xpose.msra.mxu0 0.0
    %5873 = vmatprep.subr.mxu0 0.0
    %5874 = vmatpush1.xpose.msra.mxu0 0.0
    %5875 = vmatprep.subr.mxu0 0.0
    %5876 = vmatpush1.xpose.msra.mxu0 0.0
    %5877 = vmatprep.subr.mxu0 0.0
    %5878 = vmatpush1.xpose.msra.mxu0 0.0
    %5879 = vmatprep.subr.mxu0 0.0
    %5880 = vmatpush1.xpose.msra.mxu0 0.0
    %5881 = vmatprep.subr.mxu0 0.0
    %5882 = vmatpush1.xpose.msra.mxu0 0.0
    %5883 = vmatprep.subr.mxu0 0.0
    %5884 = vmatpush1.xpose.msra.mxu0 0.0
    %5885 = vmatprep.subr.mxu0 0.0
    %5886 = vmatpush1.xpose.msra.mxu0 0.0
    %5887 = vmatprep.subr.mxu0 0.0
    %5888 = vmatpush1.xpose.msra.mxu0 0.0
    %5889 = vmatprep.subr.mxu0 0.0
    %5890 = vmatpush1.xpose.msra.mxu0 0.0
    %5891 = vmatprep.subr.mxu0 0.0
    %5892 = vmatpush1.xpose.msra.mxu0 0.0
    %5893 = vmatprep.subr.mxu0 0.0
    %5894 = vmatpush1.xpose.msra.mxu0 0.0
    %5895 = vmatprep.mubr.f32.mxu0 0.0
    %5896 = vmatmul.mubr.f32.gmra.mrb[0].mxu0 %v5827
    %v5897 = vpop.f32.mrb[0].mxu0
    %v5898 = vadd.f32 0.0, %v5897
    %v5899 = vpop.f32.mrb[0].mxu0
    %5900 = vdwg.mxu0
    %5901 = vrot.lane.b32.xlu0 %v4414, 104
    %v5902 = vpop.permute.xlu0 %5901
    %5903 = vrot.lane.b32.xlu0 %v4497, 104
    %v5904 = vpop.permute.xlu0 %5903
    %v5905 = vsel %vm346, %v5902, 0
    %v5907 = vsel %vm346, %v5904, 0
    %5909 = vmatprep.subr.mxu0 0.0
    %5910 = vmatpush1.xpose.msra.mxu0 %v5907
    %5911 = vmatprep.subr.mxu0 0.0
    %5912 = vmatpush1.xpose.msra.mxu0 0.0
    %5913 = vmatprep.subr.mxu0 0.0
    %5914 = vmatpush1.xpose.msra.mxu0 0.0
    %5915 = vmatprep.subr.mxu0 0.0
    %5916 = vmatpush1.xpose.msra.mxu0 0.0
    %5917 = vmatprep.subr.mxu0 0.0
    %5918 = vmatpush1.xpose.msra.mxu0 0.0
    %5919 = vmatprep.subr.mxu0 0.0
    %5920 = vmatpush1.xpose.msra.mxu0 0.0
    %5921 = vmatprep.subr.mxu0 0.0
    %5922 = vmatpush1.xpose.msra.mxu0 0.0
    %5923 = vmatprep.subr.mxu0 0.0
    %5924 = vmatpush1.xpose.msra.mxu0 0.0
    %5925 = vmatprep.subr.mxu0 0.0
    %5926 = vmatpush1.xpose.msra.mxu0 0.0
    %5927 = vmatprep.subr.mxu0 0.0
    %5928 = vmatpush1.xpose.msra.mxu0 0.0
    %5929 = vmatprep.subr.mxu0 0.0
    %5930 = vmatpush1.xpose.msra.mxu0 0.0
    %5931 = vmatprep.subr.mxu0 0.0
    %5932 = vmatpush1.xpose.msra.mxu0 0.0
    %5933 = vmatprep.subr.mxu0 0.0
    %5934 = vmatpush1.xpose.msra.mxu0 0.0
    %5935 = vmatprep.subr.mxu0 0.0
    %5936 = vmatpush1.xpose.msra.mxu0 0.0
    %5937 = vmatprep.subr.mxu0 0.0
    %5938 = vmatpush1.xpose.msra.mxu0 0.0
    %5939 = vmatprep.subr.mxu0 0.0
    %5940 = vmatpush1.xpose.msra.mxu0 0.0
    %5941 = vmatprep.subr.mxu0 0.0
    %5942 = vmatpush1.xpose.msra.mxu0 0.0
    %5943 = vmatprep.subr.mxu0 0.0
    %5944 = vmatpush1.xpose.msra.mxu0 0.0
    %5945 = vmatprep.subr.mxu0 0.0
    %5946 = vmatpush1.xpose.msra.mxu0 0.0
    %5947 = vmatprep.subr.mxu0 0.0
    %5948 = vmatpush1.xpose.msra.mxu0 0.0
    %5949 = vmatprep.subr.mxu0 0.0
    %5950 = vmatpush1.xpose.msra.mxu0 0.0
    %5951 = vmatprep.subr.mxu0 0.0
    %5952 = vmatpush1.xpose.msra.mxu0 0.0
    %5953 = vmatprep.subr.mxu0 0.0
    %5954 = vmatpush1.xpose.msra.mxu0 0.0
    %5955 = vmatprep.subr.mxu0 0.0
    %5956 = vmatpush1.xpose.msra.mxu0 0.0
    %5957 = vmatprep.subr.mxu0 0.0
    %5958 = vmatpush1.xpose.msra.mxu0 0.0
    %5959 = vmatprep.subr.mxu0 0.0
    %5960 = vmatpush1.xpose.msra.mxu0 0.0
    %5961 = vmatprep.subr.mxu0 0.0
    %5962 = vmatpush1.xpose.msra.mxu0 0.0
    %5963 = vmatprep.subr.mxu0 0.0
    %5964 = vmatpush1.xpose.msra.mxu0 0.0
    %5965 = vmatprep.subr.mxu0 0.0
    %5966 = vmatpush1.xpose.msra.mxu0 0.0
    %5967 = vmatprep.subr.mxu0 0.0
    %5968 = vmatpush1.xpose.msra.mxu0 0.0
    %5969 = vmatprep.subr.mxu0 0.0
    %5970 = vmatpush1.xpose.msra.mxu0 0.0
    %5971 = vmatprep.subr.mxu0 0.0
    %5972 = vmatpush1.xpose.msra.mxu0 0.0
    %5973 = vmatprep.mubr.f32.mxu0 0.0
    %5974 = vmatmul.mubr.f32.gmra.mrb[0].mxu0 %v5905
    %v5975 = vpop.f32.mrb[0].mxu0
    %v5976 = vadd.f32 0.0, %v5975
    %v5977 = vpop.f32.mrb[0].mxu0
    %5978 = vdwg.mxu0
    %v5979 = vsel %vm346, %v5898, -inf
    %5980 = vmax.xlane.f32.xlu0 %v5979
    %v5981 = vpop.xlane.xlu0 %5980
    %v5982 = vsel %vm346, %v5976, -inf
    %5983 = vmax.xlane.f32.xlu0 %v5982
    %v5984 = vpop.xlane.xlu0 %5983
    %v5985 = vsub.f32 %v5898, %v5981
    %v5986 = vsub.f32 %v5976, %v5984
    %v5987 = vmul.f32 %v5985, 1.442695
    %v5988 = vpow.pop %v5987
    %v5989 = vmul.f32 %v5986, 1.442695
    %v5990 = vpow.pop %v5989
    %v5991 = vsel %vm346, %v5988, 0.0
    %5992 = vadd.xlane.f32.xlu0 %v5991
    %v5993 = vpop.xlane.xlu0 %5992
    %v5994 = vsel %vm346, %v5990, 0.0
    %5995 = vadd.xlane.f32.xlu0 %v5994
    %v5996 = vpop.xlane.xlu0 %5995
    %v5997 = vrcp.pop %v5993
    %v5998 = vmul.f32 %v5988, %v5997
    %v5999 = vrcp.pop %v5996
    %v6000 = vmul.f32 %v5990, %v5999
    %6001 = vrot.lane.b32.xlu0 %v4583, 104
    %v6002 = vpop.permute.xlu0 %6001
    %v6005 = vsel %vm346, %v5998, 0
    %6007 = vmatprep.subr.mxu0 0.0
    %6008 = vmatpush1.msra.mxu0 %v6002
    %6009 = vmatprep.subr.mxu0 0.0
    %6010 = vmatpush1.msra.mxu0 0.0
    %6011 = vmatprep.subr.mxu0 0.0
    %6012 = vmatpush1.msra.mxu0 0.0
    %6013 = vmatprep.subr.mxu0 0.0
    %6014 = vmatpush1.msra.mxu0 0.0
    %6015 = vmatprep.subr.mxu0 0.0
    %6016 = vmatpush1.msra.mxu0 0.0
    %6017 = vmatprep.subr.mxu0 0.0
    %6018 = vmatpush1.msra.mxu0 0.0
    %6019 = vmatprep.subr.mxu0 0.0
    %6020 = vmatpush1.msra.mxu0 0.0
    %6021 = vmatprep.subr.mxu0 0.0
    %6022 = vmatpush1.msra.mxu0 0.0
    %6023 = vmatprep.subr.mxu0 0.0
    %6024 = vmatpush1.msra.mxu0 0.0
    %6025 = vmatprep.subr.mxu0 0.0
    %6026 = vmatpush1.msra.mxu0 0.0
    %6027 = vmatprep.subr.mxu0 0.0
    %6028 = vmatpush1.msra.mxu0 0.0
    %6029 = vmatprep.subr.mxu0 0.0
    %6030 = vmatpush1.msra.mxu0 0.0
    %6031 = vmatprep.subr.mxu0 0.0
    %6032 = vmatpush1.msra.mxu0 0.0
    %6033 = vmatprep.subr.mxu0 0.0
    %6034 = vmatpush1.msra.mxu0 0.0
    %6035 = vmatprep.subr.mxu0 0.0
    %6036 = vmatpush1.msra.mxu0 0.0
    %6037 = vmatprep.subr.mxu0 0.0
    %6038 = vmatpush1.msra.mxu0 0.0
    %6039 = vmatprep.subr.mxu0 0.0
    %6040 = vmatpush1.msra.mxu0 0.0
    %6041 = vmatprep.subr.mxu0 0.0
    %6042 = vmatpush1.msra.mxu0 0.0
    %6043 = vmatprep.subr.mxu0 0.0
    %6044 = vmatpush1.msra.mxu0 0.0
    %6045 = vmatprep.subr.mxu0 0.0
    %6046 = vmatpush1.msra.mxu0 0.0
    %6047 = vmatprep.subr.mxu0 0.0
    %6048 = vmatpush1.msra.mxu0 0.0
    %6049 = vmatprep.subr.mxu0 0.0
    %6050 = vmatpush1.msra.mxu0 0.0
    %6051 = vmatprep.subr.mxu0 0.0
    %6052 = vmatpush1.msra.mxu0 0.0
    %6053 = vmatprep.subr.mxu0 0.0
    %6054 = vmatpush1.msra.mxu0 0.0
    %6055 = vmatprep.subr.mxu0 0.0
    %6056 = vmatpush1.msra.mxu0 0.0
    %6057 = vmatprep.subr.mxu0 0.0
    %6058 = vmatpush1.msra.mxu0 0.0
    %6059 = vmatprep.subr.mxu0 0.0
    %6060 = vmatpush1.msra.mxu0 0.0
    %6061 = vmatprep.subr.mxu0 0.0
    %6062 = vmatpush1.msra.mxu0 0.0
    %6063 = vmatprep.subr.mxu0 0.0
    %6064 = vmatpush1.msra.mxu0 0.0
    %6065 = vmatprep.subr.mxu0 0.0
    %6066 = vmatpush1.msra.mxu0 0.0
    %6067 = vmatprep.subr.mxu0 0.0
    %6068 = vmatpush1.msra.mxu0 0.0
    %6069 = vmatprep.subr.mxu0 0.0
    %6070 = vmatpush1.msra.mxu0 0.0
    %6071 = vmatprep.mubr.f32.mxu0 0.0
    %6072 = vmatmul.mubr.f32.gmra.mrb[0].mxu0 %v6005
    %v6073 = vpop.f32.mrb[0].mxu0
    %v6074 = vadd.f32 0.0, %v6073
    %v6075 = vpop.f32.mrb[0].mxu0
    %6076 = vdwg.mxu0
    %6077 = vrot.lane.b32.xlu0 %v4588, 104
    %v6078 = vpop.permute.xlu0 %6077
    %v6081 = vsel %vm346, %v6000, 0
    %6083 = vmatprep.subr.mxu0 0.0
    %6084 = vmatpush1.msra.mxu0 %v6078
    %6085 = vmatprep.subr.mxu0 0.0
    %6086 = vmatpush1.msra.mxu0 0.0
    %6087 = vmatprep.subr.mxu0 0.0
    %6088 = vmatpush1.msra.mxu0 0.0
    %6089 = vmatprep.subr.mxu0 0.0
    %6090 = vmatpush1.msra.mxu0 0.0
    %6091 = vmatprep.subr.mxu0 0.0
    %6092 = vmatpush1.msra.mxu0 0.0
    %6093 = vmatprep.subr.mxu0 0.0
    %6094 = vmatpush1.msra.mxu0 0.0
    %6095 = vmatprep.subr.mxu0 0.0
    %6096 = vmatpush1.msra.mxu0 0.0
    %6097 = vmatprep.subr.mxu0 0.0
    %6098 = vmatpush1.msra.mxu0 0.0
    %6099 = vmatprep.subr.mxu0 0.0
    %6100 = vmatpush1.msra.mxu0 0.0
    %6101 = vmatprep.subr.mxu0 0.0
    %6102 = vmatpush1.msra.mxu0 0.0
    %6103 = vmatprep.subr.mxu0 0.0
    %6104 = vmatpush1.msra.mxu0 0.0
    %6105 = vmatprep.subr.mxu0 0.0
    %6106 = vmatpush1.msra.mxu0 0.0
    %6107 = vmatprep.subr.mxu0 0.0
    %6108 = vmatpush1.msra.mxu0 0.0
    %6109 = vmatprep.subr.mxu0 0.0
    %6110 = vmatpush1.msra.mxu0 0.0
    %6111 = vmatprep.subr.mxu0 0.0
    %6112 = vmatpush1.msra.mxu0 0.0
    %6113 = vmatprep.subr.mxu0 0.0
    %6114 = vmatpush1.msra.mxu0 0.0
    %6115 = vmatprep.subr.mxu0 0.0
    %6116 = vmatpush1.msra.mxu0 0.0
    %6117 = vmatprep.subr.mxu0 0.0
    %6118 = vmatpush1.msra.mxu0 0.0
    %6119 = vmatprep.subr.mxu0 0.0
    %6120 = vmatpush1.msra.mxu0 0.0
    %6121 = vmatprep.subr.mxu0 0.0
    %6122 = vmatpush1.msra.mxu0 0.0
    %6123 = vmatprep.subr.mxu0 0.0
    %6124 = vmatpush1.msra.mxu0 0.0
    %6125 = vmatprep.subr.mxu0 0.0
    %6126 = vmatpush1.msra.mxu0 0.0
    %6127 = vmatprep.subr.mxu0 0.0
    %6128 = vmatpush1.msra.mxu0 0.0
    %6129 = vmatprep.subr.mxu0 0.0
    %6130 = vmatpush1.msra.mxu0 0.0
    %6131 = vmatprep.subr.mxu0 0.0
    %6132 = vmatpush1.msra.mxu0 0.0
    %6133 = vmatprep.subr.mxu0 0.0
    %6134 = vmatpush1.msra.mxu0 0.0
    %6135 = vmatprep.subr.mxu0 0.0
    %6136 = vmatpush1.msra.mxu0 0.0
    %6137 = vmatprep.subr.mxu0 0.0
    %6138 = vmatpush1.msra.mxu0 0.0
    %6139 = vmatprep.subr.mxu0 0.0
    %6140 = vmatpush1.msra.mxu0 0.0
    %6141 = vmatprep.subr.mxu0 0.0
    %6142 = vmatpush1.msra.mxu0 0.0
    %6143 = vmatprep.subr.mxu0 0.0
    %6144 = vmatpush1.msra.mxu0 0.0
    %6145 = vmatprep.subr.mxu0 0.0
    %6146 = vmatpush1.msra.mxu0 0.0
    %6147 = vmatprep.mubr.f32.mxu0 0.0
    %6148 = vmatmul.mubr.f32.gmra.mrb[0].mxu0 %v6081
    %v6149 = vpop.f32.mrb[0].mxu0
    %v6150 = vadd.f32 0.0, %v6149
    %v6151 = vpop.f32.mrb[0].mxu0
    %6152 = vdwg.mxu0
    %v6154 = vsel %vm346, %v6074, 0
    %v6157 = vsel %vm346, %v6150, 0
    %6159 = vmatprep.subr.mxu0 0.0
    %6160 = vmatpush1.msra.mxu0 %v4595
    %6161 = vmatprep.subr.mxu0 0.0
    %6162 = vmatpush1.msra.mxu0 0.0
    %6163 = vmatprep.subr.mxu0 0.0
    %6164 = vmatpush1.msra.mxu0 0.0
    %6165 = vmatprep.subr.mxu0 0.0
    %6166 = vmatpush1.msra.mxu0 0.0
    %6167 = vmatprep.subr.mxu0 0.0
    %6168 = vmatpush1.msra.mxu0 0.0
    %6169 = vmatprep.subr.mxu0 0.0
    %6170 = vmatpush1.msra.mxu0 0.0
    %6171 = vmatprep.subr.mxu0 0.0
    %6172 = vmatpush1.msra.mxu0 0.0
    %6173 = vmatprep.subr.mxu0 0.0
    %6174 = vmatpush1.msra.mxu0 0.0
    %6175 = vmatprep.subr.mxu0 0.0
    %6176 = vmatpush1.msra.mxu0 0.0
    %6177 = vmatprep.subr.mxu0 0.0
    %6178 = vmatpush1.msra.mxu0 0.0
    %6179 = vmatprep.subr.mxu0 0.0
    %6180 = vmatpush1.msra.mxu0 0.0
    %6181 = vmatprep.subr.mxu0 0.0
    %6182 = vmatpush1.msra.mxu0 0.0
    %6183 = vmatprep.subr.mxu0 0.0
    %6184 = vmatpush1.msra.mxu0 0.0
    %6185 = vmatprep.subr.mxu0 0.0
    %6186 = vmatpush1.msra.mxu0 0.0
    %6187 = vmatprep.subr.mxu0 0.0
    %6188 = vmatpush1.msra.mxu0 0.0
    %6189 = vmatprep.subr.mxu0 0.0
    %6190 = vmatpush1.msra.mxu0 0.0
    %6191 = vmatprep.subr.mxu0 0.0
    %6192 = vmatpush1.msra.mxu0 0.0
    %6193 = vmatprep.subr.mxu0 0.0
    %6194 = vmatpush1.msra.mxu0 0.0
    %6195 = vmatprep.subr.mxu0 0.0
    %6196 = vmatpush1.msra.mxu0 0.0
    %6197 = vmatprep.subr.mxu0 0.0
    %6198 = vmatpush1.msra.mxu0 0.0
    %6199 = vmatprep.subr.mxu0 0.0
    %6200 = vmatpush1.msra.mxu0 0.0
    %6201 = vmatprep.subr.mxu0 0.0
    %6202 = vmatpush1.msra.mxu0 0.0
    %6203 = vmatprep.subr.mxu0 0.0
    %6204 = vmatpush1.msra.mxu0 0.0
    %6205 = vmatprep.subr.mxu0 0.0
    %6206 = vmatpush1.msra.mxu0 0.0
    %6207 = vmatprep.subr.mxu0 0.0
    %6208 = vmatpush1.msra.mxu0 0.0
    %6209 = vmatprep.subr.mxu0 0.0
    %6210 = vmatpush1.msra.mxu0 0.0
    %6211 = vmatprep.subr.mxu0 0.0
    %6212 = vmatpush1.msra.mxu0 0.0
    %6213 = vmatprep.subr.mxu0 0.0
    %6214 = vmatpush1.msra.mxu0 0.0
    %6215 = vmatprep.subr.mxu0 0.0
    %6216 = vmatpush1.msra.mxu0 0.0
    %6217 = vmatprep.subr.mxu0 0.0
    %6218 = vmatpush1.msra.mxu0 0.0
    %6219 = vmatprep.subr.mxu0 0.0
    %6220 = vmatpush1.msra.mxu0 0.0
    %6221 = vmatprep.subr.mxu0 0.0
    %6222 = vmatpush1.msra.mxu0 0.0
    %6223 = vmatprep.mubr.f32.mxu0 0.0
    %6224 = vmatmul.mubr.f32.gmra.mrb[0].mxu0 %v6154
    %v6225 = vpop.f32.mrb[0].mxu0
    %v6226 = vadd.f32 0.0, %v6225
    %v6227 = vpop.f32.mrb[0].mxu0
    %6228 = vmatprep.mubr.f32.mxu0 0.0
    %6229 = vmatmul.mubr.f32.gmra.mrb[0].mxu0 %v6157
    %v6230 = vpop.f32.mrb[0].mxu0
    %v6231 = vadd.f32 0.0, %v6230
    %v6232 = vpop.f32.mrb[0].mxu0
    %6233 = vdwg.mxu0
    %v6234 = vadd.f32 %v5821, %v6226
    %v6235 = vadd.f32 %v5822, %v6231
    %v6236 = vld [vmem:[%s4326 + $0x3] sm:$0x1]
    %v6237 = vlaneseq
    %v6238 = vshrl.u32 %v6237, 7
    %v6239 = vsub.s32 0, %v6238
    %v6240 = vrot.slane %v6236, %v6239
    %v6241 = vadd.f32 %v6234, %v6240
    %v6242 = vadd.f32 %v6235, %v6240
    %v6243 = vadd.f32 %v4317, %v6241
    %v6244 = vadd.f32 %v4318, %v6242
    %s6245 = scalar_lea.vmem %s12, 4
    %v6246 = vld [vmem:[%s6245] sm:$0x1]
    %s6247 = scalar_lea.vmem %s13, 4
    %v6248 = vld [vmem:[%s6247] sm:$0x1]
    %v6249 = vsel %vm81, %v6243, 0.0
    %6250 = vadd.xlane.f32.xlu0 %v6249
    %v6251 = vpop.xlane.xlu0 %6250
    %v6252 = vsel %vm81, %v6244, 0.0
    %6253 = vadd.xlane.f32.xlu0 %v6252
    %v6254 = vpop.xlane.xlu0 %6253
    %v6255 = vmul.f32 %v6251, %v2004
    %v6256 = vmul.f32 %v6254, %v2004
    %v6257 = vsub.f32 %v6243, %v6255
    %v6258 = vsub.f32 %v6244, %v6256
    %v6259 = vmul.f32 %v6257, %v6257
    %v6260 = vmul.f32 %v6258, %v6258
    %v6261 = vsel %vm81, %v6259, 0.0
    %6262 = vadd.xlane.f32.xlu0 %v6261
    %v6263 = vpop.xlane.xlu0 %6262
    %v6264 = vsel %vm81, %v6260, 0.0
    %6265 = vadd.xlane.f32.xlu0 %v6264
    %v6266 = vpop.xlane.xlu0 %6265
    %v6267 = vmul.f32 %v6263, %v2004
    %v6268 = vmul.f32 %v6266, %v2004
    %v6269 = vadd.f32 %v6267, 1e-05
    %v6270 = vadd.f32 %v6268, 1e-05
    %v6271 = vrsqrt.pop %v6269
    %v6272 = vrsqrt.pop %v6270
    %v6273 = vmul.f32 %v6257, %v6271
    %v6274 = vmul.f32 %v6258, %v6272
    %v6275 = vlaneseq
    %v6276 = vshrl.u32 %v6275, 7
    %v6277 = vsub.s32 0, %v6276
    %v6278 = vrot.slane %v6246, %v6277
    %v6279 = vmul.f32 %v6273, %v6278
    %v6280 = vmul.f32 %v6274, %v6278
    %v6281 = vlaneseq
    %v6282 = vshrl.u32 %v6281, 7
    %v6283 = vsub.s32 0, %v6282
    %v6284 = vrot.slane %v6248, %v6283
    %v6285 = vadd.f32 %v6279, %v6284
    %v6286 = vadd.f32 %v6280, %v6284
    %v6287 = vadd.f32 %v6285, %v56
    %v6288 = vadd.f32 %v6286, %v57
    %s6289 = scalar_lea.vmem %s6, 128
    %v6290 = vld [vmem:[%s6289] sm:$0xff]
    %v6291 = vld [vmem:[%s6289 + $0x8] sm:$0xff]
    %v6292 = vld [vmem:[%s6289 + $0x10] sm:$0xff]
    %v6293 = vld [vmem:[%s6289 + $0x18] sm:$0xff]
    %s6294 = scalar_lea.vmem %s7, 4
    %v6295 = vld [vmem:[%s6294] sm:$0x1]
    %v6296 = vlaneseq
    %v6297 = vshrl.u32 %v6296, 7
    %v6298 = vsub.s32 0, %v6297
    %v6299 = vrot.slane %v6295, %v6298
    %v6301 = vsel %vm81, %v6287, 0
    %v6304 = vsel %vm81, %v6288, 0
    %6306 = vmatprep.subr.mxu0 0.0
    %6307 = vmatpush1.msra.mxu0 %v6290
    %6308 = vmatprep.subr.mxu0 0.0
    %6309 = vmatpush1.msra.mxu0 %v6291
    %6310 = vmatprep.subr.mxu0 0.0
    %6311 = vmatpush1.msra.mxu0 %v6292
    %6312 = vmatprep.subr.mxu0 0.0
    %6313 = vmatpush1.msra.mxu0 %v6293
    %6314 = vmatprep.subr.mxu0 0.0
    %6315 = vmatpush1.msra.mxu0 0.0
    %6316 = vmatprep.subr.mxu0 0.0
    %6317 = vmatpush1.msra.mxu0 0.0
    %6318 = vmatprep.subr.mxu0 0.0
    %6319 = vmatpush1.msra.mxu0 0.0
    %6320 = vmatprep.subr.mxu0 0.0
    %6321 = vmatpush1.msra.mxu0 0.0
    %6322 = vmatprep.subr.mxu0 0.0
    %6323 = vmatpush1.msra.mxu0 0.0
    %6324 = vmatprep.subr.mxu0 0.0
    %6325 = vmatpush1.msra.mxu0 0.0
    %6326 = vmatprep.subr.mxu0 0.0
    %6327 = vmatpush1.msra.mxu0 0.0
    %6328 = vmatprep.subr.mxu0 0.0
    %6329 = vmatpush1.msra.mxu0 0.0
    %6330 = vmatprep.subr.mxu0 0.0
    %6331 = vmatpush1.msra.mxu0 0.0
    %6332 = vmatprep.subr.mxu0 0.0
    %6333 = vmatpush1.msra.mxu0 0.0
    %6334 = vmatprep.subr.mxu0 0.0
    %6335 = vmatpush1.msra.mxu0 0.0
    %6336 = vmatprep.subr.mxu0 0.0
    %6337 = vmatpush1.msra.mxu0 0.0
    %6338 = vmatprep.subr.mxu0 0.0
    %6339 = vmatpush1.msra.mxu0 0.0
    %6340 = vmatprep.subr.mxu0 0.0
    %6341 = vmatpush1.msra.mxu0 0.0
    %6342 = vmatprep.subr.mxu0 0.0
    %6343 = vmatpush1.msra.mxu0 0.0
    %6344 = vmatprep.subr.mxu0 0.0
    %6345 = vmatpush1.msra.mxu0 0.0
    %6346 = vmatprep.subr.mxu0 0.0
    %6347 = vmatpush1.msra.mxu0 0.0
    %6348 = vmatprep.subr.mxu0 0.0
    %6349 = vmatpush1.msra.mxu0 0.0
    %6350 = vmatprep.subr.mxu0 0.0
    %6351 = vmatpush1.msra.mxu0 0.0
    %6352 = vmatprep.subr.mxu0 0.0
    %6353 = vmatpush1.msra.mxu0 0.0
    %6354 = vmatprep.subr.mxu0 0.0
    %6355 = vmatpush1.msra.mxu0 0.0
    %6356 = vmatprep.subr.mxu0 0.0
    %6357 = vmatpush1.msra.mxu0 0.0
    %6358 = vmatprep.subr.mxu0 0.0
    %6359 = vmatpush1.msra.mxu0 0.0
    %6360 = vmatprep.subr.mxu0 0.0
    %6361 = vmatpush1.msra.mxu0 0.0
    %6362 = vmatprep.subr.mxu0 0.0
    %6363 = vmatpush1.msra.mxu0 0.0
    %6364 = vmatprep.subr.mxu0 0.0
    %6365 = vmatpush1.msra.mxu0 0.0
    %6366 = vmatprep.subr.mxu0 0.0
    %6367 = vmatpush1.msra.mxu0 0.0
    %6368 = vmatprep.subr.mxu0 0.0
    %6369 = vmatpush1.msra.mxu0 0.0
    %6370 = vmatprep.mubr.f32.mxu0 0.0
    %6371 = vmatmul.mubr.f32.gmra.mrb[0].mxu0 %v6301
    %v6372 = vpop.f32.mrb[0].mxu0
    %v6373 = vadd.f32 %v6299, %v6372
    %v6374 = vpop.f32.mrb[0].mxu0
    %6375 = vmatprep.mubr.f32.mxu0 0.0
    %6376 = vmatmul.mubr.f32.gmra.mrb[0].mxu0 %v6304
    %v6377 = vpop.f32.mrb[0].mxu0
    %v6378 = vadd.f32 %v6299, %v6377
    %v6379 = vpop.f32.mrb[0].mxu0
    %6380 = vdwg.mxu0
    %v6381 = vmul.f32 %v6373, 0.35355338
    %v6382 = vmul.f32 %v6378, 0.35355338
    %s6383 = scalar_lea.vmem %s6, 160
    %v6384 = vld [vmem:[%s6383] sm:$0xff]
    %v6385 = vld [vmem:[%s6383 + $0x8] sm:$0xff]
    %v6386 = vld [vmem:[%s6383 + $0x10] sm:$0xff]
    %v6387 = vld [vmem:[%s6383 + $0x18] sm:$0xff]
    %v6388 = vld [vmem:[%s6294 + $0x1] sm:$0x1]
    %v6389 = vlaneseq
    %v6390 = vshrl.u32 %v6389, 7
    %v6391 = vsub.s32 0, %v6390
    %v6392 = vrot.slane %v6388, %v6391
    %6393 = vmatprep.subr.mxu0 0.0
    %6394 = vmatpush1.msra.mxu0 %v6384
    %6395 = vmatprep.subr.mxu0 0.0
    %6396 = vmatpush1.msra.mxu0 %v6385
    %6397 = vmatprep.subr.mxu0 0.0
    %6398 = vmatpush1.msra.mxu0 %v6386
    %6399 = vmatprep.subr.mxu0 0.0
    %6400 = vmatpush1.msra.mxu0 %v6387
    %6401 = vmatprep.subr.mxu0 0.0
    %6402 = vmatpush1.msra.mxu0 0.0
    %6403 = vmatprep.subr.mxu0 0.0
    %6404 = vmatpush1.msra.mxu0 0.0
    %6405 = vmatprep.subr.mxu0 0.0
    %6406 = vmatpush1.msra.mxu0 0.0
    %6407 = vmatprep.subr.mxu0 0.0
    %6408 = vmatpush1.msra.mxu0 0.0
    %6409 = vmatprep.subr.mxu0 0.0
    %6410 = vmatpush1.msra.mxu0 0.0
    %6411 = vmatprep.subr.mxu0 0.0
    %6412 = vmatpush1.msra.mxu0 0.0
    %6413 = vmatprep.subr.mxu0 0.0
    %6414 = vmatpush1.msra.mxu0 0.0
    %6415 = vmatprep.subr.mxu0 0.0
    %6416 = vmatpush1.msra.mxu0 0.0
    %6417 = vmatprep.subr.mxu0 0.0
    %6418 = vmatpush1.msra.mxu0 0.0
    %6419 = vmatprep.subr.mxu0 0.0
    %6420 = vmatpush1.msra.mxu0 0.0
    %6421 = vmatprep.subr.mxu0 0.0
    %6422 = vmatpush1.msra.mxu0 0.0
    %6423 = vmatprep.subr.mxu0 0.0
    %6424 = vmatpush1.msra.mxu0 0.0
    %6425 = vmatprep.subr.mxu0 0.0
    %6426 = vmatpush1.msra.mxu0 0.0
    %6427 = vmatprep.subr.mxu0 0.0
    %6428 = vmatpush1.msra.mxu0 0.0
    %6429 = vmatprep.subr.mxu0 0.0
    %6430 = vmatpush1.msra.mxu0 0.0
    %6431 = vmatprep.subr.mxu0 0.0
    %6432 = vmatpush1.msra.mxu0 0.0
    %6433 = vmatprep.subr.mxu0 0.0
    %6434 = vmatpush1.msra.mxu0 0.0
    %6435 = vmatprep.subr.mxu0 0.0
    %6436 = vmatpush1.msra.mxu0 0.0
    %6437 = vmatprep.subr.mxu0 0.0
    %6438 = vmatpush1.msra.mxu0 0.0
    %6439 = vmatprep.subr.mxu0 0.0
    %6440 = vmatpush1.msra.mxu0 0.0
    %6441 = vmatprep.subr.mxu0 0.0
    %6442 = vmatpush1.msra.mxu0 0.0
    %6443 = vmatprep.subr.mxu0 0.0
    %6444 = vmatpush1.msra.mxu0 0.0
    %6445 = vmatprep.subr.mxu0 0.0
    %6446 = vmatpush1.msra.mxu0 0.0
    %6447 = vmatprep.subr.mxu0 0.0
    %6448 = vmatpush1.msra.mxu0 0.0
    %6449 = vmatprep.subr.mxu0 0.0
    %6450 = vmatpush1.msra.mxu0 0.0
    %6451 = vmatprep.subr.mxu0 0.0
    %6452 = vmatpush1.msra.mxu0 0.0
    %6453 = vmatprep.subr.mxu0 0.0
    %6454 = vmatpush1.msra.mxu0 0.0
    %6455 = vmatprep.subr.mxu0 0.0
    %6456 = vmatpush1.msra.mxu0 0.0
    %6457 = vmatprep.mubr.f32.mxu0 0.0
    %6458 = vmatmul.mubr.f32.gmra.mrb[0].mxu0 %v2142
    %v6459 = vpop.f32.mrb[0].mxu0
    %v6460 = vadd.f32 %v6392, %v6459
    %v6461 = vpop.f32.mrb[0].mxu0
    %6462 = vmatprep.mubr.f32.mxu0 0.0
    %6463 = vmatmul.mubr.f32.gmra.mrb[0].mxu0 %v2145
    %v6464 = vpop.f32.mrb[0].mxu0
    %v6465 = vadd.f32 %v6392, %v6464
    %v6466 = vpop.f32.mrb[0].mxu0
    %6467 = vmatprep.mubr.f32.mxu0 0.0
    %6468 = vmatmul.mubr.f32.gmra.mrb[0].mxu0 %v2148
    %v6469 = vpop.f32.mrb[0].mxu0
    %v6470 = vadd.f32 %v6392, %v6469
    %v6471 = vpop.f32.mrb[0].mxu0
    %6472 = vmatprep.mubr.f32.mxu0 0.0
    %6473 = vmatmul.mubr.f32.gmra.mrb[0].mxu0 %v2151
    %v6474 = vpop.f32.mrb[0].mxu0
    %v6475 = vadd.f32 %v6392, %v6474
    %v6476 = vpop.f32.mrb[0].mxu0
    %6477 = vdwg.mxu0
    %s6478 = scalar_lea.vmem %s6, 192
    %v6479 = vld [vmem:[%s6478] sm:$0xff]
    %v6480 = vld [vmem:[%s6478 + $0x8] sm:$0xff]
    %v6481 = vld [vmem:[%s6478 + $0x10] sm:$0xff]
    %v6482 = vld [vmem:[%s6478 + $0x18] sm:$0xff]
    %v6483 = vld [vmem:[%s6294 + $0x2] sm:$0x1]
    %v6484 = vlaneseq
    %v6485 = vshrl.u32 %v6484, 7
    %v6486 = vsub.s32 0, %v6485
    %v6487 = vrot.slane %v6483, %v6486
    %6488 = vmatprep.subr.mxu0 0.0
    %6489 = vmatpush1.msra.mxu0 %v6479
    %6490 = vmatprep.subr.mxu0 0.0
    %6491 = vmatpush1.msra.mxu0 %v6480
    %6492 = vmatprep.subr.mxu0 0.0
    %6493 = vmatpush1.msra.mxu0 %v6481
    %6494 = vmatprep.subr.mxu0 0.0
    %6495 = vmatpush1.msra.mxu0 %v6482
    %6496 = vmatprep.subr.mxu0 0.0
    %6497 = vmatpush1.msra.mxu0 0.0
    %6498 = vmatprep.subr.mxu0 0.0
    %6499 = vmatpush1.msra.mxu0 0.0
    %6500 = vmatprep.subr.mxu0 0.0
    %6501 = vmatpush1.msra.mxu0 0.0
    %6502 = vmatprep.subr.mxu0 0.0
    %6503 = vmatpush1.msra.mxu0 0.0
    %6504 = vmatprep.subr.mxu0 0.0
    %6505 = vmatpush1.msra.mxu0 0.0
    %6506 = vmatprep.subr.mxu0 0.0
    %6507 = vmatpush1.msra.mxu0 0.0
    %6508 = vmatprep.subr.mxu0 0.0
    %6509 = vmatpush1.msra.mxu0 0.0
    %6510 = vmatprep.subr.mxu0 0.0
    %6511 = vmatpush1.msra.mxu0 0.0
    %6512 = vmatprep.subr.mxu0 0.0
    %6513 = vmatpush1.msra.mxu0 0.0
    %6514 = vmatprep.subr.mxu0 0.0
    %6515 = vmatpush1.msra.mxu0 0.0
    %6516 = vmatprep.subr.mxu0 0.0
    %6517 = vmatpush1.msra.mxu0 0.0
    %6518 = vmatprep.subr.mxu0 0.0
    %6519 = vmatpush1.msra.mxu0 0.0
    %6520 = vmatprep.subr.mxu0 0.0
    %6521 = vmatpush1.msra.mxu0 0.0
    %6522 = vmatprep.subr.mxu0 0.0
    %6523 = vmatpush1.msra.mxu0 0.0
    %6524 = vmatprep.subr.mxu0 0.0
    %6525 = vmatpush1.msra.mxu0 0.0
    %6526 = vmatprep.subr.mxu0 0.0
    %6527 = vmatpush1.msra.mxu0 0.0
    %6528 = vmatprep.subr.mxu0 0.0
    %6529 = vmatpush1.msra.mxu0 0.0
    %6530 = vmatprep.subr.mxu0 0.0
    %6531 = vmatpush1.msra.mxu0 0.0
    %6532 = vmatprep.subr.mxu0 0.0
    %6533 = vmatpush1.msra.mxu0 0.0
    %6534 = vmatprep.subr.mxu0 0.0
    %6535 = vmatpush1.msra.mxu0 0.0
    %6536 = vmatprep.subr.mxu0 0.0
    %6537 = vmatpush1.msra.mxu0 0.0
    %6538 = vmatprep.subr.mxu0 0.0
    %6539 = vmatpush1.msra.mxu0 0.0
    %6540 = vmatprep.subr.mxu0 0.0
    %6541 = vmatpush1.msra.mxu0 0.0
    %6542 = vmatprep.subr.mxu0 0.0
    %6543 = vmatpush1.msra.mxu0 0.0
    %6544 = vmatprep.subr.mxu0 0.0
    %6545 = vmatpush1.msra.mxu0 0.0
    %6546 = vmatprep.subr.mxu0 0.0
    %6547 = vmatpush1.msra.mxu0 0.0
    %6548 = vmatprep.subr.mxu0 0.0
    %6549 = vmatpush1.msra.mxu0 0.0
    %6550 = vmatprep.subr.mxu0 0.0
    %6551 = vmatpush1.msra.mxu0 0.0
    %6552 = vmatprep.mubr.f32.mxu0 0.0
    %6553 = vmatmul.mubr.f32.gmra.mrb[0].mxu0 %v2249
    %v6554 = vpop.f32.mrb[0].mxu0
    %v6555 = vadd.f32 %v6487, %v6554
    %v6556 = vpop.f32.mrb[0].mxu0
    %6557 = vmatprep.mubr.f32.mxu0 0.0
    %6558 = vmatmul.mubr.f32.gmra.mrb[0].mxu0 %v2252
    %v6559 = vpop.f32.mrb[0].mxu0
    %v6560 = vadd.f32 %v6487, %v6559
    %v6561 = vpop.f32.mrb[0].mxu0
    %6562 = vmatprep.mubr.f32.mxu0 0.0
    %6563 = vmatmul.mubr.f32.gmra.mrb[0].mxu0 %v2255
    %v6564 = vpop.f32.mrb[0].mxu0
    %v6565 = vadd.f32 %v6487, %v6564
    %v6566 = vpop.f32.mrb[0].mxu0
    %6567 = vmatprep.mubr.f32.mxu0 0.0
    %6568 = vmatmul.mubr.f32.gmra.mrb[0].mxu0 %v2258
    %v6569 = vpop.f32.mrb[0].mxu0
    %v6570 = vadd.f32 %v6487, %v6569
    %v6571 = vpop.f32.mrb[0].mxu0
    %6572 = vdwg.mxu0
    %s6573 = scalar_lea.vmem %s6, 224
    %v6574 = vld [vmem:[%s6573] sm:$0xff]
    %v6575 = vld [vmem:[%s6573 + $0x8] sm:$0xff]
    %v6576 = vld [vmem:[%s6573 + $0x10] sm:$0xff]
    %v6577 = vld [vmem:[%s6573 + $0x18] sm:$0xff]
    %v6579 = vsel %vm346, %v6381, 0
    %v6582 = vsel %vm346, %v6460, 0
    %v6585 = vsel %vm346, %v6465, 0
    %6587 = vmatprep.subr.mxu0 0.0
    %6588 = vmatpush1.xpose.msra.mxu0 %v6582
    %6589 = vmatprep.subr.mxu0 0.0
    %6590 = vmatpush1.xpose.msra.mxu0 %v6585
    %6591 = vmatprep.subr.mxu0 0.0
    %6592 = vmatpush1.xpose.msra.mxu0 0.0
    %6593 = vmatprep.subr.mxu0 0.0
    %6594 = vmatpush1.xpose.msra.mxu0 0.0
    %6595 = vmatprep.subr.mxu0 0.0
    %6596 = vmatpush1.xpose.msra.mxu0 0.0
    %6597 = vmatprep.subr.mxu0 0.0
    %6598 = vmatpush1.xpose.msra.mxu0 0.0
    %6599 = vmatprep.subr.mxu0 0.0
    %6600 = vmatpush1.xpose.msra.mxu0 0.0
    %6601 = vmatprep.subr.mxu0 0.0
    %6602 = vmatpush1.xpose.msra.mxu0 0.0
    %6603 = vmatprep.subr.mxu0 0.0
    %6604 = vmatpush1.xpose.msra.mxu0 0.0
    %6605 = vmatprep.subr.mxu0 0.0
    %6606 = vmatpush1.xpose.msra.mxu0 0.0
    %6607 = vmatprep.subr.mxu0 0.0
    %6608 = vmatpush1.xpose.msra.mxu0 0.0
    %6609 = vmatprep.subr.mxu0 0.0
    %6610 = vmatpush1.xpose.msra.mxu0 0.0
    %6611 = vmatprep.subr.mxu0 0.0
    %6612 = vmatpush1.xpose.msra.mxu0 0.0
    %6613 = vmatprep.subr.mxu0 0.0
    %6614 = vmatpush1.xpose.msra.mxu0 0.0
    %6615 = vmatprep.subr.mxu0 0.0
    %6616 = vmatpush1.xpose.msra.mxu0 0.0
    %6617 = vmatprep.subr.mxu0 0.0
    %6618 = vmatpush1.xpose.msra.mxu0 0.0
    %6619 = vmatprep.subr.mxu0 0.0
    %6620 = vmatpush1.xpose.msra.mxu0 0.0
    %6621 = vmatprep.subr.mxu0 0.0
    %6622 = vmatpush1.xpose.msra.mxu0 0.0
    %6623 = vmatprep.subr.mxu0 0.0
    %6624 = vmatpush1.xpose.msra.mxu0 0.0
    %6625 = vmatprep.subr.mxu0 0.0
    %6626 = vmatpush1.xpose.msra.mxu0 0.0
    %6627 = vmatprep.subr.mxu0 0.0
    %6628 = vmatpush1.xpose.msra.mxu0 0.0
    %6629 = vmatprep.subr.mxu0 0.0
    %6630 = vmatpush1.xpose.msra.mxu0 0.0
    %6631 = vmatprep.subr.mxu0 0.0
    %6632 = vmatpush1.xpose.msra.mxu0 0.0
    %6633 = vmatprep.subr.mxu0 0.0
    %6634 = vmatpush1.xpose.msra.mxu0 0.0
    %6635 = vmatprep.subr.mxu0 0.0
    %6636 = vmatpush1.xpose.msra.mxu0 0.0
    %6637 = vmatprep.subr.mxu0 0.0
    %6638 = vmatpush1.xpose.msra.mxu0 0.0
    %6639 = vmatprep.subr.mxu0 0.0
    %6640 = vmatpush1.xpose.msra.mxu0 0.0
    %6641 = vmatprep.subr.mxu0 0.0
    %6642 = vmatpush1.xpose.msra.mxu0 0.0
    %6643 = vmatprep.subr.mxu0 0.0
    %6644 = vmatpush1.xpose.msra.mxu0 0.0
    %6645 = vmatprep.subr.mxu0 0.0
    %6646 = vmatpush1.xpose.msra.mxu0 0.0
    %6647 = vmatprep.subr.mxu0 0.0
    %6648 = vmatpush1.xpose.msra.mxu0 0.0
    %6649 = vmatprep.subr.mxu0 0.0
    %6650 = vmatpush1.xpose.msra.mxu0 0.0
    %6651 = vmatprep.mubr.f32.mxu0 0.0
    %6652 = vmatmul.mubr.f32.gmra.mrb[0].mxu0 %v6579
    %v6653 = vpop.f32.mrb[0].mxu0
    %v6654 = vadd.f32 0.0, %v6653
    %v6655 = vpop.f32.mrb[0].mxu0
    %6656 = vdwg.mxu0
    %v6658 = vsel %vm346, %v6382, 0
    %v6661 = vsel %vm346, %v6470, 0
    %v6664 = vsel %vm346, %v6475, 0
    %6666 = vmatprep.subr.mxu0 0.0
    %6667 = vmatpush1.xpose.msra.mxu0 %v6661
    %6668 = vmatprep.subr.mxu0 0.0
    %6669 = vmatpush1.xpose.msra.mxu0 %v6664
    %6670 = vmatprep.subr.mxu0 0.0
    %6671 = vmatpush1.xpose.msra.mxu0 0.0
    %6672 = vmatprep.subr.mxu0 0.0
    %6673 = vmatpush1.xpose.msra.mxu0 0.0
    %6674 = vmatprep.subr.mxu0 0.0
    %6675 = vmatpush1.xpose.msra.mxu0 0.0
    %6676 = vmatprep.subr.mxu0 0.0
    %6677 = vmatpush1.xpose.msra.mxu0 0.0
    %6678 = vmatprep.subr.mxu0 0.0
    %6679 = vmatpush1.xpose.msra.mxu0 0.0
    %6680 = vmatprep.subr.mxu0 0.0
    %6681 = vmatpush1.xpose.msra.mxu0 0.0
    %6682 = vmatprep.subr.mxu0 0.0
    %6683 = vmatpush1.xpose.msra.mxu0 0.0
    %6684 = vmatprep.subr.mxu0 0.0
    %6685 = vmatpush1.xpose.msra.mxu0 0.0
    %6686 = vmatprep.subr.mxu0 0.0
    %6687 = vmatpush1.xpose.msra.mxu0 0.0
    %6688 = vmatprep.subr.mxu0 0.0
    %6689 = vmatpush1.xpose.msra.mxu0 0.0
    %6690 = vmatprep.subr.mxu0 0.0
    %6691 = vmatpush1.xpose.msra.mxu0 0.0
    %6692 = vmatprep.subr.mxu0 0.0
    %6693 = vmatpush1.xpose.msra.mxu0 0.0
    %6694 = vmatprep.subr.mxu0 0.0
    %6695 = vmatpush1.xpose.msra.mxu0 0.0
    %6696 = vmatprep.subr.mxu0 0.0
    %6697 = vmatpush1.xpose.msra.mxu0 0.0
    %6698 = vmatprep.subr.mxu0 0.0
    %6699 = vmatpush1.xpose.msra.mxu0 0.0
    %6700 = vmatprep.subr.mxu0 0.0
    %6701 = vmatpush1.xpose.msra.mxu0 0.0
    %6702 = vmatprep.subr.mxu0 0.0
    %6703 = vmatpush1.xpose.msra.mxu0 0.0
    %6704 = vmatprep.subr.mxu0 0.0
    %6705 = vmatpush1.xpose.msra.mxu0 0.0
    %6706 = vmatprep.subr.mxu0 0.0
    %6707 = vmatpush1.xpose.msra.mxu0 0.0
    %6708 = vmatprep.subr.mxu0 0.0
    %6709 = vmatpush1.xpose.msra.mxu0 0.0
    %6710 = vmatprep.subr.mxu0 0.0
    %6711 = vmatpush1.xpose.msra.mxu0 0.0
    %6712 = vmatprep.subr.mxu0 0.0
    %6713 = vmatpush1.xpose.msra.mxu0 0.0
    %6714 = vmatprep.subr.mxu0 0.0
    %6715 = vmatpush1.xpose.msra.mxu0 0.0
    %6716 = vmatprep.subr.mxu0 0.0
    %6717 = vmatpush1.xpose.msra.mxu0 0.0
    %6718 = vmatprep.subr.mxu0 0.0
    %6719 = vmatpush1.xpose.msra.mxu0 0.0
    %6720 = vmatprep.subr.mxu0 0.0
    %6721 = vmatpush1.xpose.msra.mxu0 0.0
    %6722 = vmatprep.subr.mxu0 0.0
    %6723 = vmatpush1.xpose.msra.mxu0 0.0
    %6724 = vmatprep.subr.mxu0 0.0
    %6725 = vmatpush1.xpose.msra.mxu0 0.0
    %6726 = vmatprep.subr.mxu0 0.0
    %6727 = vmatpush1.xpose.msra.mxu0 0.0
    %6728 = vmatprep.subr.mxu0 0.0
    %6729 = vmatpush1.xpose.msra.mxu0 0.0
    %6730 = vmatprep.mubr.f32.mxu0 0.0
    %6731 = vmatmul.mubr.f32.gmra.mrb[0].mxu0 %v6658
    %v6732 = vpop.f32.mrb[0].mxu0
    %v6733 = vadd.f32 0.0, %v6732
    %v6734 = vpop.f32.mrb[0].mxu0
    %6735 = vdwg.mxu0
    %v6736 = vsel %vm2508, %v6654, -inf
    %6737 = vmax.xlane.f32.xlu0 %v6736
    %v6738 = vpop.xlane.xlu0 %6737
    %v6739 = vsel %vm2508, %v6733, -inf
    %6740 = vmax.xlane.f32.xlu0 %v6739
    %v6741 = vpop.xlane.xlu0 %6740
    %v6742 = vsub.f32 %v6654, %v6738
    %v6743 = vsub.f32 %v6733, %v6741
    %v6744 = vmul.f32 %v6742, 1.442695
    %v6745 = vpow.pop %v6744
    %v6746 = vmul.f32 %v6743, 1.442695
    %v6747 = vpow.pop %v6746
    %v6748 = vsel %vm2508, %v6745, 0.0
    %6749 = vadd.xlane.f32.xlu0 %v6748
    %v6750 = vpop.xlane.xlu0 %6749
    %v6751 = vsel %vm2508, %v6747, 0.0
    %6752 = vadd.xlane.f32.xlu0 %v6751
    %v6753 = vpop.xlane.xlu0 %6752
    %v6754 = vrcp.pop %v6750
    %v6755 = vmul.f32 %v6745, %v6754
    %v6756 = vrcp.pop %v6753
    %v6757 = vmul.f32 %v6747, %v6756
    %v6759 = vsel %vm2508, %v6755, 0
    %6761 = vmatprep.subr.mxu0 0.0
    %6762 = vmatpush1.msra.mxu0 %v6555
    %6763 = vmatprep.subr.mxu0 0.0
    %6764 = vmatpush1.msra.mxu0 %v6560
    %6765 = vmatprep.subr.mxu0 0.0
    %6766 = vmatpush1.msra.mxu0 0.0
    %6767 = vmatprep.subr.mxu0 0.0
    %6768 = vmatpush1.msra.mxu0 0.0
    %6769 = vmatprep.subr.mxu0 0.0
    %6770 = vmatpush1.msra.mxu0 0.0
    %6771 = vmatprep.subr.mxu0 0.0
    %6772 = vmatpush1.msra.mxu0 0.0
    %6773 = vmatprep.subr.mxu0 0.0
    %6774 = vmatpush1.msra.mxu0 0.0
    %6775 = vmatprep.subr.mxu0 0.0
    %6776 = vmatpush1.msra.mxu0 0.0
    %6777 = vmatprep.subr.mxu0 0.0
    %6778 = vmatpush1.msra.mxu0 0.0
    %6779 = vmatprep.subr.mxu0 0.0
    %6780 = vmatpush1.msra.mxu0 0.0
    %6781 = vmatprep.subr.mxu0 0.0
    %6782 = vmatpush1.msra.mxu0 0.0
    %6783 = vmatprep.subr.mxu0 0.0
    %6784 = vmatpush1.msra.mxu0 0.0
    %6785 = vmatprep.subr.mxu0 0.0
    %6786 = vmatpush1.msra.mxu0 0.0
    %6787 = vmatprep.subr.mxu0 0.0
    %6788 = vmatpush1.msra.mxu0 0.0
    %6789 = vmatprep.subr.mxu0 0.0
    %6790 = vmatpush1.msra.mxu0 0.0
    %6791 = vmatprep.subr.mxu0 0.0
    %6792 = vmatpush1.msra.mxu0 0.0
    %6793 = vmatprep.subr.mxu0 0.0
    %6794 = vmatpush1.msra.mxu0 0.0
    %6795 = vmatprep.subr.mxu0 0.0
    %6796 = vmatpush1.msra.mxu0 0.0
    %6797 = vmatprep.subr.mxu0 0.0
    %6798 = vmatpush1.msra.mxu0 0.0
    %6799 = vmatprep.subr.mxu0 0.0
    %6800 = vmatpush1.msra.mxu0 0.0
    %6801 = vmatprep.subr.mxu0 0.0
    %6802 = vmatpush1.msra.mxu0 0.0
    %6803 = vmatprep.subr.mxu0 0.0
    %6804 = vmatpush1.msra.mxu0 0.0
    %6805 = vmatprep.subr.mxu0 0.0
    %6806 = vmatpush1.msra.mxu0 0.0
    %6807 = vmatprep.subr.mxu0 0.0
    %6808 = vmatpush1.msra.mxu0 0.0
    %6809 = vmatprep.subr.mxu0 0.0
    %6810 = vmatpush1.msra.mxu0 0.0
    %6811 = vmatprep.subr.mxu0 0.0
    %6812 = vmatpush1.msra.mxu0 0.0
    %6813 = vmatprep.subr.mxu0 0.0
    %6814 = vmatpush1.msra.mxu0 0.0
    %6815 = vmatprep.subr.mxu0 0.0
    %6816 = vmatpush1.msra.mxu0 0.0
    %6817 = vmatprep.subr.mxu0 0.0
    %6818 = vmatpush1.msra.mxu0 0.0
    %6819 = vmatprep.subr.mxu0 0.0
    %6820 = vmatpush1.msra.mxu0 0.0
    %6821 = vmatprep.subr.mxu0 0.0
    %6822 = vmatpush1.msra.mxu0 0.0
    %6823 = vmatprep.subr.mxu0 0.0
    %6824 = vmatpush1.msra.mxu0 0.0
    %6825 = vmatprep.mubr.f32.mxu0 0.0
    %6826 = vmatmul.mubr.f32.gmra.mrb[0].mxu0 %v6759
    %v6827 = vpop.f32.mrb[0].mxu0
    %v6828 = vadd.f32 0.0, %v6827
    %v6829 = vpop.f32.mrb[0].mxu0
    %6830 = vdwg.mxu0
    %v6832 = vsel %vm2508, %v6757, 0
    %6834 = vmatprep.subr.mxu0 0.0
    %6835 = vmatpush1.msra.mxu0 %v6565
    %6836 = vmatprep.subr.mxu0 0.0
    %6837 = vmatpush1.msra.mxu0 %v6570
    %6838 = vmatprep.subr.mxu0 0.0
    %6839 = vmatpush1.msra.mxu0 0.0
    %6840 = vmatprep.subr.mxu0 0.0
    %6841 = vmatpush1.msra.mxu0 0.0
    %6842 = vmatprep.subr.mxu0 0.0
    %6843 = vmatpush1.msra.mxu0 0.0
    %6844 = vmatprep.subr.mxu0 0.0
    %6845 = vmatpush1.msra.mxu0 0.0
    %6846 = vmatprep.subr.mxu0 0.0
    %6847 = vmatpush1.msra.mxu0 0.0
    %6848 = vmatprep.subr.mxu0 0.0
    %6849 = vmatpush1.msra.mxu0 0.0
    %6850 = vmatprep.subr.mxu0 0.0
    %6851 = vmatpush1.msra.mxu0 0.0
    %6852 = vmatprep.subr.mxu0 0.0
    %6853 = vmatpush1.msra.mxu0 0.0
    %6854 = vmatprep.subr.mxu0 0.0
    %6855 = vmatpush1.msra.mxu0 0.0
    %6856 = vmatprep.subr.mxu0 0.0
    %6857 = vmatpush1.msra.mxu0 0.0
    %6858 = vmatprep.subr.mxu0 0.0
    %6859 = vmatpush1.msra.mxu0 0.0
    %6860 = vmatprep.subr.mxu0 0.0
    %6861 = vmatpush1.msra.mxu0 0.0
    %6862 = vmatprep.subr.mxu0 0.0
    %6863 = vmatpush1.msra.mxu0 0.0
    %6864 = vmatprep.subr.mxu0 0.0
    %6865 = vmatpush1.msra.mxu0 0.0
    %6866 = vmatprep.subr.mxu0 0.0
    %6867 = vmatpush1.msra.mxu0 0.0
    %6868 = vmatprep.subr.mxu0 0.0
    %6869 = vmatpush1.msra.mxu0 0.0
    %6870 = vmatprep.subr.mxu0 0.0
    %6871 = vmatpush1.msra.mxu0 0.0
    %6872 = vmatprep.subr.mxu0 0.0
    %6873 = vmatpush1.msra.mxu0 0.0
    %6874 = vmatprep.subr.mxu0 0.0
    %6875 = vmatpush1.msra.mxu0 0.0
    %6876 = vmatprep.subr.mxu0 0.0
    %6877 = vmatpush1.msra.mxu0 0.0
    %6878 = vmatprep.subr.mxu0 0.0
    %6879 = vmatpush1.msra.mxu0 0.0
    %6880 = vmatprep.subr.mxu0 0.0
    %6881 = vmatpush1.msra.mxu0 0.0
    %6882 = vmatprep.subr.mxu0 0.0
    %6883 = vmatpush1.msra.mxu0 0.0
    %6884 = vmatprep.subr.mxu0 0.0
    %6885 = vmatpush1.msra.mxu0 0.0
    %6886 = vmatprep.subr.mxu0 0.0
    %6887 = vmatpush1.msra.mxu0 0.0
    %6888 = vmatprep.subr.mxu0 0.0
    %6889 = vmatpush1.msra.mxu0 0.0
    %6890 = vmatprep.subr.mxu0 0.0
    %6891 = vmatpush1.msra.mxu0 0.0
    %6892 = vmatprep.subr.mxu0 0.0
    %6893 = vmatpush1.msra.mxu0 0.0
    %6894 = vmatprep.subr.mxu0 0.0
    %6895 = vmatpush1.msra.mxu0 0.0
    %6896 = vmatprep.subr.mxu0 0.0
    %6897 = vmatpush1.msra.mxu0 0.0
    %6898 = vmatprep.mubr.f32.mxu0 0.0
    %6899 = vmatmul.mubr.f32.gmra.mrb[0].mxu0 %v6832
    %v6900 = vpop.f32.mrb[0].mxu0
    %v6901 = vadd.f32 0.0, %v6900
    %v6902 = vpop.f32.mrb[0].mxu0
    %6903 = vdwg.mxu0
    %6904 = vrot.lane.b32.xlu0 %v6381, 120
    %v6905 = vpop.permute.xlu0 %6904
    %6906 = vrot.lane.b32.xlu0 %v6460, 120
    %v6907 = vpop.permute.xlu0 %6906
    %6908 = vrot.lane.b32.xlu0 %v6465, 120
    %v6909 = vpop.permute.xlu0 %6908
    %v6910 = vsel %vm346, %v6905, 0
    %v6912 = vsel %vm346, %v6907, 0
    %v6914 = vsel %vm346, %v6909, 0
    %6916 = vmatprep.subr.mxu0 0.0
    %6917 = vmatpush1.xpose.msra.mxu0 %v6912
    %6918 = vmatprep.subr.mxu0 0.0
    %6919 = vmatpush1.xpose.msra.mxu0 %v6914
    %6920 = vmatprep.subr.mxu0 0.0
    %6921 = vmatpush1.xpose.msra.mxu0 0.0
    %6922 = vmatprep.subr.mxu0 0.0
    %6923 = vmatpush1.xpose.msra.mxu0 0.0
    %6924 = vmatprep.subr.mxu0 0.0
    %6925 = vmatpush1.xpose.msra.mxu0 0.0
    %6926 = vmatprep.subr.mxu0 0.0
    %6927 = vmatpush1.xpose.msra.mxu0 0.0
    %6928 = vmatprep.subr.mxu0 0.0
    %6929 = vmatpush1.xpose.msra.mxu0 0.0
    %6930 = vmatprep.subr.mxu0 0.0
    %6931 = vmatpush1.xpose.msra.mxu0 0.0
    %6932 = vmatprep.subr.mxu0 0.0
    %6933 = vmatpush1.xpose.msra.mxu0 0.0
    %6934 = vmatprep.subr.mxu0 0.0
    %6935 = vmatpush1.xpose.msra.mxu0 0.0
    %6936 = vmatprep.subr.mxu0 0.0
    %6937 = vmatpush1.xpose.msra.mxu0 0.0
    %6938 = vmatprep.subr.mxu0 0.0
    %6939 = vmatpush1.xpose.msra.mxu0 0.0
    %6940 = vmatprep.subr.mxu0 0.0
    %6941 = vmatpush1.xpose.msra.mxu0 0.0
    %6942 = vmatprep.subr.mxu0 0.0
    %6943 = vmatpush1.xpose.msra.mxu0 0.0
    %6944 = vmatprep.subr.mxu0 0.0
    %6945 = vmatpush1.xpose.msra.mxu0 0.0
    %6946 = vmatprep.subr.mxu0 0.0
    %6947 = vmatpush1.xpose.msra.mxu0 0.0
    %6948 = vmatprep.subr.mxu0 0.0
    %6949 = vmatpush1.xpose.msra.mxu0 0.0
    %6950 = vmatprep.subr.mxu0 0.0
    %6951 = vmatpush1.xpose.msra.mxu0 0.0
    %6952 = vmatprep.subr.mxu0 0.0
    %6953 = vmatpush1.xpose.msra.mxu0 0.0
    %6954 = vmatprep.subr.mxu0 0.0
    %6955 = vmatpush1.xpose.msra.mxu0 0.0
    %6956 = vmatprep.subr.mxu0 0.0
    %6957 = vmatpush1.xpose.msra.mxu0 0.0
    %6958 = vmatprep.subr.mxu0 0.0
    %6959 = vmatpush1.xpose.msra.mxu0 0.0
    %6960 = vmatprep.subr.mxu0 0.0
    %6961 = vmatpush1.xpose.msra.mxu0 0.0
    %6962 = vmatprep.subr.mxu0 0.0
    %6963 = vmatpush1.xpose.msra.mxu0 0.0
    %6964 = vmatprep.subr.mxu0 0.0
    %6965 = vmatpush1.xpose.msra.mxu0 0.0
    %6966 = vmatprep.subr.mxu0 0.0
    %6967 = vmatpush1.xpose.msra.mxu0 0.0
    %6968 = vmatprep.subr.mxu0 0.0
    %6969 = vmatpush1.xpose.msra.mxu0 0.0
    %6970 = vmatprep.subr.mxu0 0.0
    %6971 = vmatpush1.xpose.msra.mxu0 0.0
    %6972 = vmatprep.subr.mxu0 0.0
    %6973 = vmatpush1.xpose.msra.mxu0 0.0
    %6974 = vmatprep.subr.mxu0 0.0
    %6975 = vmatpush1.xpose.msra.mxu0 0.0
    %6976 = vmatprep.subr.mxu0 0.0
    %6977 = vmatpush1.xpose.msra.mxu0 0.0
    %6978 = vmatprep.subr.mxu0 0.0
    %6979 = vmatpush1.xpose.msra.mxu0 0.0
    %6980 = vmatprep.mubr.f32.mxu0 0.0
    %6981 = vmatmul.mubr.f32.gmra.mrb[0].mxu0 %v6910
    %v6982 = vpop.f32.mrb[0].mxu0
    %v6983 = vadd.f32 0.0, %v6982
    %v6984 = vpop.f32.mrb[0].mxu0
    %6985 = vdwg.mxu0
    %6986 = vrot.lane.b32.xlu0 %v6382, 120
    %v6987 = vpop.permute.xlu0 %6986
    %6988 = vrot.lane.b32.xlu0 %v6470, 120
    %v6989 = vpop.permute.xlu0 %6988
    %6990 = vrot.lane.b32.xlu0 %v6475, 120
    %v6991 = vpop.permute.xlu0 %6990
    %v6992 = vsel %vm346, %v6987, 0
    %v6994 = vsel %vm346, %v6989, 0
    %v6996 = vsel %vm346, %v6991, 0
    %6998 = vmatprep.subr.mxu0 0.0
    %6999 = vmatpush1.xpose.msra.mxu0 %v6994
    %7000 = vmatprep.subr.mxu0 0.0
    %7001 = vmatpush1.xpose.msra.mxu0 %v6996
    %7002 = vmatprep.subr.mxu0 0.0
    %7003 = vmatpush1.xpose.msra.mxu0 0.0
    %7004 = vmatprep.subr.mxu0 0.0
    %7005 = vmatpush1.xpose.msra.mxu0 0.0
    %7006 = vmatprep.subr.mxu0 0.0
    %7007 = vmatpush1.xpose.msra.mxu0 0.0
    %7008 = vmatprep.subr.mxu0 0.0
    %7009 = vmatpush1.xpose.msra.mxu0 0.0
    %7010 = vmatprep.subr.mxu0 0.0
    %7011 = vmatpush1.xpose.msra.mxu0 0.0
    %7012 = vmatprep.subr.mxu0 0.0
    %7013 = vmatpush1.xpose.msra.mxu0 0.0
    %7014 = vmatprep.subr.mxu0 0.0
    %7015 = vmatpush1.xpose.msra.mxu0 0.0
    %7016 = vmatprep.subr.mxu0 0.0
    %7017 = vmatpush1.xpose.msra.mxu0 0.0
    %7018 = vmatprep.subr.mxu0 0.0
    %7019 = vmatpush1.xpose.msra.mxu0 0.0
    %7020 = vmatprep.subr.mxu0 0.0
    %7021 = vmatpush1.xpose.msra.mxu0 0.0
    %7022 = vmatprep.subr.mxu0 0.0
    %7023 = vmatpush1.xpose.msra.mxu0 0.0
    %7024 = vmatprep.subr.mxu0 0.0
    %7025 = vmatpush1.xpose.msra.mxu0 0.0
    %7026 = vmatprep.subr.mxu0 0.0
    %7027 = vmatpush1.xpose.msra.mxu0 0.0
    %7028 = vmatprep.subr.mxu0 0.0
    %7029 = vmatpush1.xpose.msra.mxu0 0.0
    %7030 = vmatprep.subr.mxu0 0.0
    %7031 = vmatpush1.xpose.msra.mxu0 0.0
    %7032 = vmatprep.subr.mxu0 0.0
    %7033 = vmatpush1.xpose.msra.mxu0 0.0
    %7034 = vmatprep.subr.mxu0 0.0
    %7035 = vmatpush1.xpose.msra.mxu0 0.0
    %7036 = vmatprep.subr.mxu0 0.0
    %7037 = vmatpush1.xpose.msra.mxu0 0.0
    %7038 = vmatprep.subr.mxu0 0.0
    %7039 = vmatpush1.xpose.msra.mxu0 0.0
    %7040 = vmatprep.subr.mxu0 0.0
    %7041 = vmatpush1.xpose.msra.mxu0 0.0
    %7042 = vmatprep.subr.mxu0 0.0
    %7043 = vmatpush1.xpose.msra.mxu0 0.0
    %7044 = vmatprep.subr.mxu0 0.0
    %7045 = vmatpush1.xpose.msra.mxu0 0.0
    %7046 = vmatprep.subr.mxu0 0.0
    %7047 = vmatpush1.xpose.msra.mxu0 0.0
    %7048 = vmatprep.subr.mxu0 0.0
    %7049 = vmatpush1.xpose.msra.mxu0 0.0
    %7050 = vmatprep.subr.mxu0 0.0
    %7051 = vmatpush1.xpose.msra.mxu0 0.0
    %7052 = vmatprep.subr.mxu0 0.0
    %7053 = vmatpush1.xpose.msra.mxu0 0.0
    %7054 = vmatprep.subr.mxu0 0.0
    %7055 = vmatpush1.xpose.msra.mxu0 0.0
    %7056 = vmatprep.subr.mxu0 0.0
    %7057 = vmatpush1.xpose.msra.mxu0 0.0
    %7058 = vmatprep.subr.mxu0 0.0
    %7059 = vmatpush1.xpose.msra.mxu0 0.0
    %7060 = vmatprep.subr.mxu0 0.0
    %7061 = vmatpush1.xpose.msra.mxu0 0.0
    %7062 = vmatprep.mubr.f32.mxu0 0.0
    %7063 = vmatmul.mubr.f32.gmra.mrb[0].mxu0 %v6992
    %v7064 = vpop.f32.mrb[0].mxu0
    %v7065 = vadd.f32 0.0, %v7064
    %v7066 = vpop.f32.mrb[0].mxu0
    %7067 = vdwg.mxu0
    %v7068 = vsel %vm2508, %v6983, -inf
    %7069 = vmax.xlane.f32.xlu0 %v7068
    %v7070 = vpop.xlane.xlu0 %7069
    %v7071 = vsel %vm2508, %v7065, -inf
    %7072 = vmax.xlane.f32.xlu0 %v7071
    %v7073 = vpop.xlane.xlu0 %7072
    %v7074 = vsub.f32 %v6983, %v7070
    %v7075 = vsub.f32 %v7065, %v7073
    %v7076 = vmul.f32 %v7074, 1.442695
    %v7077 = vpow.pop %v7076
    %v7078 = vmul.f32 %v7075, 1.442695
    %v7079 = vpow.pop %v7078
    %v7080 = vsel %vm2508, %v7077, 0.0
    %7081 = vadd.xlane.f32.xlu0 %v7080
    %v7082 = vpop.xlane.xlu0 %7081
    %v7083 = vsel %vm2508, %v7079, 0.0
    %7084 = vadd.xlane.f32.xlu0 %v7083
    %v7085 = vpop.xlane.xlu0 %7084
    %v7086 = vrcp.pop %v7082
    %v7087 = vmul.f32 %v7077, %v7086
    %v7088 = vrcp.pop %v7085
    %v7089 = vmul.f32 %v7079, %v7088
    %7092 = vrot.lane.b32.xlu0 %v6555, 120
    %v7093 = vpop.permute.xlu0 %7092
    %7094 = vrot.lane.b32.xlu0 %v6560, 120
    %v7095 = vpop.permute.xlu0 %7094
    %v7099 = vsel %vm2508, %v7087, 0
    %7101 = vmatprep.subr.mxu0 0.0
    %7102 = vmatpush1.msra.mxu0 %v7093
    %7103 = vmatprep.subr.mxu0 0.0
    %7104 = vmatpush1.msra.mxu0 %v7095
    %7105 = vmatprep.subr.mxu0 0.0
    %7106 = vmatpush1.msra.mxu0 0.0
    %7107 = vmatprep.subr.mxu0 0.0
    %7108 = vmatpush1.msra.mxu0 0.0
    %7109 = vmatprep.subr.mxu0 0.0
    %7110 = vmatpush1.msra.mxu0 0.0
    %7111 = vmatprep.subr.mxu0 0.0
    %7112 = vmatpush1.msra.mxu0 0.0
    %7113 = vmatprep.subr.mxu0 0.0
    %7114 = vmatpush1.msra.mxu0 0.0
    %7115 = vmatprep.subr.mxu0 0.0
    %7116 = vmatpush1.msra.mxu0 0.0
    %7117 = vmatprep.subr.mxu0 0.0
    %7118 = vmatpush1.msra.mxu0 0.0
    %7119 = vmatprep.subr.mxu0 0.0
    %7120 = vmatpush1.msra.mxu0 0.0
    %7121 = vmatprep.subr.mxu0 0.0
    %7122 = vmatpush1.msra.mxu0 0.0
    %7123 = vmatprep.subr.mxu0 0.0
    %7124 = vmatpush1.msra.mxu0 0.0
    %7125 = vmatprep.subr.mxu0 0.0
    %7126 = vmatpush1.msra.mxu0 0.0
    %7127 = vmatprep.subr.mxu0 0.0
    %7128 = vmatpush1.msra.mxu0 0.0
    %7129 = vmatprep.subr.mxu0 0.0
    %7130 = vmatpush1.msra.mxu0 0.0
    %7131 = vmatprep.subr.mxu0 0.0
    %7132 = vmatpush1.msra.mxu0 0.0
    %7133 = vmatprep.subr.mxu0 0.0
    %7134 = vmatpush1.msra.mxu0 0.0
    %7135 = vmatprep.subr.mxu0 0.0
    %7136 = vmatpush1.msra.mxu0 0.0
    %7137 = vmatprep.subr.mxu0 0.0
    %7138 = vmatpush1.msra.mxu0 0.0
    %7139 = vmatprep.subr.mxu0 0.0
    %7140 = vmatpush1.msra.mxu0 0.0
    %7141 = vmatprep.subr.mxu0 0.0
    %7142 = vmatpush1.msra.mxu0 0.0
    %7143 = vmatprep.subr.mxu0 0.0
    %7144 = vmatpush1.msra.mxu0 0.0
    %7145 = vmatprep.subr.mxu0 0.0
    %7146 = vmatpush1.msra.mxu0 0.0
    %7147 = vmatprep.subr.mxu0 0.0
    %7148 = vmatpush1.msra.mxu0 0.0
    %7149 = vmatprep.subr.mxu0 0.0
    %7150 = vmatpush1.msra.mxu0 0.0
    %7151 = vmatprep.subr.mxu0 0.0
    %7152 = vmatpush1.msra.mxu0 0.0
    %7153 = vmatprep.subr.mxu0 0.0
    %7154 = vmatpush1.msra.mxu0 0.0
    %7155 = vmatprep.subr.mxu0 0.0
    %7156 = vmatpush1.msra.mxu0 0.0
    %7157 = vmatprep.subr.mxu0 0.0
    %7158 = vmatpush1.msra.mxu0 0.0
    %7159 = vmatprep.subr.mxu0 0.0
    %7160 = vmatpush1.msra.mxu0 0.0
    %7161 = vmatprep.subr.mxu0 0.0
    %7162 = vmatpush1.msra.mxu0 0.0
    %7163 = vmatprep.subr.mxu0 0.0
    %7164 = vmatpush1.msra.mxu0 0.0
    %7165 = vmatprep.mubr.f32.mxu0 0.0
    %7166 = vmatmul.mubr.f32.gmra.mrb[0].mxu0 %v7099
    %v7167 = vpop.f32.mrb[0].mxu0
    %v7168 = vadd.f32 0.0, %v7167
    %v7169 = vpop.f32.mrb[0].mxu0
    %7170 = vdwg.mxu0
    %7173 = vrot.lane.b32.xlu0 %v6565, 120
    %v7174 = vpop.permute.xlu0 %7173
    %7175 = vrot.lane.b32.xlu0 %v6570, 120
    %v7176 = vpop.permute.xlu0 %7175
    %v7180 = vsel %vm2508, %v7089, 0
    %7182 = vmatprep.subr.mxu0 0.0
    %7183 = vmatpush1.msra.mxu0 %v7174
    %7184 = vmatprep.subr.mxu0 0.0
    %7185 = vmatpush1.msra.mxu0 %v7176
    %7186 = vmatprep.subr.mxu0 0.0
    %7187 = vmatpush1.msra.mxu0 0.0
    %7188 = vmatprep.subr.mxu0 0.0
    %7189 = vmatpush1.msra.mxu0 0.0
    %7190 = vmatprep.subr.mxu0 0.0
    %7191 = vmatpush1.msra.mxu0 0.0
    %7192 = vmatprep.subr.mxu0 0.0
    %7193 = vmatpush1.msra.mxu0 0.0
    %7194 = vmatprep.subr.mxu0 0.0
    %7195 = vmatpush1.msra.mxu0 0.0
    %7196 = vmatprep.subr.mxu0 0.0
    %7197 = vmatpush1.msra.mxu0 0.0
    %7198 = vmatprep.subr.mxu0 0.0
    %7199 = vmatpush1.msra.mxu0 0.0
    %7200 = vmatprep.subr.mxu0 0.0
    %7201 = vmatpush1.msra.mxu0 0.0
    %7202 = vmatprep.subr.mxu0 0.0
    %7203 = vmatpush1.msra.mxu0 0.0
    %7204 = vmatprep.subr.mxu0 0.0
    %7205 = vmatpush1.msra.mxu0 0.0
    %7206 = vmatprep.subr.mxu0 0.0
    %7207 = vmatpush1.msra.mxu0 0.0
    %7208 = vmatprep.subr.mxu0 0.0
    %7209 = vmatpush1.msra.mxu0 0.0
    %7210 = vmatprep.subr.mxu0 0.0
    %7211 = vmatpush1.msra.mxu0 0.0
    %7212 = vmatprep.subr.mxu0 0.0
    %7213 = vmatpush1.msra.mxu0 0.0
    %7214 = vmatprep.subr.mxu0 0.0
    %7215 = vmatpush1.msra.mxu0 0.0
    %7216 = vmatprep.subr.mxu0 0.0
    %7217 = vmatpush1.msra.mxu0 0.0
    %7218 = vmatprep.subr.mxu0 0.0
    %7219 = vmatpush1.msra.mxu0 0.0
    %7220 = vmatprep.subr.mxu0 0.0
    %7221 = vmatpush1.msra.mxu0 0.0
    %7222 = vmatprep.subr.mxu0 0.0
    %7223 = vmatpush1.msra.mxu0 0.0
    %7224 = vmatprep.subr.mxu0 0.0
    %7225 = vmatpush1.msra.mxu0 0.0
    %7226 = vmatprep.subr.mxu0 0.0
    %7227 = vmatpush1.msra.mxu0 0.0
    %7228 = vmatprep.subr.mxu0 0.0
    %7229 = vmatpush1.msra.mxu0 0.0
    %7230 = vmatprep.subr.mxu0 0.0
    %7231 = vmatpush1.msra.mxu0 0.0
    %7232 = vmatprep.subr.mxu0 0.0
    %7233 = vmatpush1.msra.mxu0 0.0
    %7234 = vmatprep.subr.mxu0 0.0
    %7235 = vmatpush1.msra.mxu0 0.0
    %7236 = vmatprep.subr.mxu0 0.0
    %7237 = vmatpush1.msra.mxu0 0.0
    %7238 = vmatprep.subr.mxu0 0.0
    %7239 = vmatpush1.msra.mxu0 0.0
    %7240 = vmatprep.subr.mxu0 0.0
    %7241 = vmatpush1.msra.mxu0 0.0
    %7242 = vmatprep.subr.mxu0 0.0
    %7243 = vmatpush1.msra.mxu0 0.0
    %7244 = vmatprep.subr.mxu0 0.0
    %7245 = vmatpush1.msra.mxu0 0.0
    %7246 = vmatprep.mubr.f32.mxu0 0.0
    %7247 = vmatmul.mubr.f32.gmra.mrb[0].mxu0 %v7180
    %v7248 = vpop.f32.mrb[0].mxu0
    %v7249 = vadd.f32 0.0, %v7248
    %v7250 = vpop.f32.mrb[0].mxu0
    %7251 = vdwg.mxu0
    %v7253 = vsel %vm346, %v7168, 0
    %v7256 = vsel %vm346, %v7249, 0
    %7258 = vmatprep.subr.mxu0 0.0
    %7259 = vmatpush1.msra.mxu0 %v6575
    %7260 = vmatprep.subr.mxu0 0.0
    %7261 = vmatpush1.msra.mxu0 0.0
    %7262 = vmatprep.subr.mxu0 0.0
    %7263 = vmatpush1.msra.mxu0 0.0
    %7264 = vmatprep.subr.mxu0 0.0
    %7265 = vmatpush1.msra.mxu0 0.0
    %7266 = vmatprep.subr.mxu0 0.0
    %7267 = vmatpush1.msra.mxu0 0.0
    %7268 = vmatprep.subr.mxu0 0.0
    %7269 = vmatpush1.msra.mxu0 0.0
    %7270 = vmatprep.subr.mxu0 0.0
    %7271 = vmatpush1.msra.mxu0 0.0
    %7272 = vmatprep.subr.mxu0 0.0
    %7273 = vmatpush1.msra.mxu0 0.0
    %7274 = vmatprep.subr.mxu0 0.0
    %7275 = vmatpush1.msra.mxu0 0.0
    %7276 = vmatprep.subr.mxu0 0.0
    %7277 = vmatpush1.msra.mxu0 0.0
    %7278 = vmatprep.subr.mxu0 0.0
    %7279 = vmatpush1.msra.mxu0 0.0
    %7280 = vmatprep.subr.mxu0 0.0
    %7281 = vmatpush1.msra.mxu0 0.0
    %7282 = vmatprep.subr.mxu0 0.0
    %7283 = vmatpush1.msra.mxu0 0.0
    %7284 = vmatprep.subr.mxu0 0.0
    %7285 = vmatpush1.msra.mxu0 0.0
    %7286 = vmatprep.subr.mxu0 0.0
    %7287 = vmatpush1.msra.mxu0 0.0
    %7288 = vmatprep.subr.mxu0 0.0
    %7289 = vmatpush1.msra.mxu0 0.0
    %7290 = vmatprep.subr.mxu0 0.0
    %7291 = vmatpush1.msra.mxu0 0.0
    %7292 = vmatprep.subr.mxu0 0.0
    %7293 = vmatpush1.msra.mxu0 0.0
    %7294 = vmatprep.subr.mxu0 0.0
    %7295 = vmatpush1.msra.mxu0 0.0
    %7296 = vmatprep.subr.mxu0 0.0
    %7297 = vmatpush1.msra.mxu0 0.0
    %7298 = vmatprep.subr.mxu0 0.0
    %7299 = vmatpush1.msra.mxu0 0.0
    %7300 = vmatprep.subr.mxu0 0.0
    %7301 = vmatpush1.msra.mxu0 0.0
    %7302 = vmatprep.subr.mxu0 0.0
    %7303 = vmatpush1.msra.mxu0 0.0
    %7304 = vmatprep.subr.mxu0 0.0
    %7305 = vmatpush1.msra.mxu0 0.0
    %7306 = vmatprep.subr.mxu0 0.0
    %7307 = vmatpush1.msra.mxu0 0.0
    %7308 = vmatprep.subr.mxu0 0.0
    %7309 = vmatpush1.msra.mxu0 0.0
    %7310 = vmatprep.subr.mxu0 0.0
    %7311 = vmatpush1.msra.mxu0 0.0
    %7312 = vmatprep.subr.mxu0 0.0
    %7313 = vmatpush1.msra.mxu0 0.0
    %7314 = vmatprep.subr.mxu0 0.0
    %7315 = vmatpush1.msra.mxu0 0.0
    %7316 = vmatprep.subr.mxu0 0.0
    %7317 = vmatpush1.msra.mxu0 0.0
    %7318 = vmatprep.subr.mxu0 0.0
    %7319 = vmatpush1.msra.mxu0 0.0
    %7320 = vmatprep.subr.mxu0 0.0
    %7321 = vmatpush1.msra.mxu0 0.0
    %7322 = vmatprep.mubr.f32.mxu0 0.0
    %7323 = vmatmul.mubr.f32.gmra.mrb[0].mxu0 %v7253
    %v7324 = vpop.f32.mrb[0].mxu0
    %v7325 = vadd.f32 0.0, %v7324
    %v7326 = vpop.f32.mrb[0].mxu0
    %7327 = vmatprep.mubr.f32.mxu0 0.0
    %7328 = vmatmul.mubr.f32.gmra.mrb[0].mxu0 %v7256
    %v7329 = vpop.f32.mrb[0].mxu0
    %v7330 = vadd.f32 0.0, %v7329
    %v7331 = vpop.f32.mrb[0].mxu0
    %7332 = vdwg.mxu0
    %v7334 = vsel %vm346, %v6828, 0
    %v7337 = vsel %vm346, %v6901, 0
    %7339 = vmatprep.subr.mxu0 0.0
    %7340 = vmatpush1.msra.mxu0 %v6574
    %7341 = vmatprep.subr.mxu0 0.0
    %7342 = vmatpush1.msra.mxu0 0.0
    %7343 = vmatprep.subr.mxu0 0.0
    %7344 = vmatpush1.msra.mxu0 0.0
    %7345 = vmatprep.subr.mxu0 0.0
    %7346 = vmatpush1.msra.mxu0 0.0
    %7347 = vmatprep.subr.mxu0 0.0
    %7348 = vmatpush1.msra.mxu0 0.0
    %7349 = vmatprep.subr.mxu0 0.0
    %7350 = vmatpush1.msra.mxu0 0.0
    %7351 = vmatprep.subr.mxu0 0.0
    %7352 = vmatpush1.msra.mxu0 0.0
    %7353 = vmatprep.subr.mxu0 0.0
    %7354 = vmatpush1.msra.mxu0 0.0
    %7355 = vmatprep.subr.mxu0 0.0
    %7356 = vmatpush1.msra.mxu0 0.0
    %7357 = vmatprep.subr.mxu0 0.0
    %7358 = vmatpush1.msra.mxu0 0.0
    %7359 = vmatprep.subr.mxu0 0.0
    %7360 = vmatpush1.msra.mxu0 0.0
    %7361 = vmatprep.subr.mxu0 0.0
    %7362 = vmatpush1.msra.mxu0 0.0
    %7363 = vmatprep.subr.mxu0 0.0
    %7364 = vmatpush1.msra.mxu0 0.0
    %7365 = vmatprep.subr.mxu0 0.0
    %7366 = vmatpush1.msra.mxu0 0.0
    %7367 = vmatprep.subr.mxu0 0.0
    %7368 = vmatpush1.msra.mxu0 0.0
    %7369 = vmatprep.subr.mxu0 0.0
    %7370 = vmatpush1.msra.mxu0 0.0
    %7371 = vmatprep.subr.mxu0 0.0
    %7372 = vmatpush1.msra.mxu0 0.0
    %7373 = vmatprep.subr.mxu0 0.0
    %7374 = vmatpush1.msra.mxu0 0.0
    %7375 = vmatprep.subr.mxu0 0.0
    %7376 = vmatpush1.msra.mxu0 0.0
    %7377 = vmatprep.subr.mxu0 0.0
    %7378 = vmatpush1.msra.mxu0 0.0
    %7379 = vmatprep.subr.mxu0 0.0
    %7380 = vmatpush1.msra.mxu0 0.0
    %7381 = vmatprep.subr.mxu0 0.0
    %7382 = vmatpush1.msra.mxu0 0.0
    %7383 = vmatprep.subr.mxu0 0.0
    %7384 = vmatpush1.msra.mxu0 0.0
    %7385 = vmatprep.subr.mxu0 0.0
    %7386 = vmatpush1.msra.mxu0 0.0
    %7387 = vmatprep.subr.mxu0 0.0
    %7388 = vmatpush1.msra.mxu0 0.0
    %7389 = vmatprep.subr.mxu0 0.0
    %7390 = vmatpush1.msra.mxu0 0.0
    %7391 = vmatprep.subr.mxu0 0.0
    %7392 = vmatpush1.msra.mxu0 0.0
    %7393 = vmatprep.subr.mxu0 0.0
    %7394 = vmatpush1.msra.mxu0 0.0
    %7395 = vmatprep.subr.mxu0 0.0
    %7396 = vmatpush1.msra.mxu0 0.0
    %7397 = vmatprep.subr.mxu0 0.0
    %7398 = vmatpush1.msra.mxu0 0.0
    %7399 = vmatprep.subr.mxu0 0.0
    %7400 = vmatpush1.msra.mxu0 0.0
    %7401 = vmatprep.subr.mxu0 0.0
    %7402 = vmatpush1.msra.mxu0 0.0
    %7403 = vmatprep.mubr.f32.mxu0 0.0
    %7404 = vmatmul.mubr.f32.gmra.mrb[0].mxu0 %v7334
    %v7405 = vpop.f32.mrb[0].mxu0
    %v7406 = vadd.f32 %v7325, %v7405
    %v7407 = vpop.f32.mrb[0].mxu0
    %7408 = vmatprep.mubr.f32.mxu0 0.0
    %7409 = vmatmul.mubr.f32.gmra.mrb[0].mxu0 %v7337
    %v7410 = vpop.f32.mrb[0].mxu0
    %v7411 = vadd.f32 %v7330, %v7410
    %v7412 = vpop.f32.mrb[0].mxu0
    %7413 = vdwg.mxu0
    %7414 = vrot.lane.b32.xlu0 %v6381, 112
    %v7415 = vpop.permute.xlu0 %7414
    %7416 = vrot.lane.b32.xlu0 %v6460, 112
    %v7417 = vpop.permute.xlu0 %7416
    %7418 = vrot.lane.b32.xlu0 %v6465, 112
    %v7419 = vpop.permute.xlu0 %7418
    %v7420 = vsel %vm346, %v7415, 0
    %v7422 = vsel %vm346, %v7417, 0
    %v7424 = vsel %vm346, %v7419, 0
    %7426 = vmatprep.subr.mxu0 0.0
    %7427 = vmatpush1.xpose.msra.mxu0 %v7422
    %7428 = vmatprep.subr.mxu0 0.0
    %7429 = vmatpush1.xpose.msra.mxu0 %v7424
    %7430 = vmatprep.subr.mxu0 0.0
    %7431 = vmatpush1.xpose.msra.mxu0 0.0
    %7432 = vmatprep.subr.mxu0 0.0
    %7433 = vmatpush1.xpose.msra.mxu0 0.0
    %7434 = vmatprep.subr.mxu0 0.0
    %7435 = vmatpush1.xpose.msra.mxu0 0.0
    %7436 = vmatprep.subr.mxu0 0.0
    %7437 = vmatpush1.xpose.msra.mxu0 0.0
    %7438 = vmatprep.subr.mxu0 0.0
    %7439 = vmatpush1.xpose.msra.mxu0 0.0
    %7440 = vmatprep.subr.mxu0 0.0
    %7441 = vmatpush1.xpose.msra.mxu0 0.0
    %7442 = vmatprep.subr.mxu0 0.0
    %7443 = vmatpush1.xpose.msra.mxu0 0.0
    %7444 = vmatprep.subr.mxu0 0.0
    %7445 = vmatpush1.xpose.msra.mxu0 0.0
    %7446 = vmatprep.subr.mxu0 0.0
    %7447 = vmatpush1.xpose.msra.mxu0 0.0
    %7448 = vmatprep.subr.mxu0 0.0
    %7449 = vmatpush1.xpose.msra.mxu0 0.0
    %7450 = vmatprep.subr.mxu0 0.0
    %7451 = vmatpush1.xpose.msra.mxu0 0.0
    %7452 = vmatprep.subr.mxu0 0.0
    %7453 = vmatpush1.xpose.msra.mxu0 0.0
    %7454 = vmatprep.subr.mxu0 0.0
    %7455 = vmatpush1.xpose.msra.mxu0 0.0
    %7456 = vmatprep.subr.mxu0 0.0
    %7457 = vmatpush1.xpose.msra.mxu0 0.0
    %7458 = vmatprep.subr.mxu0 0.0
    %7459 = vmatpush1.xpose.msra.mxu0 0.0
    %7460 = vmatprep.subr.mxu0 0.0
    %7461 = vmatpush1.xpose.msra.mxu0 0.0
    %7462 = vmatprep.subr.mxu0 0.0
    %7463 = vmatpush1.xpose.msra.mxu0 0.0
    %7464 = vmatprep.subr.mxu0 0.0
    %7465 = vmatpush1.xpose.msra.mxu0 0.0
    %7466 = vmatprep.subr.mxu0 0.0
    %7467 = vmatpush1.xpose.msra.mxu0 0.0
    %7468 = vmatprep.subr.mxu0 0.0
    %7469 = vmatpush1.xpose.msra.mxu0 0.0
    %7470 = vmatprep.subr.mxu0 0.0
    %7471 = vmatpush1.xpose.msra.mxu0 0.0
    %7472 = vmatprep.subr.mxu0 0.0
    %7473 = vmatpush1.xpose.msra.mxu0 0.0
    %7474 = vmatprep.subr.mxu0 0.0
    %7475 = vmatpush1.xpose.msra.mxu0 0.0
    %7476 = vmatprep.subr.mxu0 0.0
    %7477 = vmatpush1.xpose.msra.mxu0 0.0
    %7478 = vmatprep.subr.mxu0 0.0
    %7479 = vmatpush1.xpose.msra.mxu0 0.0
    %7480 = vmatprep.subr.mxu0 0.0
    %7481 = vmatpush1.xpose.msra.mxu0 0.0
    %7482 = vmatprep.subr.mxu0 0.0
    %7483 = vmatpush1.xpose.msra.mxu0 0.0
    %7484 = vmatprep.subr.mxu0 0.0
    %7485 = vmatpush1.xpose.msra.mxu0 0.0
    %7486 = vmatprep.subr.mxu0 0.0
    %7487 = vmatpush1.xpose.msra.mxu0 0.0
    %7488 = vmatprep.subr.mxu0 0.0
    %7489 = vmatpush1.xpose.msra.mxu0 0.0
    %7490 = vmatprep.mubr.f32.mxu0 0.0
    %7491 = vmatmul.mubr.f32.gmra.mrb[0].mxu0 %v7420
    %v7492 = vpop.f32.mrb[0].mxu0
    %v7493 = vadd.f32 0.0, %v7492
    %v7494 = vpop.f32.mrb[0].mxu0
    %7495 = vdwg.mxu0
    %7496 = vrot.lane.b32.xlu0 %v6382, 112
    %v7497 = vpop.permute.xlu0 %7496
    %7498 = vrot.lane.b32.xlu0 %v6470, 112
    %v7499 = vpop.permute.xlu0 %7498
    %7500 = vrot.lane.b32.xlu0 %v6475, 112
    %v7501 = vpop.permute.xlu0 %7500
    %v7502 = vsel %vm346, %v7497, 0
    %v7504 = vsel %vm346, %v7499, 0
    %v7506 = vsel %vm346, %v7501, 0
    %7508 = vmatprep.subr.mxu0 0.0
    %7509 = vmatpush1.xpose.msra.mxu0 %v7504
    %7510 = vmatprep.subr.mxu0 0.0
    %7511 = vmatpush1.xpose.msra.mxu0 %v7506
    %7512 = vmatprep.subr.mxu0 0.0
    %7513 = vmatpush1.xpose.msra.mxu0 0.0
    %7514 = vmatprep.subr.mxu0 0.0
    %7515 = vmatpush1.xpose.msra.mxu0 0.0
    %7516 = vmatprep.subr.mxu0 0.0
    %7517 = vmatpush1.xpose.msra.mxu0 0.0
    %7518 = vmatprep.subr.mxu0 0.0
    %7519 = vmatpush1.xpose.msra.mxu0 0.0
    %7520 = vmatprep.subr.mxu0 0.0
    %7521 = vmatpush1.xpose.msra.mxu0 0.0
    %7522 = vmatprep.subr.mxu0 0.0
    %7523 = vmatpush1.xpose.msra.mxu0 0.0
    %7524 = vmatprep.subr.mxu0 0.0
    %7525 = vmatpush1.xpose.msra.mxu0 0.0
    %7526 = vmatprep.subr.mxu0 0.0
    %7527 = vmatpush1.xpose.msra.mxu0 0.0
    %7528 = vmatprep.subr.mxu0 0.0
    %7529 = vmatpush1.xpose.msra.mxu0 0.0
    %7530 = vmatprep.subr.mxu0 0.0
    %7531 = vmatpush1.xpose.msra.mxu0 0.0
    %7532 = vmatprep.subr.mxu0 0.0
    %7533 = vmatpush1.xpose.msra.mxu0 0.0
    %7534 = vmatprep.subr.mxu0 0.0
    %7535 = vmatpush1.xpose.msra.mxu0 0.0
    %7536 = vmatprep.subr.mxu0 0.0
    %7537 = vmatpush1.xpose.msra.mxu0 0.0
    %7538 = vmatprep.subr.mxu0 0.0
    %7539 = vmatpush1.xpose.msra.mxu0 0.0
    %7540 = vmatprep.subr.mxu0 0.0
    %7541 = vmatpush1.xpose.msra.mxu0 0.0
    %7542 = vmatprep.subr.mxu0 0.0
    %7543 = vmatpush1.xpose.msra.mxu0 0.0
    %7544 = vmatprep.subr.mxu0 0.0
    %7545 = vmatpush1.xpose.msra.mxu0 0.0
    %7546 = vmatprep.subr.mxu0 0.0
    %7547 = vmatpush1.xpose.msra.mxu0 0.0
    %7548 = vmatprep.subr.mxu0 0.0
    %7549 = vmatpush1.xpose.msra.mxu0 0.0
    %7550 = vmatprep.subr.mxu0 0.0
    %7551 = vmatpush1.xpose.msra.mxu0 0.0
    %7552 = vmatprep.subr.mxu0 0.0
    %7553 = vmatpush1.xpose.msra.mxu0 0.0
    %7554 = vmatprep.subr.mxu0 0.0
    %7555 = vmatpush1.xpose.msra.mxu0 0.0
    %7556 = vmatprep.subr.mxu0 0.0
    %7557 = vmatpush1.xpose.msra.mxu0 0.0
    %7558 = vmatprep.subr.mxu0 0.0
    %7559 = vmatpush1.xpose.msra.mxu0 0.0
    %7560 = vmatprep.subr.mxu0 0.0
    %7561 = vmatpush1.xpose.msra.mxu0 0.0
    %7562 = vmatprep.subr.mxu0 0.0
    %7563 = vmatpush1.xpose.msra.mxu0 0.0
    %7564 = vmatprep.subr.mxu0 0.0
    %7565 = vmatpush1.xpose.msra.mxu0 0.0
    %7566 = vmatprep.subr.mxu0 0.0
    %7567 = vmatpush1.xpose.msra.mxu0 0.0
    %7568 = vmatprep.subr.mxu0 0.0
    %7569 = vmatpush1.xpose.msra.mxu0 0.0
    %7570 = vmatprep.subr.mxu0 0.0
    %7571 = vmatpush1.xpose.msra.mxu0 0.0
    %7572 = vmatprep.mubr.f32.mxu0 0.0
    %7573 = vmatmul.mubr.f32.gmra.mrb[0].mxu0 %v7502
    %v7574 = vpop.f32.mrb[0].mxu0
    %v7575 = vadd.f32 0.0, %v7574
    %v7576 = vpop.f32.mrb[0].mxu0
    %7577 = vdwg.mxu0
    %v7578 = vsel %vm2508, %v7493, -inf
    %7579 = vmax.xlane.f32.xlu0 %v7578
    %v7580 = vpop.xlane.xlu0 %7579
    %v7581 = vsel %vm2508, %v7575, -inf
    %7582 = vmax.xlane.f32.xlu0 %v7581
    %v7583 = vpop.xlane.xlu0 %7582
    %v7584 = vsub.f32 %v7493, %v7580
    %v7585 = vsub.f32 %v7575, %v7583
    %v7586 = vmul.f32 %v7584, 1.442695
    %v7587 = vpow.pop %v7586
    %v7588 = vmul.f32 %v7585, 1.442695
    %v7589 = vpow.pop %v7588
    %v7590 = vsel %vm2508, %v7587, 0.0
    %7591 = vadd.xlane.f32.xlu0 %v7590
    %v7592 = vpop.xlane.xlu0 %7591
    %v7593 = vsel %vm2508, %v7589, 0.0
    %7594 = vadd.xlane.f32.xlu0 %v7593
    %v7595 = vpop.xlane.xlu0 %7594
    %v7596 = vrcp.pop %v7592
    %v7597 = vmul.f32 %v7587, %v7596
    %v7598 = vrcp.pop %v7595
    %v7599 = vmul.f32 %v7589, %v7598
    %7600 = vrot.lane.b32.xlu0 %v6555, 112
    %v7601 = vpop.permute.xlu0 %7600
    %7602 = vrot.lane.b32.xlu0 %v6560, 112
    %v7603 = vpop.permute.xlu0 %7602
    %v7607 = vsel %vm2508, %v7597, 0
    %7609 = vmatprep.subr.mxu0 0.0
    %7610 = vmatpush1.msra.mxu0 %v7601
    %7611 = vmatprep.subr.mxu0 0.0
    %7612 = vmatpush1.msra.mxu0 %v7603
    %7613 = vmatprep.subr.mxu0 0.0
    %7614 = vmatpush1.msra.mxu0 0.0
    %7615 = vmatprep.subr.mxu0 0.0
    %7616 = vmatpush1.msra.mxu0 0.0
    %7617 = vmatprep.subr.mxu0 0.0
    %7618 = vmatpush1.msra.mxu0 0.0
    %7619 = vmatprep.subr.mxu0 0.0
    %7620 = vmatpush1.msra.mxu0 0.0
    %7621 = vmatprep.subr.mxu0 0.0
    %7622 = vmatpush1.msra.mxu0 0.0
    %7623 = vmatprep.subr.mxu0 0.0
    %7624 = vmatpush1.msra.mxu0 0.0
    %7625 = vmatprep.subr.mxu0 0.0
    %7626 = vmatpush1.msra.mxu0 0.0
    %7627 = vmatprep.subr.mxu0 0.0
    %7628 = vmatpush1.msra.mxu0 0.0
    %7629 = vmatprep.subr.mxu0 0.0
    %7630 = vmatpush1.msra.mxu0 0.0
    %7631 = vmatprep.subr.mxu0 0.0
    %7632 = vmatpush1.msra.mxu0 0.0
    %7633 = vmatprep.subr.mxu0 0.0
    %7634 = vmatpush1.msra.mxu0 0.0
    %7635 = vmatprep.subr.mxu0 0.0
    %7636 = vmatpush1.msra.mxu0 0.0
    %7637 = vmatprep.subr.mxu0 0.0
    %7638 = vmatpush1.msra.mxu0 0.0
    %7639 = vmatprep.subr.mxu0 0.0
    %7640 = vmatpush1.msra.mxu0 0.0
    %7641 = vmatprep.subr.mxu0 0.0
    %7642 = vmatpush1.msra.mxu0 0.0
    %7643 = vmatprep.subr.mxu0 0.0
    %7644 = vmatpush1.msra.mxu0 0.0
    %7645 = vmatprep.subr.mxu0 0.0
    %7646 = vmatpush1.msra.mxu0 0.0
    %7647 = vmatprep.subr.mxu0 0.0
    %7648 = vmatpush1.msra.mxu0 0.0
    %7649 = vmatprep.subr.mxu0 0.0
    %7650 = vmatpush1.msra.mxu0 0.0
    %7651 = vmatprep.subr.mxu0 0.0
    %7652 = vmatpush1.msra.mxu0 0.0
    %7653 = vmatprep.subr.mxu0 0.0
    %7654 = vmatpush1.msra.mxu0 0.0
    %7655 = vmatprep.subr.mxu0 0.0
    %7656 = vmatpush1.msra.mxu0 0.0
    %7657 = vmatprep.subr.mxu0 0.0
    %7658 = vmatpush1.msra.mxu0 0.0
    %7659 = vmatprep.subr.mxu0 0.0
    %7660 = vmatpush1.msra.mxu0 0.0
    %7661 = vmatprep.subr.mxu0 0.0
    %7662 = vmatpush1.msra.mxu0 0.0
    %7663 = vmatprep.subr.mxu0 0.0
    %7664 = vmatpush1.msra.mxu0 0.0
    %7665 = vmatprep.subr.mxu0 0.0
    %7666 = vmatpush1.msra.mxu0 0.0
    %7667 = vmatprep.subr.mxu0 0.0
    %7668 = vmatpush1.msra.mxu0 0.0
    %7669 = vmatprep.subr.mxu0 0.0
    %7670 = vmatpush1.msra.mxu0 0.0
    %7671 = vmatprep.subr.mxu0 0.0
    %7672 = vmatpush1.msra.mxu0 0.0
    %7673 = vmatprep.mubr.f32.mxu0 0.0
    %7674 = vmatmul.mubr.f32.gmra.mrb[0].mxu0 %v7607
    %v7675 = vpop.f32.mrb[0].mxu0
    %v7676 = vadd.f32 0.0, %v7675
    %v7677 = vpop.f32.mrb[0].mxu0
    %7678 = vdwg.mxu0
    %7679 = vrot.lane.b32.xlu0 %v6565, 112
    %v7680 = vpop.permute.xlu0 %7679
    %7681 = vrot.lane.b32.xlu0 %v6570, 112
    %v7682 = vpop.permute.xlu0 %7681
    %v7686 = vsel %vm2508, %v7599, 0
    %7688 = vmatprep.subr.mxu0 0.0
    %7689 = vmatpush1.msra.mxu0 %v7680
    %7690 = vmatprep.subr.mxu0 0.0
    %7691 = vmatpush1.msra.mxu0 %v7682
    %7692 = vmatprep.subr.mxu0 0.0
    %7693 = vmatpush1.msra.mxu0 0.0
    %7694 = vmatprep.subr.mxu0 0.0
    %7695 = vmatpush1.msra.mxu0 0.0
    %7696 = vmatprep.subr.mxu0 0.0
    %7697 = vmatpush1.msra.mxu0 0.0
    %7698 = vmatprep.subr.mxu0 0.0
    %7699 = vmatpush1.msra.mxu0 0.0
    %7700 = vmatprep.subr.mxu0 0.0
    %7701 = vmatpush1.msra.mxu0 0.0
    %7702 = vmatprep.subr.mxu0 0.0
    %7703 = vmatpush1.msra.mxu0 0.0
    %7704 = vmatprep.subr.mxu0 0.0
    %7705 = vmatpush1.msra.mxu0 0.0
    %7706 = vmatprep.subr.mxu0 0.0
    %7707 = vmatpush1.msra.mxu0 0.0
    %7708 = vmatprep.subr.mxu0 0.0
    %7709 = vmatpush1.msra.mxu0 0.0
    %7710 = vmatprep.subr.mxu0 0.0
    %7711 = vmatpush1.msra.mxu0 0.0
    %7712 = vmatprep.subr.mxu0 0.0
    %7713 = vmatpush1.msra.mxu0 0.0
    %7714 = vmatprep.subr.mxu0 0.0
    %7715 = vmatpush1.msra.mxu0 0.0
    %7716 = vmatprep.subr.mxu0 0.0
    %7717 = vmatpush1.msra.mxu0 0.0
    %7718 = vmatprep.subr.mxu0 0.0
    %7719 = vmatpush1.msra.mxu0 0.0
    %7720 = vmatprep.subr.mxu0 0.0
    %7721 = vmatpush1.msra.mxu0 0.0
    %7722 = vmatprep.subr.mxu0 0.0
    %7723 = vmatpush1.msra.mxu0 0.0
    %7724 = vmatprep.subr.mxu0 0.0
    %7725 = vmatpush1.msra.mxu0 0.0
    %7726 = vmatprep.subr.mxu0 0.0
    %7727 = vmatpush1.msra.mxu0 0.0
    %7728 = vmatprep.subr.mxu0 0.0
    %7729 = vmatpush1.msra.mxu0 0.0
    %7730 = vmatprep.subr.mxu0 0.0
    %7731 = vmatpush1.msra.mxu0 0.0
    %7732 = vmatprep.subr.mxu0 0.0
    %7733 = vmatpush1.msra.mxu0 0.0
    %7734 = vmatprep.subr.mxu0 0.0
    %7735 = vmatpush1.msra.mxu0 0.0
    %7736 = vmatprep.subr.mxu0 0.0
    %7737 = vmatpush1.msra.mxu0 0.0
    %7738 = vmatprep.subr.mxu0 0.0
    %7739 = vmatpush1.msra.mxu0 0.0
    %7740 = vmatprep.subr.mxu0 0.0
    %7741 = vmatpush1.msra.mxu0 0.0
    %7742 = vmatprep.subr.mxu0 0.0
    %7743 = vmatpush1.msra.mxu0 0.0
    %7744 = vmatprep.subr.mxu0 0.0
    %7745 = vmatpush1.msra.mxu0 0.0
    %7746 = vmatprep.subr.mxu0 0.0
    %7747 = vmatpush1.msra.mxu0 0.0
    %7748 = vmatprep.subr.mxu0 0.0
    %7749 = vmatpush1.msra.mxu0 0.0
    %7750 = vmatprep.subr.mxu0 0.0
    %7751 = vmatpush1.msra.mxu0 0.0
    %7752 = vmatprep.mubr.f32.mxu0 0.0
    %7753 = vmatmul.mubr.f32.gmra.mrb[0].mxu0 %v7686
    %v7754 = vpop.f32.mrb[0].mxu0
    %v7755 = vadd.f32 0.0, %v7754
    %v7756 = vpop.f32.mrb[0].mxu0
    %7757 = vdwg.mxu0
    %v7759 = vsel %vm346, %v7676, 0
    %v7762 = vsel %vm346, %v7755, 0
    %7764 = vmatprep.subr.mxu0 0.0
    %7765 = vmatpush1.msra.mxu0 %v6576
    %7766 = vmatprep.subr.mxu0 0.0
    %7767 = vmatpush1.msra.mxu0 0.0
    %7768 = vmatprep.subr.mxu0 0.0
    %7769 = vmatpush1.msra.mxu0 0.0
    %7770 = vmatprep.subr.mxu0 0.0
    %7771 = vmatpush1.msra.mxu0 0.0
    %7772 = vmatprep.subr.mxu0 0.0
    %7773 = vmatpush1.msra.mxu0 0.0
    %7774 = vmatprep.subr.mxu0 0.0
    %7775 = vmatpush1.msra.mxu0 0.0
    %7776 = vmatprep.subr.mxu0 0.0
    %7777 = vmatpush1.msra.mxu0 0.0
    %7778 = vmatprep.subr.mxu0 0.0
    %7779 = vmatpush1.msra.mxu0 0.0
    %7780 = vmatprep.subr.mxu0 0.0
    %7781 = vmatpush1.msra.mxu0 0.0
    %7782 = vmatprep.subr.mxu0 0.0
    %7783 = vmatpush1.msra.mxu0 0.0
    %7784 = vmatprep.subr.mxu0 0.0
    %7785 = vmatpush1.msra.mxu0 0.0
    %7786 = vmatprep.subr.mxu0 0.0
    %7787 = vmatpush1.msra.mxu0 0.0
    %7788 = vmatprep.subr.mxu0 0.0
    %7789 = vmatpush1.msra.mxu0 0.0
    %7790 = vmatprep.subr.mxu0 0.0
    %7791 = vmatpush1.msra.mxu0 0.0
    %7792 = vmatprep.subr.mxu0 0.0
    %7793 = vmatpush1.msra.mxu0 0.0
    %7794 = vmatprep.subr.mxu0 0.0
    %7795 = vmatpush1.msra.mxu0 0.0
    %7796 = vmatprep.subr.mxu0 0.0
    %7797 = vmatpush1.msra.mxu0 0.0
    %7798 = vmatprep.subr.mxu0 0.0
    %7799 = vmatpush1.msra.mxu0 0.0
    %7800 = vmatprep.subr.mxu0 0.0
    %7801 = vmatpush1.msra.mxu0 0.0
    %7802 = vmatprep.subr.mxu0 0.0
    %7803 = vmatpush1.msra.mxu0 0.0
    %7804 = vmatprep.subr.mxu0 0.0
    %7805 = vmatpush1.msra.mxu0 0.0
    %7806 = vmatprep.subr.mxu0 0.0
    %7807 = vmatpush1.msra.mxu0 0.0
    %7808 = vmatprep.subr.mxu0 0.0
    %7809 = vmatpush1.msra.mxu0 0.0
    %7810 = vmatprep.subr.mxu0 0.0
    %7811 = vmatpush1.msra.mxu0 0.0
    %7812 = vmatprep.subr.mxu0 0.0
    %7813 = vmatpush1.msra.mxu0 0.0
    %7814 = vmatprep.subr.mxu0 0.0
    %7815 = vmatpush1.msra.mxu0 0.0
    %7816 = vmatprep.subr.mxu0 0.0
    %7817 = vmatpush1.msra.mxu0 0.0
    %7818 = vmatprep.subr.mxu0 0.0
    %7819 = vmatpush1.msra.mxu0 0.0
    %7820 = vmatprep.subr.mxu0 0.0
    %7821 = vmatpush1.msra.mxu0 0.0
    %7822 = vmatprep.subr.mxu0 0.0
    %7823 = vmatpush1.msra.mxu0 0.0
    %7824 = vmatprep.subr.mxu0 0.0
    %7825 = vmatpush1.msra.mxu0 0.0
    %7826 = vmatprep.subr.mxu0 0.0
    %7827 = vmatpush1.msra.mxu0 0.0
    %7828 = vmatprep.mubr.f32.mxu0 0.0
    %7829 = vmatmul.mubr.f32.gmra.mrb[0].mxu0 %v7759
    %v7830 = vpop.f32.mrb[0].mxu0
    %v7831 = vadd.f32 0.0, %v7830
    %v7832 = vpop.f32.mrb[0].mxu0
    %7833 = vmatprep.mubr.f32.mxu0 0.0
    %7834 = vmatmul.mubr.f32.gmra.mrb[0].mxu0 %v7762
    %v7835 = vpop.f32.mrb[0].mxu0
    %v7836 = vadd.f32 0.0, %v7835
    %v7837 = vpop.f32.mrb[0].mxu0
    %7838 = vdwg.mxu0
    %v7839 = vadd.f32 %v7406, %v7831
    %v7840 = vadd.f32 %v7411, %v7836
    %7841 = vrot.lane.b32.xlu0 %v6381, 104
    %v7842 = vpop.permute.xlu0 %7841
    %7843 = vrot.lane.b32.xlu0 %v6460, 104
    %v7844 = vpop.permute.xlu0 %7843
    %7845 = vrot.lane.b32.xlu0 %v6465, 104
    %v7846 = vpop.permute.xlu0 %7845
    %v7847 = vsel %vm346, %v7842, 0
    %v7849 = vsel %vm346, %v7844, 0
    %v7851 = vsel %vm346, %v7846, 0
    %7853 = vmatprep.subr.mxu0 0.0
    %7854 = vmatpush1.xpose.msra.mxu0 %v7849
    %7855 = vmatprep.subr.mxu0 0.0
    %7856 = vmatpush1.xpose.msra.mxu0 %v7851
    %7857 = vmatprep.subr.mxu0 0.0
    %7858 = vmatpush1.xpose.msra.mxu0 0.0
    %7859 = vmatprep.subr.mxu0 0.0
    %7860 = vmatpush1.xpose.msra.mxu0 0.0
    %7861 = vmatprep.subr.mxu0 0.0
    %7862 = vmatpush1.xpose.msra.mxu0 0.0
    %7863 = vmatprep.subr.mxu0 0.0
    %7864 = vmatpush1.xpose.msra.mxu0 0.0
    %7865 = vmatprep.subr.mxu0 0.0
    %7866 = vmatpush1.xpose.msra.mxu0 0.0
    %7867 = vmatprep.subr.mxu0 0.0
    %7868 = vmatpush1.xpose.msra.mxu0 0.0
    %7869 = vmatprep.subr.mxu0 0.0
    %7870 = vmatpush1.xpose.msra.mxu0 0.0
    %7871 = vmatprep.subr.mxu0 0.0
    %7872 = vmatpush1.xpose.msra.mxu0 0.0
    %7873 = vmatprep.subr.mxu0 0.0
    %7874 = vmatpush1.xpose.msra.mxu0 0.0
    %7875 = vmatprep.subr.mxu0 0.0
    %7876 = vmatpush1.xpose.msra.mxu0 0.0
    %7877 = vmatprep.subr.mxu0 0.0
    %7878 = vmatpush1.xpose.msra.mxu0 0.0
    %7879 = vmatprep.subr.mxu0 0.0
    %7880 = vmatpush1.xpose.msra.mxu0 0.0
    %7881 = vmatprep.subr.mxu0 0.0
    %7882 = vmatpush1.xpose.msra.mxu0 0.0
    %7883 = vmatprep.subr.mxu0 0.0
    %7884 = vmatpush1.xpose.msra.mxu0 0.0
    %7885 = vmatprep.subr.mxu0 0.0
    %7886 = vmatpush1.xpose.msra.mxu0 0.0
    %7887 = vmatprep.subr.mxu0 0.0
    %7888 = vmatpush1.xpose.msra.mxu0 0.0
    %7889 = vmatprep.subr.mxu0 0.0
    %7890 = vmatpush1.xpose.msra.mxu0 0.0
    %7891 = vmatprep.subr.mxu0 0.0
    %7892 = vmatpush1.xpose.msra.mxu0 0.0
    %7893 = vmatprep.subr.mxu0 0.0
    %7894 = vmatpush1.xpose.msra.mxu0 0.0
    %7895 = vmatprep.subr.mxu0 0.0
    %7896 = vmatpush1.xpose.msra.mxu0 0.0
    %7897 = vmatprep.subr.mxu0 0.0
    %7898 = vmatpush1.xpose.msra.mxu0 0.0
    %7899 = vmatprep.subr.mxu0 0.0
    %7900 = vmatpush1.xpose.msra.mxu0 0.0
    %7901 = vmatprep.subr.mxu0 0.0
    %7902 = vmatpush1.xpose.msra.mxu0 0.0
    %7903 = vmatprep.subr.mxu0 0.0
    %7904 = vmatpush1.xpose.msra.mxu0 0.0
    %7905 = vmatprep.subr.mxu0 0.0
    %7906 = vmatpush1.xpose.msra.mxu0 0.0
    %7907 = vmatprep.subr.mxu0 0.0
    %7908 = vmatpush1.xpose.msra.mxu0 0.0
    %7909 = vmatprep.subr.mxu0 0.0
    %7910 = vmatpush1.xpose.msra.mxu0 0.0
    %7911 = vmatprep.subr.mxu0 0.0
    %7912 = vmatpush1.xpose.msra.mxu0 0.0
    %7913 = vmatprep.subr.mxu0 0.0
    %7914 = vmatpush1.xpose.msra.mxu0 0.0
    %7915 = vmatprep.subr.mxu0 0.0
    %7916 = vmatpush1.xpose.msra.mxu0 0.0
    %7917 = vmatprep.mubr.f32.mxu0 0.0
    %7918 = vmatmul.mubr.f32.gmra.mrb[0].mxu0 %v7847
    %v7919 = vpop.f32.mrb[0].mxu0
    %v7920 = vadd.f32 0.0, %v7919
    %v7921 = vpop.f32.mrb[0].mxu0
    %7922 = vdwg.mxu0
    %7923 = vrot.lane.b32.xlu0 %v6382, 104
    %v7924 = vpop.permute.xlu0 %7923
    %7925 = vrot.lane.b32.xlu0 %v6470, 104
    %v7926 = vpop.permute.xlu0 %7925
    %7927 = vrot.lane.b32.xlu0 %v6475, 104
    %v7928 = vpop.permute.xlu0 %7927
    %v7929 = vsel %vm346, %v7924, 0
    %v7931 = vsel %vm346, %v7926, 0
    %v7933 = vsel %vm346, %v7928, 0
    %7935 = vmatprep.subr.mxu0 0.0
    %7936 = vmatpush1.xpose.msra.mxu0 %v7931
    %7937 = vmatprep.subr.mxu0 0.0
    %7938 = vmatpush1.xpose.msra.mxu0 %v7933
    %7939 = vmatprep.subr.mxu0 0.0
    %7940 = vmatpush1.xpose.msra.mxu0 0.0
    %7941 = vmatprep.subr.mxu0 0.0
    %7942 = vmatpush1.xpose.msra.mxu0 0.0
    %7943 = vmatprep.subr.mxu0 0.0
    %7944 = vmatpush1.xpose.msra.mxu0 0.0
    %7945 = vmatprep.subr.mxu0 0.0
    %7946 = vmatpush1.xpose.msra.mxu0 0.0
    %7947 = vmatprep.subr.mxu0 0.0
    %7948 = vmatpush1.xpose.msra.mxu0 0.0
    %7949 = vmatprep.subr.mxu0 0.0
    %7950 = vmatpush1.xpose.msra.mxu0 0.0
    %7951 = vmatprep.subr.mxu0 0.0
    %7952 = vmatpush1.xpose.msra.mxu0 0.0
    %7953 = vmatprep.subr.mxu0 0.0
    %7954 = vmatpush1.xpose.msra.mxu0 0.0
    %7955 = vmatprep.subr.mxu0 0.0
    %7956 = vmatpush1.xpose.msra.mxu0 0.0
    %7957 = vmatprep.subr.mxu0 0.0
    %7958 = vmatpush1.xpose.msra.mxu0 0.0
    %7959 = vmatprep.subr.mxu0 0.0
    %7960 = vmatpush1.xpose.msra.mxu0 0.0
    %7961 = vmatprep.subr.mxu0 0.0
    %7962 = vmatpush1.xpose.msra.mxu0 0.0
    %7963 = vmatprep.subr.mxu0 0.0
    %7964 = vmatpush1.xpose.msra.mxu0 0.0
    %7965 = vmatprep.subr.mxu0 0.0
    %7966 = vmatpush1.xpose.msra.mxu0 0.0
    %7967 = vmatprep.subr.mxu0 0.0
    %7968 = vmatpush1.xpose.msra.mxu0 0.0
    %7969 = vmatprep.subr.mxu0 0.0
    %7970 = vmatpush1.xpose.msra.mxu0 0.0
    %7971 = vmatprep.subr.mxu0 0.0
    %7972 = vmatpush1.xpose.msra.mxu0 0.0
    %7973 = vmatprep.subr.mxu0 0.0
    %7974 = vmatpush1.xpose.msra.mxu0 0.0
    %7975 = vmatprep.subr.mxu0 0.0
    %7976 = vmatpush1.xpose.msra.mxu0 0.0
    %7977 = vmatprep.subr.mxu0 0.0
    %7978 = vmatpush1.xpose.msra.mxu0 0.0
    %7979 = vmatprep.subr.mxu0 0.0
    %7980 = vmatpush1.xpose.msra.mxu0 0.0
    %7981 = vmatprep.subr.mxu0 0.0
    %7982 = vmatpush1.xpose.msra.mxu0 0.0
    %7983 = vmatprep.subr.mxu0 0.0
    %7984 = vmatpush1.xpose.msra.mxu0 0.0
    %7985 = vmatprep.subr.mxu0 0.0
    %7986 = vmatpush1.xpose.msra.mxu0 0.0
    %7987 = vmatprep.subr.mxu0 0.0
    %7988 = vmatpush1.xpose.msra.mxu0 0.0
    %7989 = vmatprep.subr.mxu0 0.0
    %7990 = vmatpush1.xpose.msra.mxu0 0.0
    %7991 = vmatprep.subr.mxu0 0.0
    %7992 = vmatpush1.xpose.msra.mxu0 0.0
    %7993 = vmatprep.subr.mxu0 0.0
    %7994 = vmatpush1.xpose.msra.mxu0 0.0
    %7995 = vmatprep.subr.mxu0 0.0
    %7996 = vmatpush1.xpose.msra.mxu0 0.0
    %7997 = vmatprep.subr.mxu0 0.0
    %7998 = vmatpush1.xpose.msra.mxu0 0.0
    %7999 = vmatprep.mubr.f32.mxu0 0.0
    %8000 = vmatmul.mubr.f32.gmra.mrb[0].mxu0 %v7929
    %v8001 = vpop.f32.mrb[0].mxu0
    %v8002 = vadd.f32 0.0, %v8001
    %v8003 = vpop.f32.mrb[0].mxu0
    %8004 = vdwg.mxu0
    %v8005 = vsel %vm2508, %v7920, -inf
    %8006 = vmax.xlane.f32.xlu0 %v8005
    %v8007 = vpop.xlane.xlu0 %8006
    %v8008 = vsel %vm2508, %v8002, -inf
    %8009 = vmax.xlane.f32.xlu0 %v8008
    %v8010 = vpop.xlane.xlu0 %8009
    %v8011 = vsub.f32 %v7920, %v8007
    %v8012 = vsub.f32 %v8002, %v8010
    %v8013 = vmul.f32 %v8011, 1.442695
    %v8014 = vpow.pop %v8013
    %v8015 = vmul.f32 %v8012, 1.442695
    %v8016 = vpow.pop %v8015
    %v8017 = vsel %vm2508, %v8014, 0.0
    %8018 = vadd.xlane.f32.xlu0 %v8017
    %v8019 = vpop.xlane.xlu0 %8018
    %v8020 = vsel %vm2508, %v8016, 0.0
    %8021 = vadd.xlane.f32.xlu0 %v8020
    %v8022 = vpop.xlane.xlu0 %8021
    %v8023 = vrcp.pop %v8019
    %v8024 = vmul.f32 %v8014, %v8023
    %v8025 = vrcp.pop %v8022
    %v8026 = vmul.f32 %v8016, %v8025
    %8027 = vrot.lane.b32.xlu0 %v6555, 104
    %v8028 = vpop.permute.xlu0 %8027
    %8029 = vrot.lane.b32.xlu0 %v6560, 104
    %v8030 = vpop.permute.xlu0 %8029
    %v8034 = vsel %vm2508, %v8024, 0
    %8036 = vmatprep.subr.mxu0 0.0
    %8037 = vmatpush1.msra.mxu0 %v8028
    %8038 = vmatprep.subr.mxu0 0.0
    %8039 = vmatpush1.msra.mxu0 %v8030
    %8040 = vmatprep.subr.mxu0 0.0
    %8041 = vmatpush1.msra.mxu0 0.0
    %8042 = vmatprep.subr.mxu0 0.0
    %8043 = vmatpush1.msra.mxu0 0.0
    %8044 = vmatprep.subr.mxu0 0.0
    %8045 = vmatpush1.msra.mxu0 0.0
    %8046 = vmatprep.subr.mxu0 0.0
    %8047 = vmatpush1.msra.mxu0 0.0
    %8048 = vmatprep.subr.mxu0 0.0
    %8049 = vmatpush1.msra.mxu0 0.0
    %8050 = vmatprep.subr.mxu0 0.0
    %8051 = vmatpush1.msra.mxu0 0.0
    %8052 = vmatprep.subr.mxu0 0.0
    %8053 = vmatpush1.msra.mxu0 0.0
    %8054 = vmatprep.subr.mxu0 0.0
    %8055 = vmatpush1.msra.mxu0 0.0
    %8056 = vmatprep.subr.mxu0 0.0
    %8057 = vmatpush1.msra.mxu0 0.0
    %8058 = vmatprep.subr.mxu0 0.0
    %8059 = vmatpush1.msra.mxu0 0.0
    %8060 = vmatprep.subr.mxu0 0.0
    %8061 = vmatpush1.msra.mxu0 0.0
    %8062 = vmatprep.subr.mxu0 0.0
    %8063 = vmatpush1.msra.mxu0 0.0
    %8064 = vmatprep.subr.mxu0 0.0
    %8065 = vmatpush1.msra.mxu0 0.0
    %8066 = vmatprep.subr.mxu0 0.0
    %8067 = vmatpush1.msra.mxu0 0.0
    %8068 = vmatprep.subr.mxu0 0.0
    %8069 = vmatpush1.msra.mxu0 0.0
    %8070 = vmatprep.subr.mxu0 0.0
    %8071 = vmatpush1.msra.mxu0 0.0
    %8072 = vmatprep.subr.mxu0 0.0
    %8073 = vmatpush1.msra.mxu0 0.0
    %8074 = vmatprep.subr.mxu0 0.0
    %8075 = vmatpush1.msra.mxu0 0.0
    %8076 = vmatprep.subr.mxu0 0.0
    %8077 = vmatpush1.msra.mxu0 0.0
    %8078 = vmatprep.subr.mxu0 0.0
    %8079 = vmatpush1.msra.mxu0 0.0
    %8080 = vmatprep.subr.mxu0 0.0
    %8081 = vmatpush1.msra.mxu0 0.0
    %8082 = vmatprep.subr.mxu0 0.0
    %8083 = vmatpush1.msra.mxu0 0.0
    %8084 = vmatprep.subr.mxu0 0.0
    %8085 = vmatpush1.msra.mxu0 0.0
    %8086 = vmatprep.subr.mxu0 0.0
    %8087 = vmatpush1.msra.mxu0 0.0
    %8088 = vmatprep.subr.mxu0 0.0
    %8089 = vmatpush1.msra.mxu0 0.0
    %8090 = vmatprep.subr.mxu0 0.0
    %8091 = vmatpush1.msra.mxu0 0.0
    %8092 = vmatprep.subr.mxu0 0.0
    %8093 = vmatpush1.msra.mxu0 0.0
    %8094 = vmatprep.subr.mxu0 0.0
    %8095 = vmatpush1.msra.mxu0 0.0
    %8096 = vmatprep.subr.mxu0 0.0
    %8097 = vmatpush1.msra.mxu0 0.0
    %8098 = vmatprep.subr.mxu0 0.0
    %8099 = vmatpush1.msra.mxu0 0.0
    %8100 = vmatprep.mubr.f32.mxu0 0.0
    %8101 = vmatmul.mubr.f32.gmra.mrb[0].mxu0 %v8034
    %v8102 = vpop.f32.mrb[0].mxu0
    %v8103 = vadd.f32 0.0, %v8102
    %v8104 = vpop.f32.mrb[0].mxu0
    %8105 = vdwg.mxu0
    %8106 = vrot.lane.b32.xlu0 %v6565, 104
    %v8107 = vpop.permute.xlu0 %8106
    %8108 = vrot.lane.b32.xlu0 %v6570, 104
    %v8109 = vpop.permute.xlu0 %8108
    %v8113 = vsel %vm2508, %v8026, 0
    %8115 = vmatprep.subr.mxu0 0.0
    %8116 = vmatpush1.msra.mxu0 %v8107
    %8117 = vmatprep.subr.mxu0 0.0
    %8118 = vmatpush1.msra.mxu0 %v8109
    %8119 = vmatprep.subr.mxu0 0.0
    %8120 = vmatpush1.msra.mxu0 0.0
    %8121 = vmatprep.subr.mxu0 0.0
    %8122 = vmatpush1.msra.mxu0 0.0
    %8123 = vmatprep.subr.mxu0 0.0
    %8124 = vmatpush1.msra.mxu0 0.0
    %8125 = vmatprep.subr.mxu0 0.0
    %8126 = vmatpush1.msra.mxu0 0.0
    %8127 = vmatprep.subr.mxu0 0.0
    %8128 = vmatpush1.msra.mxu0 0.0
    %8129 = vmatprep.subr.mxu0 0.0
    %8130 = vmatpush1.msra.mxu0 0.0
    %8131 = vmatprep.subr.mxu0 0.0
    %8132 = vmatpush1.msra.mxu0 0.0
    %8133 = vmatprep.subr.mxu0 0.0
    %8134 = vmatpush1.msra.mxu0 0.0
    %8135 = vmatprep.subr.mxu0 0.0
    %8136 = vmatpush1.msra.mxu0 0.0
    %8137 = vmatprep.subr.mxu0 0.0
    %8138 = vmatpush1.msra.mxu0 0.0
    %8139 = vmatprep.subr.mxu0 0.0
    %8140 = vmatpush1.msra.mxu0 0.0
    %8141 = vmatprep.subr.mxu0 0.0
    %8142 = vmatpush1.msra.mxu0 0.0
    %8143 = vmatprep.subr.mxu0 0.0
    %8144 = vmatpush1.msra.mxu0 0.0
    %8145 = vmatprep.subr.mxu0 0.0
    %8146 = vmatpush1.msra.mxu0 0.0
    %8147 = vmatprep.subr.mxu0 0.0
    %8148 = vmatpush1.msra.mxu0 0.0
    %8149 = vmatprep.subr.mxu0 0.0
    %8150 = vmatpush1.msra.mxu0 0.0
    %8151 = vmatprep.subr.mxu0 0.0
    %8152 = vmatpush1.msra.mxu0 0.0
    %8153 = vmatprep.subr.mxu0 0.0
    %8154 = vmatpush1.msra.mxu0 0.0
    %8155 = vmatprep.subr.mxu0 0.0
    %8156 = vmatpush1.msra.mxu0 0.0
    %8157 = vmatprep.subr.mxu0 0.0
    %8158 = vmatpush1.msra.mxu0 0.0
    %8159 = vmatprep.subr.mxu0 0.0
    %8160 = vmatpush1.msra.mxu0 0.0
    %8161 = vmatprep.subr.mxu0 0.0
    %8162 = vmatpush1.msra.mxu0 0.0
    %8163 = vmatprep.subr.mxu0 0.0
    %8164 = vmatpush1.msra.mxu0 0.0
    %8165 = vmatprep.subr.mxu0 0.0
    %8166 = vmatpush1.msra.mxu0 0.0
    %8167 = vmatprep.subr.mxu0 0.0
    %8168 = vmatpush1.msra.mxu0 0.0
    %8169 = vmatprep.subr.mxu0 0.0
    %8170 = vmatpush1.msra.mxu0 0.0
    %8171 = vmatprep.subr.mxu0 0.0
    %8172 = vmatpush1.msra.mxu0 0.0
    %8173 = vmatprep.subr.mxu0 0.0
    %8174 = vmatpush1.msra.mxu0 0.0
    %8175 = vmatprep.subr.mxu0 0.0
    %8176 = vmatpush1.msra.mxu0 0.0
    %8177 = vmatprep.subr.mxu0 0.0
    %8178 = vmatpush1.msra.mxu0 0.0
    %8179 = vmatprep.mubr.f32.mxu0 0.0
    %8180 = vmatmul.mubr.f32.gmra.mrb[0].mxu0 %v8113
    %v8181 = vpop.f32.mrb[0].mxu0
    %v8182 = vadd.f32 0.0, %v8181
    %v8183 = vpop.f32.mrb[0].mxu0
    %8184 = vdwg.mxu0
    %v8186 = vsel %vm346, %v8103, 0
    %v8189 = vsel %vm346, %v8182, 0
    %8191 = vmatprep.subr.mxu0 0.0
    %8192 = vmatpush1.msra.mxu0 %v6577
    %8193 = vmatprep.subr.mxu0 0.0
    %8194 = vmatpush1.msra.mxu0 0.0
    %8195 = vmatprep.subr.mxu0 0.0
    %8196 = vmatpush1.msra.mxu0 0.0
    %8197 = vmatprep.subr.mxu0 0.0
    %8198 = vmatpush1.msra.mxu0 0.0
    %8199 = vmatprep.subr.mxu0 0.0
    %8200 = vmatpush1.msra.mxu0 0.0
    %8201 = vmatprep.subr.mxu0 0.0
    %8202 = vmatpush1.msra.mxu0 0.0
    %8203 = vmatprep.subr.mxu0 0.0
    %8204 = vmatpush1.msra.mxu0 0.0
    %8205 = vmatprep.subr.mxu0 0.0
    %8206 = vmatpush1.msra.mxu0 0.0
    %8207 = vmatprep.subr.mxu0 0.0
    %8208 = vmatpush1.msra.mxu0 0.0
    %8209 = vmatprep.subr.mxu0 0.0
    %8210 = vmatpush1.msra.mxu0 0.0
    %8211 = vmatprep.subr.mxu0 0.0
    %8212 = vmatpush1.msra.mxu0 0.0
    %8213 = vmatprep.subr.mxu0 0.0
    %8214 = vmatpush1.msra.mxu0 0.0
    %8215 = vmatprep.subr.mxu0 0.0
    %8216 = vmatpush1.msra.mxu0 0.0
    %8217 = vmatprep.subr.mxu0 0.0
    %8218 = vmatpush1.msra.mxu0 0.0
    %8219 = vmatprep.subr.mxu0 0.0
    %8220 = vmatpush1.msra.mxu0 0.0
    %8221 = vmatprep.subr.mxu0 0.0
    %8222 = vmatpush1.msra.mxu0 0.0
    %8223 = vmatprep.subr.mxu0 0.0
    %8224 = vmatpush1.msra.mxu0 0.0
    %8225 = vmatprep.subr.mxu0 0.0
    %8226 = vmatpush1.msra.mxu0 0.0
    %8227 = vmatprep.subr.mxu0 0.0
    %8228 = vmatpush1.msra.mxu0 0.0
    %8229 = vmatprep.subr.mxu0 0.0
    %8230 = vmatpush1.msra.mxu0 0.0
    %8231 = vmatprep.subr.mxu0 0.0
    %8232 = vmatpush1.msra.mxu0 0.0
    %8233 = vmatprep.subr.mxu0 0.0
    %8234 = vmatpush1.msra.mxu0 0.0
    %8235 = vmatprep.subr.mxu0 0.0
    %8236 = vmatpush1.msra.mxu0 0.0
    %8237 = vmatprep.subr.mxu0 0.0
    %8238 = vmatpush1.msra.mxu0 0.0
    %8239 = vmatprep.subr.mxu0 0.0
    %8240 = vmatpush1.msra.mxu0 0.0
    %8241 = vmatprep.subr.mxu0 0.0
    %8242 = vmatpush1.msra.mxu0 0.0
    %8243 = vmatprep.subr.mxu0 0.0
    %8244 = vmatpush1.msra.mxu0 0.0
    %8245 = vmatprep.subr.mxu0 0.0
    %8246 = vmatpush1.msra.mxu0 0.0
    %8247 = vmatprep.subr.mxu0 0.0
    %8248 = vmatpush1.msra.mxu0 0.0
    %8249 = vmatprep.subr.mxu0 0.0
    %8250 = vmatpush1.msra.mxu0 0.0
    %8251 = vmatprep.subr.mxu0 0.0
    %8252 = vmatpush1.msra.mxu0 0.0
    %8253 = vmatprep.subr.mxu0 0.0
    %8254 = vmatpush1.msra.mxu0 0.0
    %8255 = vmatprep.mubr.f32.mxu0 0.0
    %8256 = vmatmul.mubr.f32.gmra.mrb[0].mxu0 %v8186
    %v8257 = vpop.f32.mrb[0].mxu0
    %v8258 = vadd.f32 0.0, %v8257
    %v8259 = vpop.f32.mrb[0].mxu0
    %8260 = vmatprep.mubr.f32.mxu0 0.0
    %8261 = vmatmul.mubr.f32.gmra.mrb[0].mxu0 %v8189
    %v8262 = vpop.f32.mrb[0].mxu0
    %v8263 = vadd.f32 0.0, %v8262
    %v8264 = vpop.f32.mrb[0].mxu0
    %8265 = vdwg.mxu0
    %v8266 = vadd.f32 %v7839, %v8258
    %v8267 = vadd.f32 %v7840, %v8263
    %v8268 = vld [vmem:[%s6294 + $0x3] sm:$0x1]
    %v8269 = vlaneseq
    %v8270 = vshrl.u32 %v8269, 7
    %v8271 = vsub.s32 0, %v8270
    %v8272 = vrot.slane %v8268, %v8271
    %v8273 = vadd.f32 %v8266, %v8272
    %v8274 = vadd.f32 %v8267, %v8272
    %v8275 = vadd.f32 %v6285, %v8273
    %v8276 = vadd.f32 %v6286, %v8274
    %v8277 = vld [vmem:[%s6245 + $0x1] sm:$0x1]
    %v8278 = vld [vmem:[%s6247 + $0x1] sm:$0x1]
    %v8279 = vsel %vm81, %v8275, 0.0
    %8280 = vadd.xlane.f32.xlu0 %v8279
    %v8281 = vpop.xlane.xlu0 %8280
    %v8282 = vsel %vm81, %v8276, 0.0
    %8283 = vadd.xlane.f32.xlu0 %v8282
    %v8284 = vpop.xlane.xlu0 %8283
    %v8285 = vmul.f32 %v8281, %v2004
    %v8286 = vmul.f32 %v8284, %v2004
    %v8287 = vsub.f32 %v8275, %v8285
    %v8288 = vsub.f32 %v8276, %v8286
    %v8289 = vmul.f32 %v8287, %v8287
    %v8290 = vmul.f32 %v8288, %v8288
    %v8291 = vsel %vm81, %v8289, 0.0
    %8292 = vadd.xlane.f32.xlu0 %v8291
    %v8293 = vpop.xlane.xlu0 %8292
    %v8294 = vsel %vm81, %v8290, 0.0
    %8295 = vadd.xlane.f32.xlu0 %v8294
    %v8296 = vpop.xlane.xlu0 %8295
    %v8297 = vmul.f32 %v8293, %v2004
    %v8298 = vmul.f32 %v8296, %v2004
    %v8299 = vadd.f32 %v8297, 1e-05
    %v8300 = vadd.f32 %v8298, 1e-05
    %v8301 = vrsqrt.pop %v8299
    %v8302 = vrsqrt.pop %v8300
    %v8303 = vmul.f32 %v8287, %v8301
    %v8304 = vmul.f32 %v8288, %v8302
    %v8305 = vlaneseq
    %v8306 = vshrl.u32 %v8305, 7
    %v8307 = vsub.s32 0, %v8306
    %v8308 = vrot.slane %v8277, %v8307
    %v8309 = vmul.f32 %v8303, %v8308
    %v8310 = vmul.f32 %v8304, %v8308
    %v8311 = vlaneseq
    %v8312 = vshrl.u32 %v8311, 7
    %v8313 = vsub.s32 0, %v8312
    %v8314 = vrot.slane %v8278, %v8313
    %v8315 = vadd.f32 %v8309, %v8314
    %v8316 = vadd.f32 %v8310, %v8314
    %s8317 = scalar_lea.vmem %s8, 32
    %v8318 = vld [vmem:[%s8317] sm:$0xff]
    %v8319 = vld [vmem:[%s8317 + $0x8] sm:$0xff]
    %v8320 = vld [vmem:[%s8317 + $0x10] sm:$0xff]
    %v8321 = vld [vmem:[%s8317 + $0x18] sm:$0xff]
    %v8322 = vld [vmem:[%s9 + $0x1] sm:$0x1]
    %v8323 = vlaneseq
    %v8324 = vshrl.u32 %v8323, 7
    %v8325 = vsub.s32 0, %v8324
    %v8326 = vrot.slane %v8322, %v8325
    %v8328 = vsel %vm81, %v8315, 0
    %v8331 = vsel %vm81, %v8316, 0
    %8333 = vmatprep.subr.mxu0 0.0
    %8334 = vmatpush1.msra.mxu0 %v8318
    %8335 = vmatprep.subr.mxu0 0.0
    %8336 = vmatpush1.msra.mxu0 %v8319
    %8337 = vmatprep.subr.mxu0 0.0
    %8338 = vmatpush1.msra.mxu0 %v8320
    %8339 = vmatprep.subr.mxu0 0.0
    %8340 = vmatpush1.msra.mxu0 %v8321
    %8341 = vmatprep.subr.mxu0 0.0
    %8342 = vmatpush1.msra.mxu0 0.0
    %8343 = vmatprep.subr.mxu0 0.0
    %8344 = vmatpush1.msra.mxu0 0.0
    %8345 = vmatprep.subr.mxu0 0.0
    %8346 = vmatpush1.msra.mxu0 0.0
    %8347 = vmatprep.subr.mxu0 0.0
    %8348 = vmatpush1.msra.mxu0 0.0
    %8349 = vmatprep.subr.mxu0 0.0
    %8350 = vmatpush1.msra.mxu0 0.0
    %8351 = vmatprep.subr.mxu0 0.0
    %8352 = vmatpush1.msra.mxu0 0.0
    %8353 = vmatprep.subr.mxu0 0.0
    %8354 = vmatpush1.msra.mxu0 0.0
    %8355 = vmatprep.subr.mxu0 0.0
    %8356 = vmatpush1.msra.mxu0 0.0
    %8357 = vmatprep.subr.mxu0 0.0
    %8358 = vmatpush1.msra.mxu0 0.0
    %8359 = vmatprep.subr.mxu0 0.0
    %8360 = vmatpush1.msra.mxu0 0.0
    %8361 = vmatprep.subr.mxu0 0.0
    %8362 = vmatpush1.msra.mxu0 0.0
    %8363 = vmatprep.subr.mxu0 0.0
    %8364 = vmatpush1.msra.mxu0 0.0
    %8365 = vmatprep.subr.mxu0 0.0
    %8366 = vmatpush1.msra.mxu0 0.0
    %8367 = vmatprep.subr.mxu0 0.0
    %8368 = vmatpush1.msra.mxu0 0.0
    %8369 = vmatprep.subr.mxu0 0.0
    %8370 = vmatpush1.msra.mxu0 0.0
    %8371 = vmatprep.subr.mxu0 0.0
    %8372 = vmatpush1.msra.mxu0 0.0
    %8373 = vmatprep.subr.mxu0 0.0
    %8374 = vmatpush1.msra.mxu0 0.0
    %8375 = vmatprep.subr.mxu0 0.0
    %8376 = vmatpush1.msra.mxu0 0.0
    %8377 = vmatprep.subr.mxu0 0.0
    %8378 = vmatpush1.msra.mxu0 0.0
    %8379 = vmatprep.subr.mxu0 0.0
    %8380 = vmatpush1.msra.mxu0 0.0
    %8381 = vmatprep.subr.mxu0 0.0
    %8382 = vmatpush1.msra.mxu0 0.0
    %8383 = vmatprep.subr.mxu0 0.0
    %8384 = vmatpush1.msra.mxu0 0.0
    %8385 = vmatprep.subr.mxu0 0.0
    %8386 = vmatpush1.msra.mxu0 0.0
    %8387 = vmatprep.subr.mxu0 0.0
    %8388 = vmatpush1.msra.mxu0 0.0
    %8389 = vmatprep.subr.mxu0 0.0
    %8390 = vmatpush1.msra.mxu0 0.0
    %8391 = vmatprep.subr.mxu0 0.0
    %8392 = vmatpush1.msra.mxu0 0.0
    %8393 = vmatprep.subr.mxu0 0.0
    %8394 = vmatpush1.msra.mxu0 0.0
    %8395 = vmatprep.subr.mxu0 0.0
    %8396 = vmatpush1.msra.mxu0 0.0
    %8397 = vmatprep.mubr.f32.mxu0 0.0
    %8398 = vmatmul.mubr.f32.gmra.mrb[0].mxu0 %v8328
    %v8399 = vpop.f32.mrb[0].mxu0
    %v8400 = vadd.f32 %v8326, %v8399
    %v8401 = vpop.f32.mrb[0].mxu0
    %8402 = vmatprep.mubr.f32.mxu0 0.0
    %8403 = vmatmul.mubr.f32.gmra.mrb[0].mxu0 %v8331
    %v8404 = vpop.f32.mrb[0].mxu0
    %v8405 = vadd.f32 %v8326, %v8404
    %v8406 = vpop.f32.mrb[0].mxu0
    %8407 = vdwg.mxu0
    %v8408 = vmax.f32 %v8400, 0.0
    %v8409 = vmax.f32 %v8405, 0.0
    %s8410 = scalar_lea.vmem %s10, 64
    %v8411 = vld [vmem:[%s8410] sm:$0xff]
    %v8412 = vld [vmem:[%s8410 + $0x8] sm:$0xff]
    %v8413 = vld [vmem:[%s8410 + $0x10] sm:$0xff]
    %v8414 = vld [vmem:[%s8410 + $0x18] sm:$0xff]
    %v8415 = vld [vmem:[%s8410 + $0x20] sm:$0xff]
    %v8416 = vld [vmem:[%s8410 + $0x28] sm:$0xff]
    %v8417 = vld [vmem:[%s8410 + $0x30] sm:$0xff]
    %v8418 = vld [vmem:[%s8410 + $0x38] sm:$0xff]
    %v8419 = vld [vmem:[%s11 + $0x1] sm:$0x1]
    %v8420 = vlaneseq
    %v8421 = vshrl.u32 %v8420, 7
    %v8422 = vsub.s32 0, %v8421
    %v8423 = vrot.slane %v8419, %v8422
    %v8425 = vsel %vm4195, %v8408, 0
    %v8428 = vsel %vm4195, %v8409, 0
    %8430 = vmatprep.subr.mxu0 0.0
    %8431 = vmatpush1.msra.mxu0 %v8411
    %8432 = vmatprep.subr.mxu0 0.0
    %8433 = vmatpush1.msra.mxu0 %v8412
    %8434 = vmatprep.subr.mxu0 0.0
    %8435 = vmatpush1.msra.mxu0 %v8413
    %8436 = vmatprep.subr.mxu0 0.0
    %8437 = vmatpush1.msra.mxu0 %v8414
    %8438 = vmatprep.subr.mxu0 0.0
    %8439 = vmatpush1.msra.mxu0 %v8415
    %8440 = vmatprep.subr.mxu0 0.0
    %8441 = vmatpush1.msra.mxu0 %v8416
    %8442 = vmatprep.subr.mxu0 0.0
    %8443 = vmatpush1.msra.mxu0 %v8417
    %8444 = vmatprep.subr.mxu0 0.0
    %8445 = vmatpush1.msra.mxu0 %v8418
    %8446 = vmatprep.subr.mxu0 0.0
    %8447 = vmatpush1.msra.mxu0 0.0
    %8448 = vmatprep.subr.mxu0 0.0
    %8449 = vmatpush1.msra.mxu0 0.0
    %8450 = vmatprep.subr.mxu0 0.0
    %8451 = vmatpush1.msra.mxu0 0.0
    %8452 = vmatprep.subr.mxu0 0.0
    %8453 = vmatpush1.msra.mxu0 0.0
    %8454 = vmatprep.subr.mxu0 0.0
    %8455 = vmatpush1.msra.mxu0 0.0
    %8456 = vmatprep.subr.mxu0 0.0
    %8457 = vmatpush1.msra.mxu0 0.0
    %8458 = vmatprep.subr.mxu0 0.0
    %8459 = vmatpush1.msra.mxu0 0.0
    %8460 = vmatprep.subr.mxu0 0.0
    %8461 = vmatpush1.msra.mxu0 0.0
    %8462 = vmatprep.subr.mxu0 0.0
    %8463 = vmatpush1.msra.mxu0 0.0
    %8464 = vmatprep.subr.mxu0 0.0
    %8465 = vmatpush1.msra.mxu0 0.0
    %8466 = vmatprep.subr.mxu0 0.0
    %8467 = vmatpush1.msra.mxu0 0.0
    %8468 = vmatprep.subr.mxu0 0.0
    %8469 = vmatpush1.msra.mxu0 0.0
    %8470 = vmatprep.subr.mxu0 0.0
    %8471 = vmatpush1.msra.mxu0 0.0
    %8472 = vmatprep.subr.mxu0 0.0
    %8473 = vmatpush1.msra.mxu0 0.0
    %8474 = vmatprep.subr.mxu0 0.0
    %8475 = vmatpush1.msra.mxu0 0.0
    %8476 = vmatprep.subr.mxu0 0.0
    %8477 = vmatpush1.msra.mxu0 0.0
    %8478 = vmatprep.subr.mxu0 0.0
    %8479 = vmatpush1.msra.mxu0 0.0
    %8480 = vmatprep.subr.mxu0 0.0
    %8481 = vmatpush1.msra.mxu0 0.0
    %8482 = vmatprep.subr.mxu0 0.0
    %8483 = vmatpush1.msra.mxu0 0.0
    %8484 = vmatprep.subr.mxu0 0.0
    %8485 = vmatpush1.msra.mxu0 0.0
    %8486 = vmatprep.subr.mxu0 0.0
    %8487 = vmatpush1.msra.mxu0 0.0
    %8488 = vmatprep.subr.mxu0 0.0
    %8489 = vmatpush1.msra.mxu0 0.0
    %8490 = vmatprep.subr.mxu0 0.0
    %8491 = vmatpush1.msra.mxu0 0.0
    %8492 = vmatprep.subr.mxu0 0.0
    %8493 = vmatpush1.msra.mxu0 0.0
    %8494 = vmatprep.mubr.f32.mxu0 0.0
    %8495 = vmatmul.mubr.f32.gmra.mrb[0].mxu0 %v8425
    %v8496 = vpop.f32.mrb[0].mxu0
    %v8497 = vadd.f32 %v8423, %v8496
    %v8498 = vpop.f32.mrb[0].mxu0
    %8499 = vmatprep.mubr.f32.mxu0 0.0
    %8500 = vmatmul.mubr.f32.gmra.mrb[0].mxu0 %v8428
    %v8501 = vpop.f32.mrb[0].mxu0
    %v8502 = vadd.f32 %v8423, %v8501
    %v8503 = vpop.f32.mrb[0].mxu0
    %8504 = vdwg.mxu0
    %v8505 = vadd.f32 %v8315, %v8497
    %v8506 = vadd.f32 %v8316, %v8502
    %v8507 = vld [vmem:[%s6245 + $0x2] sm:$0x1]
    %v8508 = vld [vmem:[%s6247 + $0x2] sm:$0x1]
    %v8509 = vsel %vm81, %v8505, 0.0
    %8510 = vadd.xlane.f32.xlu0 %v8509
    %v8511 = vpop.xlane.xlu0 %8510
    %v8512 = vsel %vm81, %v8506, 0.0
    %8513 = vadd.xlane.f32.xlu0 %v8512
    %v8514 = vpop.xlane.xlu0 %8513
    %v8515 = vmul.f32 %v8511, %v2004
    %v8516 = vmul.f32 %v8514, %v2004
    %v8517 = vsub.f32 %v8505, %v8515
    %v8518 = vsub.f32 %v8506, %v8516
    %v8519 = vmul.f32 %v8517, %v8517
    %v8520 = vmul.f32 %v8518, %v8518
    %v8521 = vsel %vm81, %v8519, 0.0
    %8522 = vadd.xlane.f32.xlu0 %v8521
    %v8523 = vpop.xlane.xlu0 %8522
    %v8524 = vsel %vm81, %v8520, 0.0
    %8525 = vadd.xlane.f32.xlu0 %v8524
    %v8526 = vpop.xlane.xlu0 %8525
    %v8527 = vmul.f32 %v8523, %v2004
    %v8528 = vmul.f32 %v8526, %v2004
    %v8529 = vadd.f32 %v8527, 1e-05
    %v8530 = vadd.f32 %v8528, 1e-05
    %v8531 = vrsqrt.pop %v8529
    %v8532 = vrsqrt.pop %v8530
    %v8533 = vmul.f32 %v8517, %v8531
    %v8534 = vmul.f32 %v8518, %v8532
    %v8535 = vlaneseq
    %v8536 = vshrl.u32 %v8535, 7
    %v8537 = vsub.s32 0, %v8536
    %v8538 = vrot.slane %v8507, %v8537
    %v8539 = vmul.f32 %v8533, %v8538
    %v8540 = vmul.f32 %v8534, %v8538
    %v8541 = vlaneseq
    %v8542 = vshrl.u32 %v8541, 7
    %v8543 = vsub.s32 0, %v8542
    %v8544 = vrot.slane %v8508, %v8543
    %v8545 = vadd.f32 %v8539, %v8544
    %v8546 = vadd.f32 %v8540, %v8544
    %v8547 = vld [vmem:[%s14] sm:$0x1]
    %v8548 = vld [vmem:[%s15] sm:$0x1]
    %v8549 = vsel %vm81, %v8545, 0.0
    %8550 = vadd.xlane.f32.xlu0 %v8549
    %v8551 = vpop.xlane.xlu0 %8550
    %v8552 = vsel %vm81, %v8546, 0.0
    %8553 = vadd.xlane.f32.xlu0 %v8552
    %v8554 = vpop.xlane.xlu0 %8553
    %v8555 = vmul.f32 %v8551, %v2004
    %v8556 = vmul.f32 %v8554, %v2004
    %v8557 = vsub.f32 %v8545, %v8555
    %v8558 = vsub.f32 %v8546, %v8556
    %v8559 = vmul.f32 %v8557, %v8557
    %v8560 = vmul.f32 %v8558, %v8558
    %v8561 = vsel %vm81, %v8559, 0.0
    %8562 = vadd.xlane.f32.xlu0 %v8561
    %v8563 = vpop.xlane.xlu0 %8562
    %v8564 = vsel %vm81, %v8560, 0.0
    %8565 = vadd.xlane.f32.xlu0 %v8564
    %v8566 = vpop.xlane.xlu0 %8565
    %v8567 = vmul.f32 %v8563, %v2004
    %v8568 = vmul.f32 %v8566, %v2004
    %v8569 = vadd.f32 %v8567, 1e-05
    %v8570 = vadd.f32 %v8568, 1e-05
    %v8571 = vrsqrt.pop %v8569
    %v8572 = vrsqrt.pop %v8570
    %v8573 = vmul.f32 %v8557, %v8571
    %v8574 = vmul.f32 %v8558, %v8572
    %v8576 = vlaneseq
    %v8577 = vshrl.u32 %v8576, 7
    %v8578 = vsub.s32 0, %v8577
    %v8579 = vrot.slane %v8547, %v8578
    %v8581 = vmul.f32 %v8573, %v8579
    %v8582 = vmul.f32 %v8574, %v8579
    %v8584 = vlaneseq
    %v8585 = vshrl.u32 %v8584, 7
    %v8586 = vsub.s32 0, %v8585
    %v8587 = vrot.slane %v8548, %v8586
    %v8589 = vadd.f32 %v8581, %v8587
    %v8590 = vadd.f32 %v8582, %v8587
    %8591 = vst.msk [vmem:[#allocation2] sm:$0xff] %vm81, %v8589
    %8592 = vst.msk [vmem:[#allocation2 + $0x8] sm:$0xff] %vm81, %v8590
    // Predicated region
    $region66: #{transformer_decoder.1} parent=1 // pred_check
      _
    $region67: #{transformer_decoder.1} parent=1 // pred_check_branch
      %8594 = sbr.rel (0) target = $region69
    $region68: #{transformer_decoder.1} parent=1 // pred_region
      %s8596 = ssub.s32 256, 256
      %8597 = vsyncadd [#allocation3], %s8596
      %s8598 = sshll.u32 [#allocation2], 4
      %s8599 = int_to_ptr.vmem [resolvable:$true] %s8598
      %8604 = dma.vmem_to_hbm [thread:$0]  %s8599, 256, %s16, [#allocation3], 128, 128, 8
    $region69: #{transformer_decoder.1} parent=1 // pred_fallthru
      _
    // Predicated region
    $region70: #{transformer_decoder.1} parent=1 // pred_check
      _
    $region71: #{transformer_decoder.1} parent=1 // pred_check_branch
      %8606 = sbr.rel (0) target = $region73
    $region72: #{transformer_decoder.1} parent=1 // pred_region
      %8607 = dma.done [#allocation3], 256
    $region73: #{transformer_decoder.1} parent=1 // pred_fallthru
      _
    %8608 = vsyncpa [#allocation3], 1

</llo_original>
